<compile_context>
chip_gen: v7x
topology: tpu7x:2x2x1
jax: 0.10.0
libtpu: 0.0.40
codegen_flags: <defaults>
</compile_context>

<pallas_src>
import functools

import numpy as np

import jax
import jax.numpy as jnp
from jax.experimental import pallas as pl
from jax.experimental.pallas import tpu as pltpu

EPS = 1e-5


# ----------------------------- Pallas kernel --------------------------------


def _fused_cnn_kernel(x_ref, m1_ref, sc1_ref, sh1_ref, m2_ref, sc2_ref, sh2_ref,
                      w1_ref, b1_ref, w2_ref, b2_ref, o_ref, *, bn):
    """Whole ImprovedCNN forward for one block of `bn` images.

    x_ref  : [7, bn, 256]  conv1 LHS; slab q holds the 8 consecutive padded
                           input rows 4q..4q+7 (32 lanes each) concatenated.
    m1_ref : [256, 2048]   banded conv1 weights; N-blocks of 512 = conv rows
                           4q+t (t=0..3), each split (w-parity, chan*14+w', pad32).
    m2_ref : [1536, 1024]  banded conv2 weights; K-slabs of 256 = padded conv2
                           input rows 2h''+s (s=0..5); N-blocks = conv rows
                           2h''+t (t=0..1) with the same 256-lane sub-layout.
    w1_ref : [1792, 128]   fc1 weight with NCHW-flatten permutation + zero rows
                           on pad lanes folded in.   w2_ref: [128,128] (10->128 pad).
    o_ref  : [bn, 128]     logits (only lanes 0..9 are meaningful).
    """
    f32 = jnp.float32
    rows = 7 * bn

    # ---- conv1: one batched matmul, M = 7*bn, K = 256, N = 2048 -------------
    lhs1 = jnp.concatenate([x_ref[q] for q in range(7)], axis=0)      # [7bn,256]
    out1 = jnp.dot(lhs1, m1_ref[...], preferred_element_type=f32)     # [7bn,2048]
    z1 = jnp.maximum(out1 * sc1_ref[...] + sh1_ref[...], 0.0)         # BN + ReLU
    # Fused 2x2 max-pool: the eight 256-lane blocks are (conv row 4q+t) x (w-parity).
    y1e = jnp.maximum(jnp.maximum(z1[:, 0:256], z1[:, 256:512]),
                      jnp.maximum(z1[:, 512:768], z1[:, 768:1024]))    # pooled rows 2q
    y1o = jnp.maximum(jnp.maximum(z1[:, 1024:1280], z1[:, 1280:1536]),
                      jnp.maximum(z1[:, 1536:1792], z1[:, 1792:2048]))  # rows 2q+1
    y1e = y1e.astype(jnp.bfloat16)                                     # [7bn, 256]
    y1o = y1o.astype(jnp.bfloat16)

    # ---- conv2 LHS: 6 consecutive H-padded conv1 rows per output-row pair ---
    zrow = jnp.zeros((bn, 256), jnp.bfloat16)
    pe = jnp.concatenate([zrow, y1e, zrow], axis=0)     # [9bn,256] padded rows 2j
    po = jnp.concatenate([zrow, y1o, zrow], axis=0)     # [9bn,256] padded rows 2j+1
    lhs2 = jnp.concatenate(
        [pe[0:rows], po[0:rows],
         pe[bn:rows + bn], po[bn:rows + bn],
         pe[2 * bn:rows + 2 * bn], po[2 * bn:rows + 2 * bn]],
        axis=-1)                                        # [7bn, 1536]

    # ---- conv2: one batched matmul, M = 7*bn, K = 1536, N = 1024 ------------
    out2 = jnp.dot(lhs2, m2_ref[...], preferred_element_type=f32)
    z2 = jnp.maximum(out2 * sc2_ref[...] + sh2_ref[...], 0.0)
    pooled2 = jnp.maximum(jnp.maximum(z2[:, 0:256], z2[:, 256:512]),
                          jnp.maximum(z2[:, 512:768], z2[:, 768:1024]))
    pooled2 = pooled2.astype(jnp.bfloat16)              # [7bn, 256], row = h''*bn + i

    # ---- flatten (row-groups -> lanes) + fc1 + ReLU + fc2 --------------------
    feats = jnp.concatenate([pooled2[h * bn:(h + 1) * bn, :] for h in range(7)],
                            axis=-1)                    # [bn, 1792]
    h1 = jnp.dot(feats, w1_ref[...], preferred_element_type=f32) + b1_ref[...]
    h1 = jnp.maximum(h1, 0.0).astype(jnp.bfloat16)
    # TODO(synk): Dropout(0.5) is identity in eval mode; training-mode RNG dropout not implemented.
    logits = jnp.dot(h1, w2_ref[...], preferred_element_type=f32) + b2_ref[...]
    o_ref[...] = logits


# ----------------------------- call wrapper ----------------------------------


def _round_up(x, m):
    return (x + m - 1) // m * m


def _pick_bn(n):
    # Big enough that M = 7*bn feeds the MXU (448 rows at bn=64), small enough
    # to keep >=2 grid steps for moderate batches (v7x megacore sharding).
    for bn in (64, 32, 16):
        if n >= 2 * bn:
            return bn
    return 16


def forward(x_nchw, params):
    n = x_nchw.shape[0]
    bn = _pick_bn(n)
    n_pad = _round_up(n, bn)

    # Input prep (one small XLA fusion over the raw 28x28 images):
    #   SAME pad to 32x32, pad the batch, and pack 8 consecutive padded rows
    #   (4q..4q+7) per row-group q along lanes -> [7, N_pad, 256].
    x = x_nchw[:, 0].astype(jnp.bfloat16)                    # [N, 28, 28]
    if n_pad != n:
        x = jnp.pad(x, ((0, n_pad - n), (0, 0), (0, 0)))
    xp = jnp.pad(x, ((0, 0), (2, 2), (2, 2)))                # [N_pad, 32, 32]
    x1 = jnp.stack([xp[:, 4 * q:4 * q + 8, :] for q in range(7)], axis=0)
    x1 = x1.reshape(7, n_pad, 8 * 32)                        # [7, N_pad, 256]

    logits = pl.pallas_call(
        functools.partial(_fused_cnn_kernel, bn=bn),
        out_shape=jax.ShapeDtypeStruct((n_pad, 128), jnp.float32),
        grid=(n_pad // bn,),
        in_specs=[
            pl.BlockSpec((7, bn, 256), lambda i: (0, i, 0)),     # packed input
            pl.BlockSpec((256, 2048), lambda i: (0, 0)),         # m1 (resident)
            pl.BlockSpec((1, 2048), lambda i: (0, 0)),           # bn1 scale
            pl.BlockSpec((1, 2048), lambda i: (0, 0)),           # bn1 shift
            pl.BlockSpec((1536, 1024), lambda i: (0, 0)),        # m2 (resident)
            pl.BlockSpec((1, 1024), lambda i: (0, 0)),           # bn2 scale
            pl.BlockSpec((1, 1024), lambda i: (0, 0)),           # bn2 shift
            pl.BlockSpec((1792, 128), lambda i: (0, 0)),         # fc1 weight
            pl.BlockSpec((1, 128), lambda i: (0, 0)),            # fc1 bias
            pl.BlockSpec((128, 128), lambda i: (0, 0)),          # fc2 weight
            pl.BlockSpec((1, 128), lambda i: (0, 0)),            # fc2 bias
        ],
        out_specs=pl.BlockSpec((bn, 128), lambda i: (i, 0)),
        compiler_params=pltpu.CompilerParams(
            dimension_semantics=("parallel",),
            vmem_limit_bytes=48 * 1024 * 1024),
    )(x1, params["m1"], params["sc1"], params["sh1"],
      params["m2"], params["sc2"], params["sh2"],
      params["w1m"], params["b1"], params["w2m"], params["b2"])

    return logits[:n, :10]


# ------------------------- parameter preparation -----------------------------


def _bn_fold(g, be, mu, var, b):
    scale = g / jnp.sqrt(var + EPS)
    shift = be + scale * (b - mu)
    return scale, shift


def _conv1_banded(k1):
    """m1[s*32+u, t*512 + p*256 + o*14 + w'] = k1[o,0,s-t,u-(2w'+p)] when valid.

    s = padded input row (4q+s), t = conv output row (4q+t), p = output width
    parity, w' = pooled width index.  Lanes 224..255 of each 256-block are pad.
    """
    kk = np.asarray(k1, np.float32)[:, 0]                           # [16,5,5]
    s = np.arange(8).reshape(8, 1, 1, 1, 1, 1)
    u = np.arange(32).reshape(1, 32, 1, 1, 1, 1)
    t = np.arange(4).reshape(1, 1, 4, 1, 1, 1)
    p = np.arange(2).reshape(1, 1, 1, 2, 1, 1)
    o = np.arange(16).reshape(1, 1, 1, 1, 16, 1)
    w = np.arange(14).reshape(1, 1, 1, 1, 1, 14)
    di = s - t
    dj = u - (2 * w + p)
    valid = (di >= 0) & (di <= 4) & (dj >= 0) & (dj <= 4)
    vals = kk[o, np.clip(di, 0, 4), np.clip(dj, 0, 4)] * valid      # [8,32,4,2,16,14]
    m = np.zeros((8, 32, 4, 2, 256), np.float32)
    m[..., :224] = vals.reshape(8, 32, 4, 2, 224)
    return m.reshape(256, 2048)


def _conv2_banded(k2):
    """m2[s*256 + ci*14 + v, t*512 + p*256 + o*7 + w''] = k2[o,ci,s-t,v-(2w''+p)+2].

    s = padded conv2-input row (2h''+s), t = conv2 output row (2h''+t); the
    width SAME-padding is handled by the validity mask (Toeplitz edges).
    """
    kk = np.asarray(k2, np.float32)                                  # [32,16,5,5]
    s = np.arange(6).reshape(6, 1, 1, 1, 1, 1, 1)
    ci = np.arange(16).reshape(1, 16, 1, 1, 1, 1, 1)
    v = np.arange(14).reshape(1, 1, 14, 1, 1, 1, 1)
    t = np.arange(2).reshape(1, 1, 1, 2, 1, 1, 1)
    p = np.arange(2).reshape(1, 1, 1, 1, 2, 1, 1)
    o = np.arange(32).reshape(1, 1, 1, 1, 1, 32, 1)
    w = np.arange(7).reshape(1, 1, 1, 1, 1, 1, 7)
    di = s - t
    dj = v - (2 * w + p) + 2
    valid = (di >= 0) & (di <= 4) & (dj >= 0) & (dj <= 4)
    vals = kk[o, ci, np.clip(di, 0, 4), np.clip(dj, 0, 4)] * valid   # [6,16,14,2,2,32,7]
    m = np.zeros((6, 256, 2, 2, 256), np.float32)
    m[:, :224, :, :, :224] = vals.reshape(6, 224, 2, 2, 224)
    return m.reshape(1536, 1024)


def _lane_bn(vec, width, nblk):
    """Per-channel BN value laid out as (chan*width) + 32 zero-pad lanes, tiled."""
    vec = np.asarray(vec, np.float32)
    pat = np.concatenate([np.repeat(vec, width), np.zeros(32, np.float32)])
    return np.tile(pat, nblk)[None, :]


def init_raw_params(key):
    ks = jax.random.split(key, 16)
    nrm = lambda k, shp, s=0.05: s * jax.random.normal(k, shp, dtype=jnp.float32)
    return {
        # conv1: Conv2d(1, 16, 5, padding=2) + BatchNorm2d(16)
        "w1": nrm(ks[0], (16, 1, 5, 5)), "b1": nrm(ks[1], (16,)),
        "g1": 1.0 + nrm(ks[2], (16,)), "be1": nrm(ks[3], (16,)),
        "mu1": nrm(ks[4], (16,)), "var1": jnp.abs(nrm(ks[5], (16,))) + 0.5,
        # conv2: Conv2d(16, 32, 5, padding=2) + BatchNorm2d(32)
        "w2": nrm(ks[6], (32, 16, 5, 5)), "b2": nrm(ks[7], (32,)),
        "g2": 1.0 + nrm(ks[8], (32,)), "be2": nrm(ks[9], (32,)),
        "mu2": nrm(ks[10], (32,)), "var2": jnp.abs(nrm(ks[11], (32,))) + 0.5,
        # fc1: Linear(32*7*7, 128), fc2: Linear(128, 10)
        "fw1": nrm(ks[12], (128, 32 * 7 * 7)), "fb1": nrm(ks[13], (128,)),
        "fw2": nrm(ks[14], (10, 128)), "fb2": nrm(ks[15], (10,)),
    }


def prepare_params(raw):
    m1 = _conv1_banded(raw["w1"])
    m2 = _conv2_banded(raw["w2"])

    sc1, sh1 = _bn_fold(raw["g1"], raw["be1"], raw["mu1"], raw["var1"], raw["b1"])
    sc2, sh2 = _bn_fold(raw["g2"], raw["be2"], raw["mu2"], raw["var2"], raw["b2"])
    sc1_l, sh1_l = _lane_bn(sc1, 14, 8), _lane_bn(sh1, 14, 8)        # [1, 2048]
    sc2_l, sh2_l = _lane_bn(sc2, 7, 4), _lane_bn(sh2, 7, 4)          # [1, 1024]

    # fc1: fold the NCHW-flatten permutation + pad-lane zero rows into the weight.
    fw1t = np.asarray(raw["fw1"], np.float32).T                      # [1568, 128]
    w1m = np.zeros((1792, 128), np.float32)
    hh, oo, ww = np.indices((7, 32, 7))
    src = (oo * 49 + hh * 7 + ww).reshape(-1)                        # NCHW flatten idx
    dst = (hh * 256 + oo * 7 + ww).reshape(-1)                       # kernel layout idx
    w1m[dst] = fw1t[src]

    # fc2: pad 10 -> 128 output lanes for an unmasked (lane-dense) store.
    w2m = np.zeros((128, 128), np.float32)
    w2m[:, :10] = np.asarray(raw["fw2"], np.float32).T
    b2 = np.zeros((1, 128), np.float32)
    b2[0, :10] = np.asarray(raw["fb2"], np.float32)

    return {
        "m1": jnp.asarray(m1, jnp.bfloat16),
        "sc1": jnp.asarray(sc1_l), "sh1": jnp.asarray(sh1_l),
        "m2": jnp.asarray(m2, jnp.bfloat16),
        "sc2": jnp.asarray(sc2_l), "sh2": jnp.asarray(sh2_l),
        "w1m": jnp.asarray(w1m, jnp.bfloat16),
        "b1": jnp.asarray(np.asarray(raw["fb1"], np.float32).reshape(1, 128)),
        "w2m": jnp.asarray(w2m, jnp.bfloat16),
        "b2": jnp.asarray(b2),
    }


# ------------------------------ pure-JAX reference ---------------------------


def reference_forward(x_nchw, raw):
    """XLA reference using the same bf16-rounded weights (f32 math)."""
    f32 = jnp.float32
    bf = lambda a: a.astype(jnp.bfloat16).astype(f32)

    def conv_block(x, w, b, g, be, mu, var):
        y = jax.lax.conv_general_dilated(
            x, bf(w), window_strides=(1, 1), padding="SAME",
            dimension_numbers=("NCHW", "OIHW", "NCHW"))
        scale, shift = _bn_fold(g, be, mu, var, b)
        y = y * scale[None, :, None, None] + shift[None, :, None, None]
        y = jnp.maximum(y, 0.0)
        n, c, h, wd = y.shape
        return y.reshape(n, c, h // 2, 2, wd // 2, 2).max(axis=(3, 5))

    x = bf(x_nchw)
    y = conv_block(x, raw["w1"], raw["b1"], raw["g1"], raw["be1"],
                   raw["mu1"], raw["var1"])
    y = conv_block(y, raw["w2"], raw["b2"], raw["g2"], raw["be2"],
                   raw["mu2"], raw["var2"])
    y = y.reshape(x.shape[0], -1)                       # NCHW flatten
    h1 = jnp.maximum(y @ bf(raw["fw1"]).T + raw["fb1"], 0.0)
    return h1 @ bf(raw["fw2"]).T + raw["fb2"]


# ----------------------------------- main ------------------------------------


if __name__ == "__main__":
    key = jax.random.PRNGKey(0)
    raw = init_raw_params(key)
    params = prepare_params(raw)

    x = jax.random.normal(jax.random.fold_in(key, 1234), (2, 1, 28, 28),
                          dtype=jnp.float32)

    out = jax.block_until_ready(jax.jit(forward)(x, params))
    assert out.shape == (2, 10) and out.dtype == jnp.float32

    ref = jax.block_until_ready(jax.jit(reference_forward)(x, raw))
    np.testing.assert_allclose(np.asarray(out, np.float32),
                               np.asarray(ref, np.float32),
                               rtol=0.2, atol=0.1)
    print("KERNEL_OK")
</pallas_src>

<mosaic_0001>
module attributes {stable_mosaic.version = 11 : i64} {
  func.func @_fused_cnn_kernel(%arg0: i32, %arg1: memref<7x16x256xbf16, #tpu.memory_space<vmem>>, %arg2: memref<256x2048xbf16, #tpu.memory_space<vmem>>, %arg3: memref<1x2048xf32, #tpu.memory_space<vmem>>, %arg4: memref<1x2048xf32, #tpu.memory_space<vmem>>, %arg5: memref<1536x1024xbf16, #tpu.memory_space<vmem>>, %arg6: memref<1x1024xf32, #tpu.memory_space<vmem>>, %arg7: memref<1x1024xf32, #tpu.memory_space<vmem>>, %arg8: memref<1792x128xbf16, #tpu.memory_space<vmem>>, %arg9: memref<1x128xf32, #tpu.memory_space<vmem>>, %arg10: memref<128x128xbf16, #tpu.memory_space<vmem>>, %arg11: memref<1x128xf32, #tpu.memory_space<vmem>>, %arg12: memref<16x128xf32, #tpu.memory_space<vmem>>) attributes {dimension_semantics = [#tpu.dimension_semantics<parallel>], iteration_bounds = array<i64: 1>, scalar_prefetch = 0 : i64, scratch_operands = 0 : i64, tpu.core_type = #tpu.core_type<tc>, window_params = [{transform_indices = @transform_0, window_bounds = array<i64: 7, 16, 256>}, {pipeline_mode = #tpu.pipeline_mode<synchronous>, transform_indices = @transform_1, window_bounds = array<i64: 256, 2048>}, {pipeline_mode = #tpu.pipeline_mode<synchronous>, transform_indices = @transform_2, window_bounds = array<i64: 1, 2048>}, {pipeline_mode = #tpu.pipeline_mode<synchronous>, transform_indices = @transform_3, window_bounds = array<i64: 1, 2048>}, {pipeline_mode = #tpu.pipeline_mode<synchronous>, transform_indices = @transform_4, window_bounds = array<i64: 1536, 1024>}, {pipeline_mode = #tpu.pipeline_mode<synchronous>, transform_indices = @transform_5, window_bounds = array<i64: 1, 1024>}, {pipeline_mode = #tpu.pipeline_mode<synchronous>, transform_indices = @transform_6, window_bounds = array<i64: 1, 1024>}, {pipeline_mode = #tpu.pipeline_mode<synchronous>, transform_indices = @transform_7, window_bounds = array<i64: 1792, 128>}, {pipeline_mode = #tpu.pipeline_mode<synchronous>, transform_indices = @transform_8, window_bounds = array<i64: 1, 128>}, {pipeline_mode = #tpu.pipeline_mode<synchronous>, transform_indices = @transform_9, window_bounds = array<i64: 128, 128>}, {pipeline_mode = #tpu.pipeline_mode<synchronous>, transform_indices = @transform_10, window_bounds = array<i64: 1, 128>}, {transform_indices = @transform_11, window_bounds = array<i64: 16, 128>}]} {
    %c0 = arith.constant 0 : index
    %c0_0 = arith.constant 0 : index
    %c0_1 = arith.constant 0 : index
    %0 = vector.load %arg1[%c0, %c0_0, %c0_1] : memref<7x16x256xbf16, #tpu.memory_space<vmem>>, vector<1x16x256xbf16>
    %1 = vector.shape_cast %0 : vector<1x16x256xbf16> to vector<16x256xbf16>
    %c1 = arith.constant 1 : index
    %c0_2 = arith.constant 0 : index
    %c0_3 = arith.constant 0 : index
    %2 = vector.load %arg1[%c1, %c0_2, %c0_3] : memref<7x16x256xbf16, #tpu.memory_space<vmem>>, vector<1x16x256xbf16>
    %3 = vector.shape_cast %2 : vector<1x16x256xbf16> to vector<16x256xbf16>
    %c2 = arith.constant 2 : index
    %c0_4 = arith.constant 0 : index
    %c0_5 = arith.constant 0 : index
    %4 = vector.load %arg1[%c2, %c0_4, %c0_5] : memref<7x16x256xbf16, #tpu.memory_space<vmem>>, vector<1x16x256xbf16>
    %5 = vector.shape_cast %4 : vector<1x16x256xbf16> to vector<16x256xbf16>
    %c3 = arith.constant 3 : index
    %c0_6 = arith.constant 0 : index
    %c0_7 = arith.constant 0 : index
    %6 = vector.load %arg1[%c3, %c0_6, %c0_7] : memref<7x16x256xbf16, #tpu.memory_space<vmem>>, vector<1x16x256xbf16>
    %7 = vector.shape_cast %6 : vector<1x16x256xbf16> to vector<16x256xbf16>
    %c4 = arith.constant 4 : index
    %c0_8 = arith.constant 0 : index
    %c0_9 = arith.constant 0 : index
    %8 = vector.load %arg1[%c4, %c0_8, %c0_9] : memref<7x16x256xbf16, #tpu.memory_space<vmem>>, vector<1x16x256xbf16>
    %9 = vector.shape_cast %8 : vector<1x16x256xbf16> to vector<16x256xbf16>
    %c5 = arith.constant 5 : index
    %c0_10 = arith.constant 0 : index
    %c0_11 = arith.constant 0 : index
    %10 = vector.load %arg1[%c5, %c0_10, %c0_11] : memref<7x16x256xbf16, #tpu.memory_space<vmem>>, vector<1x16x256xbf16>
    %11 = vector.shape_cast %10 : vector<1x16x256xbf16> to vector<16x256xbf16>
    %c6 = arith.constant 6 : index
    %c0_12 = arith.constant 0 : index
    %c0_13 = arith.constant 0 : index
    %12 = vector.load %arg1[%c6, %c0_12, %c0_13] : memref<7x16x256xbf16, #tpu.memory_space<vmem>>, vector<1x16x256xbf16>
    %13 = vector.shape_cast %12 : vector<1x16x256xbf16> to vector<16x256xbf16>
    %14 = tpu.concatenate %1, %3, %5, %7, %9, %11, %13 in 0 : vector<16x256xbf16>, vector<16x256xbf16>, vector<16x256xbf16>, vector<16x256xbf16>, vector<16x256xbf16>, vector<16x256xbf16>, vector<16x256xbf16> -> vector<112x256xbf16>
    %c0_14 = arith.constant 0 : index
    %c0_15 = arith.constant 0 : index
    %15 = vector.load %arg2[%c0_14, %c0_15] : memref<256x2048xbf16, #tpu.memory_space<vmem>>, vector<256x2048xbf16>
    %cst = arith.constant dense<0.000000e+00> : vector<112x2048xf32>
    %16 = tpu.matmul %14, %15, %cst {dimension_numbers = #tpu.dot_dimension_numbers<[1], [0], [0], [1], [0, 0, 1, 1], [], []>} : vector<112x256xbf16>, vector<256x2048xbf16>, vector<112x2048xf32> -> vector<112x2048xf32>
    %c0_16 = arith.constant 0 : index
    %c0_17 = arith.constant 0 : index
    %17 = vector.load %arg3[%c0_16, %c0_17] : memref<1x2048xf32, #tpu.memory_space<vmem>>, vector<1x2048xf32>
    %18 = vector.broadcast %17 : vector<1x2048xf32> to vector<112x2048xf32>
    %19 = arith.mulf %16, %18 : vector<112x2048xf32>
    %c0_18 = arith.constant 0 : index
    %c0_19 = arith.constant 0 : index
    %20 = vector.load %arg4[%c0_18, %c0_19] : memref<1x2048xf32, #tpu.memory_space<vmem>>, vector<1x2048xf32>
    %21 = vector.broadcast %20 : vector<1x2048xf32> to vector<112x2048xf32>
    %22 = arith.addf %19, %21 : vector<112x2048xf32>
    %cst_20 = arith.constant 0.000000e+00 : f32
    %23 = vector.broadcast %cst_20 : f32 to vector<112x2048xf32>
    %24 = arith.maximumf %22, %23 : vector<112x2048xf32>
    %25 = vector.extract_strided_slice %24 {offsets = [0, 0], sizes = [112, 256], strides = [1, 1]} : vector<112x2048xf32> to vector<112x256xf32>
    %26 = vector.extract_strided_slice %24 {offsets = [0, 256], sizes = [112, 256], strides = [1, 1]} : vector<112x2048xf32> to vector<112x256xf32>
    %27 = arith.maximumf %25, %26 : vector<112x256xf32>
    %28 = vector.extract_strided_slice %24 {offsets = [0, 512], sizes = [112, 256], strides = [1, 1]} : vector<112x2048xf32> to vector<112x256xf32>
    %29 = vector.extract_strided_slice %24 {offsets = [0, 768], sizes = [112, 256], strides = [1, 1]} : vector<112x2048xf32> to vector<112x256xf32>
    %30 = arith.maximumf %28, %29 : vector<112x256xf32>
    %31 = arith.maximumf %27, %30 : vector<112x256xf32>
    %32 = vector.extract_strided_slice %24 {offsets = [0, 1024], sizes = [112, 256], strides = [1, 1]} : vector<112x2048xf32> to vector<112x256xf32>
    %33 = vector.extract_strided_slice %24 {offsets = [0, 1280], sizes = [112, 256], strides = [1, 1]} : vector<112x2048xf32> to vector<112x256xf32>
    %34 = arith.maximumf %32, %33 : vector<112x256xf32>
    %35 = vector.extract_strided_slice %24 {offsets = [0, 1536], sizes = [112, 256], strides = [1, 1]} : vector<112x2048xf32> to vector<112x256xf32>
    %36 = vector.extract_strided_slice %24 {offsets = [0, 1792], sizes = [112, 256], strides = [1, 1]} : vector<112x2048xf32> to vector<112x256xf32>
    %37 = arith.maximumf %35, %36 : vector<112x256xf32>
    %38 = arith.maximumf %34, %37 : vector<112x256xf32>
    %39 = arith.truncf %31 : vector<112x256xf32> to vector<112x256xbf16>
    %40 = arith.truncf %38 : vector<112x256xf32> to vector<112x256xbf16>
    %cst_21 = arith.constant 0.000000e+00 : bf16
    %41 = vector.broadcast %cst_21 : bf16 to vector<16x256xbf16>
    %42 = tpu.concatenate %41, %39, %41 in 0 : vector<16x256xbf16>, vector<112x256xbf16>, vector<16x256xbf16> -> vector<144x256xbf16>
    %43 = tpu.concatenate %41, %40, %41 in 0 : vector<16x256xbf16>, vector<112x256xbf16>, vector<16x256xbf16> -> vector<144x256xbf16>
    %44 = vector.extract_strided_slice %42 {offsets = [0, 0], sizes = [112, 256], strides = [1, 1]} : vector<144x256xbf16> to vector<112x256xbf16>
    %45 = vector.extract_strided_slice %43 {offsets = [0, 0], sizes = [112, 256], strides = [1, 1]} : vector<144x256xbf16> to vector<112x256xbf16>
    %46 = vector.extract_strided_slice %42 {offsets = [16, 0], sizes = [112, 256], strides = [1, 1]} : vector<144x256xbf16> to vector<112x256xbf16>
    %47 = vector.extract_strided_slice %43 {offsets = [16, 0], sizes = [112, 256], strides = [1, 1]} : vector<144x256xbf16> to vector<112x256xbf16>
    %48 = vector.extract_strided_slice %42 {offsets = [32, 0], sizes = [112, 256], strides = [1, 1]} : vector<144x256xbf16> to vector<112x256xbf16>
    %49 = vector.extract_strided_slice %43 {offsets = [32, 0], sizes = [112, 256], strides = [1, 1]} : vector<144x256xbf16> to vector<112x256xbf16>
    %50 = tpu.concatenate %44, %45, %46, %47, %48, %49 in 1 : vector<112x256xbf16>, vector<112x256xbf16>, vector<112x256xbf16>, vector<112x256xbf16>, vector<112x256xbf16>, vector<112x256xbf16> -> vector<112x1536xbf16>
    %c0_22 = arith.constant 0 : index
    %c0_23 = arith.constant 0 : index
    %51 = vector.load %arg5[%c0_22, %c0_23] : memref<1536x1024xbf16, #tpu.memory_space<vmem>>, vector<1536x1024xbf16>
    %cst_24 = arith.constant dense<0.000000e+00> : vector<112x1024xf32>
    %52 = tpu.matmul %50, %51, %cst_24 {dimension_numbers = #tpu.dot_dimension_numbers<[1], [0], [0], [1], [0, 0, 1, 1], [], []>} : vector<112x1536xbf16>, vector<1536x1024xbf16>, vector<112x1024xf32> -> vector<112x1024xf32>
    %c0_25 = arith.constant 0 : index
    %c0_26 = arith.constant 0 : index
    %53 = vector.load %arg6[%c0_25, %c0_26] : memref<1x1024xf32, #tpu.memory_space<vmem>>, vector<1x1024xf32>
    %54 = vector.broadcast %53 : vector<1x1024xf32> to vector<112x1024xf32>
    %55 = arith.mulf %52, %54 : vector<112x1024xf32>
    %c0_27 = arith.constant 0 : index
    %c0_28 = arith.constant 0 : index
    %56 = vector.load %arg7[%c0_27, %c0_28] : memref<1x1024xf32, #tpu.memory_space<vmem>>, vector<1x1024xf32>
    %57 = vector.broadcast %56 : vector<1x1024xf32> to vector<112x1024xf32>
    %58 = arith.addf %55, %57 : vector<112x1024xf32>
    %cst_29 = arith.constant 0.000000e+00 : f32
    %59 = vector.broadcast %cst_29 : f32 to vector<112x1024xf32>
    %60 = arith.maximumf %58, %59 : vector<112x1024xf32>
    %61 = vector.extract_strided_slice %60 {offsets = [0, 0], sizes = [112, 256], strides = [1, 1]} : vector<112x1024xf32> to vector<112x256xf32>
    %62 = vector.extract_strided_slice %60 {offsets = [0, 256], sizes = [112, 256], strides = [1, 1]} : vector<112x1024xf32> to vector<112x256xf32>
    %63 = arith.maximumf %61, %62 : vector<112x256xf32>
    %64 = vector.extract_strided_slice %60 {offsets = [0, 512], sizes = [112, 256], strides = [1, 1]} : vector<112x1024xf32> to vector<112x256xf32>
    %65 = vector.extract_strided_slice %60 {offsets = [0, 768], sizes = [112, 256], strides = [1, 1]} : vector<112x1024xf32> to vector<112x256xf32>
    %66 = arith.maximumf %64, %65 : vector<112x256xf32>
    %67 = arith.maximumf %63, %66 : vector<112x256xf32>
    %68 = arith.truncf %67 : vector<112x256xf32> to vector<112x256xbf16>
    %69 = vector.extract_strided_slice %68 {offsets = [0, 0], sizes = [16, 256], strides = [1, 1]} : vector<112x256xbf16> to vector<16x256xbf16>
    %70 = vector.extract_strided_slice %68 {offsets = [16, 0], sizes = [16, 256], strides = [1, 1]} : vector<112x256xbf16> to vector<16x256xbf16>
    %71 = vector.extract_strided_slice %68 {offsets = [32, 0], sizes = [16, 256], strides = [1, 1]} : vector<112x256xbf16> to vector<16x256xbf16>
    %72 = vector.extract_strided_slice %68 {offsets = [48, 0], sizes = [16, 256], strides = [1, 1]} : vector<112x256xbf16> to vector<16x256xbf16>
    %73 = vector.extract_strided_slice %68 {offsets = [64, 0], sizes = [16, 256], strides = [1, 1]} : vector<112x256xbf16> to vector<16x256xbf16>
    %74 = vector.extract_strided_slice %68 {offsets = [80, 0], sizes = [16, 256], strides = [1, 1]} : vector<112x256xbf16> to vector<16x256xbf16>
    %75 = vector.extract_strided_slice %68 {offsets = [96, 0], sizes = [16, 256], strides = [1, 1]} : vector<112x256xbf16> to vector<16x256xbf16>
    %76 = tpu.concatenate %69, %70, %71, %72, %73, %74, %75 in 1 : vector<16x256xbf16>, vector<16x256xbf16>, vector<16x256xbf16>, vector<16x256xbf16>, vector<16x256xbf16>, vector<16x256xbf16>, vector<16x256xbf16> -> vector<16x1792xbf16>
    %c0_30 = arith.constant 0 : index
    %c0_31 = arith.constant 0 : index
    %77 = vector.load %arg8[%c0_30, %c0_31] : memref<1792x128xbf16, #tpu.memory_space<vmem>>, vector<1792x128xbf16>
    %cst_32 = arith.constant dense<0.000000e+00> : vector<16x128xf32>
    %78 = tpu.matmul %76, %77, %cst_32 {dimension_numbers = #tpu.dot_dimension_numbers<[1], [0], [0], [1], [0, 0, 1, 1], [], []>} : vector<16x1792xbf16>, vector<1792x128xbf16>, vector<16x128xf32> -> vector<16x128xf32>
    %c0_33 = arith.constant 0 : index
    %c0_34 = arith.constant 0 : index
    %79 = vector.load %arg9[%c0_33, %c0_34] : memref<1x128xf32, #tpu.memory_space<vmem>>, vector<1x128xf32>
    %80 = vector.broadcast %79 : vector<1x128xf32> to vector<16x128xf32>
    %81 = arith.addf %78, %80 : vector<16x128xf32>
    %cst_35 = arith.constant 0.000000e+00 : f32
    %82 = vector.broadcast %cst_35 : f32 to vector<16x128xf32>
    %83 = arith.maximumf %81, %82 : vector<16x128xf32>
    %84 = arith.truncf %83 : vector<16x128xf32> to vector<16x128xbf16>
    %c0_36 = arith.constant 0 : index
    %c0_37 = arith.constant 0 : index
    %85 = vector.load %arg10[%c0_36, %c0_37] : memref<128x128xbf16, #tpu.memory_space<vmem>>, vector<128x128xbf16>
    %cst_38 = arith.constant dense<0.000000e+00> : vector<16x128xf32>
    %86 = tpu.matmul %84, %85, %cst_38 {dimension_numbers = #tpu.dot_dimension_numbers<[1], [0], [0], [1], [0, 0, 1, 1], [], []>} : vector<16x128xbf16>, vector<128x128xbf16>, vector<16x128xf32> -> vector<16x128xf32>
    %c0_39 = arith.constant 0 : index
    %c0_40 = arith.constant 0 : index
    %87 = vector.load %arg11[%c0_39, %c0_40] : memref<1x128xf32, #tpu.memory_space<vmem>>, vector<1x128xf32>
    %88 = vector.broadcast %87 : vector<1x128xf32> to vector<16x128xf32>
    %89 = arith.addf %86, %88 : vector<16x128xf32>
    %c0_41 = arith.constant 0 : index
    %c0_42 = arith.constant 0 : index
    %90 = vector.load %arg12[%c0_41, %c0_42] : memref<16x128xf32, #tpu.memory_space<vmem>>, vector<16x128xf32>
    tpu.vector_store %arg12[%c0_41, %c0_42], %89 {strides = array<i32>} : memref<16x128xf32, #tpu.memory_space<vmem>>, vector<16x128xf32>,
    return
  }
  func.func @transform_0(%arg0: i32) -> (i32, i32, i32) {
    %c0_i32 = arith.constant 0 : i32
    %c0_i32_0 = arith.constant 0 : i32
    %c0_i32_1 = arith.constant 0 : i32
    return %c0_i32, %arg0, %c0_i32_0 : i32, i32, i32
  }
  func.func @transform_1(%arg0: i32) -> (i32, i32) {
    %c0_i32 = arith.constant 0 : i32
    %c0_i32_0 = arith.constant 0 : i32
    %c0_i32_1 = arith.constant 0 : i32
    return %c0_i32, %c0_i32_0 : i32, i32
  }
  func.func @transform_2(%arg0: i32) -> (i32, i32) {
    %c0_i32 = arith.constant 0 : i32
    %c0_i32_0 = arith.constant 0 : i32
    %c0_i32_1 = arith.constant 0 : i32
    return %c0_i32, %c0_i32_0 : i32, i32
  }
  func.func @transform_3(%arg0: i32) -> (i32, i32) {
    %c0_i32 = arith.constant 0 : i32
    %c0_i32_0 = arith.constant 0 : i32
    %c0_i32_1 = arith.constant 0 : i32
    return %c0_i32, %c0_i32_0 : i32, i32
  }
  func.func @transform_4(%arg0: i32) -> (i32, i32) {
    %c0_i32 = arith.constant 0 : i32
    %c0_i32_0 = arith.constant 0 : i32
    %c0_i32_1 = arith.constant 0 : i32
    return %c0_i32, %c0_i32_0 : i32, i32
  }
  func.func @transform_5(%arg0: i32) -> (i32, i32) {
    %c0_i32 = arith.constant 0 : i32
    %c0_i32_0 = arith.constant 0 : i32
    %c0_i32_1 = arith.constant 0 : i32
    return %c0_i32, %c0_i32_0 : i32, i32
  }
  func.func @transform_6(%arg0: i32) -> (i32, i32) {
    %c0_i32 = arith.constant 0 : i32
    %c0_i32_0 = arith.constant 0 : i32
    %c0_i32_1 = arith.constant 0 : i32
    return %c0_i32, %c0_i32_0 : i32, i32
  }
  func.func @transform_7(%arg0: i32) -> (i32, i32) {
    %c0_i32 = arith.constant 0 : i32
    %c0_i32_0 = arith.constant 0 : i32
    %c0_i32_1 = arith.constant 0 : i32
    return %c0_i32, %c0_i32_0 : i32, i32
  }
  func.func @transform_8(%arg0: i32) -> (i32, i32) {
    %c0_i32 = arith.constant 0 : i32
    %c0_i32_0 = arith.constant 0 : i32
    %c0_i32_1 = arith.constant 0 : i32
    return %c0_i32, %c0_i32_0 : i32, i32
  }
  func.func @transform_9(%arg0: i32) -> (i32, i32) {
    %c0_i32 = arith.constant 0 : i32
    %c0_i32_0 = arith.constant 0 : i32
    %c0_i32_1 = arith.constant 0 : i32
    return %c0_i32, %c0_i32_0 : i32, i32
  }
  func.func @transform_10(%arg0: i32) -> (i32, i32) {
    %c0_i32 = arith.constant 0 : i32
    %c0_i32_0 = arith.constant 0 : i32
    %c0_i32_1 = arith.constant 0 : i32
    return %c0_i32, %c0_i32_0 : i32, i32
  }
  func.func @transform_11(%arg0: i32) -> (i32, i32) {
    %c0_i32 = arith.constant 0 : i32
    %c0_i32_0 = arith.constant 0 : i32
    return %arg0, %c0_i32 : i32, i32
  }
}

</mosaic_0001>

<llo_original>
// kernel: forward.1
$region0: #{forward.1}
  #allocation0 [shape = 'u32[]', space=smem, size = 0x4, offset = 0x4, fixed_abs, tag = 'smem constant byte address 0x4 - core index']
  #allocation1 [shape = 'u32[144,128]{1,0:T(1,128)}', space=vmem, size = 0x12000, scoped, tag = 'internal scratch']
  %s0 = inlined_call_operand.vmem [shape: bf16[7,16,256], index: 0, kind: input, shape index: {}]
  %s1 = inlined_call_operand.hbm [shape: bf16[256,2048], index: 1, kind: input, shape index: {}]
  %s2 = inlined_call_operand.hbm [shape: f32[1,2048], index: 2, kind: input, shape index: {}]
  %s3 = inlined_call_operand.hbm [shape: f32[1,2048], index: 3, kind: input, shape index: {}]
  %s4 = inlined_call_operand.hbm [shape: bf16[1536,1024], index: 4, kind: input, shape index: {}]
  %s5 = inlined_call_operand.hbm [shape: f32[1,1024], index: 5, kind: input, shape index: {}]
  %s6 = inlined_call_operand.hbm [shape: f32[1,1024], index: 6, kind: input, shape index: {}]
  %s7 = inlined_call_operand.hbm [shape: bf16[1792,128], index: 7, kind: input, shape index: {}]
  %s8 = inlined_call_operand.hbm [shape: f32[1,128], index: 8, kind: input, shape index: {}]
  %s9 = inlined_call_operand.hbm [shape: bf16[128,128], index: 9, kind: input, shape index: {}]
  %s10 = inlined_call_operand.hbm [shape: f32[1,128], index: 10, kind: input, shape index: {}]
  %s11 = inlined_call_operand.vmem [shape: f32[16,128], index: 11, kind: output, shape index: {}]
  %s12 = sld [smem:[#allocation0]]
  $region94: #{forward.1} parent=0
    _
  %s14 = ssub.s32 1, %s12
  %s15 = scalar_select 0, %s14, %s12
  $region1: #{forward.1} parent=0
    #allocation2 [shape = 'u8[1048576]{0}', space=vmem, size = 0x100000, scoped, tag = 'input window, operand 1, single buffered']
    #allocation3 [shape = 's32[1]{0}', space=sflag, size = 0x4, scoped, tag = 'scoped memory for forward.1']
    #allocation4 [shape = 'u8[8192]{0}', space=vmem, size = 0x2000, scoped, tag = 'input window, operand 2, single buffered']
    #allocation5 [shape = 's32[1]{0}', space=sflag, size = 0x4, scoped, tag = 'scoped memory for forward.1']
    #allocation6 [shape = 'u8[8192]{0}', space=vmem, size = 0x2000, scoped, tag = 'input window, operand 3, single buffered']
    #allocation7 [shape = 'u8[3145728]{0}', space=vmem, size = 0x300000, scoped, tag = 'input window, operand 4, single buffered']
    #allocation8 [shape = 's32[1]{0}', space=sflag, size = 0x4, scoped, tag = 'scoped memory for forward.1']
    #allocation9 [shape = 'u8[4096]{0}', space=vmem, size = 0x1000, scoped, tag = 'input window, operand 5, single buffered']
    #allocation10 [shape = 'u8[4096]{0}', space=vmem, size = 0x1000, scoped, tag = 'input window, operand 6, single buffered']
    #allocation11 [shape = 's32[1]{0}', space=sflag, size = 0x4, scoped, tag = 'scoped memory for forward.1']
    #allocation12 [shape = 'u8[458752]{0}', space=vmem, size = 0x70000, scoped, tag = 'input window, operand 7, single buffered']
    #allocation13 [shape = 'u8[512]{0}', space=vmem, size = 0x400, scoped, tag = 'input window, operand 8, single buffered']
    #allocation14 [shape = 's32[1]{0}', space=sflag, size = 0x4, scoped, tag = 'scoped memory for forward.1']
    #allocation15 [shape = 'u8[32768]{0}', space=vmem, size = 0x8000, scoped, tag = 'input window, operand 9, single buffered']
    #allocation16 [shape = 'u8[512]{0}', space=vmem, size = 0x400, scoped, tag = 'input window, operand 10, single buffered']
    #allocation17 [shape = 's32[1]{0}', space=sflag, size = 0x4, scoped, tag = 'scoped memory for forward.1']
    %16 = vsyncpa [#allocation3], 0
    %17 = vsyncpa [#allocation5], 0
    %18 = vsyncpa [#allocation8], 0
    %19 = vsyncpa [#allocation11], 0
    %20 = vsyncpa [#allocation14], 0
    %21 = vsyncpa [#allocation17], 0
    // Predicated region
    $region2: #{forward.1} parent=1 // pred_check
      _
    $region3: #{forward.1} parent=1 // pred_check_branch
      %23 = sbr.rel (0) target = $region5
    $region4: #{forward.1} parent=1 // pred_region
      _
    $region5: #{forward.1} parent=1 // pred_fallthru
      _
    // Predicated region
    $region6: #{forward.1} parent=1 // pred_check
      _
    $region7: #{forward.1} parent=1 // pred_check_branch
      %25 = sbr.rel (0) target = $region9
    $region8: #{forward.1} parent=1 // pred_region
      %s27 = ssub.s32 32768, 32768
      %28 = vsyncadd [#allocation3], %s27
      %s29 = sshll.u32 [#allocation2], 4
      %s30 = int_to_ptr.vmem [resolvable:$true] %s29
      %35 = dma.hbm_to_vmem [thread:$0]  %s1, 32768, %s30, [#allocation3], 1024, 1024, 64
    $region9: #{forward.1} parent=1 // pred_fallthru
      _
    // Predicated region
    $region10: #{forward.1} parent=1 // pred_check
      _
    $region11: #{forward.1} parent=1 // pred_check_branch
      %37 = sbr.rel (0) target = $region13
    $region12: #{forward.1} parent=1 // pred_region
      %s39 = ssub.s32 256, 256
      %40 = vsyncadd [#allocation5], %s39
      %s42 = sshll.u32 [#allocation4], 4
      %s43 = int_to_ptr.vmem [resolvable:$true] %s42
      %45 = dma.hbm_to_vmem [thread:$0]  %s2, 256, %s43, [#allocation5]
    $region13: #{forward.1} parent=1 // pred_fallthru
      _
    // Predicated region
    $region14: #{forward.1} parent=1 // pred_check
      _
    $region15: #{forward.1} parent=1 // pred_check_branch
      %47 = sbr.rel (0) target = $region17
    $region16: #{forward.1} parent=1 // pred_region
      %s49 = ssub.s32 256, 256
      %50 = vsyncadd [#allocation5], %s49
      %s52 = sshll.u32 [#allocation6], 4
      %s53 = int_to_ptr.vmem [resolvable:$true] %s52
      %55 = dma.hbm_to_vmem [thread:$0]  %s3, 256, %s53, [#allocation5]
    $region17: #{forward.1} parent=1 // pred_fallthru
      _
    // Predicated region
    $region18: #{forward.1} parent=1 // pred_check
      _
    $region19: #{forward.1} parent=1 // pred_check_branch
      %57 = sbr.rel (0) target = $region21
    $region20: #{forward.1} parent=1 // pred_region
      %s59 = ssub.s32 98304, 98304
      %60 = vsyncadd [#allocation8], %s59
      %s61 = sshll.u32 [#allocation7], 4
      %s62 = int_to_ptr.vmem [resolvable:$true] %s61
      %67 = dma.hbm_to_vmem [thread:$0]  %s4, 98304, %s62, [#allocation8], 512, 512, 32
    $region21: #{forward.1} parent=1 // pred_fallthru
      _
    // Predicated region
    $region22: #{forward.1} parent=1 // pred_check
      _
    $region23: #{forward.1} parent=1 // pred_check_branch
      %69 = sbr.rel (0) target = $region25
    $region24: #{forward.1} parent=1 // pred_region
      %s71 = ssub.s32 128, 128
      %72 = vsyncadd [#allocation8], %s71
      %s74 = sshll.u32 [#allocation9], 4
      %s75 = int_to_ptr.vmem [resolvable:$true] %s74
      %77 = dma.hbm_to_vmem [thread:$0]  %s5, 128, %s75, [#allocation8]
    $region25: #{forward.1} parent=1 // pred_fallthru
      _
    // Predicated region
    $region26: #{forward.1} parent=1 // pred_check
      _
    $region27: #{forward.1} parent=1 // pred_check_branch
      %79 = sbr.rel (0) target = $region29
    $region28: #{forward.1} parent=1 // pred_region
      %s81 = ssub.s32 128, 128
      %82 = vsyncadd [#allocation11], %s81
      %s84 = sshll.u32 [#allocation10], 4
      %s85 = int_to_ptr.vmem [resolvable:$true] %s84
      %87 = dma.hbm_to_vmem [thread:$0]  %s6, 128, %s85, [#allocation11]
    $region29: #{forward.1} parent=1 // pred_fallthru
      _
    // Predicated region
    $region30: #{forward.1} parent=1 // pred_check
      _
    $region31: #{forward.1} parent=1 // pred_check_branch
      %89 = sbr.rel (0) target = $region33
    $region32: #{forward.1} parent=1 // pred_region
      %s91 = ssub.s32 14336, 14336
      %92 = vsyncadd [#allocation11], %s91
      %s93 = sshll.u32 [#allocation12], 4
      %s94 = int_to_ptr.vmem [resolvable:$true] %s93
      %99 = dma.hbm_to_vmem [thread:$0]  %s7, 14336, %s94, [#allocation11], 64, 64, 4
    $region33: #{forward.1} parent=1 // pred_fallthru
      _
    // Predicated region
    $region34: #{forward.1} parent=1 // pred_check
      _
    $region35: #{forward.1} parent=1 // pred_check_branch
      %101 = sbr.rel (0) target = $region37
    $region36: #{forward.1} parent=1 // pred_region
      %s103 = ssub.s32 16, 16
      %104 = vsyncadd [#allocation14], %s103
      %s106 = sshll.u32 [#allocation13], 4
      %s107 = int_to_ptr.vmem [resolvable:$true] %s106
      %109 = dma.hbm_to_vmem [thread:$0]  %s8, 16, %s107, [#allocation14]
    $region37: #{forward.1} parent=1 // pred_fallthru
      _
    // Predicated region
    $region38: #{forward.1} parent=1 // pred_check
      _
    $region39: #{forward.1} parent=1 // pred_check_branch
      %111 = sbr.rel (0) target = $region41
    $region40: #{forward.1} parent=1 // pred_region
      %s113 = ssub.s32 1024, 1024
      %114 = vsyncadd [#allocation14], %s113
      %s115 = sshll.u32 [#allocation15], 4
      %s116 = int_to_ptr.vmem [resolvable:$true] %s115
      %121 = dma.hbm_to_vmem [thread:$0]  %s9, 1024, %s116, [#allocation14], 64, 64, 4
    $region41: #{forward.1} parent=1 // pred_fallthru
      _
    // Predicated region
    $region42: #{forward.1} parent=1 // pred_check
      _
    $region43: #{forward.1} parent=1 // pred_check_branch
      %123 = sbr.rel (0) target = $region45
    $region44: #{forward.1} parent=1 // pred_region
      %s125 = ssub.s32 16, 16
      %126 = vsyncadd [#allocation17], %s125
      %s128 = sshll.u32 [#allocation16], 4
      %s129 = int_to_ptr.vmem [resolvable:$true] %s128
      %131 = dma.hbm_to_vmem [thread:$0]  %s10, 16, %s129, [#allocation17]
    $region45: #{forward.1} parent=1 // pred_fallthru
      _
    // Predicated region
    $region46: #{forward.1} parent=1 // pred_check
      _
    $region47: #{forward.1} parent=1 // pred_check_branch
      %133 = sbr.rel (0) target = $region49
    $region48: #{forward.1} parent=1 // pred_region
      %134 = dma.done [#allocation3], 32768
    $region49: #{forward.1} parent=1 // pred_fallthru
      _
    // Predicated region
    $region50: #{forward.1} parent=1 // pred_check
      _
    $region51: #{forward.1} parent=1 // pred_check_branch
      %136 = sbr.rel (0) target = $region53
    $region52: #{forward.1} parent=1 // pred_region
      %137 = dma.done [#allocation5], 256
    $region53: #{forward.1} parent=1 // pred_fallthru
      _
    // Predicated region
    $region54: #{forward.1} parent=1 // pred_check
      _
    $region55: #{forward.1} parent=1 // pred_check_branch
      %139 = sbr.rel (0) target = $region57
    $region56: #{forward.1} parent=1 // pred_region
      %140 = dma.done [#allocation5], 256
    $region57: #{forward.1} parent=1 // pred_fallthru
      _
    // Predicated region
    $region58: #{forward.1} parent=1 // pred_check
      _
    $region59: #{forward.1} parent=1 // pred_check_branch
      %142 = sbr.rel (0) target = $region61
    $region60: #{forward.1} parent=1 // pred_region
      %143 = dma.done [#allocation8], 98304
    $region61: #{forward.1} parent=1 // pred_fallthru
      _
    // Predicated region
    $region62: #{forward.1} parent=1 // pred_check
      _
    $region63: #{forward.1} parent=1 // pred_check_branch
      %145 = sbr.rel (0) target = $region65
    $region64: #{forward.1} parent=1 // pred_region
      %146 = dma.done [#allocation8], 128
    $region65: #{forward.1} parent=1 // pred_fallthru
      _
    // Predicated region
    $region66: #{forward.1} parent=1 // pred_check
      _
    $region67: #{forward.1} parent=1 // pred_check_branch
      %148 = sbr.rel (0) target = $region69
    $region68: #{forward.1} parent=1 // pred_region
      %149 = dma.done [#allocation11], 128
    $region69: #{forward.1} parent=1 // pred_fallthru
      _
    // Predicated region
    $region70: #{forward.1} parent=1 // pred_check
      _
    $region71: #{forward.1} parent=1 // pred_check_branch
      %151 = sbr.rel (0) target = $region73
    $region72: #{forward.1} parent=1 // pred_region
      %152 = dma.done [#allocation11], 14336
    $region73: #{forward.1} parent=1 // pred_fallthru
      _
    // Predicated region
    $region74: #{forward.1} parent=1 // pred_check
      _
    $region75: #{forward.1} parent=1 // pred_check_branch
      %154 = sbr.rel (0) target = $region77
    $region76: #{forward.1} parent=1 // pred_region
      %155 = dma.done [#allocation14], 16
    $region77: #{forward.1} parent=1 // pred_fallthru
      _
    // Predicated region
    $region78: #{forward.1} parent=1 // pred_check
      _
    $region79: #{forward.1} parent=1 // pred_check_branch
      %157 = sbr.rel (0) target = $region81
    $region80: #{forward.1} parent=1 // pred_region
      %158 = dma.done [#allocation14], 1024
    $region81: #{forward.1} parent=1 // pred_fallthru
      _
    // Predicated region
    $region82: #{forward.1} parent=1 // pred_check
      _
    $region83: #{forward.1} parent=1 // pred_check_branch
      %160 = sbr.rel (0) target = $region85
    $region84: #{forward.1} parent=1 // pred_region
      %161 = dma.done [#allocation17], 16
    $region85: #{forward.1} parent=1 // pred_fallthru
      _
    %v163 = vld [vmem:[%s0] sm:$0xff]
    %v164 = vld [vmem:[%s0 + $0x8] sm:$0xff]
    %s165 = scalar_lea.vmem %s0, 16
    %v166 = vld [vmem:[%s165] sm:$0xff]
    %v167 = vld [vmem:[%s165 + $0x8] sm:$0xff]
    %s168 = scalar_lea.vmem %s0, 32
    %v169 = vld [vmem:[%s168] sm:$0xff]
    %v170 = vld [vmem:[%s168 + $0x8] sm:$0xff]
    %s171 = scalar_lea.vmem %s0, 48
    %v172 = vld [vmem:[%s171] sm:$0xff]
    %v173 = vld [vmem:[%s171 + $0x8] sm:$0xff]
    %s174 = scalar_lea.vmem %s0, 64
    %v175 = vld [vmem:[%s174] sm:$0xff]
    %v176 = vld [vmem:[%s174 + $0x8] sm:$0xff]
    %s177 = scalar_lea.vmem %s0, 80
    %v178 = vld [vmem:[%s177] sm:$0xff]
    %v179 = vld [vmem:[%s177 + $0x8] sm:$0xff]
    %s180 = scalar_lea.vmem %s0, 96
    %v181 = vld [vmem:[%s180] sm:$0xff]
    %v182 = vld [vmem:[%s180 + $0x8] sm:$0xff]
    %v185 = vunpack.c.l.b16 %v163
    %v186 = vunpack.c.h.b16 %v163
    %v187 = vunpack.c.l.b16 %v164
    %v188 = vunpack.c.h.b16 %v164
    %v189 = vpack.c.b16 %v187, %v185
    %v190 = vpack.c.b16 %v188, %v186
    %v195 = vunpack.c.l.b16 %v166
    %v196 = vunpack.c.h.b16 %v166
    %v197 = vunpack.c.l.b16 %v167
    %v198 = vunpack.c.h.b16 %v167
    %v199 = vpack.c.b16 %v197, %v195
    %v200 = vpack.c.b16 %v198, %v196
    %v205 = vunpack.c.l.b16 %v169
    %v206 = vunpack.c.h.b16 %v169
    %v207 = vunpack.c.l.b16 %v170
    %v208 = vunpack.c.h.b16 %v170
    %v209 = vpack.c.b16 %v207, %v205
    %v210 = vpack.c.b16 %v208, %v206
    %v215 = vunpack.c.l.b16 %v172
    %v216 = vunpack.c.h.b16 %v172
    %v217 = vunpack.c.l.b16 %v173
    %v218 = vunpack.c.h.b16 %v173
    %v219 = vpack.c.b16 %v217, %v215
    %v220 = vpack.c.b16 %v218, %v216
    %v225 = vunpack.c.l.b16 %v175
    %v226 = vunpack.c.h.b16 %v175
    %v227 = vunpack.c.l.b16 %v176
    %v228 = vunpack.c.h.b16 %v176
    %v229 = vpack.c.b16 %v227, %v225
    %v230 = vpack.c.b16 %v228, %v226
    %v235 = vunpack.c.l.b16 %v178
    %v236 = vunpack.c.h.b16 %v178
    %v237 = vunpack.c.l.b16 %v179
    %v238 = vunpack.c.h.b16 %v179
    %v239 = vpack.c.b16 %v237, %v235
    %v240 = vpack.c.b16 %v238, %v236
    %v245 = vunpack.c.l.b16 %v181
    %v246 = vunpack.c.h.b16 %v181
    %v247 = vunpack.c.l.b16 %v182
    %v248 = vunpack.c.h.b16 %v182
    %v249 = vpack.c.b16 %v247, %v245
    %v250 = vpack.c.b16 %v248, %v246
    %v253 = vld [vmem:[#allocation2] sm:$0xff]
    %v254 = vld [vmem:[#allocation2 + $0x8] sm:$0xff]
    %v255 = vld [vmem:[#allocation2 + $0x10] sm:$0xff]
    %v256 = vld [vmem:[#allocation2 + $0x18] sm:$0xff]
    %v257 = vld [vmem:[#allocation2 + $0x20] sm:$0xff]
    %v258 = vld [vmem:[#allocation2 + $0x28] sm:$0xff]
    %v259 = vld [vmem:[#allocation2 + $0x30] sm:$0xff]
    %v260 = vld [vmem:[#allocation2 + $0x38] sm:$0xff]
    %v261 = vld [vmem:[#allocation2 + $0x40] sm:$0xff]
    %v262 = vld [vmem:[#allocation2 + $0x48] sm:$0xff]
    %v263 = vld [vmem:[#allocation2 + $0x50] sm:$0xff]
    %v264 = vld [vmem:[#allocation2 + $0x58] sm:$0xff]
    %v265 = vld [vmem:[#allocation2 + $0x60] sm:$0xff]
    %v266 = vld [vmem:[#allocation2 + $0x68] sm:$0xff]
    %v267 = vld [vmem:[#allocation2 + $0x70] sm:$0xff]
    %v268 = vld [vmem:[#allocation2 + $0x78] sm:$0xff]
    %v269 = vld [vmem:[#allocation2 + $0x80] sm:$0xff]
    %v270 = vld [vmem:[#allocation2 + $0x88] sm:$0xff]
    %v271 = vld [vmem:[#allocation2 + $0x90] sm:$0xff]
    %v272 = vld [vmem:[#allocation2 + $0x98] sm:$0xff]
    %v273 = vld [vmem:[#allocation2 + $0xa0] sm:$0xff]
    %v274 = vld [vmem:[#allocation2 + $0xa8] sm:$0xff]
    %v275 = vld [vmem:[#allocation2 + $0xb0] sm:$0xff]
    %v276 = vld [vmem:[#allocation2 + $0xb8] sm:$0xff]
    %v277 = vld [vmem:[#allocation2 + $0xc0] sm:$0xff]
    %v278 = vld [vmem:[#allocation2 + $0xc8] sm:$0xff]
    %v279 = vld [vmem:[#allocation2 + $0xd0] sm:$0xff]
    %v280 = vld [vmem:[#allocation2 + $0xd8] sm:$0xff]
    %v281 = vld [vmem:[#allocation2 + $0xe0] sm:$0xff]
    %v282 = vld [vmem:[#allocation2 + $0xe8] sm:$0xff]
    %v283 = vld [vmem:[#allocation2 + $0xf0] sm:$0xff]
    %v284 = vld [vmem:[#allocation2 + $0xf8] sm:$0xff]
    %v285 = vld [vmem:[#allocation2 + $0x100] sm:$0xff]
    %v286 = vld [vmem:[#allocation2 + $0x108] sm:$0xff]
    %v287 = vld [vmem:[#allocation2 + $0x110] sm:$0xff]
    %v288 = vld [vmem:[#allocation2 + $0x118] sm:$0xff]
    %v289 = vld [vmem:[#allocation2 + $0x120] sm:$0xff]
    %v290 = vld [vmem:[#allocation2 + $0x128] sm:$0xff]
    %v291 = vld [vmem:[#allocation2 + $0x130] sm:$0xff]
    %v292 = vld [vmem:[#allocation2 + $0x138] sm:$0xff]
    %v293 = vld [vmem:[#allocation2 + $0x140] sm:$0xff]
    %v294 = vld [vmem:[#allocation2 + $0x148] sm:$0xff]
    %v295 = vld [vmem:[#allocation2 + $0x150] sm:$0xff]
    %v296 = vld [vmem:[#allocation2 + $0x158] sm:$0xff]
    %v297 = vld [vmem:[#allocation2 + $0x160] sm:$0xff]
    %v298 = vld [vmem:[#allocation2 + $0x168] sm:$0xff]
    %v299 = vld [vmem:[#allocation2 + $0x170] sm:$0xff]
    %v300 = vld [vmem:[#allocation2 + $0x178] sm:$0xff]
    %v301 = vld [vmem:[#allocation2 + $0x180] sm:$0xff]
    %v302 = vld [vmem:[#allocation2 + $0x188] sm:$0xff]
    %v303 = vld [vmem:[#allocation2 + $0x190] sm:$0xff]
    %v304 = vld [vmem:[#allocation2 + $0x198] sm:$0xff]
    %v305 = vld [vmem:[#allocation2 + $0x1a0] sm:$0xff]
    %v306 = vld [vmem:[#allocation2 + $0x1a8] sm:$0xff]
    %v307 = vld [vmem:[#allocation2 + $0x1b0] sm:$0xff]
    %v308 = vld [vmem:[#allocation2 + $0x1b8] sm:$0xff]
    %v309 = vld [vmem:[#allocation2 + $0x1c0] sm:$0xff]
    %v310 = vld [vmem:[#allocation2 + $0x1c8] sm:$0xff]
    %v311 = vld [vmem:[#allocation2 + $0x1d0] sm:$0xff]
    %v312 = vld [vmem:[#allocation2 + $0x1d8] sm:$0xff]
    %v313 = vld [vmem:[#allocation2 + $0x1e0] sm:$0xff]
    %v314 = vld [vmem:[#allocation2 + $0x1e8] sm:$0xff]
    %v315 = vld [vmem:[#allocation2 + $0x1f0] sm:$0xff]
    %v316 = vld [vmem:[#allocation2 + $0x1f8] sm:$0xff]
    %v317 = vld [vmem:[#allocation2 + $0x200] sm:$0xff]
    %v318 = vld [vmem:[#allocation2 + $0x208] sm:$0xff]
    %v319 = vld [vmem:[#allocation2 + $0x210] sm:$0xff]
    %v320 = vld [vmem:[#allocation2 + $0x218] sm:$0xff]
    %v321 = vld [vmem:[#allocation2 + $0x220] sm:$0xff]
    %v322 = vld [vmem:[#allocation2 + $0x228] sm:$0xff]
    %v323 = vld [vmem:[#allocation2 + $0x230] sm:$0xff]
    %v324 = vld [vmem:[#allocation2 + $0x238] sm:$0xff]
    %v325 = vld [vmem:[#allocation2 + $0x240] sm:$0xff]
    %v326 = vld [vmem:[#allocation2 + $0x248] sm:$0xff]
    %v327 = vld [vmem:[#allocation2 + $0x250] sm:$0xff]
    %v328 = vld [vmem:[#allocation2 + $0x258] sm:$0xff]
    %v329 = vld [vmem:[#allocation2 + $0x260] sm:$0xff]
    %v330 = vld [vmem:[#allocation2 + $0x268] sm:$0xff]
    %v331 = vld [vmem:[#allocation2 + $0x270] sm:$0xff]
    %v332 = vld [vmem:[#allocation2 + $0x278] sm:$0xff]
    %v333 = vld [vmem:[#allocation2 + $0x280] sm:$0xff]
    %v334 = vld [vmem:[#allocation2 + $0x288] sm:$0xff]
    %v335 = vld [vmem:[#allocation2 + $0x290] sm:$0xff]
    %v336 = vld [vmem:[#allocation2 + $0x298] sm:$0xff]
    %v337 = vld [vmem:[#allocation2 + $0x2a0] sm:$0xff]
    %v338 = vld [vmem:[#allocation2 + $0x2a8] sm:$0xff]
    %v339 = vld [vmem:[#allocation2 + $0x2b0] sm:$0xff]
    %v340 = vld [vmem:[#allocation2 + $0x2b8] sm:$0xff]
    %v341 = vld [vmem:[#allocation2 + $0x2c0] sm:$0xff]
    %v342 = vld [vmem:[#allocation2 + $0x2c8] sm:$0xff]
    %v343 = vld [vmem:[#allocation2 + $0x2d0] sm:$0xff]
    %v344 = vld [vmem:[#allocation2 + $0x2d8] sm:$0xff]
    %v345 = vld [vmem:[#allocation2 + $0x2e0] sm:$0xff]
    %v346 = vld [vmem:[#allocation2 + $0x2e8] sm:$0xff]
    %v347 = vld [vmem:[#allocation2 + $0x2f0] sm:$0xff]
    %v348 = vld [vmem:[#allocation2 + $0x2f8] sm:$0xff]
    %v349 = vld [vmem:[#allocation2 + $0x300] sm:$0xff]
    %v350 = vld [vmem:[#allocation2 + $0x308] sm:$0xff]
    %v351 = vld [vmem:[#allocation2 + $0x310] sm:$0xff]
    %v352 = vld [vmem:[#allocation2 + $0x318] sm:$0xff]
    %v353 = vld [vmem:[#allocation2 + $0x320] sm:$0xff]
    %v354 = vld [vmem:[#allocation2 + $0x328] sm:$0xff]
    %v355 = vld [vmem:[#allocation2 + $0x330] sm:$0xff]
    %v356 = vld [vmem:[#allocation2 + $0x338] sm:$0xff]
    %v357 = vld [vmem:[#allocation2 + $0x340] sm:$0xff]
    %v358 = vld [vmem:[#allocation2 + $0x348] sm:$0xff]
    %v359 = vld [vmem:[#allocation2 + $0x350] sm:$0xff]
    %v360 = vld [vmem:[#allocation2 + $0x358] sm:$0xff]
    %v361 = vld [vmem:[#allocation2 + $0x360] sm:$0xff]
    %v362 = vld [vmem:[#allocation2 + $0x368] sm:$0xff]
    %v363 = vld [vmem:[#allocation2 + $0x370] sm:$0xff]
    %v364 = vld [vmem:[#allocation2 + $0x378] sm:$0xff]
    %v365 = vld [vmem:[#allocation2 + $0x380] sm:$0xff]
    %v366 = vld [vmem:[#allocation2 + $0x388] sm:$0xff]
    %v367 = vld [vmem:[#allocation2 + $0x390] sm:$0xff]
    %v368 = vld [vmem:[#allocation2 + $0x398] sm:$0xff]
    %v369 = vld [vmem:[#allocation2 + $0x3a0] sm:$0xff]
    %v370 = vld [vmem:[#allocation2 + $0x3a8] sm:$0xff]
    %v371 = vld [vmem:[#allocation2 + $0x3b0] sm:$0xff]
    %v372 = vld [vmem:[#allocation2 + $0x3b8] sm:$0xff]
    %v373 = vld [vmem:[#allocation2 + $0x3c0] sm:$0xff]
    %v374 = vld [vmem:[#allocation2 + $0x3c8] sm:$0xff]
    %v375 = vld [vmem:[#allocation2 + $0x3d0] sm:$0xff]
    %v376 = vld [vmem:[#allocation2 + $0x3d8] sm:$0xff]
    %v377 = vld [vmem:[#allocation2 + $0x3e0] sm:$0xff]
    %v378 = vld [vmem:[#allocation2 + $0x3e8] sm:$0xff]
    %v379 = vld [vmem:[#allocation2 + $0x3f0] sm:$0xff]
    %v380 = vld [vmem:[#allocation2 + $0x3f8] sm:$0xff]
    %v381 = vld [vmem:[#allocation2 + $0x400] sm:$0xff]
    %v382 = vld [vmem:[#allocation2 + $0x408] sm:$0xff]
    %v383 = vld [vmem:[#allocation2 + $0x410] sm:$0xff]
    %v384 = vld [vmem:[#allocation2 + $0x418] sm:$0xff]
    %v385 = vld [vmem:[#allocation2 + $0x420] sm:$0xff]
    %v386 = vld [vmem:[#allocation2 + $0x428] sm:$0xff]
    %v387 = vld [vmem:[#allocation2 + $0x430] sm:$0xff]
    %v388 = vld [vmem:[#allocation2 + $0x438] sm:$0xff]
    %v389 = vld [vmem:[#allocation2 + $0x440] sm:$0xff]
    %v390 = vld [vmem:[#allocation2 + $0x448] sm:$0xff]
    %v391 = vld [vmem:[#allocation2 + $0x450] sm:$0xff]
    %v392 = vld [vmem:[#allocation2 + $0x458] sm:$0xff]
    %v393 = vld [vmem:[#allocation2 + $0x460] sm:$0xff]
    %v394 = vld [vmem:[#allocation2 + $0x468] sm:$0xff]
    %v395 = vld [vmem:[#allocation2 + $0x470] sm:$0xff]
    %v396 = vld [vmem:[#allocation2 + $0x478] sm:$0xff]
    %v397 = vld [vmem:[#allocation2 + $0x480] sm:$0xff]
    %v398 = vld [vmem:[#allocation2 + $0x488] sm:$0xff]
    %v399 = vld [vmem:[#allocation2 + $0x490] sm:$0xff]
    %v400 = vld [vmem:[#allocation2 + $0x498] sm:$0xff]
    %v401 = vld [vmem:[#allocation2 + $0x4a0] sm:$0xff]
    %v402 = vld [vmem:[#allocation2 + $0x4a8] sm:$0xff]
    %v403 = vld [vmem:[#allocation2 + $0x4b0] sm:$0xff]
    %v404 = vld [vmem:[#allocation2 + $0x4b8] sm:$0xff]
    %v405 = vld [vmem:[#allocation2 + $0x4c0] sm:$0xff]
    %v406 = vld [vmem:[#allocation2 + $0x4c8] sm:$0xff]
    %v407 = vld [vmem:[#allocation2 + $0x4d0] sm:$0xff]
    %v408 = vld [vmem:[#allocation2 + $0x4d8] sm:$0xff]
    %v409 = vld [vmem:[#allocation2 + $0x4e0] sm:$0xff]
    %v410 = vld [vmem:[#allocation2 + $0x4e8] sm:$0xff]
    %v411 = vld [vmem:[#allocation2 + $0x4f0] sm:$0xff]
    %v412 = vld [vmem:[#allocation2 + $0x4f8] sm:$0xff]
    %v413 = vld [vmem:[#allocation2 + $0x500] sm:$0xff]
    %v414 = vld [vmem:[#allocation2 + $0x508] sm:$0xff]
    %v415 = vld [vmem:[#allocation2 + $0x510] sm:$0xff]
    %v416 = vld [vmem:[#allocation2 + $0x518] sm:$0xff]
    %v417 = vld [vmem:[#allocation2 + $0x520] sm:$0xff]
    %v418 = vld [vmem:[#allocation2 + $0x528] sm:$0xff]
    %v419 = vld [vmem:[#allocation2 + $0x530] sm:$0xff]
    %v420 = vld [vmem:[#allocation2 + $0x538] sm:$0xff]
    %v421 = vld [vmem:[#allocation2 + $0x540] sm:$0xff]
    %v422 = vld [vmem:[#allocation2 + $0x548] sm:$0xff]
    %v423 = vld [vmem:[#allocation2 + $0x550] sm:$0xff]
    %v424 = vld [vmem:[#allocation2 + $0x558] sm:$0xff]
    %v425 = vld [vmem:[#allocation2 + $0x560] sm:$0xff]
    %v426 = vld [vmem:[#allocation2 + $0x568] sm:$0xff]
    %v427 = vld [vmem:[#allocation2 + $0x570] sm:$0xff]
    %v428 = vld [vmem:[#allocation2 + $0x578] sm:$0xff]
    %v429 = vld [vmem:[#allocation2 + $0x580] sm:$0xff]
    %v430 = vld [vmem:[#allocation2 + $0x588] sm:$0xff]
    %v431 = vld [vmem:[#allocation2 + $0x590] sm:$0xff]
    %v432 = vld [vmem:[#allocation2 + $0x598] sm:$0xff]
    %v433 = vld [vmem:[#allocation2 + $0x5a0] sm:$0xff]
    %v434 = vld [vmem:[#allocation2 + $0x5a8] sm:$0xff]
    %v435 = vld [vmem:[#allocation2 + $0x5b0] sm:$0xff]
    %v436 = vld [vmem:[#allocation2 + $0x5b8] sm:$0xff]
    %v437 = vld [vmem:[#allocation2 + $0x5c0] sm:$0xff]
    %v438 = vld [vmem:[#allocation2 + $0x5c8] sm:$0xff]
    %v439 = vld [vmem:[#allocation2 + $0x5d0] sm:$0xff]
    %v440 = vld [vmem:[#allocation2 + $0x5d8] sm:$0xff]
    %v441 = vld [vmem:[#allocation2 + $0x5e0] sm:$0xff]
    %v442 = vld [vmem:[#allocation2 + $0x5e8] sm:$0xff]
    %v443 = vld [vmem:[#allocation2 + $0x5f0] sm:$0xff]
    %v444 = vld [vmem:[#allocation2 + $0x5f8] sm:$0xff]
    %v445 = vld [vmem:[#allocation2 + $0x600] sm:$0xff]
    %v446 = vld [vmem:[#allocation2 + $0x608] sm:$0xff]
    %v447 = vld [vmem:[#allocation2 + $0x610] sm:$0xff]
    %v448 = vld [vmem:[#allocation2 + $0x618] sm:$0xff]
    %v449 = vld [vmem:[#allocation2 + $0x620] sm:$0xff]
    %v450 = vld [vmem:[#allocation2 + $0x628] sm:$0xff]
    %v451 = vld [vmem:[#allocation2 + $0x630] sm:$0xff]
    %v452 = vld [vmem:[#allocation2 + $0x638] sm:$0xff]
    %v453 = vld [vmem:[#allocation2 + $0x640] sm:$0xff]
    %v454 = vld [vmem:[#allocation2 + $0x648] sm:$0xff]
    %v455 = vld [vmem:[#allocation2 + $0x650] sm:$0xff]
    %v456 = vld [vmem:[#allocation2 + $0x658] sm:$0xff]
    %v457 = vld [vmem:[#allocation2 + $0x660] sm:$0xff]
    %v458 = vld [vmem:[#allocation2 + $0x668] sm:$0xff]
    %v459 = vld [vmem:[#allocation2 + $0x670] sm:$0xff]
    %v460 = vld [vmem:[#allocation2 + $0x678] sm:$0xff]
    %v461 = vld [vmem:[#allocation2 + $0x680] sm:$0xff]
    %v462 = vld [vmem:[#allocation2 + $0x688] sm:$0xff]
    %v463 = vld [vmem:[#allocation2 + $0x690] sm:$0xff]
    %v464 = vld [vmem:[#allocation2 + $0x698] sm:$0xff]
    %v465 = vld [vmem:[#allocation2 + $0x6a0] sm:$0xff]
    %v466 = vld [vmem:[#allocation2 + $0x6a8] sm:$0xff]
    %v467 = vld [vmem:[#allocation2 + $0x6b0] sm:$0xff]
    %v468 = vld [vmem:[#allocation2 + $0x6b8] sm:$0xff]
    %v469 = vld [vmem:[#allocation2 + $0x6c0] sm:$0xff]
    %v470 = vld [vmem:[#allocation2 + $0x6c8] sm:$0xff]
    %v471 = vld [vmem:[#allocation2 + $0x6d0] sm:$0xff]
    %v472 = vld [vmem:[#allocation2 + $0x6d8] sm:$0xff]
    %v473 = vld [vmem:[#allocation2 + $0x6e0] sm:$0xff]
    %v474 = vld [vmem:[#allocation2 + $0x6e8] sm:$0xff]
    %v475 = vld [vmem:[#allocation2 + $0x6f0] sm:$0xff]
    %v476 = vld [vmem:[#allocation2 + $0x6f8] sm:$0xff]
    %v477 = vld [vmem:[#allocation2 + $0x700] sm:$0xff]
    %v478 = vld [vmem:[#allocation2 + $0x708] sm:$0xff]
    %v479 = vld [vmem:[#allocation2 + $0x710] sm:$0xff]
    %v480 = vld [vmem:[#allocation2 + $0x718] sm:$0xff]
    %v481 = vld [vmem:[#allocation2 + $0x720] sm:$0xff]
    %v482 = vld [vmem:[#allocation2 + $0x728] sm:$0xff]
    %v483 = vld [vmem:[#allocation2 + $0x730] sm:$0xff]
    %v484 = vld [vmem:[#allocation2 + $0x738] sm:$0xff]
    %v485 = vld [vmem:[#allocation2 + $0x740] sm:$0xff]
    %v486 = vld [vmem:[#allocation2 + $0x748] sm:$0xff]
    %v487 = vld [vmem:[#allocation2 + $0x750] sm:$0xff]
    %v488 = vld [vmem:[#allocation2 + $0x758] sm:$0xff]
    %v489 = vld [vmem:[#allocation2 + $0x760] sm:$0xff]
    %v490 = vld [vmem:[#allocation2 + $0x768] sm:$0xff]
    %v491 = vld [vmem:[#allocation2 + $0x770] sm:$0xff]
    %v492 = vld [vmem:[#allocation2 + $0x778] sm:$0xff]
    %v493 = vld [vmem:[#allocation2 + $0x780] sm:$0xff]
    %v494 = vld [vmem:[#allocation2 + $0x788] sm:$0xff]
    %v495 = vld [vmem:[#allocation2 + $0x790] sm:$0xff]
    %v496 = vld [vmem:[#allocation2 + $0x798] sm:$0xff]
    %v497 = vld [vmem:[#allocation2 + $0x7a0] sm:$0xff]
    %v498 = vld [vmem:[#allocation2 + $0x7a8] sm:$0xff]
    %v499 = vld [vmem:[#allocation2 + $0x7b0] sm:$0xff]
    %v500 = vld [vmem:[#allocation2 + $0x7b8] sm:$0xff]
    %v501 = vld [vmem:[#allocation2 + $0x7c0] sm:$0xff]
    %v502 = vld [vmem:[#allocation2 + $0x7c8] sm:$0xff]
    %v503 = vld [vmem:[#allocation2 + $0x7d0] sm:$0xff]
    %v504 = vld [vmem:[#allocation2 + $0x7d8] sm:$0xff]
    %v505 = vld [vmem:[#allocation2 + $0x7e0] sm:$0xff]
    %v506 = vld [vmem:[#allocation2 + $0x7e8] sm:$0xff]
    %v507 = vld [vmem:[#allocation2 + $0x7f0] sm:$0xff]
    %v508 = vld [vmem:[#allocation2 + $0x7f8] sm:$0xff]
    %v765 = vunpack.c.l.b16 %v253
    %v766 = vunpack.c.h.b16 %v253
    %v767 = vunpack.c.l.b16 %v254
    %v768 = vunpack.c.h.b16 %v254
    %v769 = vunpack.c.l.b16 %v255
    %v770 = vunpack.c.h.b16 %v255
    %v771 = vunpack.c.l.b16 %v256
    %v772 = vunpack.c.h.b16 %v256
    %v773 = vunpack.c.l.b16 %v257
    %v774 = vunpack.c.h.b16 %v257
    %v775 = vunpack.c.l.b16 %v258
    %v776 = vunpack.c.h.b16 %v258
    %v777 = vunpack.c.l.b16 %v259
    %v778 = vunpack.c.h.b16 %v259
    %v779 = vunpack.c.l.b16 %v260
    %v780 = vunpack.c.h.b16 %v260
    %v781 = vunpack.c.l.b16 %v261
    %v782 = vunpack.c.h.b16 %v261
    %v783 = vunpack.c.l.b16 %v262
    %v784 = vunpack.c.h.b16 %v262
    %v785 = vunpack.c.l.b16 %v263
    %v786 = vunpack.c.h.b16 %v263
    %v787 = vunpack.c.l.b16 %v264
    %v788 = vunpack.c.h.b16 %v264
    %v789 = vunpack.c.l.b16 %v265
    %v790 = vunpack.c.h.b16 %v265
    %v791 = vunpack.c.l.b16 %v266
    %v792 = vunpack.c.h.b16 %v266
    %v793 = vunpack.c.l.b16 %v267
    %v794 = vunpack.c.h.b16 %v267
    %v795 = vunpack.c.l.b16 %v268
    %v796 = vunpack.c.h.b16 %v268
    %v797 = vunpack.c.l.b16 %v269
    %v798 = vunpack.c.h.b16 %v269
    %v799 = vunpack.c.l.b16 %v270
    %v800 = vunpack.c.h.b16 %v270
    %v801 = vunpack.c.l.b16 %v271
    %v802 = vunpack.c.h.b16 %v271
    %v803 = vunpack.c.l.b16 %v272
    %v804 = vunpack.c.h.b16 %v272
    %v805 = vunpack.c.l.b16 %v273
    %v806 = vunpack.c.h.b16 %v273
    %v807 = vunpack.c.l.b16 %v274
    %v808 = vunpack.c.h.b16 %v274
    %v809 = vunpack.c.l.b16 %v275
    %v810 = vunpack.c.h.b16 %v275
    %v811 = vunpack.c.l.b16 %v276
    %v812 = vunpack.c.h.b16 %v276
    %v813 = vunpack.c.l.b16 %v277
    %v814 = vunpack.c.h.b16 %v277
    %v815 = vunpack.c.l.b16 %v278
    %v816 = vunpack.c.h.b16 %v278
    %v817 = vunpack.c.l.b16 %v279
    %v818 = vunpack.c.h.b16 %v279
    %v819 = vunpack.c.l.b16 %v280
    %v820 = vunpack.c.h.b16 %v280
    %v821 = vunpack.c.l.b16 %v281
    %v822 = vunpack.c.h.b16 %v281
    %v823 = vunpack.c.l.b16 %v282
    %v824 = vunpack.c.h.b16 %v282
    %v825 = vunpack.c.l.b16 %v283
    %v826 = vunpack.c.h.b16 %v283
    %v827 = vunpack.c.l.b16 %v284
    %v828 = vunpack.c.h.b16 %v284
    %v829 = vunpack.c.l.b16 %v285
    %v830 = vunpack.c.h.b16 %v285
    %v831 = vunpack.c.l.b16 %v286
    %v832 = vunpack.c.h.b16 %v286
    %v833 = vunpack.c.l.b16 %v287
    %v834 = vunpack.c.h.b16 %v287
    %v835 = vunpack.c.l.b16 %v288
    %v836 = vunpack.c.h.b16 %v288
    %v837 = vunpack.c.l.b16 %v289
    %v838 = vunpack.c.h.b16 %v289
    %v839 = vunpack.c.l.b16 %v290
    %v840 = vunpack.c.h.b16 %v290
    %v841 = vunpack.c.l.b16 %v291
    %v842 = vunpack.c.h.b16 %v291
    %v843 = vunpack.c.l.b16 %v292
    %v844 = vunpack.c.h.b16 %v292
    %v845 = vunpack.c.l.b16 %v293
    %v846 = vunpack.c.h.b16 %v293
    %v847 = vunpack.c.l.b16 %v294
    %v848 = vunpack.c.h.b16 %v294
    %v849 = vunpack.c.l.b16 %v295
    %v850 = vunpack.c.h.b16 %v295
    %v851 = vunpack.c.l.b16 %v296
    %v852 = vunpack.c.h.b16 %v296
    %v853 = vunpack.c.l.b16 %v297
    %v854 = vunpack.c.h.b16 %v297
    %v855 = vunpack.c.l.b16 %v298
    %v856 = vunpack.c.h.b16 %v298
    %v857 = vunpack.c.l.b16 %v299
    %v858 = vunpack.c.h.b16 %v299
    %v859 = vunpack.c.l.b16 %v300
    %v860 = vunpack.c.h.b16 %v300
    %v861 = vunpack.c.l.b16 %v301
    %v862 = vunpack.c.h.b16 %v301
    %v863 = vunpack.c.l.b16 %v302
    %v864 = vunpack.c.h.b16 %v302
    %v865 = vunpack.c.l.b16 %v303
    %v866 = vunpack.c.h.b16 %v303
    %v867 = vunpack.c.l.b16 %v304
    %v868 = vunpack.c.h.b16 %v304
    %v869 = vunpack.c.l.b16 %v305
    %v870 = vunpack.c.h.b16 %v305
    %v871 = vunpack.c.l.b16 %v306
    %v872 = vunpack.c.h.b16 %v306
    %v873 = vunpack.c.l.b16 %v307
    %v874 = vunpack.c.h.b16 %v307
    %v875 = vunpack.c.l.b16 %v308
    %v876 = vunpack.c.h.b16 %v308
    %v877 = vunpack.c.l.b16 %v309
    %v878 = vunpack.c.h.b16 %v309
    %v879 = vunpack.c.l.b16 %v310
    %v880 = vunpack.c.h.b16 %v310
    %v881 = vunpack.c.l.b16 %v311
    %v882 = vunpack.c.h.b16 %v311
    %v883 = vunpack.c.l.b16 %v312
    %v884 = vunpack.c.h.b16 %v312
    %v885 = vunpack.c.l.b16 %v313
    %v886 = vunpack.c.h.b16 %v313
    %v887 = vunpack.c.l.b16 %v314
    %v888 = vunpack.c.h.b16 %v314
    %v889 = vunpack.c.l.b16 %v315
    %v890 = vunpack.c.h.b16 %v315
    %v891 = vunpack.c.l.b16 %v316
    %v892 = vunpack.c.h.b16 %v316
    %v893 = vunpack.c.l.b16 %v317
    %v894 = vunpack.c.h.b16 %v317
    %v895 = vunpack.c.l.b16 %v318
    %v896 = vunpack.c.h.b16 %v318
    %v897 = vunpack.c.l.b16 %v319
    %v898 = vunpack.c.h.b16 %v319
    %v899 = vunpack.c.l.b16 %v320
    %v900 = vunpack.c.h.b16 %v320
    %v901 = vunpack.c.l.b16 %v321
    %v902 = vunpack.c.h.b16 %v321
    %v903 = vunpack.c.l.b16 %v322
    %v904 = vunpack.c.h.b16 %v322
    %v905 = vunpack.c.l.b16 %v323
    %v906 = vunpack.c.h.b16 %v323
    %v907 = vunpack.c.l.b16 %v324
    %v908 = vunpack.c.h.b16 %v324
    %v909 = vunpack.c.l.b16 %v325
    %v910 = vunpack.c.h.b16 %v325
    %v911 = vunpack.c.l.b16 %v326
    %v912 = vunpack.c.h.b16 %v326
    %v913 = vunpack.c.l.b16 %v327
    %v914 = vunpack.c.h.b16 %v327
    %v915 = vunpack.c.l.b16 %v328
    %v916 = vunpack.c.h.b16 %v328
    %v917 = vunpack.c.l.b16 %v329
    %v918 = vunpack.c.h.b16 %v329
    %v919 = vunpack.c.l.b16 %v330
    %v920 = vunpack.c.h.b16 %v330
    %v921 = vunpack.c.l.b16 %v331
    %v922 = vunpack.c.h.b16 %v331
    %v923 = vunpack.c.l.b16 %v332
    %v924 = vunpack.c.h.b16 %v332
    %v925 = vunpack.c.l.b16 %v333
    %v926 = vunpack.c.h.b16 %v333
    %v927 = vunpack.c.l.b16 %v334
    %v928 = vunpack.c.h.b16 %v334
    %v929 = vunpack.c.l.b16 %v335
    %v930 = vunpack.c.h.b16 %v335
    %v931 = vunpack.c.l.b16 %v336
    %v932 = vunpack.c.h.b16 %v336
    %v933 = vunpack.c.l.b16 %v337
    %v934 = vunpack.c.h.b16 %v337
    %v935 = vunpack.c.l.b16 %v338
    %v936 = vunpack.c.h.b16 %v338
    %v937 = vunpack.c.l.b16 %v339
    %v938 = vunpack.c.h.b16 %v339
    %v939 = vunpack.c.l.b16 %v340
    %v940 = vunpack.c.h.b16 %v340
    %v941 = vunpack.c.l.b16 %v341
    %v942 = vunpack.c.h.b16 %v341
    %v943 = vunpack.c.l.b16 %v342
    %v944 = vunpack.c.h.b16 %v342
    %v945 = vunpack.c.l.b16 %v343
    %v946 = vunpack.c.h.b16 %v343
    %v947 = vunpack.c.l.b16 %v344
    %v948 = vunpack.c.h.b16 %v344
    %v949 = vunpack.c.l.b16 %v345
    %v950 = vunpack.c.h.b16 %v345
    %v951 = vunpack.c.l.b16 %v346
    %v952 = vunpack.c.h.b16 %v346
    %v953 = vunpack.c.l.b16 %v347
    %v954 = vunpack.c.h.b16 %v347
    %v955 = vunpack.c.l.b16 %v348
    %v956 = vunpack.c.h.b16 %v348
    %v957 = vunpack.c.l.b16 %v349
    %v958 = vunpack.c.h.b16 %v349
    %v959 = vunpack.c.l.b16 %v350
    %v960 = vunpack.c.h.b16 %v350
    %v961 = vunpack.c.l.b16 %v351
    %v962 = vunpack.c.h.b16 %v351
    %v963 = vunpack.c.l.b16 %v352
    %v964 = vunpack.c.h.b16 %v352
    %v965 = vunpack.c.l.b16 %v353
    %v966 = vunpack.c.h.b16 %v353
    %v967 = vunpack.c.l.b16 %v354
    %v968 = vunpack.c.h.b16 %v354
    %v969 = vunpack.c.l.b16 %v355
    %v970 = vunpack.c.h.b16 %v355
    %v971 = vunpack.c.l.b16 %v356
    %v972 = vunpack.c.h.b16 %v356
    %v973 = vunpack.c.l.b16 %v357
    %v974 = vunpack.c.h.b16 %v357
    %v975 = vunpack.c.l.b16 %v358
    %v976 = vunpack.c.h.b16 %v358
    %v977 = vunpack.c.l.b16 %v359
    %v978 = vunpack.c.h.b16 %v359
    %v979 = vunpack.c.l.b16 %v360
    %v980 = vunpack.c.h.b16 %v360
    %v981 = vunpack.c.l.b16 %v361
    %v982 = vunpack.c.h.b16 %v361
    %v983 = vunpack.c.l.b16 %v362
    %v984 = vunpack.c.h.b16 %v362
    %v985 = vunpack.c.l.b16 %v363
    %v986 = vunpack.c.h.b16 %v363
    %v987 = vunpack.c.l.b16 %v364
    %v988 = vunpack.c.h.b16 %v364
    %v989 = vunpack.c.l.b16 %v365
    %v990 = vunpack.c.h.b16 %v365
    %v991 = vunpack.c.l.b16 %v366
    %v992 = vunpack.c.h.b16 %v366
    %v993 = vunpack.c.l.b16 %v367
    %v994 = vunpack.c.h.b16 %v367
    %v995 = vunpack.c.l.b16 %v368
    %v996 = vunpack.c.h.b16 %v368
    %v997 = vunpack.c.l.b16 %v369
    %v998 = vunpack.c.h.b16 %v369
    %v999 = vunpack.c.l.b16 %v370
    %v1000 = vunpack.c.h.b16 %v370
    %v1001 = vunpack.c.l.b16 %v371
    %v1002 = vunpack.c.h.b16 %v371
    %v1003 = vunpack.c.l.b16 %v372
    %v1004 = vunpack.c.h.b16 %v372
    %v1005 = vunpack.c.l.b16 %v373
    %v1006 = vunpack.c.h.b16 %v373
    %v1007 = vunpack.c.l.b16 %v374
    %v1008 = vunpack.c.h.b16 %v374
    %v1009 = vunpack.c.l.b16 %v375
    %v1010 = vunpack.c.h.b16 %v375
    %v1011 = vunpack.c.l.b16 %v376
    %v1012 = vunpack.c.h.b16 %v376
    %v1013 = vunpack.c.l.b16 %v377
    %v1014 = vunpack.c.h.b16 %v377
    %v1015 = vunpack.c.l.b16 %v378
    %v1016 = vunpack.c.h.b16 %v378
    %v1017 = vunpack.c.l.b16 %v379
    %v1018 = vunpack.c.h.b16 %v379
    %v1019 = vunpack.c.l.b16 %v380
    %v1020 = vunpack.c.h.b16 %v380
    %v1021 = vunpack.c.l.b16 %v381
    %v1022 = vunpack.c.h.b16 %v381
    %v1023 = vunpack.c.l.b16 %v382
    %v1024 = vunpack.c.h.b16 %v382
    %v1025 = vunpack.c.l.b16 %v383
    %v1026 = vunpack.c.h.b16 %v383
    %v1027 = vunpack.c.l.b16 %v384
    %v1028 = vunpack.c.h.b16 %v384
    %v1029 = vunpack.c.l.b16 %v385
    %v1030 = vunpack.c.h.b16 %v385
    %v1031 = vunpack.c.l.b16 %v386
    %v1032 = vunpack.c.h.b16 %v386
    %v1033 = vunpack.c.l.b16 %v387
    %v1034 = vunpack.c.h.b16 %v387
    %v1035 = vunpack.c.l.b16 %v388
    %v1036 = vunpack.c.h.b16 %v388
    %v1037 = vunpack.c.l.b16 %v389
    %v1038 = vunpack.c.h.b16 %v389
    %v1039 = vunpack.c.l.b16 %v390
    %v1040 = vunpack.c.h.b16 %v390
    %v1041 = vunpack.c.l.b16 %v391
    %v1042 = vunpack.c.h.b16 %v391
    %v1043 = vunpack.c.l.b16 %v392
    %v1044 = vunpack.c.h.b16 %v392
    %v1045 = vunpack.c.l.b16 %v393
    %v1046 = vunpack.c.h.b16 %v393
    %v1047 = vunpack.c.l.b16 %v394
    %v1048 = vunpack.c.h.b16 %v394
    %v1049 = vunpack.c.l.b16 %v395
    %v1050 = vunpack.c.h.b16 %v395
    %v1051 = vunpack.c.l.b16 %v396
    %v1052 = vunpack.c.h.b16 %v396
    %v1053 = vunpack.c.l.b16 %v397
    %v1054 = vunpack.c.h.b16 %v397
    %v1055 = vunpack.c.l.b16 %v398
    %v1056 = vunpack.c.h.b16 %v398
    %v1057 = vunpack.c.l.b16 %v399
    %v1058 = vunpack.c.h.b16 %v399
    %v1059 = vunpack.c.l.b16 %v400
    %v1060 = vunpack.c.h.b16 %v400
    %v1061 = vunpack.c.l.b16 %v401
    %v1062 = vunpack.c.h.b16 %v401
    %v1063 = vunpack.c.l.b16 %v402
    %v1064 = vunpack.c.h.b16 %v402
    %v1065 = vunpack.c.l.b16 %v403
    %v1066 = vunpack.c.h.b16 %v403
    %v1067 = vunpack.c.l.b16 %v404
    %v1068 = vunpack.c.h.b16 %v404
    %v1069 = vunpack.c.l.b16 %v405
    %v1070 = vunpack.c.h.b16 %v405
    %v1071 = vunpack.c.l.b16 %v406
    %v1072 = vunpack.c.h.b16 %v406
    %v1073 = vunpack.c.l.b16 %v407
    %v1074 = vunpack.c.h.b16 %v407
    %v1075 = vunpack.c.l.b16 %v408
    %v1076 = vunpack.c.h.b16 %v408
    %v1077 = vunpack.c.l.b16 %v409
    %v1078 = vunpack.c.h.b16 %v409
    %v1079 = vunpack.c.l.b16 %v410
    %v1080 = vunpack.c.h.b16 %v410
    %v1081 = vunpack.c.l.b16 %v411
    %v1082 = vunpack.c.h.b16 %v411
    %v1083 = vunpack.c.l.b16 %v412
    %v1084 = vunpack.c.h.b16 %v412
    %v1085 = vunpack.c.l.b16 %v413
    %v1086 = vunpack.c.h.b16 %v413
    %v1087 = vunpack.c.l.b16 %v414
    %v1088 = vunpack.c.h.b16 %v414
    %v1089 = vunpack.c.l.b16 %v415
    %v1090 = vunpack.c.h.b16 %v415
    %v1091 = vunpack.c.l.b16 %v416
    %v1092 = vunpack.c.h.b16 %v416
    %v1093 = vunpack.c.l.b16 %v417
    %v1094 = vunpack.c.h.b16 %v417
    %v1095 = vunpack.c.l.b16 %v418
    %v1096 = vunpack.c.h.b16 %v418
    %v1097 = vunpack.c.l.b16 %v419
    %v1098 = vunpack.c.h.b16 %v419
    %v1099 = vunpack.c.l.b16 %v420
    %v1100 = vunpack.c.h.b16 %v420
    %v1101 = vunpack.c.l.b16 %v421
    %v1102 = vunpack.c.h.b16 %v421
    %v1103 = vunpack.c.l.b16 %v422
    %v1104 = vunpack.c.h.b16 %v422
    %v1105 = vunpack.c.l.b16 %v423
    %v1106 = vunpack.c.h.b16 %v423
    %v1107 = vunpack.c.l.b16 %v424
    %v1108 = vunpack.c.h.b16 %v424
    %v1109 = vunpack.c.l.b16 %v425
    %v1110 = vunpack.c.h.b16 %v425
    %v1111 = vunpack.c.l.b16 %v426
    %v1112 = vunpack.c.h.b16 %v426
    %v1113 = vunpack.c.l.b16 %v427
    %v1114 = vunpack.c.h.b16 %v427
    %v1115 = vunpack.c.l.b16 %v428
    %v1116 = vunpack.c.h.b16 %v428
    %v1117 = vunpack.c.l.b16 %v429
    %v1118 = vunpack.c.h.b16 %v429
    %v1119 = vunpack.c.l.b16 %v430
    %v1120 = vunpack.c.h.b16 %v430
    %v1121 = vunpack.c.l.b16 %v431
    %v1122 = vunpack.c.h.b16 %v431
    %v1123 = vunpack.c.l.b16 %v432
    %v1124 = vunpack.c.h.b16 %v432
    %v1125 = vunpack.c.l.b16 %v433
    %v1126 = vunpack.c.h.b16 %v433
    %v1127 = vunpack.c.l.b16 %v434
    %v1128 = vunpack.c.h.b16 %v434
    %v1129 = vunpack.c.l.b16 %v435
    %v1130 = vunpack.c.h.b16 %v435
    %v1131 = vunpack.c.l.b16 %v436
    %v1132 = vunpack.c.h.b16 %v436
    %v1133 = vunpack.c.l.b16 %v437
    %v1134 = vunpack.c.h.b16 %v437
    %v1135 = vunpack.c.l.b16 %v438
    %v1136 = vunpack.c.h.b16 %v438
    %v1137 = vunpack.c.l.b16 %v439
    %v1138 = vunpack.c.h.b16 %v439
    %v1139 = vunpack.c.l.b16 %v440
    %v1140 = vunpack.c.h.b16 %v440
    %v1141 = vunpack.c.l.b16 %v441
    %v1142 = vunpack.c.h.b16 %v441
    %v1143 = vunpack.c.l.b16 %v442
    %v1144 = vunpack.c.h.b16 %v442
    %v1145 = vunpack.c.l.b16 %v443
    %v1146 = vunpack.c.h.b16 %v443
    %v1147 = vunpack.c.l.b16 %v444
    %v1148 = vunpack.c.h.b16 %v444
    %v1149 = vunpack.c.l.b16 %v445
    %v1150 = vunpack.c.h.b16 %v445
    %v1151 = vunpack.c.l.b16 %v446
    %v1152 = vunpack.c.h.b16 %v446
    %v1153 = vunpack.c.l.b16 %v447
    %v1154 = vunpack.c.h.b16 %v447
    %v1155 = vunpack.c.l.b16 %v448
    %v1156 = vunpack.c.h.b16 %v448
    %v1157 = vunpack.c.l.b16 %v449
    %v1158 = vunpack.c.h.b16 %v449
    %v1159 = vunpack.c.l.b16 %v450
    %v1160 = vunpack.c.h.b16 %v450
    %v1161 = vunpack.c.l.b16 %v451
    %v1162 = vunpack.c.h.b16 %v451
    %v1163 = vunpack.c.l.b16 %v452
    %v1164 = vunpack.c.h.b16 %v452
    %v1165 = vunpack.c.l.b16 %v453
    %v1166 = vunpack.c.h.b16 %v453
    %v1167 = vunpack.c.l.b16 %v454
    %v1168 = vunpack.c.h.b16 %v454
    %v1169 = vunpack.c.l.b16 %v455
    %v1170 = vunpack.c.h.b16 %v455
    %v1171 = vunpack.c.l.b16 %v456
    %v1172 = vunpack.c.h.b16 %v456
    %v1173 = vunpack.c.l.b16 %v457
    %v1174 = vunpack.c.h.b16 %v457
    %v1175 = vunpack.c.l.b16 %v458
    %v1176 = vunpack.c.h.b16 %v458
    %v1177 = vunpack.c.l.b16 %v459
    %v1178 = vunpack.c.h.b16 %v459
    %v1179 = vunpack.c.l.b16 %v460
    %v1180 = vunpack.c.h.b16 %v460
    %v1181 = vunpack.c.l.b16 %v461
    %v1182 = vunpack.c.h.b16 %v461
    %v1183 = vunpack.c.l.b16 %v462
    %v1184 = vunpack.c.h.b16 %v462
    %v1185 = vunpack.c.l.b16 %v463
    %v1186 = vunpack.c.h.b16 %v463
    %v1187 = vunpack.c.l.b16 %v464
    %v1188 = vunpack.c.h.b16 %v464
    %v1189 = vunpack.c.l.b16 %v465
    %v1190 = vunpack.c.h.b16 %v465
    %v1191 = vunpack.c.l.b16 %v466
    %v1192 = vunpack.c.h.b16 %v466
    %v1193 = vunpack.c.l.b16 %v467
    %v1194 = vunpack.c.h.b16 %v467
    %v1195 = vunpack.c.l.b16 %v468
    %v1196 = vunpack.c.h.b16 %v468
    %v1197 = vunpack.c.l.b16 %v469
    %v1198 = vunpack.c.h.b16 %v469
    %v1199 = vunpack.c.l.b16 %v470
    %v1200 = vunpack.c.h.b16 %v470
    %v1201 = vunpack.c.l.b16 %v471
    %v1202 = vunpack.c.h.b16 %v471
    %v1203 = vunpack.c.l.b16 %v472
    %v1204 = vunpack.c.h.b16 %v472
    %v1205 = vunpack.c.l.b16 %v473
    %v1206 = vunpack.c.h.b16 %v473
    %v1207 = vunpack.c.l.b16 %v474
    %v1208 = vunpack.c.h.b16 %v474
    %v1209 = vunpack.c.l.b16 %v475
    %v1210 = vunpack.c.h.b16 %v475
    %v1211 = vunpack.c.l.b16 %v476
    %v1212 = vunpack.c.h.b16 %v476
    %v1213 = vunpack.c.l.b16 %v477
    %v1214 = vunpack.c.h.b16 %v477
    %v1215 = vunpack.c.l.b16 %v478
    %v1216 = vunpack.c.h.b16 %v478
    %v1217 = vunpack.c.l.b16 %v479
    %v1218 = vunpack.c.h.b16 %v479
    %v1219 = vunpack.c.l.b16 %v480
    %v1220 = vunpack.c.h.b16 %v480
    %v1221 = vunpack.c.l.b16 %v481
    %v1222 = vunpack.c.h.b16 %v481
    %v1223 = vunpack.c.l.b16 %v482
    %v1224 = vunpack.c.h.b16 %v482
    %v1225 = vunpack.c.l.b16 %v483
    %v1226 = vunpack.c.h.b16 %v483
    %v1227 = vunpack.c.l.b16 %v484
    %v1228 = vunpack.c.h.b16 %v484
    %v1229 = vunpack.c.l.b16 %v485
    %v1230 = vunpack.c.h.b16 %v485
    %v1231 = vunpack.c.l.b16 %v486
    %v1232 = vunpack.c.h.b16 %v486
    %v1233 = vunpack.c.l.b16 %v487
    %v1234 = vunpack.c.h.b16 %v487
    %v1235 = vunpack.c.l.b16 %v488
    %v1236 = vunpack.c.h.b16 %v488
    %v1237 = vunpack.c.l.b16 %v489
    %v1238 = vunpack.c.h.b16 %v489
    %v1239 = vunpack.c.l.b16 %v490
    %v1240 = vunpack.c.h.b16 %v490
    %v1241 = vunpack.c.l.b16 %v491
    %v1242 = vunpack.c.h.b16 %v491
    %v1243 = vunpack.c.l.b16 %v492
    %v1244 = vunpack.c.h.b16 %v492
    %v1245 = vunpack.c.l.b16 %v493
    %v1246 = vunpack.c.h.b16 %v493
    %v1247 = vunpack.c.l.b16 %v494
    %v1248 = vunpack.c.h.b16 %v494
    %v1249 = vunpack.c.l.b16 %v495
    %v1250 = vunpack.c.h.b16 %v495
    %v1251 = vunpack.c.l.b16 %v496
    %v1252 = vunpack.c.h.b16 %v496
    %v1253 = vunpack.c.l.b16 %v497
    %v1254 = vunpack.c.h.b16 %v497
    %v1255 = vunpack.c.l.b16 %v498
    %v1256 = vunpack.c.h.b16 %v498
    %v1257 = vunpack.c.l.b16 %v499
    %v1258 = vunpack.c.h.b16 %v499
    %v1259 = vunpack.c.l.b16 %v500
    %v1260 = vunpack.c.h.b16 %v500
    %v1261 = vunpack.c.l.b16 %v501
    %v1262 = vunpack.c.h.b16 %v501
    %v1263 = vunpack.c.l.b16 %v502
    %v1264 = vunpack.c.h.b16 %v502
    %v1265 = vunpack.c.l.b16 %v503
    %v1266 = vunpack.c.h.b16 %v503
    %v1267 = vunpack.c.l.b16 %v504
    %v1268 = vunpack.c.h.b16 %v504
    %v1269 = vunpack.c.l.b16 %v505
    %v1270 = vunpack.c.h.b16 %v505
    %v1271 = vunpack.c.l.b16 %v506
    %v1272 = vunpack.c.h.b16 %v506
    %v1273 = vunpack.c.l.b16 %v507
    %v1274 = vunpack.c.h.b16 %v507
    %v1275 = vunpack.c.l.b16 %v508
    %v1276 = vunpack.c.h.b16 %v508
    %v1277 = vpack.c.b16 %v781, %v765
    %v1278 = vpack.c.b16 %v782, %v766
    %v1279 = vpack.c.b16 %v783, %v767
    %v1280 = vpack.c.b16 %v784, %v768
    %v1281 = vpack.c.b16 %v785, %v769
    %v1282 = vpack.c.b16 %v786, %v770
    %v1283 = vpack.c.b16 %v787, %v771
    %v1284 = vpack.c.b16 %v788, %v772
    %v1285 = vpack.c.b16 %v789, %v773
    %v1286 = vpack.c.b16 %v790, %v774
    %v1287 = vpack.c.b16 %v791, %v775
    %v1288 = vpack.c.b16 %v792, %v776
    %v1289 = vpack.c.b16 %v793, %v777
    %v1290 = vpack.c.b16 %v794, %v778
    %v1291 = vpack.c.b16 %v795, %v779
    %v1292 = vpack.c.b16 %v796, %v780
    %v1293 = vpack.c.b16 %v813, %v797
    %v1294 = vpack.c.b16 %v814, %v798
    %v1295 = vpack.c.b16 %v815, %v799
    %v1296 = vpack.c.b16 %v816, %v800
    %v1297 = vpack.c.b16 %v817, %v801
    %v1298 = vpack.c.b16 %v818, %v802
    %v1299 = vpack.c.b16 %v819, %v803
    %v1300 = vpack.c.b16 %v820, %v804
    %v1301 = vpack.c.b16 %v821, %v805
    %v1302 = vpack.c.b16 %v822, %v806
    %v1303 = vpack.c.b16 %v823, %v807
    %v1304 = vpack.c.b16 %v824, %v808
    %v1305 = vpack.c.b16 %v825, %v809
    %v1306 = vpack.c.b16 %v826, %v810
    %v1307 = vpack.c.b16 %v827, %v811
    %v1308 = vpack.c.b16 %v828, %v812
    %v1309 = vpack.c.b16 %v845, %v829
    %v1310 = vpack.c.b16 %v846, %v830
    %v1311 = vpack.c.b16 %v847, %v831
    %v1312 = vpack.c.b16 %v848, %v832
    %v1313 = vpack.c.b16 %v849, %v833
    %v1314 = vpack.c.b16 %v850, %v834
    %v1315 = vpack.c.b16 %v851, %v835
    %v1316 = vpack.c.b16 %v852, %v836
    %v1317 = vpack.c.b16 %v853, %v837
    %v1318 = vpack.c.b16 %v854, %v838
    %v1319 = vpack.c.b16 %v855, %v839
    %v1320 = vpack.c.b16 %v856, %v840
    %v1321 = vpack.c.b16 %v857, %v841
    %v1322 = vpack.c.b16 %v858, %v842
    %v1323 = vpack.c.b16 %v859, %v843
    %v1324 = vpack.c.b16 %v860, %v844
    %v1325 = vpack.c.b16 %v877, %v861
    %v1326 = vpack.c.b16 %v878, %v862
    %v1327 = vpack.c.b16 %v879, %v863
    %v1328 = vpack.c.b16 %v880, %v864
    %v1329 = vpack.c.b16 %v881, %v865
    %v1330 = vpack.c.b16 %v882, %v866
    %v1331 = vpack.c.b16 %v883, %v867
    %v1332 = vpack.c.b16 %v884, %v868
    %v1333 = vpack.c.b16 %v885, %v869
    %v1334 = vpack.c.b16 %v886, %v870
    %v1335 = vpack.c.b16 %v887, %v871
    %v1336 = vpack.c.b16 %v888, %v872
    %v1337 = vpack.c.b16 %v889, %v873
    %v1338 = vpack.c.b16 %v890, %v874
    %v1339 = vpack.c.b16 %v891, %v875
    %v1340 = vpack.c.b16 %v892, %v876
    %v1341 = vpack.c.b16 %v909, %v893
    %v1342 = vpack.c.b16 %v910, %v894
    %v1343 = vpack.c.b16 %v911, %v895
    %v1344 = vpack.c.b16 %v912, %v896
    %v1345 = vpack.c.b16 %v913, %v897
    %v1346 = vpack.c.b16 %v914, %v898
    %v1347 = vpack.c.b16 %v915, %v899
    %v1348 = vpack.c.b16 %v916, %v900
    %v1349 = vpack.c.b16 %v917, %v901
    %v1350 = vpack.c.b16 %v918, %v902
    %v1351 = vpack.c.b16 %v919, %v903
    %v1352 = vpack.c.b16 %v920, %v904
    %v1353 = vpack.c.b16 %v921, %v905
    %v1354 = vpack.c.b16 %v922, %v906
    %v1355 = vpack.c.b16 %v923, %v907
    %v1356 = vpack.c.b16 %v924, %v908
    %v1357 = vpack.c.b16 %v941, %v925
    %v1358 = vpack.c.b16 %v942, %v926
    %v1359 = vpack.c.b16 %v943, %v927
    %v1360 = vpack.c.b16 %v944, %v928
    %v1361 = vpack.c.b16 %v945, %v929
    %v1362 = vpack.c.b16 %v946, %v930
    %v1363 = vpack.c.b16 %v947, %v931
    %v1364 = vpack.c.b16 %v948, %v932
    %v1365 = vpack.c.b16 %v949, %v933
    %v1366 = vpack.c.b16 %v950, %v934
    %v1367 = vpack.c.b16 %v951, %v935
    %v1368 = vpack.c.b16 %v952, %v936
    %v1369 = vpack.c.b16 %v953, %v937
    %v1370 = vpack.c.b16 %v954, %v938
    %v1371 = vpack.c.b16 %v955, %v939
    %v1372 = vpack.c.b16 %v956, %v940
    %v1373 = vpack.c.b16 %v973, %v957
    %v1374 = vpack.c.b16 %v974, %v958
    %v1375 = vpack.c.b16 %v975, %v959
    %v1376 = vpack.c.b16 %v976, %v960
    %v1377 = vpack.c.b16 %v977, %v961
    %v1378 = vpack.c.b16 %v978, %v962
    %v1379 = vpack.c.b16 %v979, %v963
    %v1380 = vpack.c.b16 %v980, %v964
    %v1381 = vpack.c.b16 %v981, %v965
    %v1382 = vpack.c.b16 %v982, %v966
    %v1383 = vpack.c.b16 %v983, %v967
    %v1384 = vpack.c.b16 %v984, %v968
    %v1385 = vpack.c.b16 %v985, %v969
    %v1386 = vpack.c.b16 %v986, %v970
    %v1387 = vpack.c.b16 %v987, %v971
    %v1388 = vpack.c.b16 %v988, %v972
    %v1389 = vpack.c.b16 %v1005, %v989
    %v1390 = vpack.c.b16 %v1006, %v990
    %v1391 = vpack.c.b16 %v1007, %v991
    %v1392 = vpack.c.b16 %v1008, %v992
    %v1393 = vpack.c.b16 %v1009, %v993
    %v1394 = vpack.c.b16 %v1010, %v994
    %v1395 = vpack.c.b16 %v1011, %v995
    %v1396 = vpack.c.b16 %v1012, %v996
    %v1397 = vpack.c.b16 %v1013, %v997
    %v1398 = vpack.c.b16 %v1014, %v998
    %v1399 = vpack.c.b16 %v1015, %v999
    %v1400 = vpack.c.b16 %v1016, %v1000
    %v1401 = vpack.c.b16 %v1017, %v1001
    %v1402 = vpack.c.b16 %v1018, %v1002
    %v1403 = vpack.c.b16 %v1019, %v1003
    %v1404 = vpack.c.b16 %v1020, %v1004
    %v1405 = vpack.c.b16 %v1037, %v1021
    %v1406 = vpack.c.b16 %v1038, %v1022
    %v1407 = vpack.c.b16 %v1039, %v1023
    %v1408 = vpack.c.b16 %v1040, %v1024
    %v1409 = vpack.c.b16 %v1041, %v1025
    %v1410 = vpack.c.b16 %v1042, %v1026
    %v1411 = vpack.c.b16 %v1043, %v1027
    %v1412 = vpack.c.b16 %v1044, %v1028
    %v1413 = vpack.c.b16 %v1045, %v1029
    %v1414 = vpack.c.b16 %v1046, %v1030
    %v1415 = vpack.c.b16 %v1047, %v1031
    %v1416 = vpack.c.b16 %v1048, %v1032
    %v1417 = vpack.c.b16 %v1049, %v1033
    %v1418 = vpack.c.b16 %v1050, %v1034
    %v1419 = vpack.c.b16 %v1051, %v1035
    %v1420 = vpack.c.b16 %v1052, %v1036
    %v1421 = vpack.c.b16 %v1069, %v1053
    %v1422 = vpack.c.b16 %v1070, %v1054
    %v1423 = vpack.c.b16 %v1071, %v1055
    %v1424 = vpack.c.b16 %v1072, %v1056
    %v1425 = vpack.c.b16 %v1073, %v1057
    %v1426 = vpack.c.b16 %v1074, %v1058
    %v1427 = vpack.c.b16 %v1075, %v1059
    %v1428 = vpack.c.b16 %v1076, %v1060
    %v1429 = vpack.c.b16 %v1077, %v1061
    %v1430 = vpack.c.b16 %v1078, %v1062
    %v1431 = vpack.c.b16 %v1079, %v1063
    %v1432 = vpack.c.b16 %v1080, %v1064
    %v1433 = vpack.c.b16 %v1081, %v1065
    %v1434 = vpack.c.b16 %v1082, %v1066
    %v1435 = vpack.c.b16 %v1083, %v1067
    %v1436 = vpack.c.b16 %v1084, %v1068
    %v1437 = vpack.c.b16 %v1101, %v1085
    %v1438 = vpack.c.b16 %v1102, %v1086
    %v1439 = vpack.c.b16 %v1103, %v1087
    %v1440 = vpack.c.b16 %v1104, %v1088
    %v1441 = vpack.c.b16 %v1105, %v1089
    %v1442 = vpack.c.b16 %v1106, %v1090
    %v1443 = vpack.c.b16 %v1107, %v1091
    %v1444 = vpack.c.b16 %v1108, %v1092
    %v1445 = vpack.c.b16 %v1109, %v1093
    %v1446 = vpack.c.b16 %v1110, %v1094
    %v1447 = vpack.c.b16 %v1111, %v1095
    %v1448 = vpack.c.b16 %v1112, %v1096
    %v1449 = vpack.c.b16 %v1113, %v1097
    %v1450 = vpack.c.b16 %v1114, %v1098
    %v1451 = vpack.c.b16 %v1115, %v1099
    %v1452 = vpack.c.b16 %v1116, %v1100
    %v1453 = vpack.c.b16 %v1133, %v1117
    %v1454 = vpack.c.b16 %v1134, %v1118
    %v1455 = vpack.c.b16 %v1135, %v1119
    %v1456 = vpack.c.b16 %v1136, %v1120
    %v1457 = vpack.c.b16 %v1137, %v1121
    %v1458 = vpack.c.b16 %v1138, %v1122
    %v1459 = vpack.c.b16 %v1139, %v1123
    %v1460 = vpack.c.b16 %v1140, %v1124
    %v1461 = vpack.c.b16 %v1141, %v1125
    %v1462 = vpack.c.b16 %v1142, %v1126
    %v1463 = vpack.c.b16 %v1143, %v1127
    %v1464 = vpack.c.b16 %v1144, %v1128
    %v1465 = vpack.c.b16 %v1145, %v1129
    %v1466 = vpack.c.b16 %v1146, %v1130
    %v1467 = vpack.c.b16 %v1147, %v1131
    %v1468 = vpack.c.b16 %v1148, %v1132
    %v1469 = vpack.c.b16 %v1165, %v1149
    %v1470 = vpack.c.b16 %v1166, %v1150
    %v1471 = vpack.c.b16 %v1167, %v1151
    %v1472 = vpack.c.b16 %v1168, %v1152
    %v1473 = vpack.c.b16 %v1169, %v1153
    %v1474 = vpack.c.b16 %v1170, %v1154
    %v1475 = vpack.c.b16 %v1171, %v1155
    %v1476 = vpack.c.b16 %v1172, %v1156
    %v1477 = vpack.c.b16 %v1173, %v1157
    %v1478 = vpack.c.b16 %v1174, %v1158
    %v1479 = vpack.c.b16 %v1175, %v1159
    %v1480 = vpack.c.b16 %v1176, %v1160
    %v1481 = vpack.c.b16 %v1177, %v1161
    %v1482 = vpack.c.b16 %v1178, %v1162
    %v1483 = vpack.c.b16 %v1179, %v1163
    %v1484 = vpack.c.b16 %v1180, %v1164
    %v1485 = vpack.c.b16 %v1197, %v1181
    %v1486 = vpack.c.b16 %v1198, %v1182
    %v1487 = vpack.c.b16 %v1199, %v1183
    %v1488 = vpack.c.b16 %v1200, %v1184
    %v1489 = vpack.c.b16 %v1201, %v1185
    %v1490 = vpack.c.b16 %v1202, %v1186
    %v1491 = vpack.c.b16 %v1203, %v1187
    %v1492 = vpack.c.b16 %v1204, %v1188
    %v1493 = vpack.c.b16 %v1205, %v1189
    %v1494 = vpack.c.b16 %v1206, %v1190
    %v1495 = vpack.c.b16 %v1207, %v1191
    %v1496 = vpack.c.b16 %v1208, %v1192
    %v1497 = vpack.c.b16 %v1209, %v1193
    %v1498 = vpack.c.b16 %v1210, %v1194
    %v1499 = vpack.c.b16 %v1211, %v1195
    %v1500 = vpack.c.b16 %v1212, %v1196
    %v1501 = vpack.c.b16 %v1229, %v1213
    %v1502 = vpack.c.b16 %v1230, %v1214
    %v1503 = vpack.c.b16 %v1231, %v1215
    %v1504 = vpack.c.b16 %v1232, %v1216
    %v1505 = vpack.c.b16 %v1233, %v1217
    %v1506 = vpack.c.b16 %v1234, %v1218
    %v1507 = vpack.c.b16 %v1235, %v1219
    %v1508 = vpack.c.b16 %v1236, %v1220
    %v1509 = vpack.c.b16 %v1237, %v1221
    %v1510 = vpack.c.b16 %v1238, %v1222
    %v1511 = vpack.c.b16 %v1239, %v1223
    %v1512 = vpack.c.b16 %v1240, %v1224
    %v1513 = vpack.c.b16 %v1241, %v1225
    %v1514 = vpack.c.b16 %v1242, %v1226
    %v1515 = vpack.c.b16 %v1243, %v1227
    %v1516 = vpack.c.b16 %v1244, %v1228
    %v1517 = vpack.c.b16 %v1261, %v1245
    %v1518 = vpack.c.b16 %v1262, %v1246
    %v1519 = vpack.c.b16 %v1263, %v1247
    %v1520 = vpack.c.b16 %v1264, %v1248
    %v1521 = vpack.c.b16 %v1265, %v1249
    %v1522 = vpack.c.b16 %v1266, %v1250
    %v1523 = vpack.c.b16 %v1267, %v1251
    %v1524 = vpack.c.b16 %v1268, %v1252
    %v1525 = vpack.c.b16 %v1269, %v1253
    %v1526 = vpack.c.b16 %v1270, %v1254
    %v1527 = vpack.c.b16 %v1271, %v1255
    %v1528 = vpack.c.b16 %v1272, %v1256
    %v1529 = vpack.c.b16 %v1273, %v1257
    %v1530 = vpack.c.b16 %v1274, %v1258
    %v1531 = vpack.c.b16 %v1275, %v1259
    %v1532 = vpack.c.b16 %v1276, %v1260
    %1789 = vmatprep.subr.bf16.mxu0 %v1278
    %1790 = vmatpush1.bf16.msra.mxu0 %v1277
    %1791 = vmatprep.subr.bf16.mxu0 %v1294
    %1792 = vmatpush1.bf16.msra.mxu0 %v1293
    %1793 = vmatprep.subr.bf16.mxu0 %v1310
    %1794 = vmatpush1.bf16.msra.mxu0 %v1309
    %1795 = vmatprep.subr.bf16.mxu0 %v1326
    %1796 = vmatpush1.bf16.msra.mxu0 %v1325
    %1797 = vmatprep.subr.bf16.mxu0 %v1342
    %1798 = vmatpush1.bf16.msra.mxu0 %v1341
    %1799 = vmatprep.subr.bf16.mxu0 %v1358
    %1800 = vmatpush1.bf16.msra.mxu0 %v1357
    %1801 = vmatprep.subr.bf16.mxu0 %v1374
    %1802 = vmatpush1.bf16.msra.mxu0 %v1373
    %1803 = vmatprep.subr.bf16.mxu0 %v1390
    %1804 = vmatpush1.bf16.msra.mxu0 %v1389
    %1805 = vmatprep.subr.bf16.mxu0 %v1406
    %1806 = vmatpush1.bf16.msra.mxu0 %v1405
    %1807 = vmatprep.subr.bf16.mxu0 %v1422
    %1808 = vmatpush1.bf16.msra.mxu0 %v1421
    %1809 = vmatprep.subr.bf16.mxu0 %v1438
    %1810 = vmatpush1.bf16.msra.mxu0 %v1437
    %1811 = vmatprep.subr.bf16.mxu0 %v1454
    %1812 = vmatpush1.bf16.msra.mxu0 %v1453
    %1813 = vmatprep.subr.bf16.mxu0 %v1470
    %1814 = vmatpush1.bf16.msra.mxu0 %v1469
    %1815 = vmatprep.subr.bf16.mxu0 %v1486
    %1816 = vmatpush1.bf16.msra.mxu0 %v1485
    %1817 = vmatprep.subr.bf16.mxu0 %v1502
    %1818 = vmatpush1.bf16.msra.mxu0 %v1501
    %1819 = vmatprep.subr.bf16.mxu0 %v1518
    %1820 = vmatpush1.bf16.msra.mxu0 %v1517
    %1821 = vmatprep.mubr.bf16.mxu0 %v190
    %1822 = vmatmul.mubr.bf16.gmra.mrb[0].mxu0 %v189
    %v1823 = vpop.f32.mrb[0].mxu0
    %v1824 = vadd.f32 0.0, %v1823
    %v1825 = vpop.f32.mrb[0].mxu0
    %v1826 = vadd.f32 0.0, %v1825
    %v1827 = vpop.f32.mrb[0].mxu0
    %v1828 = vadd.f32 0.0, %v1827
    %v1829 = vpop.f32.mrb[0].mxu0
    %v1830 = vadd.f32 0.0, %v1829
    %1831 = vmatprep.mubr.bf16.mxu0 %v200
    %1832 = vmatmul.mubr.bf16.gmra.mrb[0].mxu0 %v199
    %v1833 = vpop.f32.mrb[0].mxu0
    %v1834 = vadd.f32 0.0, %v1833
    %v1835 = vpop.f32.mrb[0].mxu0
    %v1836 = vadd.f32 0.0, %v1835
    %v1837 = vpop.f32.mrb[0].mxu0
    %v1838 = vadd.f32 0.0, %v1837
    %v1839 = vpop.f32.mrb[0].mxu0
    %v1840 = vadd.f32 0.0, %v1839
    %1841 = vmatprep.mubr.bf16.mxu0 %v210
    %1842 = vmatmul.mubr.bf16.gmra.mrb[0].mxu0 %v209
    %v1843 = vpop.f32.mrb[0].mxu0
    %v1844 = vadd.f32 0.0, %v1843
    %v1845 = vpop.f32.mrb[0].mxu0
    %v1846 = vadd.f32 0.0, %v1845
    %v1847 = vpop.f32.mrb[0].mxu0
    %v1848 = vadd.f32 0.0, %v1847
    %v1849 = vpop.f32.mrb[0].mxu0
    %v1850 = vadd.f32 0.0, %v1849
    %1851 = vmatprep.mubr.bf16.mxu0 %v220
    %1852 = vmatmul.mubr.bf16.gmra.mrb[0].mxu0 %v219
    %v1853 = vpop.f32.mrb[0].mxu0
    %v1854 = vadd.f32 0.0, %v1853
    %v1855 = vpop.f32.mrb[0].mxu0
    %v1856 = vadd.f32 0.0, %v1855
    %v1857 = vpop.f32.mrb[0].mxu0
    %v1858 = vadd.f32 0.0, %v1857
    %v1859 = vpop.f32.mrb[0].mxu0
    %v1860 = vadd.f32 0.0, %v1859
    %1861 = vmatprep.mubr.bf16.mxu0 %v230
    %1862 = vmatmul.mubr.bf16.gmra.mrb[0].mxu0 %v229
    %v1863 = vpop.f32.mrb[0].mxu0
    %v1864 = vadd.f32 0.0, %v1863
    %v1865 = vpop.f32.mrb[0].mxu0
    %v1866 = vadd.f32 0.0, %v1865
    %v1867 = vpop.f32.mrb[0].mxu0
    %v1868 = vadd.f32 0.0, %v1867
    %v1869 = vpop.f32.mrb[0].mxu0
    %v1870 = vadd.f32 0.0, %v1869
    %1871 = vmatprep.mubr.bf16.mxu0 %v240
    %1872 = vmatmul.mubr.bf16.gmra.mrb[0].mxu0 %v239
    %v1873 = vpop.f32.mrb[0].mxu0
    %v1874 = vadd.f32 0.0, %v1873
    %v1875 = vpop.f32.mrb[0].mxu0
    %v1876 = vadd.f32 0.0, %v1875
    %v1877 = vpop.f32.mrb[0].mxu0
    %v1878 = vadd.f32 0.0, %v1877
    %v1879 = vpop.f32.mrb[0].mxu0
    %v1880 = vadd.f32 0.0, %v1879
    %1881 = vmatprep.mubr.bf16.mxu0 %v250
    %1882 = vmatmul.mubr.bf16.gmra.mrb[0].mxu0 %v249
    %v1883 = vpop.f32.mrb[0].mxu0
    %v1884 = vadd.f32 0.0, %v1883
    %v1885 = vpop.f32.mrb[0].mxu0
    %v1886 = vadd.f32 0.0, %v1885
    %v1887 = vpop.f32.mrb[0].mxu0
    %v1888 = vadd.f32 0.0, %v1887
    %v1889 = vpop.f32.mrb[0].mxu0
    %v1890 = vadd.f32 0.0, %v1889
    %1891 = vdwg.mxu0
    %1892 = vmatprep.subr.bf16.mxu0 %v1280
    %1893 = vmatpush1.bf16.msra.mxu0 %v1279
    %1894 = vmatprep.subr.bf16.mxu0 %v1296
    %1895 = vmatpush1.bf16.msra.mxu0 %v1295
    %1896 = vmatprep.subr.bf16.mxu0 %v1312
    %1897 = vmatpush1.bf16.msra.mxu0 %v1311
    %1898 = vmatprep.subr.bf16.mxu0 %v1328
    %1899 = vmatpush1.bf16.msra.mxu0 %v1327
    %1900 = vmatprep.subr.bf16.mxu0 %v1344
    %1901 = vmatpush1.bf16.msra.mxu0 %v1343
    %1902 = vmatprep.subr.bf16.mxu0 %v1360
    %1903 = vmatpush1.bf16.msra.mxu0 %v1359
    %1904 = vmatprep.subr.bf16.mxu0 %v1376
    %1905 = vmatpush1.bf16.msra.mxu0 %v1375
    %1906 = vmatprep.subr.bf16.mxu0 %v1392
    %1907 = vmatpush1.bf16.msra.mxu0 %v1391
    %1908 = vmatprep.subr.bf16.mxu0 %v1408
    %1909 = vmatpush1.bf16.msra.mxu0 %v1407
    %1910 = vmatprep.subr.bf16.mxu0 %v1424
    %1911 = vmatpush1.bf16.msra.mxu0 %v1423
    %1912 = vmatprep.subr.bf16.mxu0 %v1440
    %1913 = vmatpush1.bf16.msra.mxu0 %v1439
    %1914 = vmatprep.subr.bf16.mxu0 %v1456
    %1915 = vmatpush1.bf16.msra.mxu0 %v1455
    %1916 = vmatprep.subr.bf16.mxu0 %v1472
    %1917 = vmatpush1.bf16.msra.mxu0 %v1471
    %1918 = vmatprep.subr.bf16.mxu0 %v1488
    %1919 = vmatpush1.bf16.msra.mxu0 %v1487
    %1920 = vmatprep.subr.bf16.mxu0 %v1504
    %1921 = vmatpush1.bf16.msra.mxu0 %v1503
    %1922 = vmatprep.subr.bf16.mxu0 %v1520
    %1923 = vmatpush1.bf16.msra.mxu0 %v1519
    %1924 = vmatprep.mubr.bf16.mxu0 %v190
    %1925 = vmatmul.mubr.bf16.gmra.mrb[0].mxu0 %v189
    %v1926 = vpop.f32.mrb[0].mxu0
    %v1927 = vadd.f32 0.0, %v1926
    %v1928 = vpop.f32.mrb[0].mxu0
    %v1929 = vadd.f32 0.0, %v1928
    %v1930 = vpop.f32.mrb[0].mxu0
    %v1931 = vadd.f32 0.0, %v1930
    %v1932 = vpop.f32.mrb[0].mxu0
    %v1933 = vadd.f32 0.0, %v1932
    %1934 = vmatprep.mubr.bf16.mxu0 %v200
    %1935 = vmatmul.mubr.bf16.gmra.mrb[0].mxu0 %v199
    %v1936 = vpop.f32.mrb[0].mxu0
    %v1937 = vadd.f32 0.0, %v1936
    %v1938 = vpop.f32.mrb[0].mxu0
    %v1939 = vadd.f32 0.0, %v1938
    %v1940 = vpop.f32.mrb[0].mxu0
    %v1941 = vadd.f32 0.0, %v1940
    %v1942 = vpop.f32.mrb[0].mxu0
    %v1943 = vadd.f32 0.0, %v1942
    %1944 = vmatprep.mubr.bf16.mxu0 %v210
    %1945 = vmatmul.mubr.bf16.gmra.mrb[0].mxu0 %v209
    %v1946 = vpop.f32.mrb[0].mxu0
    %v1947 = vadd.f32 0.0, %v1946
    %v1948 = vpop.f32.mrb[0].mxu0
    %v1949 = vadd.f32 0.0, %v1948
    %v1950 = vpop.f32.mrb[0].mxu0
    %v1951 = vadd.f32 0.0, %v1950
    %v1952 = vpop.f32.mrb[0].mxu0
    %v1953 = vadd.f32 0.0, %v1952
    %1954 = vmatprep.mubr.bf16.mxu0 %v220
    %1955 = vmatmul.mubr.bf16.gmra.mrb[0].mxu0 %v219
    %v1956 = vpop.f32.mrb[0].mxu0
    %v1957 = vadd.f32 0.0, %v1956
    %v1958 = vpop.f32.mrb[0].mxu0
    %v1959 = vadd.f32 0.0, %v1958
    %v1960 = vpop.f32.mrb[0].mxu0
    %v1961 = vadd.f32 0.0, %v1960
    %v1962 = vpop.f32.mrb[0].mxu0
    %v1963 = vadd.f32 0.0, %v1962
    %1964 = vmatprep.mubr.bf16.mxu0 %v230
    %1965 = vmatmul.mubr.bf16.gmra.mrb[0].mxu0 %v229
    %v1966 = vpop.f32.mrb[0].mxu0
    %v1967 = vadd.f32 0.0, %v1966
    %v1968 = vpop.f32.mrb[0].mxu0
    %v1969 = vadd.f32 0.0, %v1968
    %v1970 = vpop.f32.mrb[0].mxu0
    %v1971 = vadd.f32 0.0, %v1970
    %v1972 = vpop.f32.mrb[0].mxu0
    %v1973 = vadd.f32 0.0, %v1972
    %1974 = vmatprep.mubr.bf16.mxu0 %v240
    %1975 = vmatmul.mubr.bf16.gmra.mrb[0].mxu0 %v239
    %v1976 = vpop.f32.mrb[0].mxu0
    %v1977 = vadd.f32 0.0, %v1976
    %v1978 = vpop.f32.mrb[0].mxu0
    %v1979 = vadd.f32 0.0, %v1978
    %v1980 = vpop.f32.mrb[0].mxu0
    %v1981 = vadd.f32 0.0, %v1980
    %v1982 = vpop.f32.mrb[0].mxu0
    %v1983 = vadd.f32 0.0, %v1982
    %1984 = vmatprep.mubr.bf16.mxu0 %v250
    %1985 = vmatmul.mubr.bf16.gmra.mrb[0].mxu0 %v249
    %v1986 = vpop.f32.mrb[0].mxu0
    %v1987 = vadd.f32 0.0, %v1986
    %v1988 = vpop.f32.mrb[0].mxu0
    %v1989 = vadd.f32 0.0, %v1988
    %v1990 = vpop.f32.mrb[0].mxu0
    %v1991 = vadd.f32 0.0, %v1990
    %v1992 = vpop.f32.mrb[0].mxu0
    %v1993 = vadd.f32 0.0, %v1992
    %1994 = vdwg.mxu0
    %1995 = vmatprep.subr.bf16.mxu0 %v1282
    %1996 = vmatpush1.bf16.msra.mxu0 %v1281
    %1997 = vmatprep.subr.bf16.mxu0 %v1298
    %1998 = vmatpush1.bf16.msra.mxu0 %v1297
    %1999 = vmatprep.subr.bf16.mxu0 %v1314
    %2000 = vmatpush1.bf16.msra.mxu0 %v1313
    %2001 = vmatprep.subr.bf16.mxu0 %v1330
    %2002 = vmatpush1.bf16.msra.mxu0 %v1329
    %2003 = vmatprep.subr.bf16.mxu0 %v1346
    %2004 = vmatpush1.bf16.msra.mxu0 %v1345
    %2005 = vmatprep.subr.bf16.mxu0 %v1362
    %2006 = vmatpush1.bf16.msra.mxu0 %v1361
    %2007 = vmatprep.subr.bf16.mxu0 %v1378
    %2008 = vmatpush1.bf16.msra.mxu0 %v1377
    %2009 = vmatprep.subr.bf16.mxu0 %v1394
    %2010 = vmatpush1.bf16.msra.mxu0 %v1393
    %2011 = vmatprep.subr.bf16.mxu0 %v1410
    %2012 = vmatpush1.bf16.msra.mxu0 %v1409
    %2013 = vmatprep.subr.bf16.mxu0 %v1426
    %2014 = vmatpush1.bf16.msra.mxu0 %v1425
    %2015 = vmatprep.subr.bf16.mxu0 %v1442
    %2016 = vmatpush1.bf16.msra.mxu0 %v1441
    %2017 = vmatprep.subr.bf16.mxu0 %v1458
    %2018 = vmatpush1.bf16.msra.mxu0 %v1457
    %2019 = vmatprep.subr.bf16.mxu0 %v1474
    %2020 = vmatpush1.bf16.msra.mxu0 %v1473
    %2021 = vmatprep.subr.bf16.mxu0 %v1490
    %2022 = vmatpush1.bf16.msra.mxu0 %v1489
    %2023 = vmatprep.subr.bf16.mxu0 %v1506
    %2024 = vmatpush1.bf16.msra.mxu0 %v1505
    %2025 = vmatprep.subr.bf16.mxu0 %v1522
    %2026 = vmatpush1.bf16.msra.mxu0 %v1521
    %2027 = vmatprep.mubr.bf16.mxu0 %v190
    %2028 = vmatmul.mubr.bf16.gmra.mrb[0].mxu0 %v189
    %v2029 = vpop.f32.mrb[0].mxu0
    %v2030 = vadd.f32 0.0, %v2029
    %v2031 = vpop.f32.mrb[0].mxu0
    %v2032 = vadd.f32 0.0, %v2031
    %v2033 = vpop.f32.mrb[0].mxu0
    %v2034 = vadd.f32 0.0, %v2033
    %v2035 = vpop.f32.mrb[0].mxu0
    %v2036 = vadd.f32 0.0, %v2035
    %2037 = vmatprep.mubr.bf16.mxu0 %v200
    %2038 = vmatmul.mubr.bf16.gmra.mrb[0].mxu0 %v199
    %v2039 = vpop.f32.mrb[0].mxu0
    %v2040 = vadd.f32 0.0, %v2039
    %v2041 = vpop.f32.mrb[0].mxu0
    %v2042 = vadd.f32 0.0, %v2041
    %v2043 = vpop.f32.mrb[0].mxu0
    %v2044 = vadd.f32 0.0, %v2043
    %v2045 = vpop.f32.mrb[0].mxu0
    %v2046 = vadd.f32 0.0, %v2045
    %2047 = vmatprep.mubr.bf16.mxu0 %v210
    %2048 = vmatmul.mubr.bf16.gmra.mrb[0].mxu0 %v209
    %v2049 = vpop.f32.mrb[0].mxu0
    %v2050 = vadd.f32 0.0, %v2049
    %v2051 = vpop.f32.mrb[0].mxu0
    %v2052 = vadd.f32 0.0, %v2051
    %v2053 = vpop.f32.mrb[0].mxu0
    %v2054 = vadd.f32 0.0, %v2053
    %v2055 = vpop.f32.mrb[0].mxu0
    %v2056 = vadd.f32 0.0, %v2055
    %2057 = vmatprep.mubr.bf16.mxu0 %v220
    %2058 = vmatmul.mubr.bf16.gmra.mrb[0].mxu0 %v219
    %v2059 = vpop.f32.mrb[0].mxu0
    %v2060 = vadd.f32 0.0, %v2059
    %v2061 = vpop.f32.mrb[0].mxu0
    %v2062 = vadd.f32 0.0, %v2061
    %v2063 = vpop.f32.mrb[0].mxu0
    %v2064 = vadd.f32 0.0, %v2063
    %v2065 = vpop.f32.mrb[0].mxu0
    %v2066 = vadd.f32 0.0, %v2065
    %2067 = vmatprep.mubr.bf16.mxu0 %v230
    %2068 = vmatmul.mubr.bf16.gmra.mrb[0].mxu0 %v229
    %v2069 = vpop.f32.mrb[0].mxu0
    %v2070 = vadd.f32 0.0, %v2069
    %v2071 = vpop.f32.mrb[0].mxu0
    %v2072 = vadd.f32 0.0, %v2071
    %v2073 = vpop.f32.mrb[0].mxu0
    %v2074 = vadd.f32 0.0, %v2073
    %v2075 = vpop.f32.mrb[0].mxu0
    %v2076 = vadd.f32 0.0, %v2075
    %2077 = vmatprep.mubr.bf16.mxu0 %v240
    %2078 = vmatmul.mubr.bf16.gmra.mrb[0].mxu0 %v239
    %v2079 = vpop.f32.mrb[0].mxu0
    %v2080 = vadd.f32 0.0, %v2079
    %v2081 = vpop.f32.mrb[0].mxu0
    %v2082 = vadd.f32 0.0, %v2081
    %v2083 = vpop.f32.mrb[0].mxu0
    %v2084 = vadd.f32 0.0, %v2083
    %v2085 = vpop.f32.mrb[0].mxu0
    %v2086 = vadd.f32 0.0, %v2085
    %2087 = vmatprep.mubr.bf16.mxu0 %v250
    %2088 = vmatmul.mubr.bf16.gmra.mrb[0].mxu0 %v249
    %v2089 = vpop.f32.mrb[0].mxu0
    %v2090 = vadd.f32 0.0, %v2089
    %v2091 = vpop.f32.mrb[0].mxu0
    %v2092 = vadd.f32 0.0, %v2091
    %v2093 = vpop.f32.mrb[0].mxu0
    %v2094 = vadd.f32 0.0, %v2093
    %v2095 = vpop.f32.mrb[0].mxu0
    %v2096 = vadd.f32 0.0, %v2095
    %2097 = vdwg.mxu0
    %2098 = vmatprep.subr.bf16.mxu0 %v1284
    %2099 = vmatpush1.bf16.msra.mxu0 %v1283
    %2100 = vmatprep.subr.bf16.mxu0 %v1300
    %2101 = vmatpush1.bf16.msra.mxu0 %v1299
    %2102 = vmatprep.subr.bf16.mxu0 %v1316
    %2103 = vmatpush1.bf16.msra.mxu0 %v1315
    %2104 = vmatprep.subr.bf16.mxu0 %v1332
    %2105 = vmatpush1.bf16.msra.mxu0 %v1331
    %2106 = vmatprep.subr.bf16.mxu0 %v1348
    %2107 = vmatpush1.bf16.msra.mxu0 %v1347
    %2108 = vmatprep.subr.bf16.mxu0 %v1364
    %2109 = vmatpush1.bf16.msra.mxu0 %v1363
    %2110 = vmatprep.subr.bf16.mxu0 %v1380
    %2111 = vmatpush1.bf16.msra.mxu0 %v1379
    %2112 = vmatprep.subr.bf16.mxu0 %v1396
    %2113 = vmatpush1.bf16.msra.mxu0 %v1395
    %2114 = vmatprep.subr.bf16.mxu0 %v1412
    %2115 = vmatpush1.bf16.msra.mxu0 %v1411
    %2116 = vmatprep.subr.bf16.mxu0 %v1428
    %2117 = vmatpush1.bf16.msra.mxu0 %v1427
    %2118 = vmatprep.subr.bf16.mxu0 %v1444
    %2119 = vmatpush1.bf16.msra.mxu0 %v1443
    %2120 = vmatprep.subr.bf16.mxu0 %v1460
    %2121 = vmatpush1.bf16.msra.mxu0 %v1459
    %2122 = vmatprep.subr.bf16.mxu0 %v1476
    %2123 = vmatpush1.bf16.msra.mxu0 %v1475
    %2124 = vmatprep.subr.bf16.mxu0 %v1492
    %2125 = vmatpush1.bf16.msra.mxu0 %v1491
    %2126 = vmatprep.subr.bf16.mxu0 %v1508
    %2127 = vmatpush1.bf16.msra.mxu0 %v1507
    %2128 = vmatprep.subr.bf16.mxu0 %v1524
    %2129 = vmatpush1.bf16.msra.mxu0 %v1523
    %2130 = vmatprep.mubr.bf16.mxu0 %v190
    %2131 = vmatmul.mubr.bf16.gmra.mrb[0].mxu0 %v189
    %v2132 = vpop.f32.mrb[0].mxu0
    %v2133 = vadd.f32 0.0, %v2132
    %v2134 = vpop.f32.mrb[0].mxu0
    %v2135 = vadd.f32 0.0, %v2134
    %v2136 = vpop.f32.mrb[0].mxu0
    %v2137 = vadd.f32 0.0, %v2136
    %v2138 = vpop.f32.mrb[0].mxu0
    %v2139 = vadd.f32 0.0, %v2138
    %2140 = vmatprep.mubr.bf16.mxu0 %v200
    %2141 = vmatmul.mubr.bf16.gmra.mrb[0].mxu0 %v199
    %v2142 = vpop.f32.mrb[0].mxu0
    %v2143 = vadd.f32 0.0, %v2142
    %v2144 = vpop.f32.mrb[0].mxu0
    %v2145 = vadd.f32 0.0, %v2144
    %v2146 = vpop.f32.mrb[0].mxu0
    %v2147 = vadd.f32 0.0, %v2146
    %v2148 = vpop.f32.mrb[0].mxu0
    %v2149 = vadd.f32 0.0, %v2148
    %2150 = vmatprep.mubr.bf16.mxu0 %v210
    %2151 = vmatmul.mubr.bf16.gmra.mrb[0].mxu0 %v209
    %v2152 = vpop.f32.mrb[0].mxu0
    %v2153 = vadd.f32 0.0, %v2152
    %v2154 = vpop.f32.mrb[0].mxu0
    %v2155 = vadd.f32 0.0, %v2154
    %v2156 = vpop.f32.mrb[0].mxu0
    %v2157 = vadd.f32 0.0, %v2156
    %v2158 = vpop.f32.mrb[0].mxu0
    %v2159 = vadd.f32 0.0, %v2158
    %2160 = vmatprep.mubr.bf16.mxu0 %v220
    %2161 = vmatmul.mubr.bf16.gmra.mrb[0].mxu0 %v219
    %v2162 = vpop.f32.mrb[0].mxu0
    %v2163 = vadd.f32 0.0, %v2162
    %v2164 = vpop.f32.mrb[0].mxu0
    %v2165 = vadd.f32 0.0, %v2164
    %v2166 = vpop.f32.mrb[0].mxu0
    %v2167 = vadd.f32 0.0, %v2166
    %v2168 = vpop.f32.mrb[0].mxu0
    %v2169 = vadd.f32 0.0, %v2168
    %2170 = vmatprep.mubr.bf16.mxu0 %v230
    %2171 = vmatmul.mubr.bf16.gmra.mrb[0].mxu0 %v229
    %v2172 = vpop.f32.mrb[0].mxu0
    %v2173 = vadd.f32 0.0, %v2172
    %v2174 = vpop.f32.mrb[0].mxu0
    %v2175 = vadd.f32 0.0, %v2174
    %v2176 = vpop.f32.mrb[0].mxu0
    %v2177 = vadd.f32 0.0, %v2176
    %v2178 = vpop.f32.mrb[0].mxu0
    %v2179 = vadd.f32 0.0, %v2178
    %2180 = vmatprep.mubr.bf16.mxu0 %v240
    %2181 = vmatmul.mubr.bf16.gmra.mrb[0].mxu0 %v239
    %v2182 = vpop.f32.mrb[0].mxu0
    %v2183 = vadd.f32 0.0, %v2182
    %v2184 = vpop.f32.mrb[0].mxu0
    %v2185 = vadd.f32 0.0, %v2184
    %v2186 = vpop.f32.mrb[0].mxu0
    %v2187 = vadd.f32 0.0, %v2186
    %v2188 = vpop.f32.mrb[0].mxu0
    %v2189 = vadd.f32 0.0, %v2188
    %2190 = vmatprep.mubr.bf16.mxu0 %v250
    %2191 = vmatmul.mubr.bf16.gmra.mrb[0].mxu0 %v249
    %v2192 = vpop.f32.mrb[0].mxu0
    %v2193 = vadd.f32 0.0, %v2192
    %v2194 = vpop.f32.mrb[0].mxu0
    %v2195 = vadd.f32 0.0, %v2194
    %v2196 = vpop.f32.mrb[0].mxu0
    %v2197 = vadd.f32 0.0, %v2196
    %v2198 = vpop.f32.mrb[0].mxu0
    %v2199 = vadd.f32 0.0, %v2198
    %2200 = vdwg.mxu0
    %2201 = vmatprep.subr.bf16.mxu0 %v1286
    %2202 = vmatpush1.bf16.msra.mxu0 %v1285
    %2203 = vmatprep.subr.bf16.mxu0 %v1302
    %2204 = vmatpush1.bf16.msra.mxu0 %v1301
    %2205 = vmatprep.subr.bf16.mxu0 %v1318
    %2206 = vmatpush1.bf16.msra.mxu0 %v1317
    %2207 = vmatprep.subr.bf16.mxu0 %v1334
    %2208 = vmatpush1.bf16.msra.mxu0 %v1333
    %2209 = vmatprep.subr.bf16.mxu0 %v1350
    %2210 = vmatpush1.bf16.msra.mxu0 %v1349
    %2211 = vmatprep.subr.bf16.mxu0 %v1366
    %2212 = vmatpush1.bf16.msra.mxu0 %v1365
    %2213 = vmatprep.subr.bf16.mxu0 %v1382
    %2214 = vmatpush1.bf16.msra.mxu0 %v1381
    %2215 = vmatprep.subr.bf16.mxu0 %v1398
    %2216 = vmatpush1.bf16.msra.mxu0 %v1397
    %2217 = vmatprep.subr.bf16.mxu0 %v1414
    %2218 = vmatpush1.bf16.msra.mxu0 %v1413
    %2219 = vmatprep.subr.bf16.mxu0 %v1430
    %2220 = vmatpush1.bf16.msra.mxu0 %v1429
    %2221 = vmatprep.subr.bf16.mxu0 %v1446
    %2222 = vmatpush1.bf16.msra.mxu0 %v1445
    %2223 = vmatprep.subr.bf16.mxu0 %v1462
    %2224 = vmatpush1.bf16.msra.mxu0 %v1461
    %2225 = vmatprep.subr.bf16.mxu0 %v1478
    %2226 = vmatpush1.bf16.msra.mxu0 %v1477
    %2227 = vmatprep.subr.bf16.mxu0 %v1494
    %2228 = vmatpush1.bf16.msra.mxu0 %v1493
    %2229 = vmatprep.subr.bf16.mxu0 %v1510
    %2230 = vmatpush1.bf16.msra.mxu0 %v1509
    %2231 = vmatprep.subr.bf16.mxu0 %v1526
    %2232 = vmatpush1.bf16.msra.mxu0 %v1525
    %2233 = vmatprep.mubr.bf16.mxu0 %v190
    %2234 = vmatmul.mubr.bf16.gmra.mrb[0].mxu0 %v189
    %v2235 = vpop.f32.mrb[0].mxu0
    %v2236 = vadd.f32 0.0, %v2235
    %v2237 = vpop.f32.mrb[0].mxu0
    %v2238 = vadd.f32 0.0, %v2237
    %v2239 = vpop.f32.mrb[0].mxu0
    %v2240 = vadd.f32 0.0, %v2239
    %v2241 = vpop.f32.mrb[0].mxu0
    %v2242 = vadd.f32 0.0, %v2241
    %2243 = vmatprep.mubr.bf16.mxu0 %v200
    %2244 = vmatmul.mubr.bf16.gmra.mrb[0].mxu0 %v199
    %v2245 = vpop.f32.mrb[0].mxu0
    %v2246 = vadd.f32 0.0, %v2245
    %v2247 = vpop.f32.mrb[0].mxu0
    %v2248 = vadd.f32 0.0, %v2247
    %v2249 = vpop.f32.mrb[0].mxu0
    %v2250 = vadd.f32 0.0, %v2249
    %v2251 = vpop.f32.mrb[0].mxu0
    %v2252 = vadd.f32 0.0, %v2251
    %2253 = vmatprep.mubr.bf16.mxu0 %v210
    %2254 = vmatmul.mubr.bf16.gmra.mrb[0].mxu0 %v209
    %v2255 = vpop.f32.mrb[0].mxu0
    %v2256 = vadd.f32 0.0, %v2255
    %v2257 = vpop.f32.mrb[0].mxu0
    %v2258 = vadd.f32 0.0, %v2257
    %v2259 = vpop.f32.mrb[0].mxu0
    %v2260 = vadd.f32 0.0, %v2259
    %v2261 = vpop.f32.mrb[0].mxu0
    %v2262 = vadd.f32 0.0, %v2261
    %2263 = vmatprep.mubr.bf16.mxu0 %v220
    %2264 = vmatmul.mubr.bf16.gmra.mrb[0].mxu0 %v219
    %v2265 = vpop.f32.mrb[0].mxu0
    %v2266 = vadd.f32 0.0, %v2265
    %v2267 = vpop.f32.mrb[0].mxu0
    %v2268 = vadd.f32 0.0, %v2267
    %v2269 = vpop.f32.mrb[0].mxu0
    %v2270 = vadd.f32 0.0, %v2269
    %v2271 = vpop.f32.mrb[0].mxu0
    %v2272 = vadd.f32 0.0, %v2271
    %2273 = vmatprep.mubr.bf16.mxu0 %v230
    %2274 = vmatmul.mubr.bf16.gmra.mrb[0].mxu0 %v229
    %v2275 = vpop.f32.mrb[0].mxu0
    %v2276 = vadd.f32 0.0, %v2275
    %v2277 = vpop.f32.mrb[0].mxu0
    %v2278 = vadd.f32 0.0, %v2277
    %v2279 = vpop.f32.mrb[0].mxu0
    %v2280 = vadd.f32 0.0, %v2279
    %v2281 = vpop.f32.mrb[0].mxu0
    %v2282 = vadd.f32 0.0, %v2281
    %2283 = vmatprep.mubr.bf16.mxu0 %v240
    %2284 = vmatmul.mubr.bf16.gmra.mrb[0].mxu0 %v239
    %v2285 = vpop.f32.mrb[0].mxu0
    %v2286 = vadd.f32 0.0, %v2285
    %v2287 = vpop.f32.mrb[0].mxu0
    %v2288 = vadd.f32 0.0, %v2287
    %v2289 = vpop.f32.mrb[0].mxu0
    %v2290 = vadd.f32 0.0, %v2289
    %v2291 = vpop.f32.mrb[0].mxu0
    %v2292 = vadd.f32 0.0, %v2291
    %2293 = vmatprep.mubr.bf16.mxu0 %v250
    %2294 = vmatmul.mubr.bf16.gmra.mrb[0].mxu0 %v249
    %v2295 = vpop.f32.mrb[0].mxu0
    %v2296 = vadd.f32 0.0, %v2295
    %v2297 = vpop.f32.mrb[0].mxu0
    %v2298 = vadd.f32 0.0, %v2297
    %v2299 = vpop.f32.mrb[0].mxu0
    %v2300 = vadd.f32 0.0, %v2299
    %v2301 = vpop.f32.mrb[0].mxu0
    %v2302 = vadd.f32 0.0, %v2301
    %2303 = vdwg.mxu0
    %2304 = vmatprep.subr.bf16.mxu0 %v1288
    %2305 = vmatpush1.bf16.msra.mxu0 %v1287
    %2306 = vmatprep.subr.bf16.mxu0 %v1304
    %2307 = vmatpush1.bf16.msra.mxu0 %v1303
    %2308 = vmatprep.subr.bf16.mxu0 %v1320
    %2309 = vmatpush1.bf16.msra.mxu0 %v1319
    %2310 = vmatprep.subr.bf16.mxu0 %v1336
    %2311 = vmatpush1.bf16.msra.mxu0 %v1335
    %2312 = vmatprep.subr.bf16.mxu0 %v1352
    %2313 = vmatpush1.bf16.msra.mxu0 %v1351
    %2314 = vmatprep.subr.bf16.mxu0 %v1368
    %2315 = vmatpush1.bf16.msra.mxu0 %v1367
    %2316 = vmatprep.subr.bf16.mxu0 %v1384
    %2317 = vmatpush1.bf16.msra.mxu0 %v1383
    %2318 = vmatprep.subr.bf16.mxu0 %v1400
    %2319 = vmatpush1.bf16.msra.mxu0 %v1399
    %2320 = vmatprep.subr.bf16.mxu0 %v1416
    %2321 = vmatpush1.bf16.msra.mxu0 %v1415
    %2322 = vmatprep.subr.bf16.mxu0 %v1432
    %2323 = vmatpush1.bf16.msra.mxu0 %v1431
    %2324 = vmatprep.subr.bf16.mxu0 %v1448
    %2325 = vmatpush1.bf16.msra.mxu0 %v1447
    %2326 = vmatprep.subr.bf16.mxu0 %v1464
    %2327 = vmatpush1.bf16.msra.mxu0 %v1463
    %2328 = vmatprep.subr.bf16.mxu0 %v1480
    %2329 = vmatpush1.bf16.msra.mxu0 %v1479
    %2330 = vmatprep.subr.bf16.mxu0 %v1496
    %2331 = vmatpush1.bf16.msra.mxu0 %v1495
    %2332 = vmatprep.subr.bf16.mxu0 %v1512
    %2333 = vmatpush1.bf16.msra.mxu0 %v1511
    %2334 = vmatprep.subr.bf16.mxu0 %v1528
    %2335 = vmatpush1.bf16.msra.mxu0 %v1527
    %2336 = vmatprep.mubr.bf16.mxu0 %v190
    %2337 = vmatmul.mubr.bf16.gmra.mrb[0].mxu0 %v189
    %v2338 = vpop.f32.mrb[0].mxu0
    %v2339 = vadd.f32 0.0, %v2338
    %v2340 = vpop.f32.mrb[0].mxu0
    %v2341 = vadd.f32 0.0, %v2340
    %v2342 = vpop.f32.mrb[0].mxu0
    %v2343 = vadd.f32 0.0, %v2342
    %v2344 = vpop.f32.mrb[0].mxu0
    %v2345 = vadd.f32 0.0, %v2344
    %2346 = vmatprep.mubr.bf16.mxu0 %v200
    %2347 = vmatmul.mubr.bf16.gmra.mrb[0].mxu0 %v199
    %v2348 = vpop.f32.mrb[0].mxu0
    %v2349 = vadd.f32 0.0, %v2348
    %v2350 = vpop.f32.mrb[0].mxu0
    %v2351 = vadd.f32 0.0, %v2350
    %v2352 = vpop.f32.mrb[0].mxu0
    %v2353 = vadd.f32 0.0, %v2352
    %v2354 = vpop.f32.mrb[0].mxu0
    %v2355 = vadd.f32 0.0, %v2354
    %2356 = vmatprep.mubr.bf16.mxu0 %v210
    %2357 = vmatmul.mubr.bf16.gmra.mrb[0].mxu0 %v209
    %v2358 = vpop.f32.mrb[0].mxu0
    %v2359 = vadd.f32 0.0, %v2358
    %v2360 = vpop.f32.mrb[0].mxu0
    %v2361 = vadd.f32 0.0, %v2360
    %v2362 = vpop.f32.mrb[0].mxu0
    %v2363 = vadd.f32 0.0, %v2362
    %v2364 = vpop.f32.mrb[0].mxu0
    %v2365 = vadd.f32 0.0, %v2364
    %2366 = vmatprep.mubr.bf16.mxu0 %v220
    %2367 = vmatmul.mubr.bf16.gmra.mrb[0].mxu0 %v219
    %v2368 = vpop.f32.mrb[0].mxu0
    %v2369 = vadd.f32 0.0, %v2368
    %v2370 = vpop.f32.mrb[0].mxu0
    %v2371 = vadd.f32 0.0, %v2370
    %v2372 = vpop.f32.mrb[0].mxu0
    %v2373 = vadd.f32 0.0, %v2372
    %v2374 = vpop.f32.mrb[0].mxu0
    %v2375 = vadd.f32 0.0, %v2374
    %2376 = vmatprep.mubr.bf16.mxu0 %v230
    %2377 = vmatmul.mubr.bf16.gmra.mrb[0].mxu0 %v229
    %v2378 = vpop.f32.mrb[0].mxu0
    %v2379 = vadd.f32 0.0, %v2378
    %v2380 = vpop.f32.mrb[0].mxu0
    %v2381 = vadd.f32 0.0, %v2380
    %v2382 = vpop.f32.mrb[0].mxu0
    %v2383 = vadd.f32 0.0, %v2382
    %v2384 = vpop.f32.mrb[0].mxu0
    %v2385 = vadd.f32 0.0, %v2384
    %2386 = vmatprep.mubr.bf16.mxu0 %v240
    %2387 = vmatmul.mubr.bf16.gmra.mrb[0].mxu0 %v239
    %v2388 = vpop.f32.mrb[0].mxu0
    %v2389 = vadd.f32 0.0, %v2388
    %v2390 = vpop.f32.mrb[0].mxu0
    %v2391 = vadd.f32 0.0, %v2390
    %v2392 = vpop.f32.mrb[0].mxu0
    %v2393 = vadd.f32 0.0, %v2392
    %v2394 = vpop.f32.mrb[0].mxu0
    %v2395 = vadd.f32 0.0, %v2394
    %2396 = vmatprep.mubr.bf16.mxu0 %v250
    %2397 = vmatmul.mubr.bf16.gmra.mrb[0].mxu0 %v249
    %v2398 = vpop.f32.mrb[0].mxu0
    %v2399 = vadd.f32 0.0, %v2398
    %v2400 = vpop.f32.mrb[0].mxu0
    %v2401 = vadd.f32 0.0, %v2400
    %v2402 = vpop.f32.mrb[0].mxu0
    %v2403 = vadd.f32 0.0, %v2402
    %v2404 = vpop.f32.mrb[0].mxu0
    %v2405 = vadd.f32 0.0, %v2404
    %2406 = vdwg.mxu0
    %2407 = vmatprep.subr.bf16.mxu0 %v1290
    %2408 = vmatpush1.bf16.msra.mxu0 %v1289
    %2409 = vmatprep.subr.bf16.mxu0 %v1306
    %2410 = vmatpush1.bf16.msra.mxu0 %v1305
    %2411 = vmatprep.subr.bf16.mxu0 %v1322
    %2412 = vmatpush1.bf16.msra.mxu0 %v1321
    %2413 = vmatprep.subr.bf16.mxu0 %v1338
    %2414 = vmatpush1.bf16.msra.mxu0 %v1337
    %2415 = vmatprep.subr.bf16.mxu0 %v1354
    %2416 = vmatpush1.bf16.msra.mxu0 %v1353
    %2417 = vmatprep.subr.bf16.mxu0 %v1370
    %2418 = vmatpush1.bf16.msra.mxu0 %v1369
    %2419 = vmatprep.subr.bf16.mxu0 %v1386
    %2420 = vmatpush1.bf16.msra.mxu0 %v1385
    %2421 = vmatprep.subr.bf16.mxu0 %v1402
    %2422 = vmatpush1.bf16.msra.mxu0 %v1401
    %2423 = vmatprep.subr.bf16.mxu0 %v1418
    %2424 = vmatpush1.bf16.msra.mxu0 %v1417
    %2425 = vmatprep.subr.bf16.mxu0 %v1434
    %2426 = vmatpush1.bf16.msra.mxu0 %v1433
    %2427 = vmatprep.subr.bf16.mxu0 %v1450
    %2428 = vmatpush1.bf16.msra.mxu0 %v1449
    %2429 = vmatprep.subr.bf16.mxu0 %v1466
    %2430 = vmatpush1.bf16.msra.mxu0 %v1465
    %2431 = vmatprep.subr.bf16.mxu0 %v1482
    %2432 = vmatpush1.bf16.msra.mxu0 %v1481
    %2433 = vmatprep.subr.bf16.mxu0 %v1498
    %2434 = vmatpush1.bf16.msra.mxu0 %v1497
    %2435 = vmatprep.subr.bf16.mxu0 %v1514
    %2436 = vmatpush1.bf16.msra.mxu0 %v1513
    %2437 = vmatprep.subr.bf16.mxu0 %v1530
    %2438 = vmatpush1.bf16.msra.mxu0 %v1529
    %2439 = vmatprep.mubr.bf16.mxu0 %v190
    %2440 = vmatmul.mubr.bf16.gmra.mrb[0].mxu0 %v189
    %v2441 = vpop.f32.mrb[0].mxu0
    %v2442 = vadd.f32 0.0, %v2441
    %v2443 = vpop.f32.mrb[0].mxu0
    %v2444 = vadd.f32 0.0, %v2443
    %v2445 = vpop.f32.mrb[0].mxu0
    %v2446 = vadd.f32 0.0, %v2445
    %v2447 = vpop.f32.mrb[0].mxu0
    %v2448 = vadd.f32 0.0, %v2447
    %2449 = vmatprep.mubr.bf16.mxu0 %v200
    %2450 = vmatmul.mubr.bf16.gmra.mrb[0].mxu0 %v199
    %v2451 = vpop.f32.mrb[0].mxu0
    %v2452 = vadd.f32 0.0, %v2451
    %v2453 = vpop.f32.mrb[0].mxu0
    %v2454 = vadd.f32 0.0, %v2453
    %v2455 = vpop.f32.mrb[0].mxu0
    %v2456 = vadd.f32 0.0, %v2455
    %v2457 = vpop.f32.mrb[0].mxu0
    %v2458 = vadd.f32 0.0, %v2457
    %2459 = vmatprep.mubr.bf16.mxu0 %v210
    %2460 = vmatmul.mubr.bf16.gmra.mrb[0].mxu0 %v209
    %v2461 = vpop.f32.mrb[0].mxu0
    %v2462 = vadd.f32 0.0, %v2461
    %v2463 = vpop.f32.mrb[0].mxu0
    %v2464 = vadd.f32 0.0, %v2463
    %v2465 = vpop.f32.mrb[0].mxu0
    %v2466 = vadd.f32 0.0, %v2465
    %v2467 = vpop.f32.mrb[0].mxu0
    %v2468 = vadd.f32 0.0, %v2467
    %2469 = vmatprep.mubr.bf16.mxu0 %v220
    %2470 = vmatmul.mubr.bf16.gmra.mrb[0].mxu0 %v219
    %v2471 = vpop.f32.mrb[0].mxu0
    %v2472 = vadd.f32 0.0, %v2471
    %v2473 = vpop.f32.mrb[0].mxu0
    %v2474 = vadd.f32 0.0, %v2473
    %v2475 = vpop.f32.mrb[0].mxu0
    %v2476 = vadd.f32 0.0, %v2475
    %v2477 = vpop.f32.mrb[0].mxu0
    %v2478 = vadd.f32 0.0, %v2477
    %2479 = vmatprep.mubr.bf16.mxu0 %v230
    %2480 = vmatmul.mubr.bf16.gmra.mrb[0].mxu0 %v229
    %v2481 = vpop.f32.mrb[0].mxu0
    %v2482 = vadd.f32 0.0, %v2481
    %v2483 = vpop.f32.mrb[0].mxu0
    %v2484 = vadd.f32 0.0, %v2483
    %v2485 = vpop.f32.mrb[0].mxu0
    %v2486 = vadd.f32 0.0, %v2485
    %v2487 = vpop.f32.mrb[0].mxu0
    %v2488 = vadd.f32 0.0, %v2487
    %2489 = vmatprep.mubr.bf16.mxu0 %v240
    %2490 = vmatmul.mubr.bf16.gmra.mrb[0].mxu0 %v239
    %v2491 = vpop.f32.mrb[0].mxu0
    %v2492 = vadd.f32 0.0, %v2491
    %v2493 = vpop.f32.mrb[0].mxu0
    %v2494 = vadd.f32 0.0, %v2493
    %v2495 = vpop.f32.mrb[0].mxu0
    %v2496 = vadd.f32 0.0, %v2495
    %v2497 = vpop.f32.mrb[0].mxu0
    %v2498 = vadd.f32 0.0, %v2497
    %2499 = vmatprep.mubr.bf16.mxu0 %v250
    %2500 = vmatmul.mubr.bf16.gmra.mrb[0].mxu0 %v249
    %v2501 = vpop.f32.mrb[0].mxu0
    %v2502 = vadd.f32 0.0, %v2501
    %v2503 = vpop.f32.mrb[0].mxu0
    %v2504 = vadd.f32 0.0, %v2503
    %v2505 = vpop.f32.mrb[0].mxu0
    %v2506 = vadd.f32 0.0, %v2505
    %v2507 = vpop.f32.mrb[0].mxu0
    %v2508 = vadd.f32 0.0, %v2507
    %2509 = vdwg.mxu0
    %2510 = vmatprep.subr.bf16.mxu0 %v1292
    %2511 = vmatpush1.bf16.msra.mxu0 %v1291
    %2512 = vmatprep.subr.bf16.mxu0 %v1308
    %2513 = vmatpush1.bf16.msra.mxu0 %v1307
    %2514 = vmatprep.subr.bf16.mxu0 %v1324
    %2515 = vmatpush1.bf16.msra.mxu0 %v1323
    %2516 = vmatprep.subr.bf16.mxu0 %v1340
    %2517 = vmatpush1.bf16.msra.mxu0 %v1339
    %2518 = vmatprep.subr.bf16.mxu0 %v1356
    %2519 = vmatpush1.bf16.msra.mxu0 %v1355
    %2520 = vmatprep.subr.bf16.mxu0 %v1372
    %2521 = vmatpush1.bf16.msra.mxu0 %v1371
    %2522 = vmatprep.subr.bf16.mxu0 %v1388
    %2523 = vmatpush1.bf16.msra.mxu0 %v1387
    %2524 = vmatprep.subr.bf16.mxu0 %v1404
    %2525 = vmatpush1.bf16.msra.mxu0 %v1403
    %2526 = vmatprep.subr.bf16.mxu0 %v1420
    %2527 = vmatpush1.bf16.msra.mxu0 %v1419
    %2528 = vmatprep.subr.bf16.mxu0 %v1436
    %2529 = vmatpush1.bf16.msra.mxu0 %v1435
    %2530 = vmatprep.subr.bf16.mxu0 %v1452
    %2531 = vmatpush1.bf16.msra.mxu0 %v1451
    %2532 = vmatprep.subr.bf16.mxu0 %v1468
    %2533 = vmatpush1.bf16.msra.mxu0 %v1467
    %2534 = vmatprep.subr.bf16.mxu0 %v1484
    %2535 = vmatpush1.bf16.msra.mxu0 %v1483
    %2536 = vmatprep.subr.bf16.mxu0 %v1500
    %2537 = vmatpush1.bf16.msra.mxu0 %v1499
    %2538 = vmatprep.subr.bf16.mxu0 %v1516
    %2539 = vmatpush1.bf16.msra.mxu0 %v1515
    %2540 = vmatprep.subr.bf16.mxu0 %v1532
    %2541 = vmatpush1.bf16.msra.mxu0 %v1531
    %2542 = vmatprep.mubr.bf16.mxu0 %v190
    %2543 = vmatmul.mubr.bf16.gmra.mrb[0].mxu0 %v189
    %v2544 = vpop.f32.mrb[0].mxu0
    %v2545 = vadd.f32 0.0, %v2544
    %v2546 = vpop.f32.mrb[0].mxu0
    %v2547 = vadd.f32 0.0, %v2546
    %v2548 = vpop.f32.mrb[0].mxu0
    %v2549 = vadd.f32 0.0, %v2548
    %v2550 = vpop.f32.mrb[0].mxu0
    %v2551 = vadd.f32 0.0, %v2550
    %2552 = vmatprep.mubr.bf16.mxu0 %v200
    %2553 = vmatmul.mubr.bf16.gmra.mrb[0].mxu0 %v199
    %v2554 = vpop.f32.mrb[0].mxu0
    %v2555 = vadd.f32 0.0, %v2554
    %v2556 = vpop.f32.mrb[0].mxu0
    %v2557 = vadd.f32 0.0, %v2556
    %v2558 = vpop.f32.mrb[0].mxu0
    %v2559 = vadd.f32 0.0, %v2558
    %v2560 = vpop.f32.mrb[0].mxu0
    %v2561 = vadd.f32 0.0, %v2560
    %2562 = vmatprep.mubr.bf16.mxu0 %v210
    %2563 = vmatmul.mubr.bf16.gmra.mrb[0].mxu0 %v209
    %v2564 = vpop.f32.mrb[0].mxu0
    %v2565 = vadd.f32 0.0, %v2564
    %v2566 = vpop.f32.mrb[0].mxu0
    %v2567 = vadd.f32 0.0, %v2566
    %v2568 = vpop.f32.mrb[0].mxu0
    %v2569 = vadd.f32 0.0, %v2568
    %v2570 = vpop.f32.mrb[0].mxu0
    %v2571 = vadd.f32 0.0, %v2570
    %2572 = vmatprep.mubr.bf16.mxu0 %v220
    %2573 = vmatmul.mubr.bf16.gmra.mrb[0].mxu0 %v219
    %v2574 = vpop.f32.mrb[0].mxu0
    %v2575 = vadd.f32 0.0, %v2574
    %v2576 = vpop.f32.mrb[0].mxu0
    %v2577 = vadd.f32 0.0, %v2576
    %v2578 = vpop.f32.mrb[0].mxu0
    %v2579 = vadd.f32 0.0, %v2578
    %v2580 = vpop.f32.mrb[0].mxu0
    %v2581 = vadd.f32 0.0, %v2580
    %2582 = vmatprep.mubr.bf16.mxu0 %v230
    %2583 = vmatmul.mubr.bf16.gmra.mrb[0].mxu0 %v229
    %v2584 = vpop.f32.mrb[0].mxu0
    %v2585 = vadd.f32 0.0, %v2584
    %v2586 = vpop.f32.mrb[0].mxu0
    %v2587 = vadd.f32 0.0, %v2586
    %v2588 = vpop.f32.mrb[0].mxu0
    %v2589 = vadd.f32 0.0, %v2588
    %v2590 = vpop.f32.mrb[0].mxu0
    %v2591 = vadd.f32 0.0, %v2590
    %2592 = vmatprep.mubr.bf16.mxu0 %v240
    %2593 = vmatmul.mubr.bf16.gmra.mrb[0].mxu0 %v239
    %v2594 = vpop.f32.mrb[0].mxu0
    %v2595 = vadd.f32 0.0, %v2594
    %v2596 = vpop.f32.mrb[0].mxu0
    %v2597 = vadd.f32 0.0, %v2596
    %v2598 = vpop.f32.mrb[0].mxu0
    %v2599 = vadd.f32 0.0, %v2598
    %v2600 = vpop.f32.mrb[0].mxu0
    %v2601 = vadd.f32 0.0, %v2600
    %2602 = vmatprep.mubr.bf16.mxu0 %v250
    %2603 = vmatmul.mubr.bf16.gmra.mrb[0].mxu0 %v249
    %v2604 = vpop.f32.mrb[0].mxu0
    %v2605 = vadd.f32 0.0, %v2604
    %v2606 = vpop.f32.mrb[0].mxu0
    %v2607 = vadd.f32 0.0, %v2606
    %v2608 = vpop.f32.mrb[0].mxu0
    %v2609 = vadd.f32 0.0, %v2608
    %v2610 = vpop.f32.mrb[0].mxu0
    %v2611 = vadd.f32 0.0, %v2610
    %2612 = vdwg.mxu0
    %v2613 = vld [vmem:[#allocation4] sm:$0xff]
    %v2614 = vld [vmem:[#allocation4 + $0x8] sm:$0xff]
    %v2617 = vlaneseq
    %v2618 = vshrl.u32 %v2617, 7
    %v2619 = vsub.s32 0, %v2618
    %v2620 = vrot.slane %v2613, %v2619
    %v2621 = vlaneseq
    %v2622 = vshrl.u32 %v2621, 7
    %v2623 = vsub.s32 1, %v2622
    %v2624 = vrot.slane %v2613, %v2623
    %v2625 = vlaneseq
    %v2626 = vshrl.u32 %v2625, 7
    %v2627 = vsub.s32 2, %v2626
    %v2628 = vrot.slane %v2613, %v2627
    %v2629 = vlaneseq
    %v2630 = vshrl.u32 %v2629, 7
    %v2631 = vsub.s32 3, %v2630
    %v2632 = vrot.slane %v2613, %v2631
    %v2633 = vlaneseq
    %v2634 = vshrl.u32 %v2633, 7
    %v2635 = vsub.s32 4, %v2634
    %v2636 = vrot.slane %v2613, %v2635
    %v2637 = vlaneseq
    %v2638 = vshrl.u32 %v2637, 7
    %v2639 = vsub.s32 5, %v2638
    %v2640 = vrot.slane %v2613, %v2639
    %v2641 = vlaneseq
    %v2642 = vshrl.u32 %v2641, 7
    %v2643 = vsub.s32 6, %v2642
    %v2644 = vrot.slane %v2613, %v2643
    %v2645 = vlaneseq
    %v2646 = vshrl.u32 %v2645, 7
    %v2647 = vsub.s32 7, %v2646
    %v2648 = vrot.slane %v2613, %v2647
    %v2649 = vlaneseq
    %v2650 = vshrl.u32 %v2649, 7
    %v2651 = vsub.s32 0, %v2650
    %v2652 = vrot.slane %v2614, %v2651
    %v2653 = vlaneseq
    %v2654 = vshrl.u32 %v2653, 7
    %v2655 = vsub.s32 1, %v2654
    %v2656 = vrot.slane %v2614, %v2655
    %v2657 = vlaneseq
    %v2658 = vshrl.u32 %v2657, 7
    %v2659 = vsub.s32 2, %v2658
    %v2660 = vrot.slane %v2614, %v2659
    %v2661 = vlaneseq
    %v2662 = vshrl.u32 %v2661, 7
    %v2663 = vsub.s32 3, %v2662
    %v2664 = vrot.slane %v2614, %v2663
    %v2665 = vlaneseq
    %v2666 = vshrl.u32 %v2665, 7
    %v2667 = vsub.s32 4, %v2666
    %v2668 = vrot.slane %v2614, %v2667
    %v2669 = vlaneseq
    %v2670 = vshrl.u32 %v2669, 7
    %v2671 = vsub.s32 5, %v2670
    %v2672 = vrot.slane %v2614, %v2671
    %v2673 = vlaneseq
    %v2674 = vshrl.u32 %v2673, 7
    %v2675 = vsub.s32 6, %v2674
    %v2676 = vrot.slane %v2614, %v2675
    %v2677 = vlaneseq
    %v2678 = vshrl.u32 %v2677, 7
    %v2679 = vsub.s32 7, %v2678
    %v2680 = vrot.slane %v2614, %v2679
    %v2697 = vmul.f32 %v1824, %v2620
    %v2698 = vmul.f32 %v1826, %v2624
    %v2699 = vmul.f32 %v1927, %v2628
    %v2700 = vmul.f32 %v1929, %v2632
    %v2701 = vmul.f32 %v2030, %v2636
    %v2702 = vmul.f32 %v2032, %v2640
    %v2703 = vmul.f32 %v2133, %v2644
    %v2704 = vmul.f32 %v2135, %v2648
    %v2705 = vmul.f32 %v2236, %v2652
    %v2706 = vmul.f32 %v2238, %v2656
    %v2707 = vmul.f32 %v2339, %v2660
    %v2708 = vmul.f32 %v2341, %v2664
    %v2709 = vmul.f32 %v2442, %v2668
    %v2710 = vmul.f32 %v2444, %v2672
    %v2711 = vmul.f32 %v2545, %v2676
    %v2712 = vmul.f32 %v2547, %v2680
    %v2713 = vmul.f32 %v1828, %v2620
    %v2714 = vmul.f32 %v1830, %v2624
    %v2715 = vmul.f32 %v1931, %v2628
    %v2716 = vmul.f32 %v1933, %v2632
    %v2717 = vmul.f32 %v2034, %v2636
    %v2718 = vmul.f32 %v2036, %v2640
    %v2719 = vmul.f32 %v2137, %v2644
    %v2720 = vmul.f32 %v2139, %v2648
    %v2721 = vmul.f32 %v2240, %v2652
    %v2722 = vmul.f32 %v2242, %v2656
    %v2723 = vmul.f32 %v2343, %v2660
    %v2724 = vmul.f32 %v2345, %v2664
    %v2725 = vmul.f32 %v2446, %v2668
    %v2726 = vmul.f32 %v2448, %v2672
    %v2727 = vmul.f32 %v2549, %v2676
    %v2728 = vmul.f32 %v2551, %v2680
    %v2729 = vmul.f32 %v1834, %v2620
    %v2730 = vmul.f32 %v1836, %v2624
    %v2731 = vmul.f32 %v1937, %v2628
    %v2732 = vmul.f32 %v1939, %v2632
    %v2733 = vmul.f32 %v2040, %v2636
    %v2734 = vmul.f32 %v2042, %v2640
    %v2735 = vmul.f32 %v2143, %v2644
    %v2736 = vmul.f32 %v2145, %v2648
    %v2737 = vmul.f32 %v2246, %v2652
    %v2738 = vmul.f32 %v2248, %v2656
    %v2739 = vmul.f32 %v2349, %v2660
    %v2740 = vmul.f32 %v2351, %v2664
    %v2741 = vmul.f32 %v2452, %v2668
    %v2742 = vmul.f32 %v2454, %v2672
    %v2743 = vmul.f32 %v2555, %v2676
    %v2744 = vmul.f32 %v2557, %v2680
    %v2745 = vmul.f32 %v1838, %v2620
    %v2746 = vmul.f32 %v1840, %v2624
    %v2747 = vmul.f32 %v1941, %v2628
    %v2748 = vmul.f32 %v1943, %v2632
    %v2749 = vmul.f32 %v2044, %v2636
    %v2750 = vmul.f32 %v2046, %v2640
    %v2751 = vmul.f32 %v2147, %v2644
    %v2752 = vmul.f32 %v2149, %v2648
    %v2753 = vmul.f32 %v2250, %v2652
    %v2754 = vmul.f32 %v2252, %v2656
    %v2755 = vmul.f32 %v2353, %v2660
    %v2756 = vmul.f32 %v2355, %v2664
    %v2757 = vmul.f32 %v2456, %v2668
    %v2758 = vmul.f32 %v2458, %v2672
    %v2759 = vmul.f32 %v2559, %v2676
    %v2760 = vmul.f32 %v2561, %v2680
    %v2761 = vmul.f32 %v1844, %v2620
    %v2762 = vmul.f32 %v1846, %v2624
    %v2763 = vmul.f32 %v1947, %v2628
    %v2764 = vmul.f32 %v1949, %v2632
    %v2765 = vmul.f32 %v2050, %v2636
    %v2766 = vmul.f32 %v2052, %v2640
    %v2767 = vmul.f32 %v2153, %v2644
    %v2768 = vmul.f32 %v2155, %v2648
    %v2769 = vmul.f32 %v2256, %v2652
    %v2770 = vmul.f32 %v2258, %v2656
    %v2771 = vmul.f32 %v2359, %v2660
    %v2772 = vmul.f32 %v2361, %v2664
    %v2773 = vmul.f32 %v2462, %v2668
    %v2774 = vmul.f32 %v2464, %v2672
    %v2775 = vmul.f32 %v2565, %v2676
    %v2776 = vmul.f32 %v2567, %v2680
    %v2777 = vmul.f32 %v1848, %v2620
    %v2778 = vmul.f32 %v1850, %v2624
    %v2779 = vmul.f32 %v1951, %v2628
    %v2780 = vmul.f32 %v1953, %v2632
    %v2781 = vmul.f32 %v2054, %v2636
    %v2782 = vmul.f32 %v2056, %v2640
    %v2783 = vmul.f32 %v2157, %v2644
    %v2784 = vmul.f32 %v2159, %v2648
    %v2785 = vmul.f32 %v2260, %v2652
    %v2786 = vmul.f32 %v2262, %v2656
    %v2787 = vmul.f32 %v2363, %v2660
    %v2788 = vmul.f32 %v2365, %v2664
    %v2789 = vmul.f32 %v2466, %v2668
    %v2790 = vmul.f32 %v2468, %v2672
    %v2791 = vmul.f32 %v2569, %v2676
    %v2792 = vmul.f32 %v2571, %v2680
    %v2793 = vmul.f32 %v1854, %v2620
    %v2794 = vmul.f32 %v1856, %v2624
    %v2795 = vmul.f32 %v1957, %v2628
    %v2796 = vmul.f32 %v1959, %v2632
    %v2797 = vmul.f32 %v2060, %v2636
    %v2798 = vmul.f32 %v2062, %v2640
    %v2799 = vmul.f32 %v2163, %v2644
    %v2800 = vmul.f32 %v2165, %v2648
    %v2801 = vmul.f32 %v2266, %v2652
    %v2802 = vmul.f32 %v2268, %v2656
    %v2803 = vmul.f32 %v2369, %v2660
    %v2804 = vmul.f32 %v2371, %v2664
    %v2805 = vmul.f32 %v2472, %v2668
    %v2806 = vmul.f32 %v2474, %v2672
    %v2807 = vmul.f32 %v2575, %v2676
    %v2808 = vmul.f32 %v2577, %v2680
    %v2809 = vmul.f32 %v1858, %v2620
    %v2810 = vmul.f32 %v1860, %v2624
    %v2811 = vmul.f32 %v1961, %v2628
    %v2812 = vmul.f32 %v1963, %v2632
    %v2813 = vmul.f32 %v2064, %v2636
    %v2814 = vmul.f32 %v2066, %v2640
    %v2815 = vmul.f32 %v2167, %v2644
    %v2816 = vmul.f32 %v2169, %v2648
    %v2817 = vmul.f32 %v2270, %v2652
    %v2818 = vmul.f32 %v2272, %v2656
    %v2819 = vmul.f32 %v2373, %v2660
    %v2820 = vmul.f32 %v2375, %v2664
    %v2821 = vmul.f32 %v2476, %v2668
    %v2822 = vmul.f32 %v2478, %v2672
    %v2823 = vmul.f32 %v2579, %v2676
    %v2824 = vmul.f32 %v2581, %v2680
    %v2825 = vmul.f32 %v1864, %v2620
    %v2826 = vmul.f32 %v1866, %v2624
    %v2827 = vmul.f32 %v1967, %v2628
    %v2828 = vmul.f32 %v1969, %v2632
    %v2829 = vmul.f32 %v2070, %v2636
    %v2830 = vmul.f32 %v2072, %v2640
    %v2831 = vmul.f32 %v2173, %v2644
    %v2832 = vmul.f32 %v2175, %v2648
    %v2833 = vmul.f32 %v2276, %v2652
    %v2834 = vmul.f32 %v2278, %v2656
    %v2835 = vmul.f32 %v2379, %v2660
    %v2836 = vmul.f32 %v2381, %v2664
    %v2837 = vmul.f32 %v2482, %v2668
    %v2838 = vmul.f32 %v2484, %v2672
    %v2839 = vmul.f32 %v2585, %v2676
    %v2840 = vmul.f32 %v2587, %v2680
    %v2841 = vmul.f32 %v1868, %v2620
    %v2842 = vmul.f32 %v1870, %v2624
    %v2843 = vmul.f32 %v1971, %v2628
    %v2844 = vmul.f32 %v1973, %v2632
    %v2845 = vmul.f32 %v2074, %v2636
    %v2846 = vmul.f32 %v2076, %v2640
    %v2847 = vmul.f32 %v2177, %v2644
    %v2848 = vmul.f32 %v2179, %v2648
    %v2849 = vmul.f32 %v2280, %v2652
    %v2850 = vmul.f32 %v2282, %v2656
    %v2851 = vmul.f32 %v2383, %v2660
    %v2852 = vmul.f32 %v2385, %v2664
    %v2853 = vmul.f32 %v2486, %v2668
    %v2854 = vmul.f32 %v2488, %v2672
    %v2855 = vmul.f32 %v2589, %v2676
    %v2856 = vmul.f32 %v2591, %v2680
    %v2857 = vmul.f32 %v1874, %v2620
    %v2858 = vmul.f32 %v1876, %v2624
    %v2859 = vmul.f32 %v1977, %v2628
    %v2860 = vmul.f32 %v1979, %v2632
    %v2861 = vmul.f32 %v2080, %v2636
    %v2862 = vmul.f32 %v2082, %v2640
    %v2863 = vmul.f32 %v2183, %v2644
    %v2864 = vmul.f32 %v2185, %v2648
    %v2865 = vmul.f32 %v2286, %v2652
    %v2866 = vmul.f32 %v2288, %v2656
    %v2867 = vmul.f32 %v2389, %v2660
    %v2868 = vmul.f32 %v2391, %v2664
    %v2869 = vmul.f32 %v2492, %v2668
    %v2870 = vmul.f32 %v2494, %v2672
    %v2871 = vmul.f32 %v2595, %v2676
    %v2872 = vmul.f32 %v2597, %v2680
    %v2873 = vmul.f32 %v1878, %v2620
    %v2874 = vmul.f32 %v1880, %v2624
    %v2875 = vmul.f32 %v1981, %v2628
    %v2876 = vmul.f32 %v1983, %v2632
    %v2877 = vmul.f32 %v2084, %v2636
    %v2878 = vmul.f32 %v2086, %v2640
    %v2879 = vmul.f32 %v2187, %v2644
    %v2880 = vmul.f32 %v2189, %v2648
    %v2881 = vmul.f32 %v2290, %v2652
    %v2882 = vmul.f32 %v2292, %v2656
    %v2883 = vmul.f32 %v2393, %v2660
    %v2884 = vmul.f32 %v2395, %v2664
    %v2885 = vmul.f32 %v2496, %v2668
    %v2886 = vmul.f32 %v2498, %v2672
    %v2887 = vmul.f32 %v2599, %v2676
    %v2888 = vmul.f32 %v2601, %v2680
    %v2889 = vmul.f32 %v1884, %v2620
    %v2890 = vmul.f32 %v1886, %v2624
    %v2891 = vmul.f32 %v1987, %v2628
    %v2892 = vmul.f32 %v1989, %v2632
    %v2893 = vmul.f32 %v2090, %v2636
    %v2894 = vmul.f32 %v2092, %v2640
    %v2895 = vmul.f32 %v2193, %v2644
    %v2896 = vmul.f32 %v2195, %v2648
    %v2897 = vmul.f32 %v2296, %v2652
    %v2898 = vmul.f32 %v2298, %v2656
    %v2899 = vmul.f32 %v2399, %v2660
    %v2900 = vmul.f32 %v2401, %v2664
    %v2901 = vmul.f32 %v2502, %v2668
    %v2902 = vmul.f32 %v2504, %v2672
    %v2903 = vmul.f32 %v2605, %v2676
    %v2904 = vmul.f32 %v2607, %v2680
    %v2905 = vmul.f32 %v1888, %v2620
    %v2906 = vmul.f32 %v1890, %v2624
    %v2907 = vmul.f32 %v1991, %v2628
    %v2908 = vmul.f32 %v1993, %v2632
    %v2909 = vmul.f32 %v2094, %v2636
    %v2910 = vmul.f32 %v2096, %v2640
    %v2911 = vmul.f32 %v2197, %v2644
    %v2912 = vmul.f32 %v2199, %v2648
    %v2913 = vmul.f32 %v2300, %v2652
    %v2914 = vmul.f32 %v2302, %v2656
    %v2915 = vmul.f32 %v2403, %v2660
    %v2916 = vmul.f32 %v2405, %v2664
    %v2917 = vmul.f32 %v2506, %v2668
    %v2918 = vmul.f32 %v2508, %v2672
    %v2919 = vmul.f32 %v2609, %v2676
    %v2920 = vmul.f32 %v2611, %v2680
    %v2921 = vld [vmem:[#allocation6] sm:$0xff]
    %v2922 = vld [vmem:[#allocation6 + $0x8] sm:$0xff]
    %v2925 = vlaneseq
    %v2926 = vshrl.u32 %v2925, 7
    %v2927 = vsub.s32 0, %v2926
    %v2928 = vrot.slane %v2921, %v2927
    %v2929 = vlaneseq
    %v2930 = vshrl.u32 %v2929, 7
    %v2931 = vsub.s32 1, %v2930
    %v2932 = vrot.slane %v2921, %v2931
    %v2933 = vlaneseq
    %v2934 = vshrl.u32 %v2933, 7
    %v2935 = vsub.s32 2, %v2934
    %v2936 = vrot.slane %v2921, %v2935
    %v2937 = vlaneseq
    %v2938 = vshrl.u32 %v2937, 7
    %v2939 = vsub.s32 3, %v2938
    %v2940 = vrot.slane %v2921, %v2939
    %v2941 = vlaneseq
    %v2942 = vshrl.u32 %v2941, 7
    %v2943 = vsub.s32 4, %v2942
    %v2944 = vrot.slane %v2921, %v2943
    %v2945 = vlaneseq
    %v2946 = vshrl.u32 %v2945, 7
    %v2947 = vsub.s32 5, %v2946
    %v2948 = vrot.slane %v2921, %v2947
    %v2949 = vlaneseq
    %v2950 = vshrl.u32 %v2949, 7
    %v2951 = vsub.s32 6, %v2950
    %v2952 = vrot.slane %v2921, %v2951
    %v2953 = vlaneseq
    %v2954 = vshrl.u32 %v2953, 7
    %v2955 = vsub.s32 7, %v2954
    %v2956 = vrot.slane %v2921, %v2955
    %v2957 = vlaneseq
    %v2958 = vshrl.u32 %v2957, 7
    %v2959 = vsub.s32 0, %v2958
    %v2960 = vrot.slane %v2922, %v2959
    %v2961 = vlaneseq
    %v2962 = vshrl.u32 %v2961, 7
    %v2963 = vsub.s32 1, %v2962
    %v2964 = vrot.slane %v2922, %v2963
    %v2965 = vlaneseq
    %v2966 = vshrl.u32 %v2965, 7
    %v2967 = vsub.s32 2, %v2966
    %v2968 = vrot.slane %v2922, %v2967
    %v2969 = vlaneseq
    %v2970 = vshrl.u32 %v2969, 7
    %v2971 = vsub.s32 3, %v2970
    %v2972 = vrot.slane %v2922, %v2971
    %v2973 = vlaneseq
    %v2974 = vshrl.u32 %v2973, 7
    %v2975 = vsub.s32 4, %v2974
    %v2976 = vrot.slane %v2922, %v2975
    %v2977 = vlaneseq
    %v2978 = vshrl.u32 %v2977, 7
    %v2979 = vsub.s32 5, %v2978
    %v2980 = vrot.slane %v2922, %v2979
    %v2981 = vlaneseq
    %v2982 = vshrl.u32 %v2981, 7
    %v2983 = vsub.s32 6, %v2982
    %v2984 = vrot.slane %v2922, %v2983
    %v2985 = vlaneseq
    %v2986 = vshrl.u32 %v2985, 7
    %v2987 = vsub.s32 7, %v2986
    %v2988 = vrot.slane %v2922, %v2987
    %v3005 = vadd.f32 %v2697, %v2928
    %v3006 = vadd.f32 %v2698, %v2932
    %v3007 = vadd.f32 %v2699, %v2936
    %v3008 = vadd.f32 %v2700, %v2940
    %v3009 = vadd.f32 %v2701, %v2944
    %v3010 = vadd.f32 %v2702, %v2948
    %v3011 = vadd.f32 %v2703, %v2952
    %v3012 = vadd.f32 %v2704, %v2956
    %v3013 = vadd.f32 %v2705, %v2960
    %v3014 = vadd.f32 %v2706, %v2964
    %v3015 = vadd.f32 %v2707, %v2968
    %v3016 = vadd.f32 %v2708, %v2972
    %v3017 = vadd.f32 %v2709, %v2976
    %v3018 = vadd.f32 %v2710, %v2980
    %v3019 = vadd.f32 %v2711, %v2984
    %v3020 = vadd.f32 %v2712, %v2988
    %v3021 = vadd.f32 %v2713, %v2928
    %v3022 = vadd.f32 %v2714, %v2932
    %v3023 = vadd.f32 %v2715, %v2936
    %v3024 = vadd.f32 %v2716, %v2940
    %v3025 = vadd.f32 %v2717, %v2944
    %v3026 = vadd.f32 %v2718, %v2948
    %v3027 = vadd.f32 %v2719, %v2952
    %v3028 = vadd.f32 %v2720, %v2956
    %v3029 = vadd.f32 %v2721, %v2960
    %v3030 = vadd.f32 %v2722, %v2964
    %v3031 = vadd.f32 %v2723, %v2968
    %v3032 = vadd.f32 %v2724, %v2972
    %v3033 = vadd.f32 %v2725, %v2976
    %v3034 = vadd.f32 %v2726, %v2980
    %v3035 = vadd.f32 %v2727, %v2984
    %v3036 = vadd.f32 %v2728, %v2988
    %v3037 = vadd.f32 %v2729, %v2928
    %v3038 = vadd.f32 %v2730, %v2932
    %v3039 = vadd.f32 %v2731, %v2936
    %v3040 = vadd.f32 %v2732, %v2940
    %v3041 = vadd.f32 %v2733, %v2944
    %v3042 = vadd.f32 %v2734, %v2948
    %v3043 = vadd.f32 %v2735, %v2952
    %v3044 = vadd.f32 %v2736, %v2956
    %v3045 = vadd.f32 %v2737, %v2960
    %v3046 = vadd.f32 %v2738, %v2964
    %v3047 = vadd.f32 %v2739, %v2968
    %v3048 = vadd.f32 %v2740, %v2972
    %v3049 = vadd.f32 %v2741, %v2976
    %v3050 = vadd.f32 %v2742, %v2980
    %v3051 = vadd.f32 %v2743, %v2984
    %v3052 = vadd.f32 %v2744, %v2988
    %v3053 = vadd.f32 %v2745, %v2928
    %v3054 = vadd.f32 %v2746, %v2932
    %v3055 = vadd.f32 %v2747, %v2936
    %v3056 = vadd.f32 %v2748, %v2940
    %v3057 = vadd.f32 %v2749, %v2944
    %v3058 = vadd.f32 %v2750, %v2948
    %v3059 = vadd.f32 %v2751, %v2952
    %v3060 = vadd.f32 %v2752, %v2956
    %v3061 = vadd.f32 %v2753, %v2960
    %v3062 = vadd.f32 %v2754, %v2964
    %v3063 = vadd.f32 %v2755, %v2968
    %v3064 = vadd.f32 %v2756, %v2972
    %v3065 = vadd.f32 %v2757, %v2976
    %v3066 = vadd.f32 %v2758, %v2980
    %v3067 = vadd.f32 %v2759, %v2984
    %v3068 = vadd.f32 %v2760, %v2988
    %v3069 = vadd.f32 %v2761, %v2928
    %v3070 = vadd.f32 %v2762, %v2932
    %v3071 = vadd.f32 %v2763, %v2936
    %v3072 = vadd.f32 %v2764, %v2940
    %v3073 = vadd.f32 %v2765, %v2944
    %v3074 = vadd.f32 %v2766, %v2948
    %v3075 = vadd.f32 %v2767, %v2952
    %v3076 = vadd.f32 %v2768, %v2956
    %v3077 = vadd.f32 %v2769, %v2960
    %v3078 = vadd.f32 %v2770, %v2964
    %v3079 = vadd.f32 %v2771, %v2968
    %v3080 = vadd.f32 %v2772, %v2972
    %v3081 = vadd.f32 %v2773, %v2976
    %v3082 = vadd.f32 %v2774, %v2980
    %v3083 = vadd.f32 %v2775, %v2984
    %v3084 = vadd.f32 %v2776, %v2988
    %v3085 = vadd.f32 %v2777, %v2928
    %v3086 = vadd.f32 %v2778, %v2932
    %v3087 = vadd.f32 %v2779, %v2936
    %v3088 = vadd.f32 %v2780, %v2940
    %v3089 = vadd.f32 %v2781, %v2944
    %v3090 = vadd.f32 %v2782, %v2948
    %v3091 = vadd.f32 %v2783, %v2952
    %v3092 = vadd.f32 %v2784, %v2956
    %v3093 = vadd.f32 %v2785, %v2960
    %v3094 = vadd.f32 %v2786, %v2964
    %v3095 = vadd.f32 %v2787, %v2968
    %v3096 = vadd.f32 %v2788, %v2972
    %v3097 = vadd.f32 %v2789, %v2976
    %v3098 = vadd.f32 %v2790, %v2980
    %v3099 = vadd.f32 %v2791, %v2984
    %v3100 = vadd.f32 %v2792, %v2988
    %v3101 = vadd.f32 %v2793, %v2928
    %v3102 = vadd.f32 %v2794, %v2932
    %v3103 = vadd.f32 %v2795, %v2936
    %v3104 = vadd.f32 %v2796, %v2940
    %v3105 = vadd.f32 %v2797, %v2944
    %v3106 = vadd.f32 %v2798, %v2948
    %v3107 = vadd.f32 %v2799, %v2952
    %v3108 = vadd.f32 %v2800, %v2956
    %v3109 = vadd.f32 %v2801, %v2960
    %v3110 = vadd.f32 %v2802, %v2964
    %v3111 = vadd.f32 %v2803, %v2968
    %v3112 = vadd.f32 %v2804, %v2972
    %v3113 = vadd.f32 %v2805, %v2976
    %v3114 = vadd.f32 %v2806, %v2980
    %v3115 = vadd.f32 %v2807, %v2984
    %v3116 = vadd.f32 %v2808, %v2988
    %v3117 = vadd.f32 %v2809, %v2928
    %v3118 = vadd.f32 %v2810, %v2932
    %v3119 = vadd.f32 %v2811, %v2936
    %v3120 = vadd.f32 %v2812, %v2940
    %v3121 = vadd.f32 %v2813, %v2944
    %v3122 = vadd.f32 %v2814, %v2948
    %v3123 = vadd.f32 %v2815, %v2952
    %v3124 = vadd.f32 %v2816, %v2956
    %v3125 = vadd.f32 %v2817, %v2960
    %v3126 = vadd.f32 %v2818, %v2964
    %v3127 = vadd.f32 %v2819, %v2968
    %v3128 = vadd.f32 %v2820, %v2972
    %v3129 = vadd.f32 %v2821, %v2976
    %v3130 = vadd.f32 %v2822, %v2980
    %v3131 = vadd.f32 %v2823, %v2984
    %v3132 = vadd.f32 %v2824, %v2988
    %v3133 = vadd.f32 %v2825, %v2928
    %v3134 = vadd.f32 %v2826, %v2932
    %v3135 = vadd.f32 %v2827, %v2936
    %v3136 = vadd.f32 %v2828, %v2940
    %v3137 = vadd.f32 %v2829, %v2944
    %v3138 = vadd.f32 %v2830, %v2948
    %v3139 = vadd.f32 %v2831, %v2952
    %v3140 = vadd.f32 %v2832, %v2956
    %v3141 = vadd.f32 %v2833, %v2960
    %v3142 = vadd.f32 %v2834, %v2964
    %v3143 = vadd.f32 %v2835, %v2968
    %v3144 = vadd.f32 %v2836, %v2972
    %v3145 = vadd.f32 %v2837, %v2976
    %v3146 = vadd.f32 %v2838, %v2980
    %v3147 = vadd.f32 %v2839, %v2984
    %v3148 = vadd.f32 %v2840, %v2988
    %v3149 = vadd.f32 %v2841, %v2928
    %v3150 = vadd.f32 %v2842, %v2932
    %v3151 = vadd.f32 %v2843, %v2936
    %v3152 = vadd.f32 %v2844, %v2940
    %v3153 = vadd.f32 %v2845, %v2944
    %v3154 = vadd.f32 %v2846, %v2948
    %v3155 = vadd.f32 %v2847, %v2952
    %v3156 = vadd.f32 %v2848, %v2956
    %v3157 = vadd.f32 %v2849, %v2960
    %v3158 = vadd.f32 %v2850, %v2964
    %v3159 = vadd.f32 %v2851, %v2968
    %v3160 = vadd.f32 %v2852, %v2972
    %v3161 = vadd.f32 %v2853, %v2976
    %v3162 = vadd.f32 %v2854, %v2980
    %v3163 = vadd.f32 %v2855, %v2984
    %v3164 = vadd.f32 %v2856, %v2988
    %v3165 = vadd.f32 %v2857, %v2928
    %v3166 = vadd.f32 %v2858, %v2932
    %v3167 = vadd.f32 %v2859, %v2936
    %v3168 = vadd.f32 %v2860, %v2940
    %v3169 = vadd.f32 %v2861, %v2944
    %v3170 = vadd.f32 %v2862, %v2948
    %v3171 = vadd.f32 %v2863, %v2952
    %v3172 = vadd.f32 %v2864, %v2956
    %v3173 = vadd.f32 %v2865, %v2960
    %v3174 = vadd.f32 %v2866, %v2964
    %v3175 = vadd.f32 %v2867, %v2968
    %v3176 = vadd.f32 %v2868, %v2972
    %v3177 = vadd.f32 %v2869, %v2976
    %v3178 = vadd.f32 %v2870, %v2980
    %v3179 = vadd.f32 %v2871, %v2984
    %v3180 = vadd.f32 %v2872, %v2988
    %v3181 = vadd.f32 %v2873, %v2928
    %v3182 = vadd.f32 %v2874, %v2932
    %v3183 = vadd.f32 %v2875, %v2936
    %v3184 = vadd.f32 %v2876, %v2940
    %v3185 = vadd.f32 %v2877, %v2944
    %v3186 = vadd.f32 %v2878, %v2948
    %v3187 = vadd.f32 %v2879, %v2952
    %v3188 = vadd.f32 %v2880, %v2956
    %v3189 = vadd.f32 %v2881, %v2960
    %v3190 = vadd.f32 %v2882, %v2964
    %v3191 = vadd.f32 %v2883, %v2968
    %v3192 = vadd.f32 %v2884, %v2972
    %v3193 = vadd.f32 %v2885, %v2976
    %v3194 = vadd.f32 %v2886, %v2980
    %v3195 = vadd.f32 %v2887, %v2984
    %v3196 = vadd.f32 %v2888, %v2988
    %v3197 = vadd.f32 %v2889, %v2928
    %v3198 = vadd.f32 %v2890, %v2932
    %v3199 = vadd.f32 %v2891, %v2936
    %v3200 = vadd.f32 %v2892, %v2940
    %v3201 = vadd.f32 %v2893, %v2944
    %v3202 = vadd.f32 %v2894, %v2948
    %v3203 = vadd.f32 %v2895, %v2952
    %v3204 = vadd.f32 %v2896, %v2956
    %v3205 = vadd.f32 %v2897, %v2960
    %v3206 = vadd.f32 %v2898, %v2964
    %v3207 = vadd.f32 %v2899, %v2968
    %v3208 = vadd.f32 %v2900, %v2972
    %v3209 = vadd.f32 %v2901, %v2976
    %v3210 = vadd.f32 %v2902, %v2980
    %v3211 = vadd.f32 %v2903, %v2984
    %v3212 = vadd.f32 %v2904, %v2988
    %v3213 = vadd.f32 %v2905, %v2928
    %v3214 = vadd.f32 %v2906, %v2932
    %v3215 = vadd.f32 %v2907, %v2936
    %v3216 = vadd.f32 %v2908, %v2940
    %v3217 = vadd.f32 %v2909, %v2944
    %v3218 = vadd.f32 %v2910, %v2948
    %v3219 = vadd.f32 %v2911, %v2952
    %v3220 = vadd.f32 %v2912, %v2956
    %v3221 = vadd.f32 %v2913, %v2960
    %v3222 = vadd.f32 %v2914, %v2964
    %v3223 = vadd.f32 %v2915, %v2968
    %v3224 = vadd.f32 %v2916, %v2972
    %v3225 = vadd.f32 %v2917, %v2976
    %v3226 = vadd.f32 %v2918, %v2980
    %v3227 = vadd.f32 %v2919, %v2984
    %v3228 = vadd.f32 %v2920, %v2988
    %v3229 = vmax.f32 %v3005, 0.0
    %v3230 = vmax.f32 %v3006, 0.0
    %v3231 = vmax.f32 %v3007, 0.0
    %v3232 = vmax.f32 %v3008, 0.0
    %v3233 = vmax.f32 %v3009, 0.0
    %v3234 = vmax.f32 %v3010, 0.0
    %v3235 = vmax.f32 %v3011, 0.0
    %v3236 = vmax.f32 %v3012, 0.0
    %v3237 = vmax.f32 %v3013, 0.0
    %v3238 = vmax.f32 %v3014, 0.0
    %v3239 = vmax.f32 %v3015, 0.0
    %v3240 = vmax.f32 %v3016, 0.0
    %v3241 = vmax.f32 %v3017, 0.0
    %v3242 = vmax.f32 %v3018, 0.0
    %v3243 = vmax.f32 %v3019, 0.0
    %v3244 = vmax.f32 %v3020, 0.0
    %v3245 = vmax.f32 %v3021, 0.0
    %v3246 = vmax.f32 %v3022, 0.0
    %v3247 = vmax.f32 %v3023, 0.0
    %v3248 = vmax.f32 %v3024, 0.0
    %v3249 = vmax.f32 %v3025, 0.0
    %v3250 = vmax.f32 %v3026, 0.0
    %v3251 = vmax.f32 %v3027, 0.0
    %v3252 = vmax.f32 %v3028, 0.0
    %v3253 = vmax.f32 %v3029, 0.0
    %v3254 = vmax.f32 %v3030, 0.0
    %v3255 = vmax.f32 %v3031, 0.0
    %v3256 = vmax.f32 %v3032, 0.0
    %v3257 = vmax.f32 %v3033, 0.0
    %v3258 = vmax.f32 %v3034, 0.0
    %v3259 = vmax.f32 %v3035, 0.0
    %v3260 = vmax.f32 %v3036, 0.0
    %v3261 = vmax.f32 %v3037, 0.0
    %v3262 = vmax.f32 %v3038, 0.0
    %v3263 = vmax.f32 %v3039, 0.0
    %v3264 = vmax.f32 %v3040, 0.0
    %v3265 = vmax.f32 %v3041, 0.0
    %v3266 = vmax.f32 %v3042, 0.0
    %v3267 = vmax.f32 %v3043, 0.0
    %v3268 = vmax.f32 %v3044, 0.0
    %v3269 = vmax.f32 %v3045, 0.0
    %v3270 = vmax.f32 %v3046, 0.0
    %v3271 = vmax.f32 %v3047, 0.0
    %v3272 = vmax.f32 %v3048, 0.0
    %v3273 = vmax.f32 %v3049, 0.0
    %v3274 = vmax.f32 %v3050, 0.0
    %v3275 = vmax.f32 %v3051, 0.0
    %v3276 = vmax.f32 %v3052, 0.0
    %v3277 = vmax.f32 %v3053, 0.0
    %v3278 = vmax.f32 %v3054, 0.0
    %v3279 = vmax.f32 %v3055, 0.0
    %v3280 = vmax.f32 %v3056, 0.0
    %v3281 = vmax.f32 %v3057, 0.0
    %v3282 = vmax.f32 %v3058, 0.0
    %v3283 = vmax.f32 %v3059, 0.0
    %v3284 = vmax.f32 %v3060, 0.0
    %v3285 = vmax.f32 %v3061, 0.0
    %v3286 = vmax.f32 %v3062, 0.0
    %v3287 = vmax.f32 %v3063, 0.0
    %v3288 = vmax.f32 %v3064, 0.0
    %v3289 = vmax.f32 %v3065, 0.0
    %v3290 = vmax.f32 %v3066, 0.0
    %v3291 = vmax.f32 %v3067, 0.0
    %v3292 = vmax.f32 %v3068, 0.0
    %v3293 = vmax.f32 %v3069, 0.0
    %v3294 = vmax.f32 %v3070, 0.0
    %v3295 = vmax.f32 %v3071, 0.0
    %v3296 = vmax.f32 %v3072, 0.0
    %v3297 = vmax.f32 %v3073, 0.0
    %v3298 = vmax.f32 %v3074, 0.0
    %v3299 = vmax.f32 %v3075, 0.0
    %v3300 = vmax.f32 %v3076, 0.0
    %v3301 = vmax.f32 %v3077, 0.0
    %v3302 = vmax.f32 %v3078, 0.0
    %v3303 = vmax.f32 %v3079, 0.0
    %v3304 = vmax.f32 %v3080, 0.0
    %v3305 = vmax.f32 %v3081, 0.0
    %v3306 = vmax.f32 %v3082, 0.0
    %v3307 = vmax.f32 %v3083, 0.0
    %v3308 = vmax.f32 %v3084, 0.0
    %v3309 = vmax.f32 %v3085, 0.0
    %v3310 = vmax.f32 %v3086, 0.0
    %v3311 = vmax.f32 %v3087, 0.0
    %v3312 = vmax.f32 %v3088, 0.0
    %v3313 = vmax.f32 %v3089, 0.0
    %v3314 = vmax.f32 %v3090, 0.0
    %v3315 = vmax.f32 %v3091, 0.0
    %v3316 = vmax.f32 %v3092, 0.0
    %v3317 = vmax.f32 %v3093, 0.0
    %v3318 = vmax.f32 %v3094, 0.0
    %v3319 = vmax.f32 %v3095, 0.0
    %v3320 = vmax.f32 %v3096, 0.0
    %v3321 = vmax.f32 %v3097, 0.0
    %v3322 = vmax.f32 %v3098, 0.0
    %v3323 = vmax.f32 %v3099, 0.0
    %v3324 = vmax.f32 %v3100, 0.0
    %v3325 = vmax.f32 %v3101, 0.0
    %v3326 = vmax.f32 %v3102, 0.0
    %v3327 = vmax.f32 %v3103, 0.0
    %v3328 = vmax.f32 %v3104, 0.0
    %v3329 = vmax.f32 %v3105, 0.0
    %v3330 = vmax.f32 %v3106, 0.0
    %v3331 = vmax.f32 %v3107, 0.0
    %v3332 = vmax.f32 %v3108, 0.0
    %v3333 = vmax.f32 %v3109, 0.0
    %v3334 = vmax.f32 %v3110, 0.0
    %v3335 = vmax.f32 %v3111, 0.0
    %v3336 = vmax.f32 %v3112, 0.0
    %v3337 = vmax.f32 %v3113, 0.0
    %v3338 = vmax.f32 %v3114, 0.0
    %v3339 = vmax.f32 %v3115, 0.0
    %v3340 = vmax.f32 %v3116, 0.0
    %v3341 = vmax.f32 %v3117, 0.0
    %v3342 = vmax.f32 %v3118, 0.0
    %v3343 = vmax.f32 %v3119, 0.0
    %v3344 = vmax.f32 %v3120, 0.0
    %v3345 = vmax.f32 %v3121, 0.0
    %v3346 = vmax.f32 %v3122, 0.0
    %v3347 = vmax.f32 %v3123, 0.0
    %v3348 = vmax.f32 %v3124, 0.0
    %v3349 = vmax.f32 %v3125, 0.0
    %v3350 = vmax.f32 %v3126, 0.0
    %v3351 = vmax.f32 %v3127, 0.0
    %v3352 = vmax.f32 %v3128, 0.0
    %v3353 = vmax.f32 %v3129, 0.0
    %v3354 = vmax.f32 %v3130, 0.0
    %v3355 = vmax.f32 %v3131, 0.0
    %v3356 = vmax.f32 %v3132, 0.0
    %v3357 = vmax.f32 %v3133, 0.0
    %v3358 = vmax.f32 %v3134, 0.0
    %v3359 = vmax.f32 %v3135, 0.0
    %v3360 = vmax.f32 %v3136, 0.0
    %v3361 = vmax.f32 %v3137, 0.0
    %v3362 = vmax.f32 %v3138, 0.0
    %v3363 = vmax.f32 %v3139, 0.0
    %v3364 = vmax.f32 %v3140, 0.0
    %v3365 = vmax.f32 %v3141, 0.0
    %v3366 = vmax.f32 %v3142, 0.0
    %v3367 = vmax.f32 %v3143, 0.0
    %v3368 = vmax.f32 %v3144, 0.0
    %v3369 = vmax.f32 %v3145, 0.0
    %v3370 = vmax.f32 %v3146, 0.0
    %v3371 = vmax.f32 %v3147, 0.0
    %v3372 = vmax.f32 %v3148, 0.0
    %v3373 = vmax.f32 %v3149, 0.0
    %v3374 = vmax.f32 %v3150, 0.0
    %v3375 = vmax.f32 %v3151, 0.0
    %v3376 = vmax.f32 %v3152, 0.0
    %v3377 = vmax.f32 %v3153, 0.0
    %v3378 = vmax.f32 %v3154, 0.0
    %v3379 = vmax.f32 %v3155, 0.0
    %v3380 = vmax.f32 %v3156, 0.0
    %v3381 = vmax.f32 %v3157, 0.0
    %v3382 = vmax.f32 %v3158, 0.0
    %v3383 = vmax.f32 %v3159, 0.0
    %v3384 = vmax.f32 %v3160, 0.0
    %v3385 = vmax.f32 %v3161, 0.0
    %v3386 = vmax.f32 %v3162, 0.0
    %v3387 = vmax.f32 %v3163, 0.0
    %v3388 = vmax.f32 %v3164, 0.0
    %v3389 = vmax.f32 %v3165, 0.0
    %v3390 = vmax.f32 %v3166, 0.0
    %v3391 = vmax.f32 %v3167, 0.0
    %v3392 = vmax.f32 %v3168, 0.0
    %v3393 = vmax.f32 %v3169, 0.0
    %v3394 = vmax.f32 %v3170, 0.0
    %v3395 = vmax.f32 %v3171, 0.0
    %v3396 = vmax.f32 %v3172, 0.0
    %v3397 = vmax.f32 %v3173, 0.0
    %v3398 = vmax.f32 %v3174, 0.0
    %v3399 = vmax.f32 %v3175, 0.0
    %v3400 = vmax.f32 %v3176, 0.0
    %v3401 = vmax.f32 %v3177, 0.0
    %v3402 = vmax.f32 %v3178, 0.0
    %v3403 = vmax.f32 %v3179, 0.0
    %v3404 = vmax.f32 %v3180, 0.0
    %v3405 = vmax.f32 %v3181, 0.0
    %v3406 = vmax.f32 %v3182, 0.0
    %v3407 = vmax.f32 %v3183, 0.0
    %v3408 = vmax.f32 %v3184, 0.0
    %v3409 = vmax.f32 %v3185, 0.0
    %v3410 = vmax.f32 %v3186, 0.0
    %v3411 = vmax.f32 %v3187, 0.0
    %v3412 = vmax.f32 %v3188, 0.0
    %v3413 = vmax.f32 %v3189, 0.0
    %v3414 = vmax.f32 %v3190, 0.0
    %v3415 = vmax.f32 %v3191, 0.0
    %v3416 = vmax.f32 %v3192, 0.0
    %v3417 = vmax.f32 %v3193, 0.0
    %v3418 = vmax.f32 %v3194, 0.0
    %v3419 = vmax.f32 %v3195, 0.0
    %v3420 = vmax.f32 %v3196, 0.0
    %v3421 = vmax.f32 %v3197, 0.0
    %v3422 = vmax.f32 %v3198, 0.0
    %v3423 = vmax.f32 %v3199, 0.0
    %v3424 = vmax.f32 %v3200, 0.0
    %v3425 = vmax.f32 %v3201, 0.0
    %v3426 = vmax.f32 %v3202, 0.0
    %v3427 = vmax.f32 %v3203, 0.0
    %v3428 = vmax.f32 %v3204, 0.0
    %v3429 = vmax.f32 %v3205, 0.0
    %v3430 = vmax.f32 %v3206, 0.0
    %v3431 = vmax.f32 %v3207, 0.0
    %v3432 = vmax.f32 %v3208, 0.0
    %v3433 = vmax.f32 %v3209, 0.0
    %v3434 = vmax.f32 %v3210, 0.0
    %v3435 = vmax.f32 %v3211, 0.0
    %v3436 = vmax.f32 %v3212, 0.0
    %v3437 = vmax.f32 %v3213, 0.0
    %v3438 = vmax.f32 %v3214, 0.0
    %v3439 = vmax.f32 %v3215, 0.0
    %v3440 = vmax.f32 %v3216, 0.0
    %v3441 = vmax.f32 %v3217, 0.0
    %v3442 = vmax.f32 %v3218, 0.0
    %v3443 = vmax.f32 %v3219, 0.0
    %v3444 = vmax.f32 %v3220, 0.0
    %v3445 = vmax.f32 %v3221, 0.0
    %v3446 = vmax.f32 %v3222, 0.0
    %v3447 = vmax.f32 %v3223, 0.0
    %v3448 = vmax.f32 %v3224, 0.0
    %v3449 = vmax.f32 %v3225, 0.0
    %v3450 = vmax.f32 %v3226, 0.0
    %v3451 = vmax.f32 %v3227, 0.0
    %v3452 = vmax.f32 %v3228, 0.0
    %v3453 = vmax.f32 %v3229, %v3231
    %v3454 = vmax.f32 %v3230, %v3232
    %v3455 = vmax.f32 %v3245, %v3247
    %v3456 = vmax.f32 %v3246, %v3248
    %v3457 = vmax.f32 %v3261, %v3263
    %v3458 = vmax.f32 %v3262, %v3264
    %v3459 = vmax.f32 %v3277, %v3279
    %v3460 = vmax.f32 %v3278, %v3280
    %v3461 = vmax.f32 %v3293, %v3295
    %v3462 = vmax.f32 %v3294, %v3296
    %v3463 = vmax.f32 %v3309, %v3311
    %v3464 = vmax.f32 %v3310, %v3312
    %v3465 = vmax.f32 %v3325, %v3327
    %v3466 = vmax.f32 %v3326, %v3328
    %v3467 = vmax.f32 %v3341, %v3343
    %v3468 = vmax.f32 %v3342, %v3344
    %v3469 = vmax.f32 %v3357, %v3359
    %v3470 = vmax.f32 %v3358, %v3360
    %v3471 = vmax.f32 %v3373, %v3375
    %v3472 = vmax.f32 %v3374, %v3376
    %v3473 = vmax.f32 %v3389, %v3391
    %v3474 = vmax.f32 %v3390, %v3392
    %v3475 = vmax.f32 %v3405, %v3407
    %v3476 = vmax.f32 %v3406, %v3408
    %v3477 = vmax.f32 %v3421, %v3423
    %v3478 = vmax.f32 %v3422, %v3424
    %v3479 = vmax.f32 %v3437, %v3439
    %v3480 = vmax.f32 %v3438, %v3440
    %v3481 = vmax.f32 %v3233, %v3235
    %v3482 = vmax.f32 %v3234, %v3236
    %v3483 = vmax.f32 %v3249, %v3251
    %v3484 = vmax.f32 %v3250, %v3252
    %v3485 = vmax.f32 %v3265, %v3267
    %v3486 = vmax.f32 %v3266, %v3268
    %v3487 = vmax.f32 %v3281, %v3283
    %v3488 = vmax.f32 %v3282, %v3284
    %v3489 = vmax.f32 %v3297, %v3299
    %v3490 = vmax.f32 %v3298, %v3300
    %v3491 = vmax.f32 %v3313, %v3315
    %v3492 = vmax.f32 %v3314, %v3316
    %v3493 = vmax.f32 %v3329, %v3331
    %v3494 = vmax.f32 %v3330, %v3332
    %v3495 = vmax.f32 %v3345, %v3347
    %v3496 = vmax.f32 %v3346, %v3348
    %v3497 = vmax.f32 %v3361, %v3363
    %v3498 = vmax.f32 %v3362, %v3364
    %v3499 = vmax.f32 %v3377, %v3379
    %v3500 = vmax.f32 %v3378, %v3380
    %v3501 = vmax.f32 %v3393, %v3395
    %v3502 = vmax.f32 %v3394, %v3396
    %v3503 = vmax.f32 %v3409, %v3411
    %v3504 = vmax.f32 %v3410, %v3412
    %v3505 = vmax.f32 %v3425, %v3427
    %v3506 = vmax.f32 %v3426, %v3428
    %v3507 = vmax.f32 %v3441, %v3443
    %v3508 = vmax.f32 %v3442, %v3444
    %v3509 = vmax.f32 %v3453, %v3481
    %v3510 = vmax.f32 %v3454, %v3482
    %v3511 = vmax.f32 %v3455, %v3483
    %v3512 = vmax.f32 %v3456, %v3484
    %v3513 = vmax.f32 %v3457, %v3485
    %v3514 = vmax.f32 %v3458, %v3486
    %v3515 = vmax.f32 %v3459, %v3487
    %v3516 = vmax.f32 %v3460, %v3488
    %v3517 = vmax.f32 %v3461, %v3489
    %v3518 = vmax.f32 %v3462, %v3490
    %v3519 = vmax.f32 %v3463, %v3491
    %v3520 = vmax.f32 %v3464, %v3492
    %v3521 = vmax.f32 %v3465, %v3493
    %v3522 = vmax.f32 %v3466, %v3494
    %v3523 = vmax.f32 %v3467, %v3495
    %v3524 = vmax.f32 %v3468, %v3496
    %v3525 = vmax.f32 %v3469, %v3497
    %v3526 = vmax.f32 %v3470, %v3498
    %v3527 = vmax.f32 %v3471, %v3499
    %v3528 = vmax.f32 %v3472, %v3500
    %v3529 = vmax.f32 %v3473, %v3501
    %v3530 = vmax.f32 %v3474, %v3502
    %v3531 = vmax.f32 %v3475, %v3503
    %v3532 = vmax.f32 %v3476, %v3504
    %v3533 = vmax.f32 %v3477, %v3505
    %v3534 = vmax.f32 %v3478, %v3506
    %v3535 = vmax.f32 %v3479, %v3507
    %v3536 = vmax.f32 %v3480, %v3508
    %v3537 = vmax.f32 %v3237, %v3239
    %v3538 = vmax.f32 %v3238, %v3240
    %v3539 = vmax.f32 %v3253, %v3255
    %v3540 = vmax.f32 %v3254, %v3256
    %v3541 = vmax.f32 %v3269, %v3271
    %v3542 = vmax.f32 %v3270, %v3272
    %v3543 = vmax.f32 %v3285, %v3287
    %v3544 = vmax.f32 %v3286, %v3288
    %v3545 = vmax.f32 %v3301, %v3303
    %v3546 = vmax.f32 %v3302, %v3304
    %v3547 = vmax.f32 %v3317, %v3319
    %v3548 = vmax.f32 %v3318, %v3320
    %v3549 = vmax.f32 %v3333, %v3335
    %v3550 = vmax.f32 %v3334, %v3336
    %v3551 = vmax.f32 %v3349, %v3351
    %v3552 = vmax.f32 %v3350, %v3352
    %v3553 = vmax.f32 %v3365, %v3367
    %v3554 = vmax.f32 %v3366, %v3368
    %v3555 = vmax.f32 %v3381, %v3383
    %v3556 = vmax.f32 %v3382, %v3384
    %v3557 = vmax.f32 %v3397, %v3399
    %v3558 = vmax.f32 %v3398, %v3400
    %v3559 = vmax.f32 %v3413, %v3415
    %v3560 = vmax.f32 %v3414, %v3416
    %v3561 = vmax.f32 %v3429, %v3431
    %v3562 = vmax.f32 %v3430, %v3432
    %v3563 = vmax.f32 %v3445, %v3447
    %v3564 = vmax.f32 %v3446, %v3448
    %v3565 = vmax.f32 %v3241, %v3243
    %v3566 = vmax.f32 %v3242, %v3244
    %v3567 = vmax.f32 %v3257, %v3259
    %v3568 = vmax.f32 %v3258, %v3260
    %v3569 = vmax.f32 %v3273, %v3275
    %v3570 = vmax.f32 %v3274, %v3276
    %v3571 = vmax.f32 %v3289, %v3291
    %v3572 = vmax.f32 %v3290, %v3292
    %v3573 = vmax.f32 %v3305, %v3307
    %v3574 = vmax.f32 %v3306, %v3308
    %v3575 = vmax.f32 %v3321, %v3323
    %v3576 = vmax.f32 %v3322, %v3324
    %v3577 = vmax.f32 %v3337, %v3339
    %v3578 = vmax.f32 %v3338, %v3340
    %v3579 = vmax.f32 %v3353, %v3355
    %v3580 = vmax.f32 %v3354, %v3356
    %v3581 = vmax.f32 %v3369, %v3371
    %v3582 = vmax.f32 %v3370, %v3372
    %v3583 = vmax.f32 %v3385, %v3387
    %v3584 = vmax.f32 %v3386, %v3388
    %v3585 = vmax.f32 %v3401, %v3403
    %v3586 = vmax.f32 %v3402, %v3404
    %v3587 = vmax.f32 %v3417, %v3419
    %v3588 = vmax.f32 %v3418, %v3420
    %v3589 = vmax.f32 %v3433, %v3435
    %v3590 = vmax.f32 %v3434, %v3436
    %v3591 = vmax.f32 %v3449, %v3451
    %v3592 = vmax.f32 %v3450, %v3452
    %v3593 = vmax.f32 %v3537, %v3565
    %v3594 = vmax.f32 %v3538, %v3566
    %v3595 = vmax.f32 %v3539, %v3567
    %v3596 = vmax.f32 %v3540, %v3568
    %v3597 = vmax.f32 %v3541, %v3569
    %v3598 = vmax.f32 %v3542, %v3570
    %v3599 = vmax.f32 %v3543, %v3571
    %v3600 = vmax.f32 %v3544, %v3572
    %v3601 = vmax.f32 %v3545, %v3573
    %v3602 = vmax.f32 %v3546, %v3574
    %v3603 = vmax.f32 %v3547, %v3575
    %v3604 = vmax.f32 %v3548, %v3576
    %v3605 = vmax.f32 %v3549, %v3577
    %v3606 = vmax.f32 %v3550, %v3578
    %v3607 = vmax.f32 %v3551, %v3579
    %v3608 = vmax.f32 %v3552, %v3580
    %v3609 = vmax.f32 %v3553, %v3581
    %v3610 = vmax.f32 %v3554, %v3582
    %v3611 = vmax.f32 %v3555, %v3583
    %v3612 = vmax.f32 %v3556, %v3584
    %v3613 = vmax.f32 %v3557, %v3585
    %v3614 = vmax.f32 %v3558, %v3586
    %v3615 = vmax.f32 %v3559, %v3587
    %v3616 = vmax.f32 %v3560, %v3588
    %v3617 = vmax.f32 %v3561, %v3589
    %v3618 = vmax.f32 %v3562, %v3590
    %v3619 = vmax.f32 %v3563, %v3591
    %v3620 = vmax.f32 %v3564, %v3592
    %v3621 = vpack.c.bf16 %v3511, %v3509
    %v3622 = vpack.c.bf16 %v3512, %v3510
    %v3623 = vpack.c.bf16 %v3515, %v3513
    %v3624 = vpack.c.bf16 %v3516, %v3514
    %v3625 = vpack.c.bf16 %v3519, %v3517
    %v3626 = vpack.c.bf16 %v3520, %v3518
    %v3627 = vpack.c.bf16 %v3523, %v3521
    %v3628 = vpack.c.bf16 %v3524, %v3522
    %v3629 = vpack.c.bf16 %v3527, %v3525
    %v3630 = vpack.c.bf16 %v3528, %v3526
    %v3631 = vpack.c.bf16 %v3531, %v3529
    %v3632 = vpack.c.bf16 %v3532, %v3530
    %v3633 = vpack.c.bf16 %v3535, %v3533
    %v3634 = vpack.c.bf16 %v3536, %v3534
    %v3635 = vpack.c.bf16 %v3595, %v3593
    %v3636 = vpack.c.bf16 %v3596, %v3594
    %v3637 = vpack.c.bf16 %v3599, %v3597
    %v3638 = vpack.c.bf16 %v3600, %v3598
    %v3639 = vpack.c.bf16 %v3603, %v3601
    %v3640 = vpack.c.bf16 %v3604, %v3602
    %v3641 = vpack.c.bf16 %v3607, %v3605
    %v3642 = vpack.c.bf16 %v3608, %v3606
    %v3643 = vpack.c.bf16 %v3611, %v3609
    %v3644 = vpack.c.bf16 %v3612, %v3610
    %v3645 = vpack.c.bf16 %v3615, %v3613
    %v3646 = vpack.c.bf16 %v3616, %v3614
    %v3647 = vpack.c.bf16 %v3619, %v3617
    %v3648 = vpack.c.bf16 %v3620, %v3618
    %v3649 = vld [vmem:[#allocation7] sm:$0xff]
    %v3650 = vld [vmem:[#allocation7 + $0x8] sm:$0xff]
    %v3651 = vld [vmem:[#allocation7 + $0x10] sm:$0xff]
    %v3652 = vld [vmem:[#allocation7 + $0x18] sm:$0xff]
    %v3653 = vld [vmem:[#allocation7 + $0x20] sm:$0xff]
    %v3654 = vld [vmem:[#allocation7 + $0x28] sm:$0xff]
    %v3655 = vld [vmem:[#allocation7 + $0x30] sm:$0xff]
    %v3656 = vld [vmem:[#allocation7 + $0x38] sm:$0xff]
    %v3657 = vld [vmem:[#allocation7 + $0x40] sm:$0xff]
    %v3658 = vld [vmem:[#allocation7 + $0x48] sm:$0xff]
    %v3659 = vld [vmem:[#allocation7 + $0x50] sm:$0xff]
    %v3660 = vld [vmem:[#allocation7 + $0x58] sm:$0xff]
    %v3661 = vld [vmem:[#allocation7 + $0x60] sm:$0xff]
    %v3662 = vld [vmem:[#allocation7 + $0x68] sm:$0xff]
    %v3663 = vld [vmem:[#allocation7 + $0x70] sm:$0xff]
    %v3664 = vld [vmem:[#allocation7 + $0x78] sm:$0xff]
    %v3665 = vld [vmem:[#allocation7 + $0x80] sm:$0xff]
    %v3666 = vld [vmem:[#allocation7 + $0x88] sm:$0xff]
    %v3667 = vld [vmem:[#allocation7 + $0x90] sm:$0xff]
    %v3668 = vld [vmem:[#allocation7 + $0x98] sm:$0xff]
    %v3669 = vld [vmem:[#allocation7 + $0xa0] sm:$0xff]
    %v3670 = vld [vmem:[#allocation7 + $0xa8] sm:$0xff]
    %v3671 = vld [vmem:[#allocation7 + $0xb0] sm:$0xff]
    %v3672 = vld [vmem:[#allocation7 + $0xb8] sm:$0xff]
    %v3673 = vld [vmem:[#allocation7 + $0xc0] sm:$0xff]
    %v3674 = vld [vmem:[#allocation7 + $0xc8] sm:$0xff]
    %v3675 = vld [vmem:[#allocation7 + $0xd0] sm:$0xff]
    %v3676 = vld [vmem:[#allocation7 + $0xd8] sm:$0xff]
    %v3677 = vld [vmem:[#allocation7 + $0xe0] sm:$0xff]
    %v3678 = vld [vmem:[#allocation7 + $0xe8] sm:$0xff]
    %v3679 = vld [vmem:[#allocation7 + $0xf0] sm:$0xff]
    %v3680 = vld [vmem:[#allocation7 + $0xf8] sm:$0xff]
    %v3681 = vld [vmem:[#allocation7 + $0x100] sm:$0xff]
    %v3682 = vld [vmem:[#allocation7 + $0x108] sm:$0xff]
    %v3683 = vld [vmem:[#allocation7 + $0x110] sm:$0xff]
    %v3684 = vld [vmem:[#allocation7 + $0x118] sm:$0xff]
    %v3685 = vld [vmem:[#allocation7 + $0x120] sm:$0xff]
    %v3686 = vld [vmem:[#allocation7 + $0x128] sm:$0xff]
    %v3687 = vld [vmem:[#allocation7 + $0x130] sm:$0xff]
    %v3688 = vld [vmem:[#allocation7 + $0x138] sm:$0xff]
    %v3689 = vld [vmem:[#allocation7 + $0x140] sm:$0xff]
    %v3690 = vld [vmem:[#allocation7 + $0x148] sm:$0xff]
    %v3691 = vld [vmem:[#allocation7 + $0x150] sm:$0xff]
    %v3692 = vld [vmem:[#allocation7 + $0x158] sm:$0xff]
    %v3693 = vld [vmem:[#allocation7 + $0x160] sm:$0xff]
    %v3694 = vld [vmem:[#allocation7 + $0x168] sm:$0xff]
    %v3695 = vld [vmem:[#allocation7 + $0x170] sm:$0xff]
    %v3696 = vld [vmem:[#allocation7 + $0x178] sm:$0xff]
    %v3697 = vld [vmem:[#allocation7 + $0x180] sm:$0xff]
    %v3698 = vld [vmem:[#allocation7 + $0x188] sm:$0xff]
    %v3699 = vld [vmem:[#allocation7 + $0x190] sm:$0xff]
    %v3700 = vld [vmem:[#allocation7 + $0x198] sm:$0xff]
    %v3701 = vld [vmem:[#allocation7 + $0x1a0] sm:$0xff]
    %v3702 = vld [vmem:[#allocation7 + $0x1a8] sm:$0xff]
    %v3703 = vld [vmem:[#allocation7 + $0x1b0] sm:$0xff]
    %v3704 = vld [vmem:[#allocation7 + $0x1b8] sm:$0xff]
    %v3705 = vld [vmem:[#allocation7 + $0x1c0] sm:$0xff]
    %v3706 = vld [vmem:[#allocation7 + $0x1c8] sm:$0xff]
    %v3707 = vld [vmem:[#allocation7 + $0x1d0] sm:$0xff]
    %v3708 = vld [vmem:[#allocation7 + $0x1d8] sm:$0xff]
    %v3709 = vld [vmem:[#allocation7 + $0x1e0] sm:$0xff]
    %v3710 = vld [vmem:[#allocation7 + $0x1e8] sm:$0xff]
    %v3711 = vld [vmem:[#allocation7 + $0x1f0] sm:$0xff]
    %v3712 = vld [vmem:[#allocation7 + $0x1f8] sm:$0xff]
    %v3713 = vld [vmem:[#allocation7 + $0x200] sm:$0xff]
    %v3714 = vld [vmem:[#allocation7 + $0x208] sm:$0xff]
    %v3715 = vld [vmem:[#allocation7 + $0x210] sm:$0xff]
    %v3716 = vld [vmem:[#allocation7 + $0x218] sm:$0xff]
    %v3717 = vld [vmem:[#allocation7 + $0x220] sm:$0xff]
    %v3718 = vld [vmem:[#allocation7 + $0x228] sm:$0xff]
    %v3719 = vld [vmem:[#allocation7 + $0x230] sm:$0xff]
    %v3720 = vld [vmem:[#allocation7 + $0x238] sm:$0xff]
    %v3721 = vld [vmem:[#allocation7 + $0x240] sm:$0xff]
    %v3722 = vld [vmem:[#allocation7 + $0x248] sm:$0xff]
    %v3723 = vld [vmem:[#allocation7 + $0x250] sm:$0xff]
    %v3724 = vld [vmem:[#allocation7 + $0x258] sm:$0xff]
    %v3725 = vld [vmem:[#allocation7 + $0x260] sm:$0xff]
    %v3726 = vld [vmem:[#allocation7 + $0x268] sm:$0xff]
    %v3727 = vld [vmem:[#allocation7 + $0x270] sm:$0xff]
    %v3728 = vld [vmem:[#allocation7 + $0x278] sm:$0xff]
    %v3729 = vld [vmem:[#allocation7 + $0x280] sm:$0xff]
    %v3730 = vld [vmem:[#allocation7 + $0x288] sm:$0xff]
    %v3731 = vld [vmem:[#allocation7 + $0x290] sm:$0xff]
    %v3732 = vld [vmem:[#allocation7 + $0x298] sm:$0xff]
    %v3733 = vld [vmem:[#allocation7 + $0x2a0] sm:$0xff]
    %v3734 = vld [vmem:[#allocation7 + $0x2a8] sm:$0xff]
    %v3735 = vld [vmem:[#allocation7 + $0x2b0] sm:$0xff]
    %v3736 = vld [vmem:[#allocation7 + $0x2b8] sm:$0xff]
    %v3737 = vld [vmem:[#allocation7 + $0x2c0] sm:$0xff]
    %v3738 = vld [vmem:[#allocation7 + $0x2c8] sm:$0xff]
    %v3739 = vld [vmem:[#allocation7 + $0x2d0] sm:$0xff]
    %v3740 = vld [vmem:[#allocation7 + $0x2d8] sm:$0xff]
    %v3741 = vld [vmem:[#allocation7 + $0x2e0] sm:$0xff]
    %v3742 = vld [vmem:[#allocation7 + $0x2e8] sm:$0xff]
    %v3743 = vld [vmem:[#allocation7 + $0x2f0] sm:$0xff]
    %v3744 = vld [vmem:[#allocation7 + $0x2f8] sm:$0xff]
    %v3745 = vld [vmem:[#allocation7 + $0x300] sm:$0xff]
    %v3746 = vld [vmem:[#allocation7 + $0x308] sm:$0xff]
    %v3747 = vld [vmem:[#allocation7 + $0x310] sm:$0xff]
    %v3748 = vld [vmem:[#allocation7 + $0x318] sm:$0xff]
    %v3749 = vld [vmem:[#allocation7 + $0x320] sm:$0xff]
    %v3750 = vld [vmem:[#allocation7 + $0x328] sm:$0xff]
    %v3751 = vld [vmem:[#allocation7 + $0x330] sm:$0xff]
    %v3752 = vld [vmem:[#allocation7 + $0x338] sm:$0xff]
    %v3753 = vld [vmem:[#allocation7 + $0x340] sm:$0xff]
    %v3754 = vld [vmem:[#allocation7 + $0x348] sm:$0xff]
    %v3755 = vld [vmem:[#allocation7 + $0x350] sm:$0xff]
    %v3756 = vld [vmem:[#allocation7 + $0x358] sm:$0xff]
    %v3757 = vld [vmem:[#allocation7 + $0x360] sm:$0xff]
    %v3758 = vld [vmem:[#allocation7 + $0x368] sm:$0xff]
    %v3759 = vld [vmem:[#allocation7 + $0x370] sm:$0xff]
    %v3760 = vld [vmem:[#allocation7 + $0x378] sm:$0xff]
    %v3761 = vld [vmem:[#allocation7 + $0x380] sm:$0xff]
    %v3762 = vld [vmem:[#allocation7 + $0x388] sm:$0xff]
    %v3763 = vld [vmem:[#allocation7 + $0x390] sm:$0xff]
    %v3764 = vld [vmem:[#allocation7 + $0x398] sm:$0xff]
    %v3765 = vld [vmem:[#allocation7 + $0x3a0] sm:$0xff]
    %v3766 = vld [vmem:[#allocation7 + $0x3a8] sm:$0xff]
    %v3767 = vld [vmem:[#allocation7 + $0x3b0] sm:$0xff]
    %v3768 = vld [vmem:[#allocation7 + $0x3b8] sm:$0xff]
    %v3769 = vld [vmem:[#allocation7 + $0x3c0] sm:$0xff]
    %v3770 = vld [vmem:[#allocation7 + $0x3c8] sm:$0xff]
    %v3771 = vld [vmem:[#allocation7 + $0x3d0] sm:$0xff]
    %v3772 = vld [vmem:[#allocation7 + $0x3d8] sm:$0xff]
    %v3773 = vld [vmem:[#allocation7 + $0x3e0] sm:$0xff]
    %v3774 = vld [vmem:[#allocation7 + $0x3e8] sm:$0xff]
    %v3775 = vld [vmem:[#allocation7 + $0x3f0] sm:$0xff]
    %v3776 = vld [vmem:[#allocation7 + $0x3f8] sm:$0xff]
    %v3777 = vld [vmem:[#allocation7 + $0x400] sm:$0xff]
    %v3778 = vld [vmem:[#allocation7 + $0x408] sm:$0xff]
    %v3779 = vld [vmem:[#allocation7 + $0x410] sm:$0xff]
    %v3780 = vld [vmem:[#allocation7 + $0x418] sm:$0xff]
    %v3781 = vld [vmem:[#allocation7 + $0x420] sm:$0xff]
    %v3782 = vld [vmem:[#allocation7 + $0x428] sm:$0xff]
    %v3783 = vld [vmem:[#allocation7 + $0x430] sm:$0xff]
    %v3784 = vld [vmem:[#allocation7 + $0x438] sm:$0xff]
    %v3785 = vld [vmem:[#allocation7 + $0x440] sm:$0xff]
    %v3786 = vld [vmem:[#allocation7 + $0x448] sm:$0xff]
    %v3787 = vld [vmem:[#allocation7 + $0x450] sm:$0xff]
    %v3788 = vld [vmem:[#allocation7 + $0x458] sm:$0xff]
    %v3789 = vld [vmem:[#allocation7 + $0x460] sm:$0xff]
    %v3790 = vld [vmem:[#allocation7 + $0x468] sm:$0xff]
    %v3791 = vld [vmem:[#allocation7 + $0x470] sm:$0xff]
    %v3792 = vld [vmem:[#allocation7 + $0x478] sm:$0xff]
    %v3793 = vld [vmem:[#allocation7 + $0x480] sm:$0xff]
    %v3794 = vld [vmem:[#allocation7 + $0x488] sm:$0xff]
    %v3795 = vld [vmem:[#allocation7 + $0x490] sm:$0xff]
    %v3796 = vld [vmem:[#allocation7 + $0x498] sm:$0xff]
    %v3797 = vld [vmem:[#allocation7 + $0x4a0] sm:$0xff]
    %v3798 = vld [vmem:[#allocation7 + $0x4a8] sm:$0xff]
    %v3799 = vld [vmem:[#allocation7 + $0x4b0] sm:$0xff]
    %v3800 = vld [vmem:[#allocation7 + $0x4b8] sm:$0xff]
    %v3801 = vld [vmem:[#allocation7 + $0x4c0] sm:$0xff]
    %v3802 = vld [vmem:[#allocation7 + $0x4c8] sm:$0xff]
    %v3803 = vld [vmem:[#allocation7 + $0x4d0] sm:$0xff]
    %v3804 = vld [vmem:[#allocation7 + $0x4d8] sm:$0xff]
    %v3805 = vld [vmem:[#allocation7 + $0x4e0] sm:$0xff]
    %v3806 = vld [vmem:[#allocation7 + $0x4e8] sm:$0xff]
    %v3807 = vld [vmem:[#allocation7 + $0x4f0] sm:$0xff]
    %v3808 = vld [vmem:[#allocation7 + $0x4f8] sm:$0xff]
    %v3809 = vld [vmem:[#allocation7 + $0x500] sm:$0xff]
    %v3810 = vld [vmem:[#allocation7 + $0x508] sm:$0xff]
    %v3811 = vld [vmem:[#allocation7 + $0x510] sm:$0xff]
    %v3812 = vld [vmem:[#allocation7 + $0x518] sm:$0xff]
    %v3813 = vld [vmem:[#allocation7 + $0x520] sm:$0xff]
    %v3814 = vld [vmem:[#allocation7 + $0x528] sm:$0xff]
    %v3815 = vld [vmem:[#allocation7 + $0x530] sm:$0xff]
    %v3816 = vld [vmem:[#allocation7 + $0x538] sm:$0xff]
    %v3817 = vld [vmem:[#allocation7 + $0x540] sm:$0xff]
    %v3818 = vld [vmem:[#allocation7 + $0x548] sm:$0xff]
    %v3819 = vld [vmem:[#allocation7 + $0x550] sm:$0xff]
    %v3820 = vld [vmem:[#allocation7 + $0x558] sm:$0xff]
    %v3821 = vld [vmem:[#allocation7 + $0x560] sm:$0xff]
    %v3822 = vld [vmem:[#allocation7 + $0x568] sm:$0xff]
    %v3823 = vld [vmem:[#allocation7 + $0x570] sm:$0xff]
    %v3824 = vld [vmem:[#allocation7 + $0x578] sm:$0xff]
    %v3825 = vld [vmem:[#allocation7 + $0x580] sm:$0xff]
    %v3826 = vld [vmem:[#allocation7 + $0x588] sm:$0xff]
    %v3827 = vld [vmem:[#allocation7 + $0x590] sm:$0xff]
    %v3828 = vld [vmem:[#allocation7 + $0x598] sm:$0xff]
    %v3829 = vld [vmem:[#allocation7 + $0x5a0] sm:$0xff]
    %v3830 = vld [vmem:[#allocation7 + $0x5a8] sm:$0xff]
    %v3831 = vld [vmem:[#allocation7 + $0x5b0] sm:$0xff]
    %v3832 = vld [vmem:[#allocation7 + $0x5b8] sm:$0xff]
    %v3833 = vld [vmem:[#allocation7 + $0x5c0] sm:$0xff]
    %v3834 = vld [vmem:[#allocation7 + $0x5c8] sm:$0xff]
    %v3835 = vld [vmem:[#allocation7 + $0x5d0] sm:$0xff]
    %v3836 = vld [vmem:[#allocation7 + $0x5d8] sm:$0xff]
    %v3837 = vld [vmem:[#allocation7 + $0x5e0] sm:$0xff]
    %v3838 = vld [vmem:[#allocation7 + $0x5e8] sm:$0xff]
    %v3839 = vld [vmem:[#allocation7 + $0x5f0] sm:$0xff]
    %v3840 = vld [vmem:[#allocation7 + $0x5f8] sm:$0xff]
    %v3841 = vld [vmem:[#allocation7 + $0x600] sm:$0xff]
    %v3842 = vld [vmem:[#allocation7 + $0x608] sm:$0xff]
    %v3843 = vld [vmem:[#allocation7 + $0x610] sm:$0xff]
    %v3844 = vld [vmem:[#allocation7 + $0x618] sm:$0xff]
    %v3845 = vld [vmem:[#allocation7 + $0x620] sm:$0xff]
    %v3846 = vld [vmem:[#allocation7 + $0x628] sm:$0xff]
    %v3847 = vld [vmem:[#allocation7 + $0x630] sm:$0xff]
    %v3848 = vld [vmem:[#allocation7 + $0x638] sm:$0xff]
    %v3849 = vld [vmem:[#allocation7 + $0x640] sm:$0xff]
    %v3850 = vld [vmem:[#allocation7 + $0x648] sm:$0xff]
    %v3851 = vld [vmem:[#allocation7 + $0x650] sm:$0xff]
    %v3852 = vld [vmem:[#allocation7 + $0x658] sm:$0xff]
    %v3853 = vld [vmem:[#allocation7 + $0x660] sm:$0xff]
    %v3854 = vld [vmem:[#allocation7 + $0x668] sm:$0xff]
    %v3855 = vld [vmem:[#allocation7 + $0x670] sm:$0xff]
    %v3856 = vld [vmem:[#allocation7 + $0x678] sm:$0xff]
    %v3857 = vld [vmem:[#allocation7 + $0x680] sm:$0xff]
    %v3858 = vld [vmem:[#allocation7 + $0x688] sm:$0xff]
    %v3859 = vld [vmem:[#allocation7 + $0x690] sm:$0xff]
    %v3860 = vld [vmem:[#allocation7 + $0x698] sm:$0xff]
    %v3861 = vld [vmem:[#allocation7 + $0x6a0] sm:$0xff]
    %v3862 = vld [vmem:[#allocation7 + $0x6a8] sm:$0xff]
    %v3863 = vld [vmem:[#allocation7 + $0x6b0] sm:$0xff]
    %v3864 = vld [vmem:[#allocation7 + $0x6b8] sm:$0xff]
    %v3865 = vld [vmem:[#allocation7 + $0x6c0] sm:$0xff]
    %v3866 = vld [vmem:[#allocation7 + $0x6c8] sm:$0xff]
    %v3867 = vld [vmem:[#allocation7 + $0x6d0] sm:$0xff]
    %v3868 = vld [vmem:[#allocation7 + $0x6d8] sm:$0xff]
    %v3869 = vld [vmem:[#allocation7 + $0x6e0] sm:$0xff]
    %v3870 = vld [vmem:[#allocation7 + $0x6e8] sm:$0xff]
    %v3871 = vld [vmem:[#allocation7 + $0x6f0] sm:$0xff]
    %v3872 = vld [vmem:[#allocation7 + $0x6f8] sm:$0xff]
    %v3873 = vld [vmem:[#allocation7 + $0x700] sm:$0xff]
    %v3874 = vld [vmem:[#allocation7 + $0x708] sm:$0xff]
    %v3875 = vld [vmem:[#allocation7 + $0x710] sm:$0xff]
    %v3876 = vld [vmem:[#allocation7 + $0x718] sm:$0xff]
    %v3877 = vld [vmem:[#allocation7 + $0x720] sm:$0xff]
    %v3878 = vld [vmem:[#allocation7 + $0x728] sm:$0xff]
    %v3879 = vld [vmem:[#allocation7 + $0x730] sm:$0xff]
    %v3880 = vld [vmem:[#allocation7 + $0x738] sm:$0xff]
    %v3881 = vld [vmem:[#allocation7 + $0x740] sm:$0xff]
    %v3882 = vld [vmem:[#allocation7 + $0x748] sm:$0xff]
    %v3883 = vld [vmem:[#allocation7 + $0x750] sm:$0xff]
    %v3884 = vld [vmem:[#allocation7 + $0x758] sm:$0xff]
    %v3885 = vld [vmem:[#allocation7 + $0x760] sm:$0xff]
    %v3886 = vld [vmem:[#allocation7 + $0x768] sm:$0xff]
    %v3887 = vld [vmem:[#allocation7 + $0x770] sm:$0xff]
    %v3888 = vld [vmem:[#allocation7 + $0x778] sm:$0xff]
    %v3889 = vld [vmem:[#allocation7 + $0x780] sm:$0xff]
    %v3890 = vld [vmem:[#allocation7 + $0x788] sm:$0xff]
    %v3891 = vld [vmem:[#allocation7 + $0x790] sm:$0xff]
    %v3892 = vld [vmem:[#allocation7 + $0x798] sm:$0xff]
    %v3893 = vld [vmem:[#allocation7 + $0x7a0] sm:$0xff]
    %v3894 = vld [vmem:[#allocation7 + $0x7a8] sm:$0xff]
    %v3895 = vld [vmem:[#allocation7 + $0x7b0] sm:$0xff]
    %v3896 = vld [vmem:[#allocation7 + $0x7b8] sm:$0xff]
    %v3897 = vld [vmem:[#allocation7 + $0x7c0] sm:$0xff]
    %v3898 = vld [vmem:[#allocation7 + $0x7c8] sm:$0xff]
    %v3899 = vld [vmem:[#allocation7 + $0x7d0] sm:$0xff]
    %v3900 = vld [vmem:[#allocation7 + $0x7d8] sm:$0xff]
    %v3901 = vld [vmem:[#allocation7 + $0x7e0] sm:$0xff]
    %v3902 = vld [vmem:[#allocation7 + $0x7e8] sm:$0xff]
    %v3903 = vld [vmem:[#allocation7 + $0x7f0] sm:$0xff]
    %v3904 = vld [vmem:[#allocation7 + $0x7f8] sm:$0xff]
    %v3905 = vld [vmem:[#allocation7 + $0x800] sm:$0xff]
    %v3906 = vld [vmem:[#allocation7 + $0x808] sm:$0xff]
    %v3907 = vld [vmem:[#allocation7 + $0x810] sm:$0xff]
    %v3908 = vld [vmem:[#allocation7 + $0x818] sm:$0xff]
    %v3909 = vld [vmem:[#allocation7 + $0x820] sm:$0xff]
    %v3910 = vld [vmem:[#allocation7 + $0x828] sm:$0xff]
    %v3911 = vld [vmem:[#allocation7 + $0x830] sm:$0xff]
    %v3912 = vld [vmem:[#allocation7 + $0x838] sm:$0xff]
    %v3913 = vld [vmem:[#allocation7 + $0x840] sm:$0xff]
    %v3914 = vld [vmem:[#allocation7 + $0x848] sm:$0xff]
    %v3915 = vld [vmem:[#allocation7 + $0x850] sm:$0xff]
    %v3916 = vld [vmem:[#allocation7 + $0x858] sm:$0xff]
    %v3917 = vld [vmem:[#allocation7 + $0x860] sm:$0xff]
    %v3918 = vld [vmem:[#allocation7 + $0x868] sm:$0xff]
    %v3919 = vld [vmem:[#allocation7 + $0x870] sm:$0xff]
    %v3920 = vld [vmem:[#allocation7 + $0x878] sm:$0xff]
    %v3921 = vld [vmem:[#allocation7 + $0x880] sm:$0xff]
    %v3922 = vld [vmem:[#allocation7 + $0x888] sm:$0xff]
    %v3923 = vld [vmem:[#allocation7 + $0x890] sm:$0xff]
    %v3924 = vld [vmem:[#allocation7 + $0x898] sm:$0xff]
    %v3925 = vld [vmem:[#allocation7 + $0x8a0] sm:$0xff]
    %v3926 = vld [vmem:[#allocation7 + $0x8a8] sm:$0xff]
    %v3927 = vld [vmem:[#allocation7 + $0x8b0] sm:$0xff]
    %v3928 = vld [vmem:[#allocation7 + $0x8b8] sm:$0xff]
    %v3929 = vld [vmem:[#allocation7 + $0x8c0] sm:$0xff]
    %v3930 = vld [vmem:[#allocation7 + $0x8c8] sm:$0xff]
    %v3931 = vld [vmem:[#allocation7 + $0x8d0] sm:$0xff]
    %v3932 = vld [vmem:[#allocation7 + $0x8d8] sm:$0xff]
    %v3933 = vld [vmem:[#allocation7 + $0x8e0] sm:$0xff]
    %v3934 = vld [vmem:[#allocation7 + $0x8e8] sm:$0xff]
    %v3935 = vld [vmem:[#allocation7 + $0x8f0] sm:$0xff]
    %v3936 = vld [vmem:[#allocation7 + $0x8f8] sm:$0xff]
    %v3937 = vld [vmem:[#allocation7 + $0x900] sm:$0xff]
    %v3938 = vld [vmem:[#allocation7 + $0x908] sm:$0xff]
    %v3939 = vld [vmem:[#allocation7 + $0x910] sm:$0xff]
    %v3940 = vld [vmem:[#allocation7 + $0x918] sm:$0xff]
    %v3941 = vld [vmem:[#allocation7 + $0x920] sm:$0xff]
    %v3942 = vld [vmem:[#allocation7 + $0x928] sm:$0xff]
    %v3943 = vld [vmem:[#allocation7 + $0x930] sm:$0xff]
    %v3944 = vld [vmem:[#allocation7 + $0x938] sm:$0xff]
    %v3945 = vld [vmem:[#allocation7 + $0x940] sm:$0xff]
    %v3946 = vld [vmem:[#allocation7 + $0x948] sm:$0xff]
    %v3947 = vld [vmem:[#allocation7 + $0x950] sm:$0xff]
    %v3948 = vld [vmem:[#allocation7 + $0x958] sm:$0xff]
    %v3949 = vld [vmem:[#allocation7 + $0x960] sm:$0xff]
    %v3950 = vld [vmem:[#allocation7 + $0x968] sm:$0xff]
    %v3951 = vld [vmem:[#allocation7 + $0x970] sm:$0xff]
    %v3952 = vld [vmem:[#allocation7 + $0x978] sm:$0xff]
    %v3953 = vld [vmem:[#allocation7 + $0x980] sm:$0xff]
    %v3954 = vld [vmem:[#allocation7 + $0x988] sm:$0xff]
    %v3955 = vld [vmem:[#allocation7 + $0x990] sm:$0xff]
    %v3956 = vld [vmem:[#allocation7 + $0x998] sm:$0xff]
    %v3957 = vld [vmem:[#allocation7 + $0x9a0] sm:$0xff]
    %v3958 = vld [vmem:[#allocation7 + $0x9a8] sm:$0xff]
    %v3959 = vld [vmem:[#allocation7 + $0x9b0] sm:$0xff]
    %v3960 = vld [vmem:[#allocation7 + $0x9b8] sm:$0xff]
    %v3961 = vld [vmem:[#allocation7 + $0x9c0] sm:$0xff]
    %v3962 = vld [vmem:[#allocation7 + $0x9c8] sm:$0xff]
    %v3963 = vld [vmem:[#allocation7 + $0x9d0] sm:$0xff]
    %v3964 = vld [vmem:[#allocation7 + $0x9d8] sm:$0xff]
    %v3965 = vld [vmem:[#allocation7 + $0x9e0] sm:$0xff]
    %v3966 = vld [vmem:[#allocation7 + $0x9e8] sm:$0xff]
    %v3967 = vld [vmem:[#allocation7 + $0x9f0] sm:$0xff]
    %v3968 = vld [vmem:[#allocation7 + $0x9f8] sm:$0xff]
    %v3969 = vld [vmem:[#allocation7 + $0xa00] sm:$0xff]
    %v3970 = vld [vmem:[#allocation7 + $0xa08] sm:$0xff]
    %v3971 = vld [vmem:[#allocation7 + $0xa10] sm:$0xff]
    %v3972 = vld [vmem:[#allocation7 + $0xa18] sm:$0xff]
    %v3973 = vld [vmem:[#allocation7 + $0xa20] sm:$0xff]
    %v3974 = vld [vmem:[#allocation7 + $0xa28] sm:$0xff]
    %v3975 = vld [vmem:[#allocation7 + $0xa30] sm:$0xff]
    %v3976 = vld [vmem:[#allocation7 + $0xa38] sm:$0xff]
    %v3977 = vld [vmem:[#allocation7 + $0xa40] sm:$0xff]
    %v3978 = vld [vmem:[#allocation7 + $0xa48] sm:$0xff]
    %v3979 = vld [vmem:[#allocation7 + $0xa50] sm:$0xff]
    %v3980 = vld [vmem:[#allocation7 + $0xa58] sm:$0xff]
    %v3981 = vld [vmem:[#allocation7 + $0xa60] sm:$0xff]
    %v3982 = vld [vmem:[#allocation7 + $0xa68] sm:$0xff]
    %v3983 = vld [vmem:[#allocation7 + $0xa70] sm:$0xff]
    %v3984 = vld [vmem:[#allocation7 + $0xa78] sm:$0xff]
    %v3985 = vld [vmem:[#allocation7 + $0xa80] sm:$0xff]
    %v3986 = vld [vmem:[#allocation7 + $0xa88] sm:$0xff]
    %v3987 = vld [vmem:[#allocation7 + $0xa90] sm:$0xff]
    %v3988 = vld [vmem:[#allocation7 + $0xa98] sm:$0xff]
    %v3989 = vld [vmem:[#allocation7 + $0xaa0] sm:$0xff]
    %v3990 = vld [vmem:[#allocation7 + $0xaa8] sm:$0xff]
    %v3991 = vld [vmem:[#allocation7 + $0xab0] sm:$0xff]
    %v3992 = vld [vmem:[#allocation7 + $0xab8] sm:$0xff]
    %v3993 = vld [vmem:[#allocation7 + $0xac0] sm:$0xff]
    %v3994 = vld [vmem:[#allocation7 + $0xac8] sm:$0xff]
    %v3995 = vld [vmem:[#allocation7 + $0xad0] sm:$0xff]
    %v3996 = vld [vmem:[#allocation7 + $0xad8] sm:$0xff]
    %v3997 = vld [vmem:[#allocation7 + $0xae0] sm:$0xff]
    %v3998 = vld [vmem:[#allocation7 + $0xae8] sm:$0xff]
    %v3999 = vld [vmem:[#allocation7 + $0xaf0] sm:$0xff]
    %v4000 = vld [vmem:[#allocation7 + $0xaf8] sm:$0xff]
    %v4001 = vld [vmem:[#allocation7 + $0xb00] sm:$0xff]
    %v4002 = vld [vmem:[#allocation7 + $0xb08] sm:$0xff]
    %v4003 = vld [vmem:[#allocation7 + $0xb10] sm:$0xff]
    %v4004 = vld [vmem:[#allocation7 + $0xb18] sm:$0xff]
    %v4005 = vld [vmem:[#allocation7 + $0xb20] sm:$0xff]
    %v4006 = vld [vmem:[#allocation7 + $0xb28] sm:$0xff]
    %v4007 = vld [vmem:[#allocation7 + $0xb30] sm:$0xff]
    %v4008 = vld [vmem:[#allocation7 + $0xb38] sm:$0xff]
    %v4009 = vld [vmem:[#allocation7 + $0xb40] sm:$0xff]
    %v4010 = vld [vmem:[#allocation7 + $0xb48] sm:$0xff]
    %v4011 = vld [vmem:[#allocation7 + $0xb50] sm:$0xff]
    %v4012 = vld [vmem:[#allocation7 + $0xb58] sm:$0xff]
    %v4013 = vld [vmem:[#allocation7 + $0xb60] sm:$0xff]
    %v4014 = vld [vmem:[#allocation7 + $0xb68] sm:$0xff]
    %v4015 = vld [vmem:[#allocation7 + $0xb70] sm:$0xff]
    %v4016 = vld [vmem:[#allocation7 + $0xb78] sm:$0xff]
    %v4017 = vld [vmem:[#allocation7 + $0xb80] sm:$0xff]
    %v4018 = vld [vmem:[#allocation7 + $0xb88] sm:$0xff]
    %v4019 = vld [vmem:[#allocation7 + $0xb90] sm:$0xff]
    %v4020 = vld [vmem:[#allocation7 + $0xb98] sm:$0xff]
    %v4021 = vld [vmem:[#allocation7 + $0xba0] sm:$0xff]
    %v4022 = vld [vmem:[#allocation7 + $0xba8] sm:$0xff]
    %v4023 = vld [vmem:[#allocation7 + $0xbb0] sm:$0xff]
    %v4024 = vld [vmem:[#allocation7 + $0xbb8] sm:$0xff]
    %v4025 = vld [vmem:[#allocation7 + $0xbc0] sm:$0xff]
    %v4026 = vld [vmem:[#allocation7 + $0xbc8] sm:$0xff]
    %v4027 = vld [vmem:[#allocation7 + $0xbd0] sm:$0xff]
    %v4028 = vld [vmem:[#allocation7 + $0xbd8] sm:$0xff]
    %v4029 = vld [vmem:[#allocation7 + $0xbe0] sm:$0xff]
    %v4030 = vld [vmem:[#allocation7 + $0xbe8] sm:$0xff]
    %v4031 = vld [vmem:[#allocation7 + $0xbf0] sm:$0xff]
    %v4032 = vld [vmem:[#allocation7 + $0xbf8] sm:$0xff]
    %v4033 = vld [vmem:[#allocation7 + $0xc00] sm:$0xff]
    %v4034 = vld [vmem:[#allocation7 + $0xc08] sm:$0xff]
    %v4035 = vld [vmem:[#allocation7 + $0xc10] sm:$0xff]
    %v4036 = vld [vmem:[#allocation7 + $0xc18] sm:$0xff]
    %v4037 = vld [vmem:[#allocation7 + $0xc20] sm:$0xff]
    %v4038 = vld [vmem:[#allocation7 + $0xc28] sm:$0xff]
    %v4039 = vld [vmem:[#allocation7 + $0xc30] sm:$0xff]
    %v4040 = vld [vmem:[#allocation7 + $0xc38] sm:$0xff]
    %v4041 = vld [vmem:[#allocation7 + $0xc40] sm:$0xff]
    %v4042 = vld [vmem:[#allocation7 + $0xc48] sm:$0xff]
    %v4043 = vld [vmem:[#allocation7 + $0xc50] sm:$0xff]
    %v4044 = vld [vmem:[#allocation7 + $0xc58] sm:$0xff]
    %v4045 = vld [vmem:[#allocation7 + $0xc60] sm:$0xff]
    %v4046 = vld [vmem:[#allocation7 + $0xc68] sm:$0xff]
    %v4047 = vld [vmem:[#allocation7 + $0xc70] sm:$0xff]
    %v4048 = vld [vmem:[#allocation7 + $0xc78] sm:$0xff]
    %v4049 = vld [vmem:[#allocation7 + $0xc80] sm:$0xff]
    %v4050 = vld [vmem:[#allocation7 + $0xc88] sm:$0xff]
    %v4051 = vld [vmem:[#allocation7 + $0xc90] sm:$0xff]
    %v4052 = vld [vmem:[#allocation7 + $0xc98] sm:$0xff]
    %v4053 = vld [vmem:[#allocation7 + $0xca0] sm:$0xff]
    %v4054 = vld [vmem:[#allocation7 + $0xca8] sm:$0xff]
    %v4055 = vld [vmem:[#allocation7 + $0xcb0] sm:$0xff]
    %v4056 = vld [vmem:[#allocation7 + $0xcb8] sm:$0xff]
    %v4057 = vld [vmem:[#allocation7 + $0xcc0] sm:$0xff]
    %v4058 = vld [vmem:[#allocation7 + $0xcc8] sm:$0xff]
    %v4059 = vld [vmem:[#allocation7 + $0xcd0] sm:$0xff]
    %v4060 = vld [vmem:[#allocation7 + $0xcd8] sm:$0xff]
    %v4061 = vld [vmem:[#allocation7 + $0xce0] sm:$0xff]
    %v4062 = vld [vmem:[#allocation7 + $0xce8] sm:$0xff]
    %v4063 = vld [vmem:[#allocation7 + $0xcf0] sm:$0xff]
    %v4064 = vld [vmem:[#allocation7 + $0xcf8] sm:$0xff]
    %v4065 = vld [vmem:[#allocation7 + $0xd00] sm:$0xff]
    %v4066 = vld [vmem:[#allocation7 + $0xd08] sm:$0xff]
    %v4067 = vld [vmem:[#allocation7 + $0xd10] sm:$0xff]
    %v4068 = vld [vmem:[#allocation7 + $0xd18] sm:$0xff]
    %v4069 = vld [vmem:[#allocation7 + $0xd20] sm:$0xff]
    %v4070 = vld [vmem:[#allocation7 + $0xd28] sm:$0xff]
    %v4071 = vld [vmem:[#allocation7 + $0xd30] sm:$0xff]
    %v4072 = vld [vmem:[#allocation7 + $0xd38] sm:$0xff]
    %v4073 = vld [vmem:[#allocation7 + $0xd40] sm:$0xff]
    %v4074 = vld [vmem:[#allocation7 + $0xd48] sm:$0xff]
    %v4075 = vld [vmem:[#allocation7 + $0xd50] sm:$0xff]
    %v4076 = vld [vmem:[#allocation7 + $0xd58] sm:$0xff]
    %v4077 = vld [vmem:[#allocation7 + $0xd60] sm:$0xff]
    %v4078 = vld [vmem:[#allocation7 + $0xd68] sm:$0xff]
    %v4079 = vld [vmem:[#allocation7 + $0xd70] sm:$0xff]
    %v4080 = vld [vmem:[#allocation7 + $0xd78] sm:$0xff]
    %v4081 = vld [vmem:[#allocation7 + $0xd80] sm:$0xff]
    %v4082 = vld [vmem:[#allocation7 + $0xd88] sm:$0xff]
    %v4083 = vld [vmem:[#allocation7 + $0xd90] sm:$0xff]
    %v4084 = vld [vmem:[#allocation7 + $0xd98] sm:$0xff]
    %v4085 = vld [vmem:[#allocation7 + $0xda0] sm:$0xff]
    %v4086 = vld [vmem:[#allocation7 + $0xda8] sm:$0xff]
    %v4087 = vld [vmem:[#allocation7 + $0xdb0] sm:$0xff]
    %v4088 = vld [vmem:[#allocation7 + $0xdb8] sm:$0xff]
    %v4089 = vld [vmem:[#allocation7 + $0xdc0] sm:$0xff]
    %v4090 = vld [vmem:[#allocation7 + $0xdc8] sm:$0xff]
    %v4091 = vld [vmem:[#allocation7 + $0xdd0] sm:$0xff]
    %v4092 = vld [vmem:[#allocation7 + $0xdd8] sm:$0xff]
    %v4093 = vld [vmem:[#allocation7 + $0xde0] sm:$0xff]
    %v4094 = vld [vmem:[#allocation7 + $0xde8] sm:$0xff]
    %v4095 = vld [vmem:[#allocation7 + $0xdf0] sm:$0xff]
    %v4096 = vld [vmem:[#allocation7 + $0xdf8] sm:$0xff]
    %v4097 = vld [vmem:[#allocation7 + $0xe00] sm:$0xff]
    %v4098 = vld [vmem:[#allocation7 + $0xe08] sm:$0xff]
    %v4099 = vld [vmem:[#allocation7 + $0xe10] sm:$0xff]
    %v4100 = vld [vmem:[#allocation7 + $0xe18] sm:$0xff]
    %v4101 = vld [vmem:[#allocation7 + $0xe20] sm:$0xff]
    %v4102 = vld [vmem:[#allocation7 + $0xe28] sm:$0xff]
    %v4103 = vld [vmem:[#allocation7 + $0xe30] sm:$0xff]
    %v4104 = vld [vmem:[#allocation7 + $0xe38] sm:$0xff]
    %v4105 = vld [vmem:[#allocation7 + $0xe40] sm:$0xff]
    %v4106 = vld [vmem:[#allocation7 + $0xe48] sm:$0xff]
    %v4107 = vld [vmem:[#allocation7 + $0xe50] sm:$0xff]
    %v4108 = vld [vmem:[#allocation7 + $0xe58] sm:$0xff]
    %v4109 = vld [vmem:[#allocation7 + $0xe60] sm:$0xff]
    %v4110 = vld [vmem:[#allocation7 + $0xe68] sm:$0xff]
    %v4111 = vld [vmem:[#allocation7 + $0xe70] sm:$0xff]
    %v4112 = vld [vmem:[#allocation7 + $0xe78] sm:$0xff]
    %v4113 = vld [vmem:[#allocation7 + $0xe80] sm:$0xff]
    %v4114 = vld [vmem:[#allocation7 + $0xe88] sm:$0xff]
    %v4115 = vld [vmem:[#allocation7 + $0xe90] sm:$0xff]
    %v4116 = vld [vmem:[#allocation7 + $0xe98] sm:$0xff]
    %v4117 = vld [vmem:[#allocation7 + $0xea0] sm:$0xff]
    %v4118 = vld [vmem:[#allocation7 + $0xea8] sm:$0xff]
    %v4119 = vld [vmem:[#allocation7 + $0xeb0] sm:$0xff]
    %v4120 = vld [vmem:[#allocation7 + $0xeb8] sm:$0xff]
    %v4121 = vld [vmem:[#allocation7 + $0xec0] sm:$0xff]
    %v4122 = vld [vmem:[#allocation7 + $0xec8] sm:$0xff]
    %v4123 = vld [vmem:[#allocation7 + $0xed0] sm:$0xff]
    %v4124 = vld [vmem:[#allocation7 + $0xed8] sm:$0xff]
    %v4125 = vld [vmem:[#allocation7 + $0xee0] sm:$0xff]
    %v4126 = vld [vmem:[#allocation7 + $0xee8] sm:$0xff]
    %v4127 = vld [vmem:[#allocation7 + $0xef0] sm:$0xff]
    %v4128 = vld [vmem:[#allocation7 + $0xef8] sm:$0xff]
    %v4129 = vld [vmem:[#allocation7 + $0xf00] sm:$0xff]
    %v4130 = vld [vmem:[#allocation7 + $0xf08] sm:$0xff]
    %v4131 = vld [vmem:[#allocation7 + $0xf10] sm:$0xff]
    %v4132 = vld [vmem:[#allocation7 + $0xf18] sm:$0xff]
    %v4133 = vld [vmem:[#allocation7 + $0xf20] sm:$0xff]
    %v4134 = vld [vmem:[#allocation7 + $0xf28] sm:$0xff]
    %v4135 = vld [vmem:[#allocation7 + $0xf30] sm:$0xff]
    %v4136 = vld [vmem:[#allocation7 + $0xf38] sm:$0xff]
    %v4137 = vld [vmem:[#allocation7 + $0xf40] sm:$0xff]
    %v4138 = vld [vmem:[#allocation7 + $0xf48] sm:$0xff]
    %v4139 = vld [vmem:[#allocation7 + $0xf50] sm:$0xff]
    %v4140 = vld [vmem:[#allocation7 + $0xf58] sm:$0xff]
    %v4141 = vld [vmem:[#allocation7 + $0xf60] sm:$0xff]
    %v4142 = vld [vmem:[#allocation7 + $0xf68] sm:$0xff]
    %v4143 = vld [vmem:[#allocation7 + $0xf70] sm:$0xff]
    %v4144 = vld [vmem:[#allocation7 + $0xf78] sm:$0xff]
    %v4145 = vld [vmem:[#allocation7 + $0xf80] sm:$0xff]
    %v4146 = vld [vmem:[#allocation7 + $0xf88] sm:$0xff]
    %v4147 = vld [vmem:[#allocation7 + $0xf90] sm:$0xff]
    %v4148 = vld [vmem:[#allocation7 + $0xf98] sm:$0xff]
    %v4149 = vld [vmem:[#allocation7 + $0xfa0] sm:$0xff]
    %v4150 = vld [vmem:[#allocation7 + $0xfa8] sm:$0xff]
    %v4151 = vld [vmem:[#allocation7 + $0xfb0] sm:$0xff]
    %v4152 = vld [vmem:[#allocation7 + $0xfb8] sm:$0xff]
    %v4153 = vld [vmem:[#allocation7 + $0xfc0] sm:$0xff]
    %v4154 = vld [vmem:[#allocation7 + $0xfc8] sm:$0xff]
    %v4155 = vld [vmem:[#allocation7 + $0xfd0] sm:$0xff]
    %v4156 = vld [vmem:[#allocation7 + $0xfd8] sm:$0xff]
    %v4157 = vld [vmem:[#allocation7 + $0xfe0] sm:$0xff]
    %v4158 = vld [vmem:[#allocation7 + $0xfe8] sm:$0xff]
    %v4159 = vld [vmem:[#allocation7 + $0xff0] sm:$0xff]
    %v4160 = vld [vmem:[#allocation7 + $0xff8] sm:$0xff]
    %v4161 = vld [vmem:[#allocation7 + $0x1000] sm:$0xff]
    %v4162 = vld [vmem:[#allocation7 + $0x1008] sm:$0xff]
    %v4163 = vld [vmem:[#allocation7 + $0x1010] sm:$0xff]
    %v4164 = vld [vmem:[#allocation7 + $0x1018] sm:$0xff]
    %v4165 = vld [vmem:[#allocation7 + $0x1020] sm:$0xff]
    %v4166 = vld [vmem:[#allocation7 + $0x1028] sm:$0xff]
    %v4167 = vld [vmem:[#allocation7 + $0x1030] sm:$0xff]
    %v4168 = vld [vmem:[#allocation7 + $0x1038] sm:$0xff]
    %v4169 = vld [vmem:[#allocation7 + $0x1040] sm:$0xff]
    %v4170 = vld [vmem:[#allocation7 + $0x1048] sm:$0xff]
    %v4171 = vld [vmem:[#allocation7 + $0x1050] sm:$0xff]
    %v4172 = vld [vmem:[#allocation7 + $0x1058] sm:$0xff]
    %v4173 = vld [vmem:[#allocation7 + $0x1060] sm:$0xff]
    %v4174 = vld [vmem:[#allocation7 + $0x1068] sm:$0xff]
    %v4175 = vld [vmem:[#allocation7 + $0x1070] sm:$0xff]
    %v4176 = vld [vmem:[#allocation7 + $0x1078] sm:$0xff]
    %v4177 = vld [vmem:[#allocation7 + $0x1080] sm:$0xff]
    %v4178 = vld [vmem:[#allocation7 + $0x1088] sm:$0xff]
    %v4179 = vld [vmem:[#allocation7 + $0x1090] sm:$0xff]
    %v4180 = vld [vmem:[#allocation7 + $0x1098] sm:$0xff]
    %v4181 = vld [vmem:[#allocation7 + $0x10a0] sm:$0xff]
    %v4182 = vld [vmem:[#allocation7 + $0x10a8] sm:$0xff]
    %v4183 = vld [vmem:[#allocation7 + $0x10b0] sm:$0xff]
    %v4184 = vld [vmem:[#allocation7 + $0x10b8] sm:$0xff]
    %v4185 = vld [vmem:[#allocation7 + $0x10c0] sm:$0xff]
    %v4186 = vld [vmem:[#allocation7 + $0x10c8] sm:$0xff]
    %v4187 = vld [vmem:[#allocation7 + $0x10d0] sm:$0xff]
    %v4188 = vld [vmem:[#allocation7 + $0x10d8] sm:$0xff]
    %v4189 = vld [vmem:[#allocation7 + $0x10e0] sm:$0xff]
    %v4190 = vld [vmem:[#allocation7 + $0x10e8] sm:$0xff]
    %v4191 = vld [vmem:[#allocation7 + $0x10f0] sm:$0xff]
    %v4192 = vld [vmem:[#allocation7 + $0x10f8] sm:$0xff]
    %v4193 = vld [vmem:[#allocation7 + $0x1100] sm:$0xff]
    %v4194 = vld [vmem:[#allocation7 + $0x1108] sm:$0xff]
    %v4195 = vld [vmem:[#allocation7 + $0x1110] sm:$0xff]
    %v4196 = vld [vmem:[#allocation7 + $0x1118] sm:$0xff]
    %v4197 = vld [vmem:[#allocation7 + $0x1120] sm:$0xff]
    %v4198 = vld [vmem:[#allocation7 + $0x1128] sm:$0xff]
    %v4199 = vld [vmem:[#allocation7 + $0x1130] sm:$0xff]
    %v4200 = vld [vmem:[#allocation7 + $0x1138] sm:$0xff]
    %v4201 = vld [vmem:[#allocation7 + $0x1140] sm:$0xff]
    %v4202 = vld [vmem:[#allocation7 + $0x1148] sm:$0xff]
    %v4203 = vld [vmem:[#allocation7 + $0x1150] sm:$0xff]
    %v4204 = vld [vmem:[#allocation7 + $0x1158] sm:$0xff]
    %v4205 = vld [vmem:[#allocation7 + $0x1160] sm:$0xff]
    %v4206 = vld [vmem:[#allocation7 + $0x1168] sm:$0xff]
    %v4207 = vld [vmem:[#allocation7 + $0x1170] sm:$0xff]
    %v4208 = vld [vmem:[#allocation7 + $0x1178] sm:$0xff]
    %v4209 = vld [vmem:[#allocation7 + $0x1180] sm:$0xff]
    %v4210 = vld [vmem:[#allocation7 + $0x1188] sm:$0xff]
    %v4211 = vld [vmem:[#allocation7 + $0x1190] sm:$0xff]
    %v4212 = vld [vmem:[#allocation7 + $0x1198] sm:$0xff]
    %v4213 = vld [vmem:[#allocation7 + $0x11a0] sm:$0xff]
    %v4214 = vld [vmem:[#allocation7 + $0x11a8] sm:$0xff]
    %v4215 = vld [vmem:[#allocation7 + $0x11b0] sm:$0xff]
    %v4216 = vld [vmem:[#allocation7 + $0x11b8] sm:$0xff]
    %v4217 = vld [vmem:[#allocation7 + $0x11c0] sm:$0xff]
    %v4218 = vld [vmem:[#allocation7 + $0x11c8] sm:$0xff]
    %v4219 = vld [vmem:[#allocation7 + $0x11d0] sm:$0xff]
    %v4220 = vld [vmem:[#allocation7 + $0x11d8] sm:$0xff]
    %v4221 = vld [vmem:[#allocation7 + $0x11e0] sm:$0xff]
    %v4222 = vld [vmem:[#allocation7 + $0x11e8] sm:$0xff]
    %v4223 = vld [vmem:[#allocation7 + $0x11f0] sm:$0xff]
    %v4224 = vld [vmem:[#allocation7 + $0x11f8] sm:$0xff]
    %v4225 = vld [vmem:[#allocation7 + $0x1200] sm:$0xff]
    %v4226 = vld [vmem:[#allocation7 + $0x1208] sm:$0xff]
    %v4227 = vld [vmem:[#allocation7 + $0x1210] sm:$0xff]
    %v4228 = vld [vmem:[#allocation7 + $0x1218] sm:$0xff]
    %v4229 = vld [vmem:[#allocation7 + $0x1220] sm:$0xff]
    %v4230 = vld [vmem:[#allocation7 + $0x1228] sm:$0xff]
    %v4231 = vld [vmem:[#allocation7 + $0x1230] sm:$0xff]
    %v4232 = vld [vmem:[#allocation7 + $0x1238] sm:$0xff]
    %v4233 = vld [vmem:[#allocation7 + $0x1240] sm:$0xff]
    %v4234 = vld [vmem:[#allocation7 + $0x1248] sm:$0xff]
    %v4235 = vld [vmem:[#allocation7 + $0x1250] sm:$0xff]
    %v4236 = vld [vmem:[#allocation7 + $0x1258] sm:$0xff]
    %v4237 = vld [vmem:[#allocation7 + $0x1260] sm:$0xff]
    %v4238 = vld [vmem:[#allocation7 + $0x1268] sm:$0xff]
    %v4239 = vld [vmem:[#allocation7 + $0x1270] sm:$0xff]
    %v4240 = vld [vmem:[#allocation7 + $0x1278] sm:$0xff]
    %v4241 = vld [vmem:[#allocation7 + $0x1280] sm:$0xff]
    %v4242 = vld [vmem:[#allocation7 + $0x1288] sm:$0xff]
    %v4243 = vld [vmem:[#allocation7 + $0x1290] sm:$0xff]
    %v4244 = vld [vmem:[#allocation7 + $0x1298] sm:$0xff]
    %v4245 = vld [vmem:[#allocation7 + $0x12a0] sm:$0xff]
    %v4246 = vld [vmem:[#allocation7 + $0x12a8] sm:$0xff]
    %v4247 = vld [vmem:[#allocation7 + $0x12b0] sm:$0xff]
    %v4248 = vld [vmem:[#allocation7 + $0x12b8] sm:$0xff]
    %v4249 = vld [vmem:[#allocation7 + $0x12c0] sm:$0xff]
    %v4250 = vld [vmem:[#allocation7 + $0x12c8] sm:$0xff]
    %v4251 = vld [vmem:[#allocation7 + $0x12d0] sm:$0xff]
    %v4252 = vld [vmem:[#allocation7 + $0x12d8] sm:$0xff]
    %v4253 = vld [vmem:[#allocation7 + $0x12e0] sm:$0xff]
    %v4254 = vld [vmem:[#allocation7 + $0x12e8] sm:$0xff]
    %v4255 = vld [vmem:[#allocation7 + $0x12f0] sm:$0xff]
    %v4256 = vld [vmem:[#allocation7 + $0x12f8] sm:$0xff]
    %v4257 = vld [vmem:[#allocation7 + $0x1300] sm:$0xff]
    %v4258 = vld [vmem:[#allocation7 + $0x1308] sm:$0xff]
    %v4259 = vld [vmem:[#allocation7 + $0x1310] sm:$0xff]
    %v4260 = vld [vmem:[#allocation7 + $0x1318] sm:$0xff]
    %v4261 = vld [vmem:[#allocation7 + $0x1320] sm:$0xff]
    %v4262 = vld [vmem:[#allocation7 + $0x1328] sm:$0xff]
    %v4263 = vld [vmem:[#allocation7 + $0x1330] sm:$0xff]
    %v4264 = vld [vmem:[#allocation7 + $0x1338] sm:$0xff]
    %v4265 = vld [vmem:[#allocation7 + $0x1340] sm:$0xff]
    %v4266 = vld [vmem:[#allocation7 + $0x1348] sm:$0xff]
    %v4267 = vld [vmem:[#allocation7 + $0x1350] sm:$0xff]
    %v4268 = vld [vmem:[#allocation7 + $0x1358] sm:$0xff]
    %v4269 = vld [vmem:[#allocation7 + $0x1360] sm:$0xff]
    %v4270 = vld [vmem:[#allocation7 + $0x1368] sm:$0xff]
    %v4271 = vld [vmem:[#allocation7 + $0x1370] sm:$0xff]
    %v4272 = vld [vmem:[#allocation7 + $0x1378] sm:$0xff]
    %v4273 = vld [vmem:[#allocation7 + $0x1380] sm:$0xff]
    %v4274 = vld [vmem:[#allocation7 + $0x1388] sm:$0xff]
    %v4275 = vld [vmem:[#allocation7 + $0x1390] sm:$0xff]
    %v4276 = vld [vmem:[#allocation7 + $0x1398] sm:$0xff]
    %v4277 = vld [vmem:[#allocation7 + $0x13a0] sm:$0xff]
    %v4278 = vld [vmem:[#allocation7 + $0x13a8] sm:$0xff]
    %v4279 = vld [vmem:[#allocation7 + $0x13b0] sm:$0xff]
    %v4280 = vld [vmem:[#allocation7 + $0x13b8] sm:$0xff]
    %v4281 = vld [vmem:[#allocation7 + $0x13c0] sm:$0xff]
    %v4282 = vld [vmem:[#allocation7 + $0x13c8] sm:$0xff]
    %v4283 = vld [vmem:[#allocation7 + $0x13d0] sm:$0xff]
    %v4284 = vld [vmem:[#allocation7 + $0x13d8] sm:$0xff]
    %v4285 = vld [vmem:[#allocation7 + $0x13e0] sm:$0xff]
    %v4286 = vld [vmem:[#allocation7 + $0x13e8] sm:$0xff]
    %v4287 = vld [vmem:[#allocation7 + $0x13f0] sm:$0xff]
    %v4288 = vld [vmem:[#allocation7 + $0x13f8] sm:$0xff]
    %v4289 = vld [vmem:[#allocation7 + $0x1400] sm:$0xff]
    %v4290 = vld [vmem:[#allocation7 + $0x1408] sm:$0xff]
    %v4291 = vld [vmem:[#allocation7 + $0x1410] sm:$0xff]
    %v4292 = vld [vmem:[#allocation7 + $0x1418] sm:$0xff]
    %v4293 = vld [vmem:[#allocation7 + $0x1420] sm:$0xff]
    %v4294 = vld [vmem:[#allocation7 + $0x1428] sm:$0xff]
    %v4295 = vld [vmem:[#allocation7 + $0x1430] sm:$0xff]
    %v4296 = vld [vmem:[#allocation7 + $0x1438] sm:$0xff]
    %v4297 = vld [vmem:[#allocation7 + $0x1440] sm:$0xff]
    %v4298 = vld [vmem:[#allocation7 + $0x1448] sm:$0xff]
    %v4299 = vld [vmem:[#allocation7 + $0x1450] sm:$0xff]
    %v4300 = vld [vmem:[#allocation7 + $0x1458] sm:$0xff]
    %v4301 = vld [vmem:[#allocation7 + $0x1460] sm:$0xff]
    %v4302 = vld [vmem:[#allocation7 + $0x1468] sm:$0xff]
    %v4303 = vld [vmem:[#allocation7 + $0x1470] sm:$0xff]
    %v4304 = vld [vmem:[#allocation7 + $0x1478] sm:$0xff]
    %v4305 = vld [vmem:[#allocation7 + $0x1480] sm:$0xff]
    %v4306 = vld [vmem:[#allocation7 + $0x1488] sm:$0xff]
    %v4307 = vld [vmem:[#allocation7 + $0x1490] sm:$0xff]
    %v4308 = vld [vmem:[#allocation7 + $0x1498] sm:$0xff]
    %v4309 = vld [vmem:[#allocation7 + $0x14a0] sm:$0xff]
    %v4310 = vld [vmem:[#allocation7 + $0x14a8] sm:$0xff]
    %v4311 = vld [vmem:[#allocation7 + $0x14b0] sm:$0xff]
    %v4312 = vld [vmem:[#allocation7 + $0x14b8] sm:$0xff]
    %v4313 = vld [vmem:[#allocation7 + $0x14c0] sm:$0xff]
    %v4314 = vld [vmem:[#allocation7 + $0x14c8] sm:$0xff]
    %v4315 = vld [vmem:[#allocation7 + $0x14d0] sm:$0xff]
    %v4316 = vld [vmem:[#allocation7 + $0x14d8] sm:$0xff]
    %v4317 = vld [vmem:[#allocation7 + $0x14e0] sm:$0xff]
    %v4318 = vld [vmem:[#allocation7 + $0x14e8] sm:$0xff]
    %v4319 = vld [vmem:[#allocation7 + $0x14f0] sm:$0xff]
    %v4320 = vld [vmem:[#allocation7 + $0x14f8] sm:$0xff]
    %v4321 = vld [vmem:[#allocation7 + $0x1500] sm:$0xff]
    %v4322 = vld [vmem:[#allocation7 + $0x1508] sm:$0xff]
    %v4323 = vld [vmem:[#allocation7 + $0x1510] sm:$0xff]
    %v4324 = vld [vmem:[#allocation7 + $0x1518] sm:$0xff]
    %v4325 = vld [vmem:[#allocation7 + $0x1520] sm:$0xff]
    %v4326 = vld [vmem:[#allocation7 + $0x1528] sm:$0xff]
    %v4327 = vld [vmem:[#allocation7 + $0x1530] sm:$0xff]
    %v4328 = vld [vmem:[#allocation7 + $0x1538] sm:$0xff]
    %v4329 = vld [vmem:[#allocation7 + $0x1540] sm:$0xff]
    %v4330 = vld [vmem:[#allocation7 + $0x1548] sm:$0xff]
    %v4331 = vld [vmem:[#allocation7 + $0x1550] sm:$0xff]
    %v4332 = vld [vmem:[#allocation7 + $0x1558] sm:$0xff]
    %v4333 = vld [vmem:[#allocation7 + $0x1560] sm:$0xff]
    %v4334 = vld [vmem:[#allocation7 + $0x1568] sm:$0xff]
    %v4335 = vld [vmem:[#allocation7 + $0x1570] sm:$0xff]
    %v4336 = vld [vmem:[#allocation7 + $0x1578] sm:$0xff]
    %v4337 = vld [vmem:[#allocation7 + $0x1580] sm:$0xff]
    %v4338 = vld [vmem:[#allocation7 + $0x1588] sm:$0xff]
    %v4339 = vld [vmem:[#allocation7 + $0x1590] sm:$0xff]
    %v4340 = vld [vmem:[#allocation7 + $0x1598] sm:$0xff]
    %v4341 = vld [vmem:[#allocation7 + $0x15a0] sm:$0xff]
    %v4342 = vld [vmem:[#allocation7 + $0x15a8] sm:$0xff]
    %v4343 = vld [vmem:[#allocation7 + $0x15b0] sm:$0xff]
    %v4344 = vld [vmem:[#allocation7 + $0x15b8] sm:$0xff]
    %v4345 = vld [vmem:[#allocation7 + $0x15c0] sm:$0xff]
    %v4346 = vld [vmem:[#allocation7 + $0x15c8] sm:$0xff]
    %v4347 = vld [vmem:[#allocation7 + $0x15d0] sm:$0xff]
    %v4348 = vld [vmem:[#allocation7 + $0x15d8] sm:$0xff]
    %v4349 = vld [vmem:[#allocation7 + $0x15e0] sm:$0xff]
    %v4350 = vld [vmem:[#allocation7 + $0x15e8] sm:$0xff]
    %v4351 = vld [vmem:[#allocation7 + $0x15f0] sm:$0xff]
    %v4352 = vld [vmem:[#allocation7 + $0x15f8] sm:$0xff]
    %v4353 = vld [vmem:[#allocation7 + $0x1600] sm:$0xff]
    %v4354 = vld [vmem:[#allocation7 + $0x1608] sm:$0xff]
    %v4355 = vld [vmem:[#allocation7 + $0x1610] sm:$0xff]
    %v4356 = vld [vmem:[#allocation7 + $0x1618] sm:$0xff]
    %v4357 = vld [vmem:[#allocation7 + $0x1620] sm:$0xff]
    %v4358 = vld [vmem:[#allocation7 + $0x1628] sm:$0xff]
    %v4359 = vld [vmem:[#allocation7 + $0x1630] sm:$0xff]
    %v4360 = vld [vmem:[#allocation7 + $0x1638] sm:$0xff]
    %v4361 = vld [vmem:[#allocation7 + $0x1640] sm:$0xff]
    %v4362 = vld [vmem:[#allocation7 + $0x1648] sm:$0xff]
    %v4363 = vld [vmem:[#allocation7 + $0x1650] sm:$0xff]
    %v4364 = vld [vmem:[#allocation7 + $0x1658] sm:$0xff]
    %v4365 = vld [vmem:[#allocation7 + $0x1660] sm:$0xff]
    %v4366 = vld [vmem:[#allocation7 + $0x1668] sm:$0xff]
    %v4367 = vld [vmem:[#allocation7 + $0x1670] sm:$0xff]
    %v4368 = vld [vmem:[#allocation7 + $0x1678] sm:$0xff]
    %v4369 = vld [vmem:[#allocation7 + $0x1680] sm:$0xff]
    %v4370 = vld [vmem:[#allocation7 + $0x1688] sm:$0xff]
    %v4371 = vld [vmem:[#allocation7 + $0x1690] sm:$0xff]
    %v4372 = vld [vmem:[#allocation7 + $0x1698] sm:$0xff]
    %v4373 = vld [vmem:[#allocation7 + $0x16a0] sm:$0xff]
    %v4374 = vld [vmem:[#allocation7 + $0x16a8] sm:$0xff]
    %v4375 = vld [vmem:[#allocation7 + $0x16b0] sm:$0xff]
    %v4376 = vld [vmem:[#allocation7 + $0x16b8] sm:$0xff]
    %v4377 = vld [vmem:[#allocation7 + $0x16c0] sm:$0xff]
    %v4378 = vld [vmem:[#allocation7 + $0x16c8] sm:$0xff]
    %v4379 = vld [vmem:[#allocation7 + $0x16d0] sm:$0xff]
    %v4380 = vld [vmem:[#allocation7 + $0x16d8] sm:$0xff]
    %v4381 = vld [vmem:[#allocation7 + $0x16e0] sm:$0xff]
    %v4382 = vld [vmem:[#allocation7 + $0x16e8] sm:$0xff]
    %v4383 = vld [vmem:[#allocation7 + $0x16f0] sm:$0xff]
    %v4384 = vld [vmem:[#allocation7 + $0x16f8] sm:$0xff]
    %v4385 = vld [vmem:[#allocation7 + $0x1700] sm:$0xff]
    %v4386 = vld [vmem:[#allocation7 + $0x1708] sm:$0xff]
    %v4387 = vld [vmem:[#allocation7 + $0x1710] sm:$0xff]
    %v4388 = vld [vmem:[#allocation7 + $0x1718] sm:$0xff]
    %v4389 = vld [vmem:[#allocation7 + $0x1720] sm:$0xff]
    %v4390 = vld [vmem:[#allocation7 + $0x1728] sm:$0xff]
    %v4391 = vld [vmem:[#allocation7 + $0x1730] sm:$0xff]
    %v4392 = vld [vmem:[#allocation7 + $0x1738] sm:$0xff]
    %v4393 = vld [vmem:[#allocation7 + $0x1740] sm:$0xff]
    %v4394 = vld [vmem:[#allocation7 + $0x1748] sm:$0xff]
    %v4395 = vld [vmem:[#allocation7 + $0x1750] sm:$0xff]
    %v4396 = vld [vmem:[#allocation7 + $0x1758] sm:$0xff]
    %v4397 = vld [vmem:[#allocation7 + $0x1760] sm:$0xff]
    %v4398 = vld [vmem:[#allocation7 + $0x1768] sm:$0xff]
    %v4399 = vld [vmem:[#allocation7 + $0x1770] sm:$0xff]
    %v4400 = vld [vmem:[#allocation7 + $0x1778] sm:$0xff]
    %v4401 = vld [vmem:[#allocation7 + $0x1780] sm:$0xff]
    %v4402 = vld [vmem:[#allocation7 + $0x1788] sm:$0xff]
    %v4403 = vld [vmem:[#allocation7 + $0x1790] sm:$0xff]
    %v4404 = vld [vmem:[#allocation7 + $0x1798] sm:$0xff]
    %v4405 = vld [vmem:[#allocation7 + $0x17a0] sm:$0xff]
    %v4406 = vld [vmem:[#allocation7 + $0x17a8] sm:$0xff]
    %v4407 = vld [vmem:[#allocation7 + $0x17b0] sm:$0xff]
    %v4408 = vld [vmem:[#allocation7 + $0x17b8] sm:$0xff]
    %v4409 = vld [vmem:[#allocation7 + $0x17c0] sm:$0xff]
    %v4410 = vld [vmem:[#allocation7 + $0x17c8] sm:$0xff]
    %v4411 = vld [vmem:[#allocation7 + $0x17d0] sm:$0xff]
    %v4412 = vld [vmem:[#allocation7 + $0x17d8] sm:$0xff]
    %v4413 = vld [vmem:[#allocation7 + $0x17e0] sm:$0xff]
    %v4414 = vld [vmem:[#allocation7 + $0x17e8] sm:$0xff]
    %v4415 = vld [vmem:[#allocation7 + $0x17f0] sm:$0xff]
    %v4416 = vld [vmem:[#allocation7 + $0x17f8] sm:$0xff]
    %v5185 = vunpack.c.l.b16 %v3649
    %v5186 = vunpack.c.h.b16 %v3649
    %v5187 = vunpack.c.l.b16 %v3650
    %v5188 = vunpack.c.h.b16 %v3650
    %v5189 = vunpack.c.l.b16 %v3651
    %v5190 = vunpack.c.h.b16 %v3651
    %v5191 = vunpack.c.l.b16 %v3652
    %v5192 = vunpack.c.h.b16 %v3652
    %v5193 = vunpack.c.l.b16 %v3653
    %v5194 = vunpack.c.h.b16 %v3653
    %v5195 = vunpack.c.l.b16 %v3654
    %v5196 = vunpack.c.h.b16 %v3654
    %v5197 = vunpack.c.l.b16 %v3655
    %v5198 = vunpack.c.h.b16 %v3655
    %v5199 = vunpack.c.l.b16 %v3656
    %v5200 = vunpack.c.h.b16 %v3656
    %v5201 = vunpack.c.l.b16 %v3657
    %v5202 = vunpack.c.h.b16 %v3657
    %v5203 = vunpack.c.l.b16 %v3658
    %v5204 = vunpack.c.h.b16 %v3658
    %v5205 = vunpack.c.l.b16 %v3659
    %v5206 = vunpack.c.h.b16 %v3659
    %v5207 = vunpack.c.l.b16 %v3660
    %v5208 = vunpack.c.h.b16 %v3660
    %v5209 = vunpack.c.l.b16 %v3661
    %v5210 = vunpack.c.h.b16 %v3661
    %v5211 = vunpack.c.l.b16 %v3662
    %v5212 = vunpack.c.h.b16 %v3662
    %v5213 = vunpack.c.l.b16 %v3663
    %v5214 = vunpack.c.h.b16 %v3663
    %v5215 = vunpack.c.l.b16 %v3664
    %v5216 = vunpack.c.h.b16 %v3664
    %v5217 = vunpack.c.l.b16 %v3665
    %v5218 = vunpack.c.h.b16 %v3665
    %v5219 = vunpack.c.l.b16 %v3666
    %v5220 = vunpack.c.h.b16 %v3666
    %v5221 = vunpack.c.l.b16 %v3667
    %v5222 = vunpack.c.h.b16 %v3667
    %v5223 = vunpack.c.l.b16 %v3668
    %v5224 = vunpack.c.h.b16 %v3668
    %v5225 = vunpack.c.l.b16 %v3669
    %v5226 = vunpack.c.h.b16 %v3669
    %v5227 = vunpack.c.l.b16 %v3670
    %v5228 = vunpack.c.h.b16 %v3670
    %v5229 = vunpack.c.l.b16 %v3671
    %v5230 = vunpack.c.h.b16 %v3671
    %v5231 = vunpack.c.l.b16 %v3672
    %v5232 = vunpack.c.h.b16 %v3672
    %v5233 = vunpack.c.l.b16 %v3673
    %v5234 = vunpack.c.h.b16 %v3673
    %v5235 = vunpack.c.l.b16 %v3674
    %v5236 = vunpack.c.h.b16 %v3674
    %v5237 = vunpack.c.l.b16 %v3675
    %v5238 = vunpack.c.h.b16 %v3675
    %v5239 = vunpack.c.l.b16 %v3676
    %v5240 = vunpack.c.h.b16 %v3676
    %v5241 = vunpack.c.l.b16 %v3677
    %v5242 = vunpack.c.h.b16 %v3677
    %v5243 = vunpack.c.l.b16 %v3678
    %v5244 = vunpack.c.h.b16 %v3678
    %v5245 = vunpack.c.l.b16 %v3679
    %v5246 = vunpack.c.h.b16 %v3679
    %v5247 = vunpack.c.l.b16 %v3680
    %v5248 = vunpack.c.h.b16 %v3680
    %v5249 = vunpack.c.l.b16 %v3681
    %v5250 = vunpack.c.h.b16 %v3681
    %v5251 = vunpack.c.l.b16 %v3682
    %v5252 = vunpack.c.h.b16 %v3682
    %v5253 = vunpack.c.l.b16 %v3683
    %v5254 = vunpack.c.h.b16 %v3683
    %v5255 = vunpack.c.l.b16 %v3684
    %v5256 = vunpack.c.h.b16 %v3684
    %v5257 = vunpack.c.l.b16 %v3685
    %v5258 = vunpack.c.h.b16 %v3685
    %v5259 = vunpack.c.l.b16 %v3686
    %v5260 = vunpack.c.h.b16 %v3686
    %v5261 = vunpack.c.l.b16 %v3687
    %v5262 = vunpack.c.h.b16 %v3687
    %v5263 = vunpack.c.l.b16 %v3688
    %v5264 = vunpack.c.h.b16 %v3688
    %v5265 = vunpack.c.l.b16 %v3689
    %v5266 = vunpack.c.h.b16 %v3689
    %v5267 = vunpack.c.l.b16 %v3690
    %v5268 = vunpack.c.h.b16 %v3690
    %v5269 = vunpack.c.l.b16 %v3691
    %v5270 = vunpack.c.h.b16 %v3691
    %v5271 = vunpack.c.l.b16 %v3692
    %v5272 = vunpack.c.h.b16 %v3692
    %v5273 = vunpack.c.l.b16 %v3693
    %v5274 = vunpack.c.h.b16 %v3693
    %v5275 = vunpack.c.l.b16 %v3694
    %v5276 = vunpack.c.h.b16 %v3694
    %v5277 = vunpack.c.l.b16 %v3695
    %v5278 = vunpack.c.h.b16 %v3695
    %v5279 = vunpack.c.l.b16 %v3696
    %v5280 = vunpack.c.h.b16 %v3696
    %v5281 = vunpack.c.l.b16 %v3697
    %v5282 = vunpack.c.h.b16 %v3697
    %v5283 = vunpack.c.l.b16 %v3698
    %v5284 = vunpack.c.h.b16 %v3698
    %v5285 = vunpack.c.l.b16 %v3699
    %v5286 = vunpack.c.h.b16 %v3699
    %v5287 = vunpack.c.l.b16 %v3700
    %v5288 = vunpack.c.h.b16 %v3700
    %v5289 = vunpack.c.l.b16 %v3701
    %v5290 = vunpack.c.h.b16 %v3701
    %v5291 = vunpack.c.l.b16 %v3702
    %v5292 = vunpack.c.h.b16 %v3702
    %v5293 = vunpack.c.l.b16 %v3703
    %v5294 = vunpack.c.h.b16 %v3703
    %v5295 = vunpack.c.l.b16 %v3704
    %v5296 = vunpack.c.h.b16 %v3704
    %v5297 = vunpack.c.l.b16 %v3705
    %v5298 = vunpack.c.h.b16 %v3705
    %v5299 = vunpack.c.l.b16 %v3706
    %v5300 = vunpack.c.h.b16 %v3706
    %v5301 = vunpack.c.l.b16 %v3707
    %v5302 = vunpack.c.h.b16 %v3707
    %v5303 = vunpack.c.l.b16 %v3708
    %v5304 = vunpack.c.h.b16 %v3708
    %v5305 = vunpack.c.l.b16 %v3709
    %v5306 = vunpack.c.h.b16 %v3709
    %v5307 = vunpack.c.l.b16 %v3710
    %v5308 = vunpack.c.h.b16 %v3710
    %v5309 = vunpack.c.l.b16 %v3711
    %v5310 = vunpack.c.h.b16 %v3711
    %v5311 = vunpack.c.l.b16 %v3712
    %v5312 = vunpack.c.h.b16 %v3712
    %v5313 = vunpack.c.l.b16 %v3713
    %v5314 = vunpack.c.h.b16 %v3713
    %v5315 = vunpack.c.l.b16 %v3714
    %v5316 = vunpack.c.h.b16 %v3714
    %v5317 = vunpack.c.l.b16 %v3715
    %v5318 = vunpack.c.h.b16 %v3715
    %v5319 = vunpack.c.l.b16 %v3716
    %v5320 = vunpack.c.h.b16 %v3716
    %v5321 = vunpack.c.l.b16 %v3717
    %v5322 = vunpack.c.h.b16 %v3717
    %v5323 = vunpack.c.l.b16 %v3718
    %v5324 = vunpack.c.h.b16 %v3718
    %v5325 = vunpack.c.l.b16 %v3719
    %v5326 = vunpack.c.h.b16 %v3719
    %v5327 = vunpack.c.l.b16 %v3720
    %v5328 = vunpack.c.h.b16 %v3720
    %v5329 = vunpack.c.l.b16 %v3721
    %v5330 = vunpack.c.h.b16 %v3721
    %v5331 = vunpack.c.l.b16 %v3722
    %v5332 = vunpack.c.h.b16 %v3722
    %v5333 = vunpack.c.l.b16 %v3723
    %v5334 = vunpack.c.h.b16 %v3723
    %v5335 = vunpack.c.l.b16 %v3724
    %v5336 = vunpack.c.h.b16 %v3724
    %v5337 = vunpack.c.l.b16 %v3725
    %v5338 = vunpack.c.h.b16 %v3725
    %v5339 = vunpack.c.l.b16 %v3726
    %v5340 = vunpack.c.h.b16 %v3726
    %v5341 = vunpack.c.l.b16 %v3727
    %v5342 = vunpack.c.h.b16 %v3727
    %v5343 = vunpack.c.l.b16 %v3728
    %v5344 = vunpack.c.h.b16 %v3728
    %v5345 = vunpack.c.l.b16 %v3729
    %v5346 = vunpack.c.h.b16 %v3729
    %v5347 = vunpack.c.l.b16 %v3730
    %v5348 = vunpack.c.h.b16 %v3730
    %v5349 = vunpack.c.l.b16 %v3731
    %v5350 = vunpack.c.h.b16 %v3731
    %v5351 = vunpack.c.l.b16 %v3732
    %v5352 = vunpack.c.h.b16 %v3732
    %v5353 = vunpack.c.l.b16 %v3733
    %v5354 = vunpack.c.h.b16 %v3733
    %v5355 = vunpack.c.l.b16 %v3734
    %v5356 = vunpack.c.h.b16 %v3734
    %v5357 = vunpack.c.l.b16 %v3735
    %v5358 = vunpack.c.h.b16 %v3735
    %v5359 = vunpack.c.l.b16 %v3736
    %v5360 = vunpack.c.h.b16 %v3736
    %v5361 = vunpack.c.l.b16 %v3737
    %v5362 = vunpack.c.h.b16 %v3737
    %v5363 = vunpack.c.l.b16 %v3738
    %v5364 = vunpack.c.h.b16 %v3738
    %v5365 = vunpack.c.l.b16 %v3739
    %v5366 = vunpack.c.h.b16 %v3739
    %v5367 = vunpack.c.l.b16 %v3740
    %v5368 = vunpack.c.h.b16 %v3740
    %v5369 = vunpack.c.l.b16 %v3741
    %v5370 = vunpack.c.h.b16 %v3741
    %v5371 = vunpack.c.l.b16 %v3742
    %v5372 = vunpack.c.h.b16 %v3742
    %v5373 = vunpack.c.l.b16 %v3743
    %v5374 = vunpack.c.h.b16 %v3743
    %v5375 = vunpack.c.l.b16 %v3744
    %v5376 = vunpack.c.h.b16 %v3744
    %v5377 = vunpack.c.l.b16 %v3745
    %v5378 = vunpack.c.h.b16 %v3745
    %v5379 = vunpack.c.l.b16 %v3746
    %v5380 = vunpack.c.h.b16 %v3746
    %v5381 = vunpack.c.l.b16 %v3747
    %v5382 = vunpack.c.h.b16 %v3747
    %v5383 = vunpack.c.l.b16 %v3748
    %v5384 = vunpack.c.h.b16 %v3748
    %v5385 = vunpack.c.l.b16 %v3749
    %v5386 = vunpack.c.h.b16 %v3749
    %v5387 = vunpack.c.l.b16 %v3750
    %v5388 = vunpack.c.h.b16 %v3750
    %v5389 = vunpack.c.l.b16 %v3751
    %v5390 = vunpack.c.h.b16 %v3751
    %v5391 = vunpack.c.l.b16 %v3752
    %v5392 = vunpack.c.h.b16 %v3752
    %v5393 = vunpack.c.l.b16 %v3753
    %v5394 = vunpack.c.h.b16 %v3753
    %v5395 = vunpack.c.l.b16 %v3754
    %v5396 = vunpack.c.h.b16 %v3754
    %v5397 = vunpack.c.l.b16 %v3755
    %v5398 = vunpack.c.h.b16 %v3755
    %v5399 = vunpack.c.l.b16 %v3756
    %v5400 = vunpack.c.h.b16 %v3756
    %v5401 = vunpack.c.l.b16 %v3757
    %v5402 = vunpack.c.h.b16 %v3757
    %v5403 = vunpack.c.l.b16 %v3758
    %v5404 = vunpack.c.h.b16 %v3758
    %v5405 = vunpack.c.l.b16 %v3759
    %v5406 = vunpack.c.h.b16 %v3759
    %v5407 = vunpack.c.l.b16 %v3760
    %v5408 = vunpack.c.h.b16 %v3760
    %v5409 = vunpack.c.l.b16 %v3761
    %v5410 = vunpack.c.h.b16 %v3761
    %v5411 = vunpack.c.l.b16 %v3762
    %v5412 = vunpack.c.h.b16 %v3762
    %v5413 = vunpack.c.l.b16 %v3763
    %v5414 = vunpack.c.h.b16 %v3763
    %v5415 = vunpack.c.l.b16 %v3764
    %v5416 = vunpack.c.h.b16 %v3764
    %v5417 = vunpack.c.l.b16 %v3765
    %v5418 = vunpack.c.h.b16 %v3765
    %v5419 = vunpack.c.l.b16 %v3766
    %v5420 = vunpack.c.h.b16 %v3766
    %v5421 = vunpack.c.l.b16 %v3767
    %v5422 = vunpack.c.h.b16 %v3767
    %v5423 = vunpack.c.l.b16 %v3768
    %v5424 = vunpack.c.h.b16 %v3768
    %v5425 = vunpack.c.l.b16 %v3769
    %v5426 = vunpack.c.h.b16 %v3769
    %v5427 = vunpack.c.l.b16 %v3770
    %v5428 = vunpack.c.h.b16 %v3770
    %v5429 = vunpack.c.l.b16 %v3771
    %v5430 = vunpack.c.h.b16 %v3771
    %v5431 = vunpack.c.l.b16 %v3772
    %v5432 = vunpack.c.h.b16 %v3772
    %v5433 = vunpack.c.l.b16 %v3773
    %v5434 = vunpack.c.h.b16 %v3773
    %v5435 = vunpack.c.l.b16 %v3774
    %v5436 = vunpack.c.h.b16 %v3774
    %v5437 = vunpack.c.l.b16 %v3775
    %v5438 = vunpack.c.h.b16 %v3775
    %v5439 = vunpack.c.l.b16 %v3776
    %v5440 = vunpack.c.h.b16 %v3776
    %v5441 = vunpack.c.l.b16 %v3777
    %v5442 = vunpack.c.h.b16 %v3777
    %v5443 = vunpack.c.l.b16 %v3778
    %v5444 = vunpack.c.h.b16 %v3778
    %v5445 = vunpack.c.l.b16 %v3779
    %v5446 = vunpack.c.h.b16 %v3779
    %v5447 = vunpack.c.l.b16 %v3780
    %v5448 = vunpack.c.h.b16 %v3780
    %v5449 = vunpack.c.l.b16 %v3781
    %v5450 = vunpack.c.h.b16 %v3781
    %v5451 = vunpack.c.l.b16 %v3782
    %v5452 = vunpack.c.h.b16 %v3782
    %v5453 = vunpack.c.l.b16 %v3783
    %v5454 = vunpack.c.h.b16 %v3783
    %v5455 = vunpack.c.l.b16 %v3784
    %v5456 = vunpack.c.h.b16 %v3784
    %v5457 = vunpack.c.l.b16 %v3785
    %v5458 = vunpack.c.h.b16 %v3785
    %v5459 = vunpack.c.l.b16 %v3786
    %v5460 = vunpack.c.h.b16 %v3786
    %v5461 = vunpack.c.l.b16 %v3787
    %v5462 = vunpack.c.h.b16 %v3787
    %v5463 = vunpack.c.l.b16 %v3788
    %v5464 = vunpack.c.h.b16 %v3788
    %v5465 = vunpack.c.l.b16 %v3789
    %v5466 = vunpack.c.h.b16 %v3789
    %v5467 = vunpack.c.l.b16 %v3790
    %v5468 = vunpack.c.h.b16 %v3790
    %v5469 = vunpack.c.l.b16 %v3791
    %v5470 = vunpack.c.h.b16 %v3791
    %v5471 = vunpack.c.l.b16 %v3792
    %v5472 = vunpack.c.h.b16 %v3792
    %v5473 = vunpack.c.l.b16 %v3793
    %v5474 = vunpack.c.h.b16 %v3793
    %v5475 = vunpack.c.l.b16 %v3794
    %v5476 = vunpack.c.h.b16 %v3794
    %v5477 = vunpack.c.l.b16 %v3795
    %v5478 = vunpack.c.h.b16 %v3795
    %v5479 = vunpack.c.l.b16 %v3796
    %v5480 = vunpack.c.h.b16 %v3796
    %v5481 = vunpack.c.l.b16 %v3797
    %v5482 = vunpack.c.h.b16 %v3797
    %v5483 = vunpack.c.l.b16 %v3798
    %v5484 = vunpack.c.h.b16 %v3798
    %v5485 = vunpack.c.l.b16 %v3799
    %v5486 = vunpack.c.h.b16 %v3799
    %v5487 = vunpack.c.l.b16 %v3800
    %v5488 = vunpack.c.h.b16 %v3800
    %v5489 = vunpack.c.l.b16 %v3801
    %v5490 = vunpack.c.h.b16 %v3801
    %v5491 = vunpack.c.l.b16 %v3802
    %v5492 = vunpack.c.h.b16 %v3802
    %v5493 = vunpack.c.l.b16 %v3803
    %v5494 = vunpack.c.h.b16 %v3803
    %v5495 = vunpack.c.l.b16 %v3804
    %v5496 = vunpack.c.h.b16 %v3804
    %v5497 = vunpack.c.l.b16 %v3805
    %v5498 = vunpack.c.h.b16 %v3805
    %v5499 = vunpack.c.l.b16 %v3806
    %v5500 = vunpack.c.h.b16 %v3806
    %v5501 = vunpack.c.l.b16 %v3807
    %v5502 = vunpack.c.h.b16 %v3807
    %v5503 = vunpack.c.l.b16 %v3808
    %v5504 = vunpack.c.h.b16 %v3808
    %v5505 = vunpack.c.l.b16 %v3809
    %v5506 = vunpack.c.h.b16 %v3809
    %v5507 = vunpack.c.l.b16 %v3810
    %v5508 = vunpack.c.h.b16 %v3810
    %v5509 = vunpack.c.l.b16 %v3811
    %v5510 = vunpack.c.h.b16 %v3811
    %v5511 = vunpack.c.l.b16 %v3812
    %v5512 = vunpack.c.h.b16 %v3812
    %v5513 = vunpack.c.l.b16 %v3813
    %v5514 = vunpack.c.h.b16 %v3813
    %v5515 = vunpack.c.l.b16 %v3814
    %v5516 = vunpack.c.h.b16 %v3814
    %v5517 = vunpack.c.l.b16 %v3815
    %v5518 = vunpack.c.h.b16 %v3815
    %v5519 = vunpack.c.l.b16 %v3816
    %v5520 = vunpack.c.h.b16 %v3816
    %v5521 = vunpack.c.l.b16 %v3817
    %v5522 = vunpack.c.h.b16 %v3817
    %v5523 = vunpack.c.l.b16 %v3818
    %v5524 = vunpack.c.h.b16 %v3818
    %v5525 = vunpack.c.l.b16 %v3819
    %v5526 = vunpack.c.h.b16 %v3819
    %v5527 = vunpack.c.l.b16 %v3820
    %v5528 = vunpack.c.h.b16 %v3820
    %v5529 = vunpack.c.l.b16 %v3821
    %v5530 = vunpack.c.h.b16 %v3821
    %v5531 = vunpack.c.l.b16 %v3822
    %v5532 = vunpack.c.h.b16 %v3822
    %v5533 = vunpack.c.l.b16 %v3823
    %v5534 = vunpack.c.h.b16 %v3823
    %v5535 = vunpack.c.l.b16 %v3824
    %v5536 = vunpack.c.h.b16 %v3824
    %v5537 = vunpack.c.l.b16 %v3825
    %v5538 = vunpack.c.h.b16 %v3825
    %v5539 = vunpack.c.l.b16 %v3826
    %v5540 = vunpack.c.h.b16 %v3826
    %v5541 = vunpack.c.l.b16 %v3827
    %v5542 = vunpack.c.h.b16 %v3827
    %v5543 = vunpack.c.l.b16 %v3828
    %v5544 = vunpack.c.h.b16 %v3828
    %v5545 = vunpack.c.l.b16 %v3829
    %v5546 = vunpack.c.h.b16 %v3829
    %v5547 = vunpack.c.l.b16 %v3830
    %v5548 = vunpack.c.h.b16 %v3830
    %v5549 = vunpack.c.l.b16 %v3831
    %v5550 = vunpack.c.h.b16 %v3831
    %v5551 = vunpack.c.l.b16 %v3832
    %v5552 = vunpack.c.h.b16 %v3832
    %v5553 = vunpack.c.l.b16 %v3833
    %v5554 = vunpack.c.h.b16 %v3833
    %v5555 = vunpack.c.l.b16 %v3834
    %v5556 = vunpack.c.h.b16 %v3834
    %v5557 = vunpack.c.l.b16 %v3835
    %v5558 = vunpack.c.h.b16 %v3835
    %v5559 = vunpack.c.l.b16 %v3836
    %v5560 = vunpack.c.h.b16 %v3836
    %v5561 = vunpack.c.l.b16 %v3837
    %v5562 = vunpack.c.h.b16 %v3837
    %v5563 = vunpack.c.l.b16 %v3838
    %v5564 = vunpack.c.h.b16 %v3838
    %v5565 = vunpack.c.l.b16 %v3839
    %v5566 = vunpack.c.h.b16 %v3839
    %v5567 = vunpack.c.l.b16 %v3840
    %v5568 = vunpack.c.h.b16 %v3840
    %v5569 = vunpack.c.l.b16 %v3841
    %v5570 = vunpack.c.h.b16 %v3841
    %v5571 = vunpack.c.l.b16 %v3842
    %v5572 = vunpack.c.h.b16 %v3842
    %v5573 = vunpack.c.l.b16 %v3843
    %v5574 = vunpack.c.h.b16 %v3843
    %v5575 = vunpack.c.l.b16 %v3844
    %v5576 = vunpack.c.h.b16 %v3844
    %v5577 = vunpack.c.l.b16 %v3845
    %v5578 = vunpack.c.h.b16 %v3845
    %v5579 = vunpack.c.l.b16 %v3846
    %v5580 = vunpack.c.h.b16 %v3846
    %v5581 = vunpack.c.l.b16 %v3847
    %v5582 = vunpack.c.h.b16 %v3847
    %v5583 = vunpack.c.l.b16 %v3848
    %v5584 = vunpack.c.h.b16 %v3848
    %v5585 = vunpack.c.l.b16 %v3849
    %v5586 = vunpack.c.h.b16 %v3849
    %v5587 = vunpack.c.l.b16 %v3850
    %v5588 = vunpack.c.h.b16 %v3850
    %v5589 = vunpack.c.l.b16 %v3851
    %v5590 = vunpack.c.h.b16 %v3851
    %v5591 = vunpack.c.l.b16 %v3852
    %v5592 = vunpack.c.h.b16 %v3852
    %v5593 = vunpack.c.l.b16 %v3853
    %v5594 = vunpack.c.h.b16 %v3853
    %v5595 = vunpack.c.l.b16 %v3854
    %v5596 = vunpack.c.h.b16 %v3854
    %v5597 = vunpack.c.l.b16 %v3855
    %v5598 = vunpack.c.h.b16 %v3855
    %v5599 = vunpack.c.l.b16 %v3856
    %v5600 = vunpack.c.h.b16 %v3856
    %v5601 = vunpack.c.l.b16 %v3857
    %v5602 = vunpack.c.h.b16 %v3857
    %v5603 = vunpack.c.l.b16 %v3858
    %v5604 = vunpack.c.h.b16 %v3858
    %v5605 = vunpack.c.l.b16 %v3859
    %v5606 = vunpack.c.h.b16 %v3859
    %v5607 = vunpack.c.l.b16 %v3860
    %v5608 = vunpack.c.h.b16 %v3860
    %v5609 = vunpack.c.l.b16 %v3861
    %v5610 = vunpack.c.h.b16 %v3861
    %v5611 = vunpack.c.l.b16 %v3862
    %v5612 = vunpack.c.h.b16 %v3862
    %v5613 = vunpack.c.l.b16 %v3863
    %v5614 = vunpack.c.h.b16 %v3863
    %v5615 = vunpack.c.l.b16 %v3864
    %v5616 = vunpack.c.h.b16 %v3864
    %v5617 = vunpack.c.l.b16 %v3865
    %v5618 = vunpack.c.h.b16 %v3865
    %v5619 = vunpack.c.l.b16 %v3866
    %v5620 = vunpack.c.h.b16 %v3866
    %v5621 = vunpack.c.l.b16 %v3867
    %v5622 = vunpack.c.h.b16 %v3867
    %v5623 = vunpack.c.l.b16 %v3868
    %v5624 = vunpack.c.h.b16 %v3868
    %v5625 = vunpack.c.l.b16 %v3869
    %v5626 = vunpack.c.h.b16 %v3869
    %v5627 = vunpack.c.l.b16 %v3870
    %v5628 = vunpack.c.h.b16 %v3870
    %v5629 = vunpack.c.l.b16 %v3871
    %v5630 = vunpack.c.h.b16 %v3871
    %v5631 = vunpack.c.l.b16 %v3872
    %v5632 = vunpack.c.h.b16 %v3872
    %v5633 = vunpack.c.l.b16 %v3873
    %v5634 = vunpack.c.h.b16 %v3873
    %v5635 = vunpack.c.l.b16 %v3874
    %v5636 = vunpack.c.h.b16 %v3874
    %v5637 = vunpack.c.l.b16 %v3875
    %v5638 = vunpack.c.h.b16 %v3875
    %v5639 = vunpack.c.l.b16 %v3876
    %v5640 = vunpack.c.h.b16 %v3876
    %v5641 = vunpack.c.l.b16 %v3877
    %v5642 = vunpack.c.h.b16 %v3877
    %v5643 = vunpack.c.l.b16 %v3878
    %v5644 = vunpack.c.h.b16 %v3878
    %v5645 = vunpack.c.l.b16 %v3879
    %v5646 = vunpack.c.h.b16 %v3879
    %v5647 = vunpack.c.l.b16 %v3880
    %v5648 = vunpack.c.h.b16 %v3880
    %v5649 = vunpack.c.l.b16 %v3881
    %v5650 = vunpack.c.h.b16 %v3881
    %v5651 = vunpack.c.l.b16 %v3882
    %v5652 = vunpack.c.h.b16 %v3882
    %v5653 = vunpack.c.l.b16 %v3883
    %v5654 = vunpack.c.h.b16 %v3883
    %v5655 = vunpack.c.l.b16 %v3884
    %v5656 = vunpack.c.h.b16 %v3884
    %v5657 = vunpack.c.l.b16 %v3885
    %v5658 = vunpack.c.h.b16 %v3885
    %v5659 = vunpack.c.l.b16 %v3886
    %v5660 = vunpack.c.h.b16 %v3886
    %v5661 = vunpack.c.l.b16 %v3887
    %v5662 = vunpack.c.h.b16 %v3887
    %v5663 = vunpack.c.l.b16 %v3888
    %v5664 = vunpack.c.h.b16 %v3888
    %v5665 = vunpack.c.l.b16 %v3889
    %v5666 = vunpack.c.h.b16 %v3889
    %v5667 = vunpack.c.l.b16 %v3890
    %v5668 = vunpack.c.h.b16 %v3890
    %v5669 = vunpack.c.l.b16 %v3891
    %v5670 = vunpack.c.h.b16 %v3891
    %v5671 = vunpack.c.l.b16 %v3892
    %v5672 = vunpack.c.h.b16 %v3892
    %v5673 = vunpack.c.l.b16 %v3893
    %v5674 = vunpack.c.h.b16 %v3893
    %v5675 = vunpack.c.l.b16 %v3894
    %v5676 = vunpack.c.h.b16 %v3894
    %v5677 = vunpack.c.l.b16 %v3895
    %v5678 = vunpack.c.h.b16 %v3895
    %v5679 = vunpack.c.l.b16 %v3896
    %v5680 = vunpack.c.h.b16 %v3896
    %v5681 = vunpack.c.l.b16 %v3897
    %v5682 = vunpack.c.h.b16 %v3897
    %v5683 = vunpack.c.l.b16 %v3898
    %v5684 = vunpack.c.h.b16 %v3898
    %v5685 = vunpack.c.l.b16 %v3899
    %v5686 = vunpack.c.h.b16 %v3899
    %v5687 = vunpack.c.l.b16 %v3900
    %v5688 = vunpack.c.h.b16 %v3900
    %v5689 = vunpack.c.l.b16 %v3901
    %v5690 = vunpack.c.h.b16 %v3901
    %v5691 = vunpack.c.l.b16 %v3902
    %v5692 = vunpack.c.h.b16 %v3902
    %v5693 = vunpack.c.l.b16 %v3903
    %v5694 = vunpack.c.h.b16 %v3903
    %v5695 = vunpack.c.l.b16 %v3904
    %v5696 = vunpack.c.h.b16 %v3904
    %v5697 = vunpack.c.l.b16 %v3905
    %v5698 = vunpack.c.h.b16 %v3905
    %v5699 = vunpack.c.l.b16 %v3906
    %v5700 = vunpack.c.h.b16 %v3906
    %v5701 = vunpack.c.l.b16 %v3907
    %v5702 = vunpack.c.h.b16 %v3907
    %v5703 = vunpack.c.l.b16 %v3908
    %v5704 = vunpack.c.h.b16 %v3908
    %v5705 = vunpack.c.l.b16 %v3909
    %v5706 = vunpack.c.h.b16 %v3909
    %v5707 = vunpack.c.l.b16 %v3910
    %v5708 = vunpack.c.h.b16 %v3910
    %v5709 = vunpack.c.l.b16 %v3911
    %v5710 = vunpack.c.h.b16 %v3911
    %v5711 = vunpack.c.l.b16 %v3912
    %v5712 = vunpack.c.h.b16 %v3912
    %v5713 = vunpack.c.l.b16 %v3913
    %v5714 = vunpack.c.h.b16 %v3913
    %v5715 = vunpack.c.l.b16 %v3914
    %v5716 = vunpack.c.h.b16 %v3914
    %v5717 = vunpack.c.l.b16 %v3915
    %v5718 = vunpack.c.h.b16 %v3915
    %v5719 = vunpack.c.l.b16 %v3916
    %v5720 = vunpack.c.h.b16 %v3916
    %v5721 = vunpack.c.l.b16 %v3917
    %v5722 = vunpack.c.h.b16 %v3917
    %v5723 = vunpack.c.l.b16 %v3918
    %v5724 = vunpack.c.h.b16 %v3918
    %v5725 = vunpack.c.l.b16 %v3919
    %v5726 = vunpack.c.h.b16 %v3919
    %v5727 = vunpack.c.l.b16 %v3920
    %v5728 = vunpack.c.h.b16 %v3920
    %v5729 = vunpack.c.l.b16 %v3921
    %v5730 = vunpack.c.h.b16 %v3921
    %v5731 = vunpack.c.l.b16 %v3922
    %v5732 = vunpack.c.h.b16 %v3922
    %v5733 = vunpack.c.l.b16 %v3923
    %v5734 = vunpack.c.h.b16 %v3923
    %v5735 = vunpack.c.l.b16 %v3924
    %v5736 = vunpack.c.h.b16 %v3924
    %v5737 = vunpack.c.l.b16 %v3925
    %v5738 = vunpack.c.h.b16 %v3925
    %v5739 = vunpack.c.l.b16 %v3926
    %v5740 = vunpack.c.h.b16 %v3926
    %v5741 = vunpack.c.l.b16 %v3927
    %v5742 = vunpack.c.h.b16 %v3927
    %v5743 = vunpack.c.l.b16 %v3928
    %v5744 = vunpack.c.h.b16 %v3928
    %v5745 = vunpack.c.l.b16 %v3929
    %v5746 = vunpack.c.h.b16 %v3929
    %v5747 = vunpack.c.l.b16 %v3930
    %v5748 = vunpack.c.h.b16 %v3930
    %v5749 = vunpack.c.l.b16 %v3931
    %v5750 = vunpack.c.h.b16 %v3931
    %v5751 = vunpack.c.l.b16 %v3932
    %v5752 = vunpack.c.h.b16 %v3932
    %v5753 = vunpack.c.l.b16 %v3933
    %v5754 = vunpack.c.h.b16 %v3933
    %v5755 = vunpack.c.l.b16 %v3934
    %v5756 = vunpack.c.h.b16 %v3934
    %v5757 = vunpack.c.l.b16 %v3935
    %v5758 = vunpack.c.h.b16 %v3935
    %v5759 = vunpack.c.l.b16 %v3936
    %v5760 = vunpack.c.h.b16 %v3936
    %v5761 = vunpack.c.l.b16 %v3937
    %v5762 = vunpack.c.h.b16 %v3937
    %v5763 = vunpack.c.l.b16 %v3938
    %v5764 = vunpack.c.h.b16 %v3938
    %v5765 = vunpack.c.l.b16 %v3939
    %v5766 = vunpack.c.h.b16 %v3939
    %v5767 = vunpack.c.l.b16 %v3940
    %v5768 = vunpack.c.h.b16 %v3940
    %v5769 = vunpack.c.l.b16 %v3941
    %v5770 = vunpack.c.h.b16 %v3941
    %v5771 = vunpack.c.l.b16 %v3942
    %v5772 = vunpack.c.h.b16 %v3942
    %v5773 = vunpack.c.l.b16 %v3943
    %v5774 = vunpack.c.h.b16 %v3943
    %v5775 = vunpack.c.l.b16 %v3944
    %v5776 = vunpack.c.h.b16 %v3944
    %v5777 = vunpack.c.l.b16 %v3945
    %v5778 = vunpack.c.h.b16 %v3945
    %v5779 = vunpack.c.l.b16 %v3946
    %v5780 = vunpack.c.h.b16 %v3946
    %v5781 = vunpack.c.l.b16 %v3947
    %v5782 = vunpack.c.h.b16 %v3947
    %v5783 = vunpack.c.l.b16 %v3948
    %v5784 = vunpack.c.h.b16 %v3948
    %v5785 = vunpack.c.l.b16 %v3949
    %v5786 = vunpack.c.h.b16 %v3949
    %v5787 = vunpack.c.l.b16 %v3950
    %v5788 = vunpack.c.h.b16 %v3950
    %v5789 = vunpack.c.l.b16 %v3951
    %v5790 = vunpack.c.h.b16 %v3951
    %v5791 = vunpack.c.l.b16 %v3952
    %v5792 = vunpack.c.h.b16 %v3952
    %v5793 = vunpack.c.l.b16 %v3953
    %v5794 = vunpack.c.h.b16 %v3953
    %v5795 = vunpack.c.l.b16 %v3954
    %v5796 = vunpack.c.h.b16 %v3954
    %v5797 = vunpack.c.l.b16 %v3955
    %v5798 = vunpack.c.h.b16 %v3955
    %v5799 = vunpack.c.l.b16 %v3956
    %v5800 = vunpack.c.h.b16 %v3956
    %v5801 = vunpack.c.l.b16 %v3957
    %v5802 = vunpack.c.h.b16 %v3957
    %v5803 = vunpack.c.l.b16 %v3958
    %v5804 = vunpack.c.h.b16 %v3958
    %v5805 = vunpack.c.l.b16 %v3959
    %v5806 = vunpack.c.h.b16 %v3959
    %v5807 = vunpack.c.l.b16 %v3960
    %v5808 = vunpack.c.h.b16 %v3960
    %v5809 = vunpack.c.l.b16 %v3961
    %v5810 = vunpack.c.h.b16 %v3961
    %v5811 = vunpack.c.l.b16 %v3962
    %v5812 = vunpack.c.h.b16 %v3962
    %v5813 = vunpack.c.l.b16 %v3963
    %v5814 = vunpack.c.h.b16 %v3963
    %v5815 = vunpack.c.l.b16 %v3964
    %v5816 = vunpack.c.h.b16 %v3964
    %v5817 = vunpack.c.l.b16 %v3965
    %v5818 = vunpack.c.h.b16 %v3965
    %v5819 = vunpack.c.l.b16 %v3966
    %v5820 = vunpack.c.h.b16 %v3966
    %v5821 = vunpack.c.l.b16 %v3967
    %v5822 = vunpack.c.h.b16 %v3967
    %v5823 = vunpack.c.l.b16 %v3968
    %v5824 = vunpack.c.h.b16 %v3968
    %v5825 = vunpack.c.l.b16 %v3969
    %v5826 = vunpack.c.h.b16 %v3969
    %v5827 = vunpack.c.l.b16 %v3970
    %v5828 = vunpack.c.h.b16 %v3970
    %v5829 = vunpack.c.l.b16 %v3971
    %v5830 = vunpack.c.h.b16 %v3971
    %v5831 = vunpack.c.l.b16 %v3972
    %v5832 = vunpack.c.h.b16 %v3972
    %v5833 = vunpack.c.l.b16 %v3973
    %v5834 = vunpack.c.h.b16 %v3973
    %v5835 = vunpack.c.l.b16 %v3974
    %v5836 = vunpack.c.h.b16 %v3974
    %v5837 = vunpack.c.l.b16 %v3975
    %v5838 = vunpack.c.h.b16 %v3975
    %v5839 = vunpack.c.l.b16 %v3976
    %v5840 = vunpack.c.h.b16 %v3976
    %v5841 = vunpack.c.l.b16 %v3977
    %v5842 = vunpack.c.h.b16 %v3977
    %v5843 = vunpack.c.l.b16 %v3978
    %v5844 = vunpack.c.h.b16 %v3978
    %v5845 = vunpack.c.l.b16 %v3979
    %v5846 = vunpack.c.h.b16 %v3979
    %v5847 = vunpack.c.l.b16 %v3980
    %v5848 = vunpack.c.h.b16 %v3980
    %v5849 = vunpack.c.l.b16 %v3981
    %v5850 = vunpack.c.h.b16 %v3981
    %v5851 = vunpack.c.l.b16 %v3982
    %v5852 = vunpack.c.h.b16 %v3982
    %v5853 = vunpack.c.l.b16 %v3983
    %v5854 = vunpack.c.h.b16 %v3983
    %v5855 = vunpack.c.l.b16 %v3984
    %v5856 = vunpack.c.h.b16 %v3984
    %v5857 = vunpack.c.l.b16 %v3985
    %v5858 = vunpack.c.h.b16 %v3985
    %v5859 = vunpack.c.l.b16 %v3986
    %v5860 = vunpack.c.h.b16 %v3986
    %v5861 = vunpack.c.l.b16 %v3987
    %v5862 = vunpack.c.h.b16 %v3987
    %v5863 = vunpack.c.l.b16 %v3988
    %v5864 = vunpack.c.h.b16 %v3988
    %v5865 = vunpack.c.l.b16 %v3989
    %v5866 = vunpack.c.h.b16 %v3989
    %v5867 = vunpack.c.l.b16 %v3990
    %v5868 = vunpack.c.h.b16 %v3990
    %v5869 = vunpack.c.l.b16 %v3991
    %v5870 = vunpack.c.h.b16 %v3991
    %v5871 = vunpack.c.l.b16 %v3992
    %v5872 = vunpack.c.h.b16 %v3992
    %v5873 = vunpack.c.l.b16 %v3993
    %v5874 = vunpack.c.h.b16 %v3993
    %v5875 = vunpack.c.l.b16 %v3994
    %v5876 = vunpack.c.h.b16 %v3994
    %v5877 = vunpack.c.l.b16 %v3995
    %v5878 = vunpack.c.h.b16 %v3995
    %v5879 = vunpack.c.l.b16 %v3996
    %v5880 = vunpack.c.h.b16 %v3996
    %v5881 = vunpack.c.l.b16 %v3997
    %v5882 = vunpack.c.h.b16 %v3997
    %v5883 = vunpack.c.l.b16 %v3998
    %v5884 = vunpack.c.h.b16 %v3998
    %v5885 = vunpack.c.l.b16 %v3999
    %v5886 = vunpack.c.h.b16 %v3999
    %v5887 = vunpack.c.l.b16 %v4000
    %v5888 = vunpack.c.h.b16 %v4000
    %v5889 = vunpack.c.l.b16 %v4001
    %v5890 = vunpack.c.h.b16 %v4001
    %v5891 = vunpack.c.l.b16 %v4002
    %v5892 = vunpack.c.h.b16 %v4002
    %v5893 = vunpack.c.l.b16 %v4003
    %v5894 = vunpack.c.h.b16 %v4003
    %v5895 = vunpack.c.l.b16 %v4004
    %v5896 = vunpack.c.h.b16 %v4004
    %v5897 = vunpack.c.l.b16 %v4005
    %v5898 = vunpack.c.h.b16 %v4005
    %v5899 = vunpack.c.l.b16 %v4006
    %v5900 = vunpack.c.h.b16 %v4006
    %v5901 = vunpack.c.l.b16 %v4007
    %v5902 = vunpack.c.h.b16 %v4007
    %v5903 = vunpack.c.l.b16 %v4008
    %v5904 = vunpack.c.h.b16 %v4008
    %v5905 = vunpack.c.l.b16 %v4009
    %v5906 = vunpack.c.h.b16 %v4009
    %v5907 = vunpack.c.l.b16 %v4010
    %v5908 = vunpack.c.h.b16 %v4010
    %v5909 = vunpack.c.l.b16 %v4011
    %v5910 = vunpack.c.h.b16 %v4011
    %v5911 = vunpack.c.l.b16 %v4012
    %v5912 = vunpack.c.h.b16 %v4012
    %v5913 = vunpack.c.l.b16 %v4013
    %v5914 = vunpack.c.h.b16 %v4013
    %v5915 = vunpack.c.l.b16 %v4014
    %v5916 = vunpack.c.h.b16 %v4014
    %v5917 = vunpack.c.l.b16 %v4015
    %v5918 = vunpack.c.h.b16 %v4015
    %v5919 = vunpack.c.l.b16 %v4016
    %v5920 = vunpack.c.h.b16 %v4016
    %v5921 = vunpack.c.l.b16 %v4017
    %v5922 = vunpack.c.h.b16 %v4017
    %v5923 = vunpack.c.l.b16 %v4018
    %v5924 = vunpack.c.h.b16 %v4018
    %v5925 = vunpack.c.l.b16 %v4019
    %v5926 = vunpack.c.h.b16 %v4019
    %v5927 = vunpack.c.l.b16 %v4020
    %v5928 = vunpack.c.h.b16 %v4020
    %v5929 = vunpack.c.l.b16 %v4021
    %v5930 = vunpack.c.h.b16 %v4021
    %v5931 = vunpack.c.l.b16 %v4022
    %v5932 = vunpack.c.h.b16 %v4022
    %v5933 = vunpack.c.l.b16 %v4023
    %v5934 = vunpack.c.h.b16 %v4023
    %v5935 = vunpack.c.l.b16 %v4024
    %v5936 = vunpack.c.h.b16 %v4024
    %v5937 = vunpack.c.l.b16 %v4025
    %v5938 = vunpack.c.h.b16 %v4025
    %v5939 = vunpack.c.l.b16 %v4026
    %v5940 = vunpack.c.h.b16 %v4026
    %v5941 = vunpack.c.l.b16 %v4027
    %v5942 = vunpack.c.h.b16 %v4027
    %v5943 = vunpack.c.l.b16 %v4028
    %v5944 = vunpack.c.h.b16 %v4028
    %v5945 = vunpack.c.l.b16 %v4029
    %v5946 = vunpack.c.h.b16 %v4029
    %v5947 = vunpack.c.l.b16 %v4030
    %v5948 = vunpack.c.h.b16 %v4030
    %v5949 = vunpack.c.l.b16 %v4031
    %v5950 = vunpack.c.h.b16 %v4031
    %v5951 = vunpack.c.l.b16 %v4032
    %v5952 = vunpack.c.h.b16 %v4032
    %v5953 = vunpack.c.l.b16 %v4033
    %v5954 = vunpack.c.h.b16 %v4033
    %v5955 = vunpack.c.l.b16 %v4034
    %v5956 = vunpack.c.h.b16 %v4034
    %v5957 = vunpack.c.l.b16 %v4035
    %v5958 = vunpack.c.h.b16 %v4035
    %v5959 = vunpack.c.l.b16 %v4036
    %v5960 = vunpack.c.h.b16 %v4036
    %v5961 = vunpack.c.l.b16 %v4037
    %v5962 = vunpack.c.h.b16 %v4037
    %v5963 = vunpack.c.l.b16 %v4038
    %v5964 = vunpack.c.h.b16 %v4038
    %v5965 = vunpack.c.l.b16 %v4039
    %v5966 = vunpack.c.h.b16 %v4039
    %v5967 = vunpack.c.l.b16 %v4040
    %v5968 = vunpack.c.h.b16 %v4040
    %v5969 = vunpack.c.l.b16 %v4041
    %v5970 = vunpack.c.h.b16 %v4041
    %v5971 = vunpack.c.l.b16 %v4042
    %v5972 = vunpack.c.h.b16 %v4042
    %v5973 = vunpack.c.l.b16 %v4043
    %v5974 = vunpack.c.h.b16 %v4043
    %v5975 = vunpack.c.l.b16 %v4044
    %v5976 = vunpack.c.h.b16 %v4044
    %v5977 = vunpack.c.l.b16 %v4045
    %v5978 = vunpack.c.h.b16 %v4045
    %v5979 = vunpack.c.l.b16 %v4046
    %v5980 = vunpack.c.h.b16 %v4046
    %v5981 = vunpack.c.l.b16 %v4047
    %v5982 = vunpack.c.h.b16 %v4047
    %v5983 = vunpack.c.l.b16 %v4048
    %v5984 = vunpack.c.h.b16 %v4048
    %v5985 = vunpack.c.l.b16 %v4049
    %v5986 = vunpack.c.h.b16 %v4049
    %v5987 = vunpack.c.l.b16 %v4050
    %v5988 = vunpack.c.h.b16 %v4050
    %v5989 = vunpack.c.l.b16 %v4051
    %v5990 = vunpack.c.h.b16 %v4051
    %v5991 = vunpack.c.l.b16 %v4052
    %v5992 = vunpack.c.h.b16 %v4052
    %v5993 = vunpack.c.l.b16 %v4053
    %v5994 = vunpack.c.h.b16 %v4053
    %v5995 = vunpack.c.l.b16 %v4054
    %v5996 = vunpack.c.h.b16 %v4054
    %v5997 = vunpack.c.l.b16 %v4055
    %v5998 = vunpack.c.h.b16 %v4055
    %v5999 = vunpack.c.l.b16 %v4056
    %v6000 = vunpack.c.h.b16 %v4056
    %v6001 = vunpack.c.l.b16 %v4057
    %v6002 = vunpack.c.h.b16 %v4057
    %v6003 = vunpack.c.l.b16 %v4058
    %v6004 = vunpack.c.h.b16 %v4058
    %v6005 = vunpack.c.l.b16 %v4059
    %v6006 = vunpack.c.h.b16 %v4059
    %v6007 = vunpack.c.l.b16 %v4060
    %v6008 = vunpack.c.h.b16 %v4060
    %v6009 = vunpack.c.l.b16 %v4061
    %v6010 = vunpack.c.h.b16 %v4061
    %v6011 = vunpack.c.l.b16 %v4062
    %v6012 = vunpack.c.h.b16 %v4062
    %v6013 = vunpack.c.l.b16 %v4063
    %v6014 = vunpack.c.h.b16 %v4063
    %v6015 = vunpack.c.l.b16 %v4064
    %v6016 = vunpack.c.h.b16 %v4064
    %v6017 = vunpack.c.l.b16 %v4065
    %v6018 = vunpack.c.h.b16 %v4065
    %v6019 = vunpack.c.l.b16 %v4066
    %v6020 = vunpack.c.h.b16 %v4066
    %v6021 = vunpack.c.l.b16 %v4067
    %v6022 = vunpack.c.h.b16 %v4067
    %v6023 = vunpack.c.l.b16 %v4068
    %v6024 = vunpack.c.h.b16 %v4068
    %v6025 = vunpack.c.l.b16 %v4069
    %v6026 = vunpack.c.h.b16 %v4069
    %v6027 = vunpack.c.l.b16 %v4070
    %v6028 = vunpack.c.h.b16 %v4070
    %v6029 = vunpack.c.l.b16 %v4071
    %v6030 = vunpack.c.h.b16 %v4071
    %v6031 = vunpack.c.l.b16 %v4072
    %v6032 = vunpack.c.h.b16 %v4072
    %v6033 = vunpack.c.l.b16 %v4073
    %v6034 = vunpack.c.h.b16 %v4073
    %v6035 = vunpack.c.l.b16 %v4074
    %v6036 = vunpack.c.h.b16 %v4074
    %v6037 = vunpack.c.l.b16 %v4075
    %v6038 = vunpack.c.h.b16 %v4075
    %v6039 = vunpack.c.l.b16 %v4076
    %v6040 = vunpack.c.h.b16 %v4076
    %v6041 = vunpack.c.l.b16 %v4077
    %v6042 = vunpack.c.h.b16 %v4077
    %v6043 = vunpack.c.l.b16 %v4078
    %v6044 = vunpack.c.h.b16 %v4078
    %v6045 = vunpack.c.l.b16 %v4079
    %v6046 = vunpack.c.h.b16 %v4079
    %v6047 = vunpack.c.l.b16 %v4080
    %v6048 = vunpack.c.h.b16 %v4080
    %v6049 = vunpack.c.l.b16 %v4081
    %v6050 = vunpack.c.h.b16 %v4081
    %v6051 = vunpack.c.l.b16 %v4082
    %v6052 = vunpack.c.h.b16 %v4082
    %v6053 = vunpack.c.l.b16 %v4083
    %v6054 = vunpack.c.h.b16 %v4083
    %v6055 = vunpack.c.l.b16 %v4084
    %v6056 = vunpack.c.h.b16 %v4084
    %v6057 = vunpack.c.l.b16 %v4085
    %v6058 = vunpack.c.h.b16 %v4085
    %v6059 = vunpack.c.l.b16 %v4086
    %v6060 = vunpack.c.h.b16 %v4086
    %v6061 = vunpack.c.l.b16 %v4087
    %v6062 = vunpack.c.h.b16 %v4087
    %v6063 = vunpack.c.l.b16 %v4088
    %v6064 = vunpack.c.h.b16 %v4088
    %v6065 = vunpack.c.l.b16 %v4089
    %v6066 = vunpack.c.h.b16 %v4089
    %v6067 = vunpack.c.l.b16 %v4090
    %v6068 = vunpack.c.h.b16 %v4090
    %v6069 = vunpack.c.l.b16 %v4091
    %v6070 = vunpack.c.h.b16 %v4091
    %v6071 = vunpack.c.l.b16 %v4092
    %v6072 = vunpack.c.h.b16 %v4092
    %v6073 = vunpack.c.l.b16 %v4093
    %v6074 = vunpack.c.h.b16 %v4093
    %v6075 = vunpack.c.l.b16 %v4094
    %v6076 = vunpack.c.h.b16 %v4094
    %v6077 = vunpack.c.l.b16 %v4095
    %v6078 = vunpack.c.h.b16 %v4095
    %v6079 = vunpack.c.l.b16 %v4096
    %v6080 = vunpack.c.h.b16 %v4096
    %v6081 = vunpack.c.l.b16 %v4097
    %v6082 = vunpack.c.h.b16 %v4097
    %v6083 = vunpack.c.l.b16 %v4098
    %v6084 = vunpack.c.h.b16 %v4098
    %v6085 = vunpack.c.l.b16 %v4099
    %v6086 = vunpack.c.h.b16 %v4099
    %v6087 = vunpack.c.l.b16 %v4100
    %v6088 = vunpack.c.h.b16 %v4100
    %v6089 = vunpack.c.l.b16 %v4101
    %v6090 = vunpack.c.h.b16 %v4101
    %v6091 = vunpack.c.l.b16 %v4102
    %v6092 = vunpack.c.h.b16 %v4102
    %v6093 = vunpack.c.l.b16 %v4103
    %v6094 = vunpack.c.h.b16 %v4103
    %v6095 = vunpack.c.l.b16 %v4104
    %v6096 = vunpack.c.h.b16 %v4104
    %v6097 = vunpack.c.l.b16 %v4105
    %v6098 = vunpack.c.h.b16 %v4105
    %v6099 = vunpack.c.l.b16 %v4106
    %v6100 = vunpack.c.h.b16 %v4106
    %v6101 = vunpack.c.l.b16 %v4107
    %v6102 = vunpack.c.h.b16 %v4107
    %v6103 = vunpack.c.l.b16 %v4108
    %v6104 = vunpack.c.h.b16 %v4108
    %v6105 = vunpack.c.l.b16 %v4109
    %v6106 = vunpack.c.h.b16 %v4109
    %v6107 = vunpack.c.l.b16 %v4110
    %v6108 = vunpack.c.h.b16 %v4110
    %v6109 = vunpack.c.l.b16 %v4111
    %v6110 = vunpack.c.h.b16 %v4111
    %v6111 = vunpack.c.l.b16 %v4112
    %v6112 = vunpack.c.h.b16 %v4112
    %v6113 = vunpack.c.l.b16 %v4113
    %v6114 = vunpack.c.h.b16 %v4113
    %v6115 = vunpack.c.l.b16 %v4114
    %v6116 = vunpack.c.h.b16 %v4114
    %v6117 = vunpack.c.l.b16 %v4115
    %v6118 = vunpack.c.h.b16 %v4115
    %v6119 = vunpack.c.l.b16 %v4116
    %v6120 = vunpack.c.h.b16 %v4116
    %v6121 = vunpack.c.l.b16 %v4117
    %v6122 = vunpack.c.h.b16 %v4117
    %v6123 = vunpack.c.l.b16 %v4118
    %v6124 = vunpack.c.h.b16 %v4118
    %v6125 = vunpack.c.l.b16 %v4119
    %v6126 = vunpack.c.h.b16 %v4119
    %v6127 = vunpack.c.l.b16 %v4120
    %v6128 = vunpack.c.h.b16 %v4120
    %v6129 = vunpack.c.l.b16 %v4121
    %v6130 = vunpack.c.h.b16 %v4121
    %v6131 = vunpack.c.l.b16 %v4122
    %v6132 = vunpack.c.h.b16 %v4122
    %v6133 = vunpack.c.l.b16 %v4123
    %v6134 = vunpack.c.h.b16 %v4123
    %v6135 = vunpack.c.l.b16 %v4124
    %v6136 = vunpack.c.h.b16 %v4124
    %v6137 = vunpack.c.l.b16 %v4125
    %v6138 = vunpack.c.h.b16 %v4125
    %v6139 = vunpack.c.l.b16 %v4126
    %v6140 = vunpack.c.h.b16 %v4126
    %v6141 = vunpack.c.l.b16 %v4127
    %v6142 = vunpack.c.h.b16 %v4127
    %v6143 = vunpack.c.l.b16 %v4128
    %v6144 = vunpack.c.h.b16 %v4128
    %v6145 = vunpack.c.l.b16 %v4129
    %v6146 = vunpack.c.h.b16 %v4129
    %v6147 = vunpack.c.l.b16 %v4130
    %v6148 = vunpack.c.h.b16 %v4130
    %v6149 = vunpack.c.l.b16 %v4131
    %v6150 = vunpack.c.h.b16 %v4131
    %v6151 = vunpack.c.l.b16 %v4132
    %v6152 = vunpack.c.h.b16 %v4132
    %v6153 = vunpack.c.l.b16 %v4133
    %v6154 = vunpack.c.h.b16 %v4133
    %v6155 = vunpack.c.l.b16 %v4134
    %v6156 = vunpack.c.h.b16 %v4134
    %v6157 = vunpack.c.l.b16 %v4135
    %v6158 = vunpack.c.h.b16 %v4135
    %v6159 = vunpack.c.l.b16 %v4136
    %v6160 = vunpack.c.h.b16 %v4136
    %v6161 = vunpack.c.l.b16 %v4137
    %v6162 = vunpack.c.h.b16 %v4137
    %v6163 = vunpack.c.l.b16 %v4138
    %v6164 = vunpack.c.h.b16 %v4138
    %v6165 = vunpack.c.l.b16 %v4139
    %v6166 = vunpack.c.h.b16 %v4139
    %v6167 = vunpack.c.l.b16 %v4140
    %v6168 = vunpack.c.h.b16 %v4140
    %v6169 = vunpack.c.l.b16 %v4141
    %v6170 = vunpack.c.h.b16 %v4141
    %v6171 = vunpack.c.l.b16 %v4142
    %v6172 = vunpack.c.h.b16 %v4142
    %v6173 = vunpack.c.l.b16 %v4143
    %v6174 = vunpack.c.h.b16 %v4143
    %v6175 = vunpack.c.l.b16 %v4144
    %v6176 = vunpack.c.h.b16 %v4144
    %v6177 = vunpack.c.l.b16 %v4145
    %v6178 = vunpack.c.h.b16 %v4145
    %v6179 = vunpack.c.l.b16 %v4146
    %v6180 = vunpack.c.h.b16 %v4146
    %v6181 = vunpack.c.l.b16 %v4147
    %v6182 = vunpack.c.h.b16 %v4147
    %v6183 = vunpack.c.l.b16 %v4148
    %v6184 = vunpack.c.h.b16 %v4148
    %v6185 = vunpack.c.l.b16 %v4149
    %v6186 = vunpack.c.h.b16 %v4149
    %v6187 = vunpack.c.l.b16 %v4150
    %v6188 = vunpack.c.h.b16 %v4150
    %v6189 = vunpack.c.l.b16 %v4151
    %v6190 = vunpack.c.h.b16 %v4151
    %v6191 = vunpack.c.l.b16 %v4152
    %v6192 = vunpack.c.h.b16 %v4152
    %v6193 = vunpack.c.l.b16 %v4153
    %v6194 = vunpack.c.h.b16 %v4153
    %v6195 = vunpack.c.l.b16 %v4154
    %v6196 = vunpack.c.h.b16 %v4154
    %v6197 = vunpack.c.l.b16 %v4155
    %v6198 = vunpack.c.h.b16 %v4155
    %v6199 = vunpack.c.l.b16 %v4156
    %v6200 = vunpack.c.h.b16 %v4156
    %v6201 = vunpack.c.l.b16 %v4157
    %v6202 = vunpack.c.h.b16 %v4157
    %v6203 = vunpack.c.l.b16 %v4158
    %v6204 = vunpack.c.h.b16 %v4158
    %v6205 = vunpack.c.l.b16 %v4159
    %v6206 = vunpack.c.h.b16 %v4159
    %v6207 = vunpack.c.l.b16 %v4160
    %v6208 = vunpack.c.h.b16 %v4160
    %v6209 = vunpack.c.l.b16 %v4161
    %v6210 = vunpack.c.h.b16 %v4161
    %v6211 = vunpack.c.l.b16 %v4162
    %v6212 = vunpack.c.h.b16 %v4162
    %v6213 = vunpack.c.l.b16 %v4163
    %v6214 = vunpack.c.h.b16 %v4163
    %v6215 = vunpack.c.l.b16 %v4164
    %v6216 = vunpack.c.h.b16 %v4164
    %v6217 = vunpack.c.l.b16 %v4165
    %v6218 = vunpack.c.h.b16 %v4165
    %v6219 = vunpack.c.l.b16 %v4166
    %v6220 = vunpack.c.h.b16 %v4166
    %v6221 = vunpack.c.l.b16 %v4167
    %v6222 = vunpack.c.h.b16 %v4167
    %v6223 = vunpack.c.l.b16 %v4168
    %v6224 = vunpack.c.h.b16 %v4168
    %v6225 = vunpack.c.l.b16 %v4169
    %v6226 = vunpack.c.h.b16 %v4169
    %v6227 = vunpack.c.l.b16 %v4170
    %v6228 = vunpack.c.h.b16 %v4170
    %v6229 = vunpack.c.l.b16 %v4171
    %v6230 = vunpack.c.h.b16 %v4171
    %v6231 = vunpack.c.l.b16 %v4172
    %v6232 = vunpack.c.h.b16 %v4172
    %v6233 = vunpack.c.l.b16 %v4173
    %v6234 = vunpack.c.h.b16 %v4173
    %v6235 = vunpack.c.l.b16 %v4174
    %v6236 = vunpack.c.h.b16 %v4174
    %v6237 = vunpack.c.l.b16 %v4175
    %v6238 = vunpack.c.h.b16 %v4175
    %v6239 = vunpack.c.l.b16 %v4176
    %v6240 = vunpack.c.h.b16 %v4176
    %v6241 = vunpack.c.l.b16 %v4177
    %v6242 = vunpack.c.h.b16 %v4177
    %v6243 = vunpack.c.l.b16 %v4178
    %v6244 = vunpack.c.h.b16 %v4178
    %v6245 = vunpack.c.l.b16 %v4179
    %v6246 = vunpack.c.h.b16 %v4179
    %v6247 = vunpack.c.l.b16 %v4180
    %v6248 = vunpack.c.h.b16 %v4180
    %v6249 = vunpack.c.l.b16 %v4181
    %v6250 = vunpack.c.h.b16 %v4181
    %v6251 = vunpack.c.l.b16 %v4182
    %v6252 = vunpack.c.h.b16 %v4182
    %v6253 = vunpack.c.l.b16 %v4183
    %v6254 = vunpack.c.h.b16 %v4183
    %v6255 = vunpack.c.l.b16 %v4184
    %v6256 = vunpack.c.h.b16 %v4184
    %v6257 = vunpack.c.l.b16 %v4185
    %v6258 = vunpack.c.h.b16 %v4185
    %v6259 = vunpack.c.l.b16 %v4186
    %v6260 = vunpack.c.h.b16 %v4186
    %v6261 = vunpack.c.l.b16 %v4187
    %v6262 = vunpack.c.h.b16 %v4187
    %v6263 = vunpack.c.l.b16 %v4188
    %v6264 = vunpack.c.h.b16 %v4188
    %v6265 = vunpack.c.l.b16 %v4189
    %v6266 = vunpack.c.h.b16 %v4189
    %v6267 = vunpack.c.l.b16 %v4190
    %v6268 = vunpack.c.h.b16 %v4190
    %v6269 = vunpack.c.l.b16 %v4191
    %v6270 = vunpack.c.h.b16 %v4191
    %v6271 = vunpack.c.l.b16 %v4192
    %v6272 = vunpack.c.h.b16 %v4192
    %v6273 = vunpack.c.l.b16 %v4193
    %v6274 = vunpack.c.h.b16 %v4193
    %v6275 = vunpack.c.l.b16 %v4194
    %v6276 = vunpack.c.h.b16 %v4194
    %v6277 = vunpack.c.l.b16 %v4195
    %v6278 = vunpack.c.h.b16 %v4195
    %v6279 = vunpack.c.l.b16 %v4196
    %v6280 = vunpack.c.h.b16 %v4196
    %v6281 = vunpack.c.l.b16 %v4197
    %v6282 = vunpack.c.h.b16 %v4197
    %v6283 = vunpack.c.l.b16 %v4198
    %v6284 = vunpack.c.h.b16 %v4198
    %v6285 = vunpack.c.l.b16 %v4199
    %v6286 = vunpack.c.h.b16 %v4199
    %v6287 = vunpack.c.l.b16 %v4200
    %v6288 = vunpack.c.h.b16 %v4200
    %v6289 = vunpack.c.l.b16 %v4201
    %v6290 = vunpack.c.h.b16 %v4201
    %v6291 = vunpack.c.l.b16 %v4202
    %v6292 = vunpack.c.h.b16 %v4202
    %v6293 = vunpack.c.l.b16 %v4203
    %v6294 = vunpack.c.h.b16 %v4203
    %v6295 = vunpack.c.l.b16 %v4204
    %v6296 = vunpack.c.h.b16 %v4204
    %v6297 = vunpack.c.l.b16 %v4205
    %v6298 = vunpack.c.h.b16 %v4205
    %v6299 = vunpack.c.l.b16 %v4206
    %v6300 = vunpack.c.h.b16 %v4206
    %v6301 = vunpack.c.l.b16 %v4207
    %v6302 = vunpack.c.h.b16 %v4207
    %v6303 = vunpack.c.l.b16 %v4208
    %v6304 = vunpack.c.h.b16 %v4208
    %v6305 = vunpack.c.l.b16 %v4209
    %v6306 = vunpack.c.h.b16 %v4209
    %v6307 = vunpack.c.l.b16 %v4210
    %v6308 = vunpack.c.h.b16 %v4210
    %v6309 = vunpack.c.l.b16 %v4211
    %v6310 = vunpack.c.h.b16 %v4211
    %v6311 = vunpack.c.l.b16 %v4212
    %v6312 = vunpack.c.h.b16 %v4212
    %v6313 = vunpack.c.l.b16 %v4213
    %v6314 = vunpack.c.h.b16 %v4213
    %v6315 = vunpack.c.l.b16 %v4214
    %v6316 = vunpack.c.h.b16 %v4214
    %v6317 = vunpack.c.l.b16 %v4215
    %v6318 = vunpack.c.h.b16 %v4215
    %v6319 = vunpack.c.l.b16 %v4216
    %v6320 = vunpack.c.h.b16 %v4216
    %v6321 = vunpack.c.l.b16 %v4217
    %v6322 = vunpack.c.h.b16 %v4217
    %v6323 = vunpack.c.l.b16 %v4218
    %v6324 = vunpack.c.h.b16 %v4218
    %v6325 = vunpack.c.l.b16 %v4219
    %v6326 = vunpack.c.h.b16 %v4219
    %v6327 = vunpack.c.l.b16 %v4220
    %v6328 = vunpack.c.h.b16 %v4220
    %v6329 = vunpack.c.l.b16 %v4221
    %v6330 = vunpack.c.h.b16 %v4221
    %v6331 = vunpack.c.l.b16 %v4222
    %v6332 = vunpack.c.h.b16 %v4222
    %v6333 = vunpack.c.l.b16 %v4223
    %v6334 = vunpack.c.h.b16 %v4223
    %v6335 = vunpack.c.l.b16 %v4224
    %v6336 = vunpack.c.h.b16 %v4224
    %v6337 = vunpack.c.l.b16 %v4225
    %v6338 = vunpack.c.h.b16 %v4225
    %v6339 = vunpack.c.l.b16 %v4226
    %v6340 = vunpack.c.h.b16 %v4226
    %v6341 = vunpack.c.l.b16 %v4227
    %v6342 = vunpack.c.h.b16 %v4227
    %v6343 = vunpack.c.l.b16 %v4228
    %v6344 = vunpack.c.h.b16 %v4228
    %v6345 = vunpack.c.l.b16 %v4229
    %v6346 = vunpack.c.h.b16 %v4229
    %v6347 = vunpack.c.l.b16 %v4230
    %v6348 = vunpack.c.h.b16 %v4230
    %v6349 = vunpack.c.l.b16 %v4231
    %v6350 = vunpack.c.h.b16 %v4231
    %v6351 = vunpack.c.l.b16 %v4232
    %v6352 = vunpack.c.h.b16 %v4232
    %v6353 = vunpack.c.l.b16 %v4233
    %v6354 = vunpack.c.h.b16 %v4233
    %v6355 = vunpack.c.l.b16 %v4234
    %v6356 = vunpack.c.h.b16 %v4234
    %v6357 = vunpack.c.l.b16 %v4235
    %v6358 = vunpack.c.h.b16 %v4235
    %v6359 = vunpack.c.l.b16 %v4236
    %v6360 = vunpack.c.h.b16 %v4236
    %v6361 = vunpack.c.l.b16 %v4237
    %v6362 = vunpack.c.h.b16 %v4237
    %v6363 = vunpack.c.l.b16 %v4238
    %v6364 = vunpack.c.h.b16 %v4238
    %v6365 = vunpack.c.l.b16 %v4239
    %v6366 = vunpack.c.h.b16 %v4239
    %v6367 = vunpack.c.l.b16 %v4240
    %v6368 = vunpack.c.h.b16 %v4240
    %v6369 = vunpack.c.l.b16 %v4241
    %v6370 = vunpack.c.h.b16 %v4241
    %v6371 = vunpack.c.l.b16 %v4242
    %v6372 = vunpack.c.h.b16 %v4242
    %v6373 = vunpack.c.l.b16 %v4243
    %v6374 = vunpack.c.h.b16 %v4243
    %v6375 = vunpack.c.l.b16 %v4244
    %v6376 = vunpack.c.h.b16 %v4244
    %v6377 = vunpack.c.l.b16 %v4245
    %v6378 = vunpack.c.h.b16 %v4245
    %v6379 = vunpack.c.l.b16 %v4246
    %v6380 = vunpack.c.h.b16 %v4246
    %v6381 = vunpack.c.l.b16 %v4247
    %v6382 = vunpack.c.h.b16 %v4247
    %v6383 = vunpack.c.l.b16 %v4248
    %v6384 = vunpack.c.h.b16 %v4248
    %v6385 = vunpack.c.l.b16 %v4249
    %v6386 = vunpack.c.h.b16 %v4249
    %v6387 = vunpack.c.l.b16 %v4250
    %v6388 = vunpack.c.h.b16 %v4250
    %v6389 = vunpack.c.l.b16 %v4251
    %v6390 = vunpack.c.h.b16 %v4251
    %v6391 = vunpack.c.l.b16 %v4252
    %v6392 = vunpack.c.h.b16 %v4252
    %v6393 = vunpack.c.l.b16 %v4253
    %v6394 = vunpack.c.h.b16 %v4253
    %v6395 = vunpack.c.l.b16 %v4254
    %v6396 = vunpack.c.h.b16 %v4254
    %v6397 = vunpack.c.l.b16 %v4255
    %v6398 = vunpack.c.h.b16 %v4255
    %v6399 = vunpack.c.l.b16 %v4256
    %v6400 = vunpack.c.h.b16 %v4256
    %v6401 = vunpack.c.l.b16 %v4257
    %v6402 = vunpack.c.h.b16 %v4257
    %v6403 = vunpack.c.l.b16 %v4258
    %v6404 = vunpack.c.h.b16 %v4258
    %v6405 = vunpack.c.l.b16 %v4259
    %v6406 = vunpack.c.h.b16 %v4259
    %v6407 = vunpack.c.l.b16 %v4260
    %v6408 = vunpack.c.h.b16 %v4260
    %v6409 = vunpack.c.l.b16 %v4261
    %v6410 = vunpack.c.h.b16 %v4261
    %v6411 = vunpack.c.l.b16 %v4262
    %v6412 = vunpack.c.h.b16 %v4262
    %v6413 = vunpack.c.l.b16 %v4263
    %v6414 = vunpack.c.h.b16 %v4263
    %v6415 = vunpack.c.l.b16 %v4264
    %v6416 = vunpack.c.h.b16 %v4264
    %v6417 = vunpack.c.l.b16 %v4265
    %v6418 = vunpack.c.h.b16 %v4265
    %v6419 = vunpack.c.l.b16 %v4266
    %v6420 = vunpack.c.h.b16 %v4266
    %v6421 = vunpack.c.l.b16 %v4267
    %v6422 = vunpack.c.h.b16 %v4267
    %v6423 = vunpack.c.l.b16 %v4268
    %v6424 = vunpack.c.h.b16 %v4268
    %v6425 = vunpack.c.l.b16 %v4269
    %v6426 = vunpack.c.h.b16 %v4269
    %v6427 = vunpack.c.l.b16 %v4270
    %v6428 = vunpack.c.h.b16 %v4270
    %v6429 = vunpack.c.l.b16 %v4271
    %v6430 = vunpack.c.h.b16 %v4271
    %v6431 = vunpack.c.l.b16 %v4272
    %v6432 = vunpack.c.h.b16 %v4272
    %v6433 = vunpack.c.l.b16 %v4273
    %v6434 = vunpack.c.h.b16 %v4273
    %v6435 = vunpack.c.l.b16 %v4274
    %v6436 = vunpack.c.h.b16 %v4274
    %v6437 = vunpack.c.l.b16 %v4275
    %v6438 = vunpack.c.h.b16 %v4275
    %v6439 = vunpack.c.l.b16 %v4276
    %v6440 = vunpack.c.h.b16 %v4276
    %v6441 = vunpack.c.l.b16 %v4277
    %v6442 = vunpack.c.h.b16 %v4277
    %v6443 = vunpack.c.l.b16 %v4278
    %v6444 = vunpack.c.h.b16 %v4278
    %v6445 = vunpack.c.l.b16 %v4279
    %v6446 = vunpack.c.h.b16 %v4279
    %v6447 = vunpack.c.l.b16 %v4280
    %v6448 = vunpack.c.h.b16 %v4280
    %v6449 = vunpack.c.l.b16 %v4281
    %v6450 = vunpack.c.h.b16 %v4281
    %v6451 = vunpack.c.l.b16 %v4282
    %v6452 = vunpack.c.h.b16 %v4282
    %v6453 = vunpack.c.l.b16 %v4283
    %v6454 = vunpack.c.h.b16 %v4283
    %v6455 = vunpack.c.l.b16 %v4284
    %v6456 = vunpack.c.h.b16 %v4284
    %v6457 = vunpack.c.l.b16 %v4285
    %v6458 = vunpack.c.h.b16 %v4285
    %v6459 = vunpack.c.l.b16 %v4286
    %v6460 = vunpack.c.h.b16 %v4286
    %v6461 = vunpack.c.l.b16 %v4287
    %v6462 = vunpack.c.h.b16 %v4287
    %v6463 = vunpack.c.l.b16 %v4288
    %v6464 = vunpack.c.h.b16 %v4288
    %v6465 = vunpack.c.l.b16 %v4289
    %v6466 = vunpack.c.h.b16 %v4289
    %v6467 = vunpack.c.l.b16 %v4290
    %v6468 = vunpack.c.h.b16 %v4290
    %v6469 = vunpack.c.l.b16 %v4291
    %v6470 = vunpack.c.h.b16 %v4291
    %v6471 = vunpack.c.l.b16 %v4292
    %v6472 = vunpack.c.h.b16 %v4292
    %v6473 = vunpack.c.l.b16 %v4293
    %v6474 = vunpack.c.h.b16 %v4293
    %v6475 = vunpack.c.l.b16 %v4294
    %v6476 = vunpack.c.h.b16 %v4294
    %v6477 = vunpack.c.l.b16 %v4295
    %v6478 = vunpack.c.h.b16 %v4295
    %v6479 = vunpack.c.l.b16 %v4296
    %v6480 = vunpack.c.h.b16 %v4296
    %v6481 = vunpack.c.l.b16 %v4297
    %v6482 = vunpack.c.h.b16 %v4297
    %v6483 = vunpack.c.l.b16 %v4298
    %v6484 = vunpack.c.h.b16 %v4298
    %v6485 = vunpack.c.l.b16 %v4299
    %v6486 = vunpack.c.h.b16 %v4299
    %v6487 = vunpack.c.l.b16 %v4300
    %v6488 = vunpack.c.h.b16 %v4300
    %v6489 = vunpack.c.l.b16 %v4301
    %v6490 = vunpack.c.h.b16 %v4301
    %v6491 = vunpack.c.l.b16 %v4302
    %v6492 = vunpack.c.h.b16 %v4302
    %v6493 = vunpack.c.l.b16 %v4303
    %v6494 = vunpack.c.h.b16 %v4303
    %v6495 = vunpack.c.l.b16 %v4304
    %v6496 = vunpack.c.h.b16 %v4304
    %v6497 = vunpack.c.l.b16 %v4305
    %v6498 = vunpack.c.h.b16 %v4305
    %v6499 = vunpack.c.l.b16 %v4306
    %v6500 = vunpack.c.h.b16 %v4306
    %v6501 = vunpack.c.l.b16 %v4307
    %v6502 = vunpack.c.h.b16 %v4307
    %v6503 = vunpack.c.l.b16 %v4308
    %v6504 = vunpack.c.h.b16 %v4308
    %v6505 = vunpack.c.l.b16 %v4309
    %v6506 = vunpack.c.h.b16 %v4309
    %v6507 = vunpack.c.l.b16 %v4310
    %v6508 = vunpack.c.h.b16 %v4310
    %v6509 = vunpack.c.l.b16 %v4311
    %v6510 = vunpack.c.h.b16 %v4311
    %v6511 = vunpack.c.l.b16 %v4312
    %v6512 = vunpack.c.h.b16 %v4312
    %v6513 = vunpack.c.l.b16 %v4313
    %v6514 = vunpack.c.h.b16 %v4313
    %v6515 = vunpack.c.l.b16 %v4314
    %v6516 = vunpack.c.h.b16 %v4314
    %v6517 = vunpack.c.l.b16 %v4315
    %v6518 = vunpack.c.h.b16 %v4315
    %v6519 = vunpack.c.l.b16 %v4316
    %v6520 = vunpack.c.h.b16 %v4316
    %v6521 = vunpack.c.l.b16 %v4317
    %v6522 = vunpack.c.h.b16 %v4317
    %v6523 = vunpack.c.l.b16 %v4318
    %v6524 = vunpack.c.h.b16 %v4318
    %v6525 = vunpack.c.l.b16 %v4319
    %v6526 = vunpack.c.h.b16 %v4319
    %v6527 = vunpack.c.l.b16 %v4320
    %v6528 = vunpack.c.h.b16 %v4320
    %v6529 = vunpack.c.l.b16 %v4321
    %v6530 = vunpack.c.h.b16 %v4321
    %v6531 = vunpack.c.l.b16 %v4322
    %v6532 = vunpack.c.h.b16 %v4322
    %v6533 = vunpack.c.l.b16 %v4323
    %v6534 = vunpack.c.h.b16 %v4323
    %v6535 = vunpack.c.l.b16 %v4324
    %v6536 = vunpack.c.h.b16 %v4324
    %v6537 = vunpack.c.l.b16 %v4325
    %v6538 = vunpack.c.h.b16 %v4325
    %v6539 = vunpack.c.l.b16 %v4326
    %v6540 = vunpack.c.h.b16 %v4326
    %v6541 = vunpack.c.l.b16 %v4327
    %v6542 = vunpack.c.h.b16 %v4327
    %v6543 = vunpack.c.l.b16 %v4328
    %v6544 = vunpack.c.h.b16 %v4328
    %v6545 = vunpack.c.l.b16 %v4329
    %v6546 = vunpack.c.h.b16 %v4329
    %v6547 = vunpack.c.l.b16 %v4330
    %v6548 = vunpack.c.h.b16 %v4330
    %v6549 = vunpack.c.l.b16 %v4331
    %v6550 = vunpack.c.h.b16 %v4331
    %v6551 = vunpack.c.l.b16 %v4332
    %v6552 = vunpack.c.h.b16 %v4332
    %v6553 = vunpack.c.l.b16 %v4333
    %v6554 = vunpack.c.h.b16 %v4333
    %v6555 = vunpack.c.l.b16 %v4334
    %v6556 = vunpack.c.h.b16 %v4334
    %v6557 = vunpack.c.l.b16 %v4335
    %v6558 = vunpack.c.h.b16 %v4335
    %v6559 = vunpack.c.l.b16 %v4336
    %v6560 = vunpack.c.h.b16 %v4336
    %v6561 = vunpack.c.l.b16 %v4337
    %v6562 = vunpack.c.h.b16 %v4337
    %v6563 = vunpack.c.l.b16 %v4338
    %v6564 = vunpack.c.h.b16 %v4338
    %v6565 = vunpack.c.l.b16 %v4339
    %v6566 = vunpack.c.h.b16 %v4339
    %v6567 = vunpack.c.l.b16 %v4340
    %v6568 = vunpack.c.h.b16 %v4340
    %v6569 = vunpack.c.l.b16 %v4341
    %v6570 = vunpack.c.h.b16 %v4341
    %v6571 = vunpack.c.l.b16 %v4342
    %v6572 = vunpack.c.h.b16 %v4342
    %v6573 = vunpack.c.l.b16 %v4343
    %v6574 = vunpack.c.h.b16 %v4343
    %v6575 = vunpack.c.l.b16 %v4344
    %v6576 = vunpack.c.h.b16 %v4344
    %v6577 = vunpack.c.l.b16 %v4345
    %v6578 = vunpack.c.h.b16 %v4345
    %v6579 = vunpack.c.l.b16 %v4346
    %v6580 = vunpack.c.h.b16 %v4346
    %v6581 = vunpack.c.l.b16 %v4347
    %v6582 = vunpack.c.h.b16 %v4347
    %v6583 = vunpack.c.l.b16 %v4348
    %v6584 = vunpack.c.h.b16 %v4348
    %v6585 = vunpack.c.l.b16 %v4349
    %v6586 = vunpack.c.h.b16 %v4349
    %v6587 = vunpack.c.l.b16 %v4350
    %v6588 = vunpack.c.h.b16 %v4350
    %v6589 = vunpack.c.l.b16 %v4351
    %v6590 = vunpack.c.h.b16 %v4351
    %v6591 = vunpack.c.l.b16 %v4352
    %v6592 = vunpack.c.h.b16 %v4352
    %v6593 = vunpack.c.l.b16 %v4353
    %v6594 = vunpack.c.h.b16 %v4353
    %v6595 = vunpack.c.l.b16 %v4354
    %v6596 = vunpack.c.h.b16 %v4354
    %v6597 = vunpack.c.l.b16 %v4355
    %v6598 = vunpack.c.h.b16 %v4355
    %v6599 = vunpack.c.l.b16 %v4356
    %v6600 = vunpack.c.h.b16 %v4356
    %v6601 = vunpack.c.l.b16 %v4357
    %v6602 = vunpack.c.h.b16 %v4357
    %v6603 = vunpack.c.l.b16 %v4358
    %v6604 = vunpack.c.h.b16 %v4358
    %v6605 = vunpack.c.l.b16 %v4359
    %v6606 = vunpack.c.h.b16 %v4359
    %v6607 = vunpack.c.l.b16 %v4360
    %v6608 = vunpack.c.h.b16 %v4360
    %v6609 = vunpack.c.l.b16 %v4361
    %v6610 = vunpack.c.h.b16 %v4361
    %v6611 = vunpack.c.l.b16 %v4362
    %v6612 = vunpack.c.h.b16 %v4362
    %v6613 = vunpack.c.l.b16 %v4363
    %v6614 = vunpack.c.h.b16 %v4363
    %v6615 = vunpack.c.l.b16 %v4364
    %v6616 = vunpack.c.h.b16 %v4364
    %v6617 = vunpack.c.l.b16 %v4365
    %v6618 = vunpack.c.h.b16 %v4365
    %v6619 = vunpack.c.l.b16 %v4366
    %v6620 = vunpack.c.h.b16 %v4366
    %v6621 = vunpack.c.l.b16 %v4367
    %v6622 = vunpack.c.h.b16 %v4367
    %v6623 = vunpack.c.l.b16 %v4368
    %v6624 = vunpack.c.h.b16 %v4368
    %v6625 = vunpack.c.l.b16 %v4369
    %v6626 = vunpack.c.h.b16 %v4369
    %v6627 = vunpack.c.l.b16 %v4370
    %v6628 = vunpack.c.h.b16 %v4370
    %v6629 = vunpack.c.l.b16 %v4371
    %v6630 = vunpack.c.h.b16 %v4371
    %v6631 = vunpack.c.l.b16 %v4372
    %v6632 = vunpack.c.h.b16 %v4372
    %v6633 = vunpack.c.l.b16 %v4373
    %v6634 = vunpack.c.h.b16 %v4373
    %v6635 = vunpack.c.l.b16 %v4374
    %v6636 = vunpack.c.h.b16 %v4374
    %v6637 = vunpack.c.l.b16 %v4375
    %v6638 = vunpack.c.h.b16 %v4375
    %v6639 = vunpack.c.l.b16 %v4376
    %v6640 = vunpack.c.h.b16 %v4376
    %v6641 = vunpack.c.l.b16 %v4377
    %v6642 = vunpack.c.h.b16 %v4377
    %v6643 = vunpack.c.l.b16 %v4378
    %v6644 = vunpack.c.h.b16 %v4378
    %v6645 = vunpack.c.l.b16 %v4379
    %v6646 = vunpack.c.h.b16 %v4379
    %v6647 = vunpack.c.l.b16 %v4380
    %v6648 = vunpack.c.h.b16 %v4380
    %v6649 = vunpack.c.l.b16 %v4381
    %v6650 = vunpack.c.h.b16 %v4381
    %v6651 = vunpack.c.l.b16 %v4382
    %v6652 = vunpack.c.h.b16 %v4382
    %v6653 = vunpack.c.l.b16 %v4383
    %v6654 = vunpack.c.h.b16 %v4383
    %v6655 = vunpack.c.l.b16 %v4384
    %v6656 = vunpack.c.h.b16 %v4384
    %v6657 = vunpack.c.l.b16 %v4385
    %v6658 = vunpack.c.h.b16 %v4385
    %v6659 = vunpack.c.l.b16 %v4386
    %v6660 = vunpack.c.h.b16 %v4386
    %v6661 = vunpack.c.l.b16 %v4387
    %v6662 = vunpack.c.h.b16 %v4387
    %v6663 = vunpack.c.l.b16 %v4388
    %v6664 = vunpack.c.h.b16 %v4388
    %v6665 = vunpack.c.l.b16 %v4389
    %v6666 = vunpack.c.h.b16 %v4389
    %v6667 = vunpack.c.l.b16 %v4390
    %v6668 = vunpack.c.h.b16 %v4390
    %v6669 = vunpack.c.l.b16 %v4391
    %v6670 = vunpack.c.h.b16 %v4391
    %v6671 = vunpack.c.l.b16 %v4392
    %v6672 = vunpack.c.h.b16 %v4392
    %v6673 = vunpack.c.l.b16 %v4393
    %v6674 = vunpack.c.h.b16 %v4393
    %v6675 = vunpack.c.l.b16 %v4394
    %v6676 = vunpack.c.h.b16 %v4394
    %v6677 = vunpack.c.l.b16 %v4395
    %v6678 = vunpack.c.h.b16 %v4395
    %v6679 = vunpack.c.l.b16 %v4396
    %v6680 = vunpack.c.h.b16 %v4396
    %v6681 = vunpack.c.l.b16 %v4397
    %v6682 = vunpack.c.h.b16 %v4397
    %v6683 = vunpack.c.l.b16 %v4398
    %v6684 = vunpack.c.h.b16 %v4398
    %v6685 = vunpack.c.l.b16 %v4399
    %v6686 = vunpack.c.h.b16 %v4399
    %v6687 = vunpack.c.l.b16 %v4400
    %v6688 = vunpack.c.h.b16 %v4400
    %v6689 = vunpack.c.l.b16 %v4401
    %v6690 = vunpack.c.h.b16 %v4401
    %v6691 = vunpack.c.l.b16 %v4402
    %v6692 = vunpack.c.h.b16 %v4402
    %v6693 = vunpack.c.l.b16 %v4403
    %v6694 = vunpack.c.h.b16 %v4403
    %v6695 = vunpack.c.l.b16 %v4404
    %v6696 = vunpack.c.h.b16 %v4404
    %v6697 = vunpack.c.l.b16 %v4405
    %v6698 = vunpack.c.h.b16 %v4405
    %v6699 = vunpack.c.l.b16 %v4406
    %v6700 = vunpack.c.h.b16 %v4406
    %v6701 = vunpack.c.l.b16 %v4407
    %v6702 = vunpack.c.h.b16 %v4407
    %v6703 = vunpack.c.l.b16 %v4408
    %v6704 = vunpack.c.h.b16 %v4408
    %v6705 = vunpack.c.l.b16 %v4409
    %v6706 = vunpack.c.h.b16 %v4409
    %v6707 = vunpack.c.l.b16 %v4410
    %v6708 = vunpack.c.h.b16 %v4410
    %v6709 = vunpack.c.l.b16 %v4411
    %v6710 = vunpack.c.h.b16 %v4411
    %v6711 = vunpack.c.l.b16 %v4412
    %v6712 = vunpack.c.h.b16 %v4412
    %v6713 = vunpack.c.l.b16 %v4413
    %v6714 = vunpack.c.h.b16 %v4413
    %v6715 = vunpack.c.l.b16 %v4414
    %v6716 = vunpack.c.h.b16 %v4414
    %v6717 = vunpack.c.l.b16 %v4415
    %v6718 = vunpack.c.h.b16 %v4415
    %v6719 = vunpack.c.l.b16 %v4416
    %v6720 = vunpack.c.h.b16 %v4416
    %v6721 = vpack.c.b16 %v5193, %v5185
    %v6722 = vpack.c.b16 %v5194, %v5186
    %v6723 = vpack.c.b16 %v5195, %v5187
    %v6724 = vpack.c.b16 %v5196, %v5188
    %v6725 = vpack.c.b16 %v5197, %v5189
    %v6726 = vpack.c.b16 %v5198, %v5190
    %v6727 = vpack.c.b16 %v5199, %v5191
    %v6728 = vpack.c.b16 %v5200, %v5192
    %v6729 = vpack.c.b16 %v5209, %v5201
    %v6730 = vpack.c.b16 %v5210, %v5202
    %v6731 = vpack.c.b16 %v5211, %v5203
    %v6732 = vpack.c.b16 %v5212, %v5204
    %v6733 = vpack.c.b16 %v5213, %v5205
    %v6734 = vpack.c.b16 %v5214, %v5206
    %v6735 = vpack.c.b16 %v5215, %v5207
    %v6736 = vpack.c.b16 %v5216, %v5208
    %v6737 = vpack.c.b16 %v5225, %v5217
    %v6738 = vpack.c.b16 %v5226, %v5218
    %v6739 = vpack.c.b16 %v5227, %v5219
    %v6740 = vpack.c.b16 %v5228, %v5220
    %v6741 = vpack.c.b16 %v5229, %v5221
    %v6742 = vpack.c.b16 %v5230, %v5222
    %v6743 = vpack.c.b16 %v5231, %v5223
    %v6744 = vpack.c.b16 %v5232, %v5224
    %v6745 = vpack.c.b16 %v5241, %v5233
    %v6746 = vpack.c.b16 %v5242, %v5234
    %v6747 = vpack.c.b16 %v5243, %v5235
    %v6748 = vpack.c.b16 %v5244, %v5236
    %v6749 = vpack.c.b16 %v5245, %v5237
    %v6750 = vpack.c.b16 %v5246, %v5238
    %v6751 = vpack.c.b16 %v5247, %v5239
    %v6752 = vpack.c.b16 %v5248, %v5240
    %v6753 = vpack.c.b16 %v5257, %v5249
    %v6754 = vpack.c.b16 %v5258, %v5250
    %v6755 = vpack.c.b16 %v5259, %v5251
    %v6756 = vpack.c.b16 %v5260, %v5252
    %v6757 = vpack.c.b16 %v5261, %v5253
    %v6758 = vpack.c.b16 %v5262, %v5254
    %v6759 = vpack.c.b16 %v5263, %v5255
    %v6760 = vpack.c.b16 %v5264, %v5256
    %v6761 = vpack.c.b16 %v5273, %v5265
    %v6762 = vpack.c.b16 %v5274, %v5266
    %v6763 = vpack.c.b16 %v5275, %v5267
    %v6764 = vpack.c.b16 %v5276, %v5268
    %v6765 = vpack.c.b16 %v5277, %v5269
    %v6766 = vpack.c.b16 %v5278, %v5270
    %v6767 = vpack.c.b16 %v5279, %v5271
    %v6768 = vpack.c.b16 %v5280, %v5272
    %v6769 = vpack.c.b16 %v5289, %v5281
    %v6770 = vpack.c.b16 %v5290, %v5282
    %v6771 = vpack.c.b16 %v5291, %v5283
    %v6772 = vpack.c.b16 %v5292, %v5284
    %v6773 = vpack.c.b16 %v5293, %v5285
    %v6774 = vpack.c.b16 %v5294, %v5286
    %v6775 = vpack.c.b16 %v5295, %v5287
    %v6776 = vpack.c.b16 %v5296, %v5288
    %v6777 = vpack.c.b16 %v5305, %v5297
    %v6778 = vpack.c.b16 %v5306, %v5298
    %v6779 = vpack.c.b16 %v5307, %v5299
    %v6780 = vpack.c.b16 %v5308, %v5300
    %v6781 = vpack.c.b16 %v5309, %v5301
    %v6782 = vpack.c.b16 %v5310, %v5302
    %v6783 = vpack.c.b16 %v5311, %v5303
    %v6784 = vpack.c.b16 %v5312, %v5304
    %v6785 = vpack.c.b16 %v5321, %v5313
    %v6786 = vpack.c.b16 %v5322, %v5314
    %v6787 = vpack.c.b16 %v5323, %v5315
    %v6788 = vpack.c.b16 %v5324, %v5316
    %v6789 = vpack.c.b16 %v5325, %v5317
    %v6790 = vpack.c.b16 %v5326, %v5318
    %v6791 = vpack.c.b16 %v5327, %v5319
    %v6792 = vpack.c.b16 %v5328, %v5320
    %v6793 = vpack.c.b16 %v5337, %v5329
    %v6794 = vpack.c.b16 %v5338, %v5330
    %v6795 = vpack.c.b16 %v5339, %v5331
    %v6796 = vpack.c.b16 %v5340, %v5332
    %v6797 = vpack.c.b16 %v5341, %v5333
    %v6798 = vpack.c.b16 %v5342, %v5334
    %v6799 = vpack.c.b16 %v5343, %v5335
    %v6800 = vpack.c.b16 %v5344, %v5336
    %v6801 = vpack.c.b16 %v5353, %v5345
    %v6802 = vpack.c.b16 %v5354, %v5346
    %v6803 = vpack.c.b16 %v5355, %v5347
    %v6804 = vpack.c.b16 %v5356, %v5348
    %v6805 = vpack.c.b16 %v5357, %v5349
    %v6806 = vpack.c.b16 %v5358, %v5350
    %v6807 = vpack.c.b16 %v5359, %v5351
    %v6808 = vpack.c.b16 %v5360, %v5352
    %v6809 = vpack.c.b16 %v5369, %v5361
    %v6810 = vpack.c.b16 %v5370, %v5362
    %v6811 = vpack.c.b16 %v5371, %v5363
    %v6812 = vpack.c.b16 %v5372, %v5364
    %v6813 = vpack.c.b16 %v5373, %v5365
    %v6814 = vpack.c.b16 %v5374, %v5366
    %v6815 = vpack.c.b16 %v5375, %v5367
    %v6816 = vpack.c.b16 %v5376, %v5368
    %v6817 = vpack.c.b16 %v5385, %v5377
    %v6818 = vpack.c.b16 %v5386, %v5378
    %v6819 = vpack.c.b16 %v5387, %v5379
    %v6820 = vpack.c.b16 %v5388, %v5380
    %v6821 = vpack.c.b16 %v5389, %v5381
    %v6822 = vpack.c.b16 %v5390, %v5382
    %v6823 = vpack.c.b16 %v5391, %v5383
    %v6824 = vpack.c.b16 %v5392, %v5384
    %v6825 = vpack.c.b16 %v5401, %v5393
    %v6826 = vpack.c.b16 %v5402, %v5394
    %v6827 = vpack.c.b16 %v5403, %v5395
    %v6828 = vpack.c.b16 %v5404, %v5396
    %v6829 = vpack.c.b16 %v5405, %v5397
    %v6830 = vpack.c.b16 %v5406, %v5398
    %v6831 = vpack.c.b16 %v5407, %v5399
    %v6832 = vpack.c.b16 %v5408, %v5400
    %v6833 = vpack.c.b16 %v5417, %v5409
    %v6834 = vpack.c.b16 %v5418, %v5410
    %v6835 = vpack.c.b16 %v5419, %v5411
    %v6836 = vpack.c.b16 %v5420, %v5412
    %v6837 = vpack.c.b16 %v5421, %v5413
    %v6838 = vpack.c.b16 %v5422, %v5414
    %v6839 = vpack.c.b16 %v5423, %v5415
    %v6840 = vpack.c.b16 %v5424, %v5416
    %v6841 = vpack.c.b16 %v5433, %v5425
    %v6842 = vpack.c.b16 %v5434, %v5426
    %v6843 = vpack.c.b16 %v5435, %v5427
    %v6844 = vpack.c.b16 %v5436, %v5428
    %v6845 = vpack.c.b16 %v5437, %v5429
    %v6846 = vpack.c.b16 %v5438, %v5430
    %v6847 = vpack.c.b16 %v5439, %v5431
    %v6848 = vpack.c.b16 %v5440, %v5432
    %v6849 = vpack.c.b16 %v5449, %v5441
    %v6850 = vpack.c.b16 %v5450, %v5442
    %v6851 = vpack.c.b16 %v5451, %v5443
    %v6852 = vpack.c.b16 %v5452, %v5444
    %v6853 = vpack.c.b16 %v5453, %v5445
    %v6854 = vpack.c.b16 %v5454, %v5446
    %v6855 = vpack.c.b16 %v5455, %v5447
    %v6856 = vpack.c.b16 %v5456, %v5448
    %v6857 = vpack.c.b16 %v5465, %v5457
    %v6858 = vpack.c.b16 %v5466, %v5458
    %v6859 = vpack.c.b16 %v5467, %v5459
    %v6860 = vpack.c.b16 %v5468, %v5460
    %v6861 = vpack.c.b16 %v5469, %v5461
    %v6862 = vpack.c.b16 %v5470, %v5462
    %v6863 = vpack.c.b16 %v5471, %v5463
    %v6864 = vpack.c.b16 %v5472, %v5464
    %v6865 = vpack.c.b16 %v5481, %v5473
    %v6866 = vpack.c.b16 %v5482, %v5474
    %v6867 = vpack.c.b16 %v5483, %v5475
    %v6868 = vpack.c.b16 %v5484, %v5476
    %v6869 = vpack.c.b16 %v5485, %v5477
    %v6870 = vpack.c.b16 %v5486, %v5478
    %v6871 = vpack.c.b16 %v5487, %v5479
    %v6872 = vpack.c.b16 %v5488, %v5480
    %v6873 = vpack.c.b16 %v5497, %v5489
    %v6874 = vpack.c.b16 %v5498, %v5490
    %v6875 = vpack.c.b16 %v5499, %v5491
    %v6876 = vpack.c.b16 %v5500, %v5492
    %v6877 = vpack.c.b16 %v5501, %v5493
    %v6878 = vpack.c.b16 %v5502, %v5494
    %v6879 = vpack.c.b16 %v5503, %v5495
    %v6880 = vpack.c.b16 %v5504, %v5496
    %v6881 = vpack.c.b16 %v5513, %v5505
    %v6882 = vpack.c.b16 %v5514, %v5506
    %v6883 = vpack.c.b16 %v5515, %v5507
    %v6884 = vpack.c.b16 %v5516, %v5508
    %v6885 = vpack.c.b16 %v5517, %v5509
    %v6886 = vpack.c.b16 %v5518, %v5510
    %v6887 = vpack.c.b16 %v5519, %v5511
    %v6888 = vpack.c.b16 %v5520, %v5512
    %v6889 = vpack.c.b16 %v5529, %v5521
    %v6890 = vpack.c.b16 %v5530, %v5522
    %v6891 = vpack.c.b16 %v5531, %v5523
    %v6892 = vpack.c.b16 %v5532, %v5524
    %v6893 = vpack.c.b16 %v5533, %v5525
    %v6894 = vpack.c.b16 %v5534, %v5526
    %v6895 = vpack.c.b16 %v5535, %v5527
    %v6896 = vpack.c.b16 %v5536, %v5528
    %v6897 = vpack.c.b16 %v5545, %v5537
    %v6898 = vpack.c.b16 %v5546, %v5538
    %v6899 = vpack.c.b16 %v5547, %v5539
    %v6900 = vpack.c.b16 %v5548, %v5540
    %v6901 = vpack.c.b16 %v5549, %v5541
    %v6902 = vpack.c.b16 %v5550, %v5542
    %v6903 = vpack.c.b16 %v5551, %v5543
    %v6904 = vpack.c.b16 %v5552, %v5544
    %v6905 = vpack.c.b16 %v5561, %v5553
    %v6906 = vpack.c.b16 %v5562, %v5554
    %v6907 = vpack.c.b16 %v5563, %v5555
    %v6908 = vpack.c.b16 %v5564, %v5556
    %v6909 = vpack.c.b16 %v5565, %v5557
    %v6910 = vpack.c.b16 %v5566, %v5558
    %v6911 = vpack.c.b16 %v5567, %v5559
    %v6912 = vpack.c.b16 %v5568, %v5560
    %v6913 = vpack.c.b16 %v5577, %v5569
    %v6914 = vpack.c.b16 %v5578, %v5570
    %v6915 = vpack.c.b16 %v5579, %v5571
    %v6916 = vpack.c.b16 %v5580, %v5572
    %v6917 = vpack.c.b16 %v5581, %v5573
    %v6918 = vpack.c.b16 %v5582, %v5574
    %v6919 = vpack.c.b16 %v5583, %v5575
    %v6920 = vpack.c.b16 %v5584, %v5576
    %v6921 = vpack.c.b16 %v5593, %v5585
    %v6922 = vpack.c.b16 %v5594, %v5586
    %v6923 = vpack.c.b16 %v5595, %v5587
    %v6924 = vpack.c.b16 %v5596, %v5588
    %v6925 = vpack.c.b16 %v5597, %v5589
    %v6926 = vpack.c.b16 %v5598, %v5590
    %v6927 = vpack.c.b16 %v5599, %v5591
    %v6928 = vpack.c.b16 %v5600, %v5592
    %v6929 = vpack.c.b16 %v5609, %v5601
    %v6930 = vpack.c.b16 %v5610, %v5602
    %v6931 = vpack.c.b16 %v5611, %v5603
    %v6932 = vpack.c.b16 %v5612, %v5604
    %v6933 = vpack.c.b16 %v5613, %v5605
    %v6934 = vpack.c.b16 %v5614, %v5606
    %v6935 = vpack.c.b16 %v5615, %v5607
    %v6936 = vpack.c.b16 %v5616, %v5608
    %v6937 = vpack.c.b16 %v5625, %v5617
    %v6938 = vpack.c.b16 %v5626, %v5618
    %v6939 = vpack.c.b16 %v5627, %v5619
    %v6940 = vpack.c.b16 %v5628, %v5620
    %v6941 = vpack.c.b16 %v5629, %v5621
    %v6942 = vpack.c.b16 %v5630, %v5622
    %v6943 = vpack.c.b16 %v5631, %v5623
    %v6944 = vpack.c.b16 %v5632, %v5624
    %v6945 = vpack.c.b16 %v5641, %v5633
    %v6946 = vpack.c.b16 %v5642, %v5634
    %v6947 = vpack.c.b16 %v5643, %v5635
    %v6948 = vpack.c.b16 %v5644, %v5636
    %v6949 = vpack.c.b16 %v5645, %v5637
    %v6950 = vpack.c.b16 %v5646, %v5638
    %v6951 = vpack.c.b16 %v5647, %v5639
    %v6952 = vpack.c.b16 %v5648, %v5640
    %v6953 = vpack.c.b16 %v5657, %v5649
    %v6954 = vpack.c.b16 %v5658, %v5650
    %v6955 = vpack.c.b16 %v5659, %v5651
    %v6956 = vpack.c.b16 %v5660, %v5652
    %v6957 = vpack.c.b16 %v5661, %v5653
    %v6958 = vpack.c.b16 %v5662, %v5654
    %v6959 = vpack.c.b16 %v5663, %v5655
    %v6960 = vpack.c.b16 %v5664, %v5656
    %v6961 = vpack.c.b16 %v5673, %v5665
    %v6962 = vpack.c.b16 %v5674, %v5666
    %v6963 = vpack.c.b16 %v5675, %v5667
    %v6964 = vpack.c.b16 %v5676, %v5668
    %v6965 = vpack.c.b16 %v5677, %v5669
    %v6966 = vpack.c.b16 %v5678, %v5670
    %v6967 = vpack.c.b16 %v5679, %v5671
    %v6968 = vpack.c.b16 %v5680, %v5672
    %v6969 = vpack.c.b16 %v5689, %v5681
    %v6970 = vpack.c.b16 %v5690, %v5682
    %v6971 = vpack.c.b16 %v5691, %v5683
    %v6972 = vpack.c.b16 %v5692, %v5684
    %v6973 = vpack.c.b16 %v5693, %v5685
    %v6974 = vpack.c.b16 %v5694, %v5686
    %v6975 = vpack.c.b16 %v5695, %v5687
    %v6976 = vpack.c.b16 %v5696, %v5688
    %v6977 = vpack.c.b16 %v5705, %v5697
    %v6978 = vpack.c.b16 %v5706, %v5698
    %v6979 = vpack.c.b16 %v5707, %v5699
    %v6980 = vpack.c.b16 %v5708, %v5700
    %v6981 = vpack.c.b16 %v5709, %v5701
    %v6982 = vpack.c.b16 %v5710, %v5702
    %v6983 = vpack.c.b16 %v5711, %v5703
    %v6984 = vpack.c.b16 %v5712, %v5704
    %v6985 = vpack.c.b16 %v5721, %v5713
    %v6986 = vpack.c.b16 %v5722, %v5714
    %v6987 = vpack.c.b16 %v5723, %v5715
    %v6988 = vpack.c.b16 %v5724, %v5716
    %v6989 = vpack.c.b16 %v5725, %v5717
    %v6990 = vpack.c.b16 %v5726, %v5718
    %v6991 = vpack.c.b16 %v5727, %v5719
    %v6992 = vpack.c.b16 %v5728, %v5720
    %v6993 = vpack.c.b16 %v5737, %v5729
    %v6994 = vpack.c.b16 %v5738, %v5730
    %v6995 = vpack.c.b16 %v5739, %v5731
    %v6996 = vpack.c.b16 %v5740, %v5732
    %v6997 = vpack.c.b16 %v5741, %v5733
    %v6998 = vpack.c.b16 %v5742, %v5734
    %v6999 = vpack.c.b16 %v5743, %v5735
    %v7000 = vpack.c.b16 %v5744, %v5736
    %v7001 = vpack.c.b16 %v5753, %v5745
    %v7002 = vpack.c.b16 %v5754, %v5746
    %v7003 = vpack.c.b16 %v5755, %v5747
    %v7004 = vpack.c.b16 %v5756, %v5748
    %v7005 = vpack.c.b16 %v5757, %v5749
    %v7006 = vpack.c.b16 %v5758, %v5750
    %v7007 = vpack.c.b16 %v5759, %v5751
    %v7008 = vpack.c.b16 %v5760, %v5752
    %v7009 = vpack.c.b16 %v5769, %v5761
    %v7010 = vpack.c.b16 %v5770, %v5762
    %v7011 = vpack.c.b16 %v5771, %v5763
    %v7012 = vpack.c.b16 %v5772, %v5764
    %v7013 = vpack.c.b16 %v5773, %v5765
    %v7014 = vpack.c.b16 %v5774, %v5766
    %v7015 = vpack.c.b16 %v5775, %v5767
    %v7016 = vpack.c.b16 %v5776, %v5768
    %v7017 = vpack.c.b16 %v5785, %v5777
    %v7018 = vpack.c.b16 %v5786, %v5778
    %v7019 = vpack.c.b16 %v5787, %v5779
    %v7020 = vpack.c.b16 %v5788, %v5780
    %v7021 = vpack.c.b16 %v5789, %v5781
    %v7022 = vpack.c.b16 %v5790, %v5782
    %v7023 = vpack.c.b16 %v5791, %v5783
    %v7024 = vpack.c.b16 %v5792, %v5784
    %v7025 = vpack.c.b16 %v5801, %v5793
    %v7026 = vpack.c.b16 %v5802, %v5794
    %v7027 = vpack.c.b16 %v5803, %v5795
    %v7028 = vpack.c.b16 %v5804, %v5796
    %v7029 = vpack.c.b16 %v5805, %v5797
    %v7030 = vpack.c.b16 %v5806, %v5798
    %v7031 = vpack.c.b16 %v5807, %v5799
    %v7032 = vpack.c.b16 %v5808, %v5800
    %v7033 = vpack.c.b16 %v5817, %v5809
    %v7034 = vpack.c.b16 %v5818, %v5810
    %v7035 = vpack.c.b16 %v5819, %v5811
    %v7036 = vpack.c.b16 %v5820, %v5812
    %v7037 = vpack.c.b16 %v5821, %v5813
    %v7038 = vpack.c.b16 %v5822, %v5814
    %v7039 = vpack.c.b16 %v5823, %v5815
    %v7040 = vpack.c.b16 %v5824, %v5816
    %v7041 = vpack.c.b16 %v5833, %v5825
    %v7042 = vpack.c.b16 %v5834, %v5826
    %v7043 = vpack.c.b16 %v5835, %v5827
    %v7044 = vpack.c.b16 %v5836, %v5828
    %v7045 = vpack.c.b16 %v5837, %v5829
    %v7046 = vpack.c.b16 %v5838, %v5830
    %v7047 = vpack.c.b16 %v5839, %v5831
    %v7048 = vpack.c.b16 %v5840, %v5832
    %v7049 = vpack.c.b16 %v5849, %v5841
    %v7050 = vpack.c.b16 %v5850, %v5842
    %v7051 = vpack.c.b16 %v5851, %v5843
    %v7052 = vpack.c.b16 %v5852, %v5844
    %v7053 = vpack.c.b16 %v5853, %v5845
    %v7054 = vpack.c.b16 %v5854, %v5846
    %v7055 = vpack.c.b16 %v5855, %v5847
    %v7056 = vpack.c.b16 %v5856, %v5848
    %v7057 = vpack.c.b16 %v5865, %v5857
    %v7058 = vpack.c.b16 %v5866, %v5858
    %v7059 = vpack.c.b16 %v5867, %v5859
    %v7060 = vpack.c.b16 %v5868, %v5860
    %v7061 = vpack.c.b16 %v5869, %v5861
    %v7062 = vpack.c.b16 %v5870, %v5862
    %v7063 = vpack.c.b16 %v5871, %v5863
    %v7064 = vpack.c.b16 %v5872, %v5864
    %v7065 = vpack.c.b16 %v5881, %v5873
    %v7066 = vpack.c.b16 %v5882, %v5874
    %v7067 = vpack.c.b16 %v5883, %v5875
    %v7068 = vpack.c.b16 %v5884, %v5876
    %v7069 = vpack.c.b16 %v5885, %v5877
    %v7070 = vpack.c.b16 %v5886, %v5878
    %v7071 = vpack.c.b16 %v5887, %v5879
    %v7072 = vpack.c.b16 %v5888, %v5880
    %v7073 = vpack.c.b16 %v5897, %v5889
    %v7074 = vpack.c.b16 %v5898, %v5890
    %v7075 = vpack.c.b16 %v5899, %v5891
    %v7076 = vpack.c.b16 %v5900, %v5892
    %v7077 = vpack.c.b16 %v5901, %v5893
    %v7078 = vpack.c.b16 %v5902, %v5894
    %v7079 = vpack.c.b16 %v5903, %v5895
    %v7080 = vpack.c.b16 %v5904, %v5896
    %v7081 = vpack.c.b16 %v5913, %v5905
    %v7082 = vpack.c.b16 %v5914, %v5906
    %v7083 = vpack.c.b16 %v5915, %v5907
    %v7084 = vpack.c.b16 %v5916, %v5908
    %v7085 = vpack.c.b16 %v5917, %v5909
    %v7086 = vpack.c.b16 %v5918, %v5910
    %v7087 = vpack.c.b16 %v5919, %v5911
    %v7088 = vpack.c.b16 %v5920, %v5912
    %v7089 = vpack.c.b16 %v5929, %v5921
    %v7090 = vpack.c.b16 %v5930, %v5922
    %v7091 = vpack.c.b16 %v5931, %v5923
    %v7092 = vpack.c.b16 %v5932, %v5924
    %v7093 = vpack.c.b16 %v5933, %v5925
    %v7094 = vpack.c.b16 %v5934, %v5926
    %v7095 = vpack.c.b16 %v5935, %v5927
    %v7096 = vpack.c.b16 %v5936, %v5928
    %v7097 = vpack.c.b16 %v5945, %v5937
    %v7098 = vpack.c.b16 %v5946, %v5938
    %v7099 = vpack.c.b16 %v5947, %v5939
    %v7100 = vpack.c.b16 %v5948, %v5940
    %v7101 = vpack.c.b16 %v5949, %v5941
    %v7102 = vpack.c.b16 %v5950, %v5942
    %v7103 = vpack.c.b16 %v5951, %v5943
    %v7104 = vpack.c.b16 %v5952, %v5944
    %v7105 = vpack.c.b16 %v5961, %v5953
    %v7106 = vpack.c.b16 %v5962, %v5954
    %v7107 = vpack.c.b16 %v5963, %v5955
    %v7108 = vpack.c.b16 %v5964, %v5956
    %v7109 = vpack.c.b16 %v5965, %v5957
    %v7110 = vpack.c.b16 %v5966, %v5958
    %v7111 = vpack.c.b16 %v5967, %v5959
    %v7112 = vpack.c.b16 %v5968, %v5960
    %v7113 = vpack.c.b16 %v5977, %v5969
    %v7114 = vpack.c.b16 %v5978, %v5970
    %v7115 = vpack.c.b16 %v5979, %v5971
    %v7116 = vpack.c.b16 %v5980, %v5972
    %v7117 = vpack.c.b16 %v5981, %v5973
    %v7118 = vpack.c.b16 %v5982, %v5974
    %v7119 = vpack.c.b16 %v5983, %v5975
    %v7120 = vpack.c.b16 %v5984, %v5976
    %v7121 = vpack.c.b16 %v5993, %v5985
    %v7122 = vpack.c.b16 %v5994, %v5986
    %v7123 = vpack.c.b16 %v5995, %v5987
    %v7124 = vpack.c.b16 %v5996, %v5988
    %v7125 = vpack.c.b16 %v5997, %v5989
    %v7126 = vpack.c.b16 %v5998, %v5990
    %v7127 = vpack.c.b16 %v5999, %v5991
    %v7128 = vpack.c.b16 %v6000, %v5992
    %v7129 = vpack.c.b16 %v6009, %v6001
    %v7130 = vpack.c.b16 %v6010, %v6002
    %v7131 = vpack.c.b16 %v6011, %v6003
    %v7132 = vpack.c.b16 %v6012, %v6004
    %v7133 = vpack.c.b16 %v6013, %v6005
    %v7134 = vpack.c.b16 %v6014, %v6006
    %v7135 = vpack.c.b16 %v6015, %v6007
    %v7136 = vpack.c.b16 %v6016, %v6008
    %v7137 = vpack.c.b16 %v6025, %v6017
    %v7138 = vpack.c.b16 %v6026, %v6018
    %v7139 = vpack.c.b16 %v6027, %v6019
    %v7140 = vpack.c.b16 %v6028, %v6020
    %v7141 = vpack.c.b16 %v6029, %v6021
    %v7142 = vpack.c.b16 %v6030, %v6022
    %v7143 = vpack.c.b16 %v6031, %v6023
    %v7144 = vpack.c.b16 %v6032, %v6024
    %v7145 = vpack.c.b16 %v6041, %v6033
    %v7146 = vpack.c.b16 %v6042, %v6034
    %v7147 = vpack.c.b16 %v6043, %v6035
    %v7148 = vpack.c.b16 %v6044, %v6036
    %v7149 = vpack.c.b16 %v6045, %v6037
    %v7150 = vpack.c.b16 %v6046, %v6038
    %v7151 = vpack.c.b16 %v6047, %v6039
    %v7152 = vpack.c.b16 %v6048, %v6040
    %v7153 = vpack.c.b16 %v6057, %v6049
    %v7154 = vpack.c.b16 %v6058, %v6050
    %v7155 = vpack.c.b16 %v6059, %v6051
    %v7156 = vpack.c.b16 %v6060, %v6052
    %v7157 = vpack.c.b16 %v6061, %v6053
    %v7158 = vpack.c.b16 %v6062, %v6054
    %v7159 = vpack.c.b16 %v6063, %v6055
    %v7160 = vpack.c.b16 %v6064, %v6056
    %v7161 = vpack.c.b16 %v6073, %v6065
    %v7162 = vpack.c.b16 %v6074, %v6066
    %v7163 = vpack.c.b16 %v6075, %v6067
    %v7164 = vpack.c.b16 %v6076, %v6068
    %v7165 = vpack.c.b16 %v6077, %v6069
    %v7166 = vpack.c.b16 %v6078, %v6070
    %v7167 = vpack.c.b16 %v6079, %v6071
    %v7168 = vpack.c.b16 %v6080, %v6072
    %v7169 = vpack.c.b16 %v6089, %v6081
    %v7170 = vpack.c.b16 %v6090, %v6082
    %v7171 = vpack.c.b16 %v6091, %v6083
    %v7172 = vpack.c.b16 %v6092, %v6084
    %v7173 = vpack.c.b16 %v6093, %v6085
    %v7174 = vpack.c.b16 %v6094, %v6086
    %v7175 = vpack.c.b16 %v6095, %v6087
    %v7176 = vpack.c.b16 %v6096, %v6088
    %v7177 = vpack.c.b16 %v6105, %v6097
    %v7178 = vpack.c.b16 %v6106, %v6098
    %v7179 = vpack.c.b16 %v6107, %v6099
    %v7180 = vpack.c.b16 %v6108, %v6100
    %v7181 = vpack.c.b16 %v6109, %v6101
    %v7182 = vpack.c.b16 %v6110, %v6102
    %v7183 = vpack.c.b16 %v6111, %v6103
    %v7184 = vpack.c.b16 %v6112, %v6104
    %v7185 = vpack.c.b16 %v6121, %v6113
    %v7186 = vpack.c.b16 %v6122, %v6114
    %v7187 = vpack.c.b16 %v6123, %v6115
    %v7188 = vpack.c.b16 %v6124, %v6116
    %v7189 = vpack.c.b16 %v6125, %v6117
    %v7190 = vpack.c.b16 %v6126, %v6118
    %v7191 = vpack.c.b16 %v6127, %v6119
    %v7192 = vpack.c.b16 %v6128, %v6120
    %v7193 = vpack.c.b16 %v6137, %v6129
    %v7194 = vpack.c.b16 %v6138, %v6130
    %v7195 = vpack.c.b16 %v6139, %v6131
    %v7196 = vpack.c.b16 %v6140, %v6132
    %v7197 = vpack.c.b16 %v6141, %v6133
    %v7198 = vpack.c.b16 %v6142, %v6134
    %v7199 = vpack.c.b16 %v6143, %v6135
    %v7200 = vpack.c.b16 %v6144, %v6136
    %v7201 = vpack.c.b16 %v6153, %v6145
    %v7202 = vpack.c.b16 %v6154, %v6146
    %v7203 = vpack.c.b16 %v6155, %v6147
    %v7204 = vpack.c.b16 %v6156, %v6148
    %v7205 = vpack.c.b16 %v6157, %v6149
    %v7206 = vpack.c.b16 %v6158, %v6150
    %v7207 = vpack.c.b16 %v6159, %v6151
    %v7208 = vpack.c.b16 %v6160, %v6152
    %v7209 = vpack.c.b16 %v6169, %v6161
    %v7210 = vpack.c.b16 %v6170, %v6162
    %v7211 = vpack.c.b16 %v6171, %v6163
    %v7212 = vpack.c.b16 %v6172, %v6164
    %v7213 = vpack.c.b16 %v6173, %v6165
    %v7214 = vpack.c.b16 %v6174, %v6166
    %v7215 = vpack.c.b16 %v6175, %v6167
    %v7216 = vpack.c.b16 %v6176, %v6168
    %v7217 = vpack.c.b16 %v6185, %v6177
    %v7218 = vpack.c.b16 %v6186, %v6178
    %v7219 = vpack.c.b16 %v6187, %v6179
    %v7220 = vpack.c.b16 %v6188, %v6180
    %v7221 = vpack.c.b16 %v6189, %v6181
    %v7222 = vpack.c.b16 %v6190, %v6182
    %v7223 = vpack.c.b16 %v6191, %v6183
    %v7224 = vpack.c.b16 %v6192, %v6184
    %v7225 = vpack.c.b16 %v6201, %v6193
    %v7226 = vpack.c.b16 %v6202, %v6194
    %v7227 = vpack.c.b16 %v6203, %v6195
    %v7228 = vpack.c.b16 %v6204, %v6196
    %v7229 = vpack.c.b16 %v6205, %v6197
    %v7230 = vpack.c.b16 %v6206, %v6198
    %v7231 = vpack.c.b16 %v6207, %v6199
    %v7232 = vpack.c.b16 %v6208, %v6200
    %v7233 = vpack.c.b16 %v6217, %v6209
    %v7234 = vpack.c.b16 %v6218, %v6210
    %v7235 = vpack.c.b16 %v6219, %v6211
    %v7236 = vpack.c.b16 %v6220, %v6212
    %v7237 = vpack.c.b16 %v6221, %v6213
    %v7238 = vpack.c.b16 %v6222, %v6214
    %v7239 = vpack.c.b16 %v6223, %v6215
    %v7240 = vpack.c.b16 %v6224, %v6216
    %v7241 = vpack.c.b16 %v6233, %v6225
    %v7242 = vpack.c.b16 %v6234, %v6226
    %v7243 = vpack.c.b16 %v6235, %v6227
    %v7244 = vpack.c.b16 %v6236, %v6228
    %v7245 = vpack.c.b16 %v6237, %v6229
    %v7246 = vpack.c.b16 %v6238, %v6230
    %v7247 = vpack.c.b16 %v6239, %v6231
    %v7248 = vpack.c.b16 %v6240, %v6232
    %v7249 = vpack.c.b16 %v6249, %v6241
    %v7250 = vpack.c.b16 %v6250, %v6242
    %v7251 = vpack.c.b16 %v6251, %v6243
    %v7252 = vpack.c.b16 %v6252, %v6244
    %v7253 = vpack.c.b16 %v6253, %v6245
    %v7254 = vpack.c.b16 %v6254, %v6246
    %v7255 = vpack.c.b16 %v6255, %v6247
    %v7256 = vpack.c.b16 %v6256, %v6248
    %v7257 = vpack.c.b16 %v6265, %v6257
    %v7258 = vpack.c.b16 %v6266, %v6258
    %v7259 = vpack.c.b16 %v6267, %v6259
    %v7260 = vpack.c.b16 %v6268, %v6260
    %v7261 = vpack.c.b16 %v6269, %v6261
    %v7262 = vpack.c.b16 %v6270, %v6262
    %v7263 = vpack.c.b16 %v6271, %v6263
    %v7264 = vpack.c.b16 %v6272, %v6264
    %v7265 = vpack.c.b16 %v6281, %v6273
    %v7266 = vpack.c.b16 %v6282, %v6274
    %v7267 = vpack.c.b16 %v6283, %v6275
    %v7268 = vpack.c.b16 %v6284, %v6276
    %v7269 = vpack.c.b16 %v6285, %v6277
    %v7270 = vpack.c.b16 %v6286, %v6278
    %v7271 = vpack.c.b16 %v6287, %v6279
    %v7272 = vpack.c.b16 %v6288, %v6280
    %v7273 = vpack.c.b16 %v6297, %v6289
    %v7274 = vpack.c.b16 %v6298, %v6290
    %v7275 = vpack.c.b16 %v6299, %v6291
    %v7276 = vpack.c.b16 %v6300, %v6292
    %v7277 = vpack.c.b16 %v6301, %v6293
    %v7278 = vpack.c.b16 %v6302, %v6294
    %v7279 = vpack.c.b16 %v6303, %v6295
    %v7280 = vpack.c.b16 %v6304, %v6296
    %v7281 = vpack.c.b16 %v6313, %v6305
    %v7282 = vpack.c.b16 %v6314, %v6306
    %v7283 = vpack.c.b16 %v6315, %v6307
    %v7284 = vpack.c.b16 %v6316, %v6308
    %v7285 = vpack.c.b16 %v6317, %v6309
    %v7286 = vpack.c.b16 %v6318, %v6310
    %v7287 = vpack.c.b16 %v6319, %v6311
    %v7288 = vpack.c.b16 %v6320, %v6312
    %v7289 = vpack.c.b16 %v6329, %v6321
    %v7290 = vpack.c.b16 %v6330, %v6322
    %v7291 = vpack.c.b16 %v6331, %v6323
    %v7292 = vpack.c.b16 %v6332, %v6324
    %v7293 = vpack.c.b16 %v6333, %v6325
    %v7294 = vpack.c.b16 %v6334, %v6326
    %v7295 = vpack.c.b16 %v6335, %v6327
    %v7296 = vpack.c.b16 %v6336, %v6328
    %v7297 = vpack.c.b16 %v6345, %v6337
    %v7298 = vpack.c.b16 %v6346, %v6338
    %v7299 = vpack.c.b16 %v6347, %v6339
    %v7300 = vpack.c.b16 %v6348, %v6340
    %v7301 = vpack.c.b16 %v6349, %v6341
    %v7302 = vpack.c.b16 %v6350, %v6342
    %v7303 = vpack.c.b16 %v6351, %v6343
    %v7304 = vpack.c.b16 %v6352, %v6344
    %v7305 = vpack.c.b16 %v6361, %v6353
    %v7306 = vpack.c.b16 %v6362, %v6354
    %v7307 = vpack.c.b16 %v6363, %v6355
    %v7308 = vpack.c.b16 %v6364, %v6356
    %v7309 = vpack.c.b16 %v6365, %v6357
    %v7310 = vpack.c.b16 %v6366, %v6358
    %v7311 = vpack.c.b16 %v6367, %v6359
    %v7312 = vpack.c.b16 %v6368, %v6360
    %v7313 = vpack.c.b16 %v6377, %v6369
    %v7314 = vpack.c.b16 %v6378, %v6370
    %v7315 = vpack.c.b16 %v6379, %v6371
    %v7316 = vpack.c.b16 %v6380, %v6372
    %v7317 = vpack.c.b16 %v6381, %v6373
    %v7318 = vpack.c.b16 %v6382, %v6374
    %v7319 = vpack.c.b16 %v6383, %v6375
    %v7320 = vpack.c.b16 %v6384, %v6376
    %v7321 = vpack.c.b16 %v6393, %v6385
    %v7322 = vpack.c.b16 %v6394, %v6386
    %v7323 = vpack.c.b16 %v6395, %v6387
    %v7324 = vpack.c.b16 %v6396, %v6388
    %v7325 = vpack.c.b16 %v6397, %v6389
    %v7326 = vpack.c.b16 %v6398, %v6390
    %v7327 = vpack.c.b16 %v6399, %v6391
    %v7328 = vpack.c.b16 %v6400, %v6392
    %v7329 = vpack.c.b16 %v6409, %v6401
    %v7330 = vpack.c.b16 %v6410, %v6402
    %v7331 = vpack.c.b16 %v6411, %v6403
    %v7332 = vpack.c.b16 %v6412, %v6404
    %v7333 = vpack.c.b16 %v6413, %v6405
    %v7334 = vpack.c.b16 %v6414, %v6406
    %v7335 = vpack.c.b16 %v6415, %v6407
    %v7336 = vpack.c.b16 %v6416, %v6408
    %v7337 = vpack.c.b16 %v6425, %v6417
    %v7338 = vpack.c.b16 %v6426, %v6418
    %v7339 = vpack.c.b16 %v6427, %v6419
    %v7340 = vpack.c.b16 %v6428, %v6420
    %v7341 = vpack.c.b16 %v6429, %v6421
    %v7342 = vpack.c.b16 %v6430, %v6422
    %v7343 = vpack.c.b16 %v6431, %v6423
    %v7344 = vpack.c.b16 %v6432, %v6424
    %v7345 = vpack.c.b16 %v6441, %v6433
    %v7346 = vpack.c.b16 %v6442, %v6434
    %v7347 = vpack.c.b16 %v6443, %v6435
    %v7348 = vpack.c.b16 %v6444, %v6436
    %v7349 = vpack.c.b16 %v6445, %v6437
    %v7350 = vpack.c.b16 %v6446, %v6438
    %v7351 = vpack.c.b16 %v6447, %v6439
    %v7352 = vpack.c.b16 %v6448, %v6440
    %v7353 = vpack.c.b16 %v6457, %v6449
    %v7354 = vpack.c.b16 %v6458, %v6450
    %v7355 = vpack.c.b16 %v6459, %v6451
    %v7356 = vpack.c.b16 %v6460, %v6452
    %v7357 = vpack.c.b16 %v6461, %v6453
    %v7358 = vpack.c.b16 %v6462, %v6454
    %v7359 = vpack.c.b16 %v6463, %v6455
    %v7360 = vpack.c.b16 %v6464, %v6456
    %v7361 = vpack.c.b16 %v6473, %v6465
    %v7362 = vpack.c.b16 %v6474, %v6466
    %v7363 = vpack.c.b16 %v6475, %v6467
    %v7364 = vpack.c.b16 %v6476, %v6468
    %v7365 = vpack.c.b16 %v6477, %v6469
    %v7366 = vpack.c.b16 %v6478, %v6470
    %v7367 = vpack.c.b16 %v6479, %v6471
    %v7368 = vpack.c.b16 %v6480, %v6472
    %v7369 = vpack.c.b16 %v6489, %v6481
    %v7370 = vpack.c.b16 %v6490, %v6482
    %v7371 = vpack.c.b16 %v6491, %v6483
    %v7372 = vpack.c.b16 %v6492, %v6484
    %v7373 = vpack.c.b16 %v6493, %v6485
    %v7374 = vpack.c.b16 %v6494, %v6486
    %v7375 = vpack.c.b16 %v6495, %v6487
    %v7376 = vpack.c.b16 %v6496, %v6488
    %v7377 = vpack.c.b16 %v6505, %v6497
    %v7378 = vpack.c.b16 %v6506, %v6498
    %v7379 = vpack.c.b16 %v6507, %v6499
    %v7380 = vpack.c.b16 %v6508, %v6500
    %v7381 = vpack.c.b16 %v6509, %v6501
    %v7382 = vpack.c.b16 %v6510, %v6502
    %v7383 = vpack.c.b16 %v6511, %v6503
    %v7384 = vpack.c.b16 %v6512, %v6504
    %v7385 = vpack.c.b16 %v6521, %v6513
    %v7386 = vpack.c.b16 %v6522, %v6514
    %v7387 = vpack.c.b16 %v6523, %v6515
    %v7388 = vpack.c.b16 %v6524, %v6516
    %v7389 = vpack.c.b16 %v6525, %v6517
    %v7390 = vpack.c.b16 %v6526, %v6518
    %v7391 = vpack.c.b16 %v6527, %v6519
    %v7392 = vpack.c.b16 %v6528, %v6520
    %v7393 = vpack.c.b16 %v6537, %v6529
    %v7394 = vpack.c.b16 %v6538, %v6530
    %v7395 = vpack.c.b16 %v6539, %v6531
    %v7396 = vpack.c.b16 %v6540, %v6532
    %v7397 = vpack.c.b16 %v6541, %v6533
    %v7398 = vpack.c.b16 %v6542, %v6534
    %v7399 = vpack.c.b16 %v6543, %v6535
    %v7400 = vpack.c.b16 %v6544, %v6536
    %v7401 = vpack.c.b16 %v6553, %v6545
    %v7402 = vpack.c.b16 %v6554, %v6546
    %v7403 = vpack.c.b16 %v6555, %v6547
    %v7404 = vpack.c.b16 %v6556, %v6548
    %v7405 = vpack.c.b16 %v6557, %v6549
    %v7406 = vpack.c.b16 %v6558, %v6550
    %v7407 = vpack.c.b16 %v6559, %v6551
    %v7408 = vpack.c.b16 %v6560, %v6552
    %v7409 = vpack.c.b16 %v6569, %v6561
    %v7410 = vpack.c.b16 %v6570, %v6562
    %v7411 = vpack.c.b16 %v6571, %v6563
    %v7412 = vpack.c.b16 %v6572, %v6564
    %v7413 = vpack.c.b16 %v6573, %v6565
    %v7414 = vpack.c.b16 %v6574, %v6566
    %v7415 = vpack.c.b16 %v6575, %v6567
    %v7416 = vpack.c.b16 %v6576, %v6568
    %v7417 = vpack.c.b16 %v6585, %v6577
    %v7418 = vpack.c.b16 %v6586, %v6578
    %v7419 = vpack.c.b16 %v6587, %v6579
    %v7420 = vpack.c.b16 %v6588, %v6580
    %v7421 = vpack.c.b16 %v6589, %v6581
    %v7422 = vpack.c.b16 %v6590, %v6582
    %v7423 = vpack.c.b16 %v6591, %v6583
    %v7424 = vpack.c.b16 %v6592, %v6584
    %v7425 = vpack.c.b16 %v6601, %v6593
    %v7426 = vpack.c.b16 %v6602, %v6594
    %v7427 = vpack.c.b16 %v6603, %v6595
    %v7428 = vpack.c.b16 %v6604, %v6596
    %v7429 = vpack.c.b16 %v6605, %v6597
    %v7430 = vpack.c.b16 %v6606, %v6598
    %v7431 = vpack.c.b16 %v6607, %v6599
    %v7432 = vpack.c.b16 %v6608, %v6600
    %v7433 = vpack.c.b16 %v6617, %v6609
    %v7434 = vpack.c.b16 %v6618, %v6610
    %v7435 = vpack.c.b16 %v6619, %v6611
    %v7436 = vpack.c.b16 %v6620, %v6612
    %v7437 = vpack.c.b16 %v6621, %v6613
    %v7438 = vpack.c.b16 %v6622, %v6614
    %v7439 = vpack.c.b16 %v6623, %v6615
    %v7440 = vpack.c.b16 %v6624, %v6616
    %v7441 = vpack.c.b16 %v6633, %v6625
    %v7442 = vpack.c.b16 %v6634, %v6626
    %v7443 = vpack.c.b16 %v6635, %v6627
    %v7444 = vpack.c.b16 %v6636, %v6628
    %v7445 = vpack.c.b16 %v6637, %v6629
    %v7446 = vpack.c.b16 %v6638, %v6630
    %v7447 = vpack.c.b16 %v6639, %v6631
    %v7448 = vpack.c.b16 %v6640, %v6632
    %v7449 = vpack.c.b16 %v6649, %v6641
    %v7450 = vpack.c.b16 %v6650, %v6642
    %v7451 = vpack.c.b16 %v6651, %v6643
    %v7452 = vpack.c.b16 %v6652, %v6644
    %v7453 = vpack.c.b16 %v6653, %v6645
    %v7454 = vpack.c.b16 %v6654, %v6646
    %v7455 = vpack.c.b16 %v6655, %v6647
    %v7456 = vpack.c.b16 %v6656, %v6648
    %v7457 = vpack.c.b16 %v6665, %v6657
    %v7458 = vpack.c.b16 %v6666, %v6658
    %v7459 = vpack.c.b16 %v6667, %v6659
    %v7460 = vpack.c.b16 %v6668, %v6660
    %v7461 = vpack.c.b16 %v6669, %v6661
    %v7462 = vpack.c.b16 %v6670, %v6662
    %v7463 = vpack.c.b16 %v6671, %v6663
    %v7464 = vpack.c.b16 %v6672, %v6664
    %v7465 = vpack.c.b16 %v6681, %v6673
    %v7466 = vpack.c.b16 %v6682, %v6674
    %v7467 = vpack.c.b16 %v6683, %v6675
    %v7468 = vpack.c.b16 %v6684, %v6676
    %v7469 = vpack.c.b16 %v6685, %v6677
    %v7470 = vpack.c.b16 %v6686, %v6678
    %v7471 = vpack.c.b16 %v6687, %v6679
    %v7472 = vpack.c.b16 %v6688, %v6680
    %v7473 = vpack.c.b16 %v6697, %v6689
    %v7474 = vpack.c.b16 %v6698, %v6690
    %v7475 = vpack.c.b16 %v6699, %v6691
    %v7476 = vpack.c.b16 %v6700, %v6692
    %v7477 = vpack.c.b16 %v6701, %v6693
    %v7478 = vpack.c.b16 %v6702, %v6694
    %v7479 = vpack.c.b16 %v6703, %v6695
    %v7480 = vpack.c.b16 %v6704, %v6696
    %v7481 = vpack.c.b16 %v6713, %v6705
    %v7482 = vpack.c.b16 %v6714, %v6706
    %v7483 = vpack.c.b16 %v6715, %v6707
    %v7484 = vpack.c.b16 %v6716, %v6708
    %v7485 = vpack.c.b16 %v6717, %v6709
    %v7486 = vpack.c.b16 %v6718, %v6710
    %v7487 = vpack.c.b16 %v6719, %v6711
    %v7488 = vpack.c.b16 %v6720, %v6712
    %8257 = vmatprep.subr.bf16.mxu0 %v6722
    %8258 = vmatpush1.bf16.msra.mxu0 %v6721
    %8259 = vmatprep.subr.bf16.mxu0 %v6730
    %8260 = vmatpush1.bf16.msra.mxu0 %v6729
    %8261 = vmatprep.subr.bf16.mxu0 %v6738
    %8262 = vmatpush1.bf16.msra.mxu0 %v6737
    %8263 = vmatprep.subr.bf16.mxu0 %v6746
    %8264 = vmatpush1.bf16.msra.mxu0 %v6745
    %8265 = vmatprep.subr.bf16.mxu0 %v6754
    %8266 = vmatpush1.bf16.msra.mxu0 %v6753
    %8267 = vmatprep.subr.bf16.mxu0 %v6762
    %8268 = vmatpush1.bf16.msra.mxu0 %v6761
    %8269 = vmatprep.subr.bf16.mxu0 %v6770
    %8270 = vmatpush1.bf16.msra.mxu0 %v6769
    %8271 = vmatprep.subr.bf16.mxu0 %v6778
    %8272 = vmatpush1.bf16.msra.mxu0 %v6777
    %8273 = vmatprep.subr.bf16.mxu0 %v6786
    %8274 = vmatpush1.bf16.msra.mxu0 %v6785
    %8275 = vmatprep.subr.bf16.mxu0 %v6794
    %8276 = vmatpush1.bf16.msra.mxu0 %v6793
    %8277 = vmatprep.subr.bf16.mxu0 %v6802
    %8278 = vmatpush1.bf16.msra.mxu0 %v6801
    %8279 = vmatprep.subr.bf16.mxu0 %v6810
    %8280 = vmatpush1.bf16.msra.mxu0 %v6809
    %8281 = vmatprep.subr.bf16.mxu0 %v6818
    %8282 = vmatpush1.bf16.msra.mxu0 %v6817
    %8283 = vmatprep.subr.bf16.mxu0 %v6826
    %8284 = vmatpush1.bf16.msra.mxu0 %v6825
    %8285 = vmatprep.subr.bf16.mxu0 %v6834
    %8286 = vmatpush1.bf16.msra.mxu0 %v6833
    %8287 = vmatprep.subr.bf16.mxu0 %v6842
    %8288 = vmatpush1.bf16.msra.mxu0 %v6841
    %8289 = vmatprep.mubr.bf16.mxu0 0
    %8290 = vmatmul.mubr.bf16.gmra.mrb[0].mxu0 0
    %v8291 = vpop.f32.mrb[0].mxu0
    %v8292 = vadd.f32 0.0, %v8291
    %v8293 = vpop.f32.mrb[0].mxu0
    %v8294 = vadd.f32 0.0, %v8293
    %v8295 = vpop.f32.mrb[0].mxu0
    %v8296 = vadd.f32 0.0, %v8295
    %v8297 = vpop.f32.mrb[0].mxu0
    %v8298 = vadd.f32 0.0, %v8297
    %8299 = vmatprep.mubr.bf16.mxu0 %v3622
    %8300 = vmatmul.mubr.bf16.gmra.mrb[0].mxu0 %v3621
    %v8301 = vpop.f32.mrb[0].mxu0
    %v8302 = vadd.f32 0.0, %v8301
    %v8303 = vpop.f32.mrb[0].mxu0
    %v8304 = vadd.f32 0.0, %v8303
    %v8305 = vpop.f32.mrb[0].mxu0
    %v8306 = vadd.f32 0.0, %v8305
    %v8307 = vpop.f32.mrb[0].mxu0
    %v8308 = vadd.f32 0.0, %v8307
    %8309 = vmatprep.mubr.bf16.mxu0 %v3624
    %8310 = vmatmul.mubr.bf16.gmra.mrb[0].mxu0 %v3623
    %v8311 = vpop.f32.mrb[0].mxu0
    %v8312 = vadd.f32 0.0, %v8311
    %v8313 = vpop.f32.mrb[0].mxu0
    %v8314 = vadd.f32 0.0, %v8313
    %v8315 = vpop.f32.mrb[0].mxu0
    %v8316 = vadd.f32 0.0, %v8315
    %v8317 = vpop.f32.mrb[0].mxu0
    %v8318 = vadd.f32 0.0, %v8317
    %8319 = vmatprep.mubr.bf16.mxu0 %v3626
    %8320 = vmatmul.mubr.bf16.gmra.mrb[0].mxu0 %v3625
    %v8321 = vpop.f32.mrb[0].mxu0
    %v8322 = vadd.f32 0.0, %v8321
    %v8323 = vpop.f32.mrb[0].mxu0
    %v8324 = vadd.f32 0.0, %v8323
    %v8325 = vpop.f32.mrb[0].mxu0
    %v8326 = vadd.f32 0.0, %v8325
    %v8327 = vpop.f32.mrb[0].mxu0
    %v8328 = vadd.f32 0.0, %v8327
    %8329 = vmatprep.mubr.bf16.mxu0 %v3628
    %8330 = vmatmul.mubr.bf16.gmra.mrb[0].mxu0 %v3627
    %v8331 = vpop.f32.mrb[0].mxu0
    %v8332 = vadd.f32 0.0, %v8331
    %v8333 = vpop.f32.mrb[0].mxu0
    %v8334 = vadd.f32 0.0, %v8333
    %v8335 = vpop.f32.mrb[0].mxu0
    %v8336 = vadd.f32 0.0, %v8335
    %v8337 = vpop.f32.mrb[0].mxu0
    %v8338 = vadd.f32 0.0, %v8337
    %8339 = vmatprep.mubr.bf16.mxu0 %v3630
    %8340 = vmatmul.mubr.bf16.gmra.mrb[0].mxu0 %v3629
    %v8341 = vpop.f32.mrb[0].mxu0
    %v8342 = vadd.f32 0.0, %v8341
    %v8343 = vpop.f32.mrb[0].mxu0
    %v8344 = vadd.f32 0.0, %v8343
    %v8345 = vpop.f32.mrb[0].mxu0
    %v8346 = vadd.f32 0.0, %v8345
    %v8347 = vpop.f32.mrb[0].mxu0
    %v8348 = vadd.f32 0.0, %v8347
    %8349 = vmatprep.mubr.bf16.mxu0 %v3632
    %8350 = vmatmul.mubr.bf16.gmra.mrb[0].mxu0 %v3631
    %v8351 = vpop.f32.mrb[0].mxu0
    %v8352 = vadd.f32 0.0, %v8351
    %v8353 = vpop.f32.mrb[0].mxu0
    %v8354 = vadd.f32 0.0, %v8353
    %v8355 = vpop.f32.mrb[0].mxu0
    %v8356 = vadd.f32 0.0, %v8355
    %v8357 = vpop.f32.mrb[0].mxu0
    %v8358 = vadd.f32 0.0, %v8357
    %8359 = vdwg.mxu0
    %8360 = vmatprep.subr.bf16.mxu0 %v6850
    %8361 = vmatpush1.bf16.msra.mxu0 %v6849
    %8362 = vmatprep.subr.bf16.mxu0 %v6858
    %8363 = vmatpush1.bf16.msra.mxu0 %v6857
    %8364 = vmatprep.subr.bf16.mxu0 %v6866
    %8365 = vmatpush1.bf16.msra.mxu0 %v6865
    %8366 = vmatprep.subr.bf16.mxu0 %v6874
    %8367 = vmatpush1.bf16.msra.mxu0 %v6873
    %8368 = vmatprep.subr.bf16.mxu0 %v6882
    %8369 = vmatpush1.bf16.msra.mxu0 %v6881
    %8370 = vmatprep.subr.bf16.mxu0 %v6890
    %8371 = vmatpush1.bf16.msra.mxu0 %v6889
    %8372 = vmatprep.subr.bf16.mxu0 %v6898
    %8373 = vmatpush1.bf16.msra.mxu0 %v6897
    %8374 = vmatprep.subr.bf16.mxu0 %v6906
    %8375 = vmatpush1.bf16.msra.mxu0 %v6905
    %8376 = vmatprep.subr.bf16.mxu0 %v6914
    %8377 = vmatpush1.bf16.msra.mxu0 %v6913
    %8378 = vmatprep.subr.bf16.mxu0 %v6922
    %8379 = vmatpush1.bf16.msra.mxu0 %v6921
    %8380 = vmatprep.subr.bf16.mxu0 %v6930
    %8381 = vmatpush1.bf16.msra.mxu0 %v6929
    %8382 = vmatprep.subr.bf16.mxu0 %v6938
    %8383 = vmatpush1.bf16.msra.mxu0 %v6937
    %8384 = vmatprep.subr.bf16.mxu0 %v6946
    %8385 = vmatpush1.bf16.msra.mxu0 %v6945
    %8386 = vmatprep.subr.bf16.mxu0 %v6954
    %8387 = vmatpush1.bf16.msra.mxu0 %v6953
    %8388 = vmatprep.subr.bf16.mxu0 %v6962
    %8389 = vmatpush1.bf16.msra.mxu0 %v6961
    %8390 = vmatprep.subr.bf16.mxu0 %v6970
    %8391 = vmatpush1.bf16.msra.mxu0 %v6969
    %8392 = vmatprep.mubr.bf16.mxu0 0
    %8393 = vmatmul.mubr.bf16.gmra.mrb[0].mxu0 0
    %v8394 = vpop.f32.mrb[0].mxu0
    %v8395 = vadd.f32 %v8292, %v8394
    %v8396 = vpop.f32.mrb[0].mxu0
    %v8397 = vadd.f32 %v8294, %v8396
    %v8398 = vpop.f32.mrb[0].mxu0
    %v8399 = vadd.f32 %v8296, %v8398
    %v8400 = vpop.f32.mrb[0].mxu0
    %v8401 = vadd.f32 %v8298, %v8400
    %8402 = vmatprep.mubr.bf16.mxu0 %v3636
    %8403 = vmatmul.mubr.bf16.gmra.mrb[0].mxu0 %v3635
    %v8404 = vpop.f32.mrb[0].mxu0
    %v8405 = vadd.f32 %v8302, %v8404
    %v8406 = vpop.f32.mrb[0].mxu0
    %v8407 = vadd.f32 %v8304, %v8406
    %v8408 = vpop.f32.mrb[0].mxu0
    %v8409 = vadd.f32 %v8306, %v8408
    %v8410 = vpop.f32.mrb[0].mxu0
    %v8411 = vadd.f32 %v8308, %v8410
    %8412 = vmatprep.mubr.bf16.mxu0 %v3638
    %8413 = vmatmul.mubr.bf16.gmra.mrb[0].mxu0 %v3637
    %v8414 = vpop.f32.mrb[0].mxu0
    %v8415 = vadd.f32 %v8312, %v8414
    %v8416 = vpop.f32.mrb[0].mxu0
    %v8417 = vadd.f32 %v8314, %v8416
    %v8418 = vpop.f32.mrb[0].mxu0
    %v8419 = vadd.f32 %v8316, %v8418
    %v8420 = vpop.f32.mrb[0].mxu0
    %v8421 = vadd.f32 %v8318, %v8420
    %8422 = vmatprep.mubr.bf16.mxu0 %v3640
    %8423 = vmatmul.mubr.bf16.gmra.mrb[0].mxu0 %v3639
    %v8424 = vpop.f32.mrb[0].mxu0
    %v8425 = vadd.f32 %v8322, %v8424
    %v8426 = vpop.f32.mrb[0].mxu0
    %v8427 = vadd.f32 %v8324, %v8426
    %v8428 = vpop.f32.mrb[0].mxu0
    %v8429 = vadd.f32 %v8326, %v8428
    %v8430 = vpop.f32.mrb[0].mxu0
    %v8431 = vadd.f32 %v8328, %v8430
    %8432 = vmatprep.mubr.bf16.mxu0 %v3642
    %8433 = vmatmul.mubr.bf16.gmra.mrb[0].mxu0 %v3641
    %v8434 = vpop.f32.mrb[0].mxu0
    %v8435 = vadd.f32 %v8332, %v8434
    %v8436 = vpop.f32.mrb[0].mxu0
    %v8437 = vadd.f32 %v8334, %v8436
    %v8438 = vpop.f32.mrb[0].mxu0
    %v8439 = vadd.f32 %v8336, %v8438
    %v8440 = vpop.f32.mrb[0].mxu0
    %v8441 = vadd.f32 %v8338, %v8440
    %8442 = vmatprep.mubr.bf16.mxu0 %v3644
    %8443 = vmatmul.mubr.bf16.gmra.mrb[0].mxu0 %v3643
    %v8444 = vpop.f32.mrb[0].mxu0
    %v8445 = vadd.f32 %v8342, %v8444
    %v8446 = vpop.f32.mrb[0].mxu0
    %v8447 = vadd.f32 %v8344, %v8446
    %v8448 = vpop.f32.mrb[0].mxu0
    %v8449 = vadd.f32 %v8346, %v8448
    %v8450 = vpop.f32.mrb[0].mxu0
    %v8451 = vadd.f32 %v8348, %v8450
    %8452 = vmatprep.mubr.bf16.mxu0 %v3646
    %8453 = vmatmul.mubr.bf16.gmra.mrb[0].mxu0 %v3645
    %v8454 = vpop.f32.mrb[0].mxu0
    %v8455 = vadd.f32 %v8352, %v8454
    %v8456 = vpop.f32.mrb[0].mxu0
    %v8457 = vadd.f32 %v8354, %v8456
    %v8458 = vpop.f32.mrb[0].mxu0
    %v8459 = vadd.f32 %v8356, %v8458
    %v8460 = vpop.f32.mrb[0].mxu0
    %v8461 = vadd.f32 %v8358, %v8460
    %8462 = vdwg.mxu0
    %8463 = vmatprep.subr.bf16.mxu0 %v6978
    %8464 = vmatpush1.bf16.msra.mxu0 %v6977
    %8465 = vmatprep.subr.bf16.mxu0 %v6986
    %8466 = vmatpush1.bf16.msra.mxu0 %v6985
    %8467 = vmatprep.subr.bf16.mxu0 %v6994
    %8468 = vmatpush1.bf16.msra.mxu0 %v6993
    %8469 = vmatprep.subr.bf16.mxu0 %v7002
    %8470 = vmatpush1.bf16.msra.mxu0 %v7001
    %8471 = vmatprep.subr.bf16.mxu0 %v7010
    %8472 = vmatpush1.bf16.msra.mxu0 %v7009
    %8473 = vmatprep.subr.bf16.mxu0 %v7018
    %8474 = vmatpush1.bf16.msra.mxu0 %v7017
    %8475 = vmatprep.subr.bf16.mxu0 %v7026
    %8476 = vmatpush1.bf16.msra.mxu0 %v7025
    %8477 = vmatprep.subr.bf16.mxu0 %v7034
    %8478 = vmatpush1.bf16.msra.mxu0 %v7033
    %8479 = vmatprep.subr.bf16.mxu0 %v7042
    %8480 = vmatpush1.bf16.msra.mxu0 %v7041
    %8481 = vmatprep.subr.bf16.mxu0 %v7050
    %8482 = vmatpush1.bf16.msra.mxu0 %v7049
    %8483 = vmatprep.subr.bf16.mxu0 %v7058
    %8484 = vmatpush1.bf16.msra.mxu0 %v7057
    %8485 = vmatprep.subr.bf16.mxu0 %v7066
    %8486 = vmatpush1.bf16.msra.mxu0 %v7065
    %8487 = vmatprep.subr.bf16.mxu0 %v7074
    %8488 = vmatpush1.bf16.msra.mxu0 %v7073
    %8489 = vmatprep.subr.bf16.mxu0 %v7082
    %8490 = vmatpush1.bf16.msra.mxu0 %v7081
    %8491 = vmatprep.subr.bf16.mxu0 %v7090
    %8492 = vmatpush1.bf16.msra.mxu0 %v7089
    %8493 = vmatprep.subr.bf16.mxu0 %v7098
    %8494 = vmatpush1.bf16.msra.mxu0 %v7097
    %8495 = vmatprep.mubr.bf16.mxu0 %v3622
    %8496 = vmatmul.mubr.bf16.gmra.mrb[0].mxu0 %v3621
    %v8497 = vpop.f32.mrb[0].mxu0
    %v8498 = vadd.f32 %v8395, %v8497
    %v8499 = vpop.f32.mrb[0].mxu0
    %v8500 = vadd.f32 %v8397, %v8499
    %v8501 = vpop.f32.mrb[0].mxu0
    %v8502 = vadd.f32 %v8399, %v8501
    %v8503 = vpop.f32.mrb[0].mxu0
    %v8504 = vadd.f32 %v8401, %v8503
    %8505 = vmatprep.mubr.bf16.mxu0 %v3624
    %8506 = vmatmul.mubr.bf16.gmra.mrb[0].mxu0 %v3623
    %v8507 = vpop.f32.mrb[0].mxu0
    %v8508 = vadd.f32 %v8405, %v8507
    %v8509 = vpop.f32.mrb[0].mxu0
    %v8510 = vadd.f32 %v8407, %v8509
    %v8511 = vpop.f32.mrb[0].mxu0
    %v8512 = vadd.f32 %v8409, %v8511
    %v8513 = vpop.f32.mrb[0].mxu0
    %v8514 = vadd.f32 %v8411, %v8513
    %8515 = vmatprep.mubr.bf16.mxu0 %v3626
    %8516 = vmatmul.mubr.bf16.gmra.mrb[0].mxu0 %v3625
    %v8517 = vpop.f32.mrb[0].mxu0
    %v8518 = vadd.f32 %v8415, %v8517
    %v8519 = vpop.f32.mrb[0].mxu0
    %v8520 = vadd.f32 %v8417, %v8519
    %v8521 = vpop.f32.mrb[0].mxu0
    %v8522 = vadd.f32 %v8419, %v8521
    %v8523 = vpop.f32.mrb[0].mxu0
    %v8524 = vadd.f32 %v8421, %v8523
    %8525 = vmatprep.mubr.bf16.mxu0 %v3628
    %8526 = vmatmul.mubr.bf16.gmra.mrb[0].mxu0 %v3627
    %v8527 = vpop.f32.mrb[0].mxu0
    %v8528 = vadd.f32 %v8425, %v8527
    %v8529 = vpop.f32.mrb[0].mxu0
    %v8530 = vadd.f32 %v8427, %v8529
    %v8531 = vpop.f32.mrb[0].mxu0
    %v8532 = vadd.f32 %v8429, %v8531
    %v8533 = vpop.f32.mrb[0].mxu0
    %v8534 = vadd.f32 %v8431, %v8533
    %8535 = vmatprep.mubr.bf16.mxu0 %v3630
    %8536 = vmatmul.mubr.bf16.gmra.mrb[0].mxu0 %v3629
    %v8537 = vpop.f32.mrb[0].mxu0
    %v8538 = vadd.f32 %v8435, %v8537
    %v8539 = vpop.f32.mrb[0].mxu0
    %v8540 = vadd.f32 %v8437, %v8539
    %v8541 = vpop.f32.mrb[0].mxu0
    %v8542 = vadd.f32 %v8439, %v8541
    %v8543 = vpop.f32.mrb[0].mxu0
    %v8544 = vadd.f32 %v8441, %v8543
    %8545 = vmatprep.mubr.bf16.mxu0 %v3632
    %8546 = vmatmul.mubr.bf16.gmra.mrb[0].mxu0 %v3631
    %v8547 = vpop.f32.mrb[0].mxu0
    %v8548 = vadd.f32 %v8445, %v8547
    %v8549 = vpop.f32.mrb[0].mxu0
    %v8550 = vadd.f32 %v8447, %v8549
    %v8551 = vpop.f32.mrb[0].mxu0
    %v8552 = vadd.f32 %v8449, %v8551
    %v8553 = vpop.f32.mrb[0].mxu0
    %v8554 = vadd.f32 %v8451, %v8553
    %8555 = vmatprep.mubr.bf16.mxu0 %v3634
    %8556 = vmatmul.mubr.bf16.gmra.mrb[0].mxu0 %v3633
    %v8557 = vpop.f32.mrb[0].mxu0
    %v8558 = vadd.f32 %v8455, %v8557
    %v8559 = vpop.f32.mrb[0].mxu0
    %v8560 = vadd.f32 %v8457, %v8559
    %v8561 = vpop.f32.mrb[0].mxu0
    %v8562 = vadd.f32 %v8459, %v8561
    %v8563 = vpop.f32.mrb[0].mxu0
    %v8564 = vadd.f32 %v8461, %v8563
    %8565 = vdwg.mxu0
    %8566 = vmatprep.subr.bf16.mxu0 %v7106
    %8567 = vmatpush1.bf16.msra.mxu0 %v7105
    %8568 = vmatprep.subr.bf16.mxu0 %v7114
    %8569 = vmatpush1.bf16.msra.mxu0 %v7113
    %8570 = vmatprep.subr.bf16.mxu0 %v7122
    %8571 = vmatpush1.bf16.msra.mxu0 %v7121
    %8572 = vmatprep.subr.bf16.mxu0 %v7130
    %8573 = vmatpush1.bf16.msra.mxu0 %v7129
    %8574 = vmatprep.subr.bf16.mxu0 %v7138
    %8575 = vmatpush1.bf16.msra.mxu0 %v7137
    %8576 = vmatprep.subr.bf16.mxu0 %v7146
    %8577 = vmatpush1.bf16.msra.mxu0 %v7145
    %8578 = vmatprep.subr.bf16.mxu0 %v7154
    %8579 = vmatpush1.bf16.msra.mxu0 %v7153
    %8580 = vmatprep.subr.bf16.mxu0 %v7162
    %8581 = vmatpush1.bf16.msra.mxu0 %v7161
    %8582 = vmatprep.subr.bf16.mxu0 %v7170
    %8583 = vmatpush1.bf16.msra.mxu0 %v7169
    %8584 = vmatprep.subr.bf16.mxu0 %v7178
    %8585 = vmatpush1.bf16.msra.mxu0 %v7177
    %8586 = vmatprep.subr.bf16.mxu0 %v7186
    %8587 = vmatpush1.bf16.msra.mxu0 %v7185
    %8588 = vmatprep.subr.bf16.mxu0 %v7194
    %8589 = vmatpush1.bf16.msra.mxu0 %v7193
    %8590 = vmatprep.subr.bf16.mxu0 %v7202
    %8591 = vmatpush1.bf16.msra.mxu0 %v7201
    %8592 = vmatprep.subr.bf16.mxu0 %v7210
    %8593 = vmatpush1.bf16.msra.mxu0 %v7209
    %8594 = vmatprep.subr.bf16.mxu0 %v7218
    %8595 = vmatpush1.bf16.msra.mxu0 %v7217
    %8596 = vmatprep.subr.bf16.mxu0 %v7226
    %8597 = vmatpush1.bf16.msra.mxu0 %v7225
    %8598 = vmatprep.mubr.bf16.mxu0 %v3636
    %8599 = vmatmul.mubr.bf16.gmra.mrb[0].mxu0 %v3635
    %v8600 = vpop.f32.mrb[0].mxu0
    %v8601 = vadd.f32 %v8498, %v8600
    %v8602 = vpop.f32.mrb[0].mxu0
    %v8603 = vadd.f32 %v8500, %v8602
    %v8604 = vpop.f32.mrb[0].mxu0
    %v8605 = vadd.f32 %v8502, %v8604
    %v8606 = vpop.f32.mrb[0].mxu0
    %v8607 = vadd.f32 %v8504, %v8606
    %8608 = vmatprep.mubr.bf16.mxu0 %v3638
    %8609 = vmatmul.mubr.bf16.gmra.mrb[0].mxu0 %v3637
    %v8610 = vpop.f32.mrb[0].mxu0
    %v8611 = vadd.f32 %v8508, %v8610
    %v8612 = vpop.f32.mrb[0].mxu0
    %v8613 = vadd.f32 %v8510, %v8612
    %v8614 = vpop.f32.mrb[0].mxu0
    %v8615 = vadd.f32 %v8512, %v8614
    %v8616 = vpop.f32.mrb[0].mxu0
    %v8617 = vadd.f32 %v8514, %v8616
    %8618 = vmatprep.mubr.bf16.mxu0 %v3640
    %8619 = vmatmul.mubr.bf16.gmra.mrb[0].mxu0 %v3639
    %v8620 = vpop.f32.mrb[0].mxu0
    %v8621 = vadd.f32 %v8518, %v8620
    %v8622 = vpop.f32.mrb[0].mxu0
    %v8623 = vadd.f32 %v8520, %v8622
    %v8624 = vpop.f32.mrb[0].mxu0
    %v8625 = vadd.f32 %v8522, %v8624
    %v8626 = vpop.f32.mrb[0].mxu0
    %v8627 = vadd.f32 %v8524, %v8626
    %8628 = vmatprep.mubr.bf16.mxu0 %v3642
    %8629 = vmatmul.mubr.bf16.gmra.mrb[0].mxu0 %v3641
    %v8630 = vpop.f32.mrb[0].mxu0
    %v8631 = vadd.f32 %v8528, %v8630
    %v8632 = vpop.f32.mrb[0].mxu0
    %v8633 = vadd.f32 %v8530, %v8632
    %v8634 = vpop.f32.mrb[0].mxu0
    %v8635 = vadd.f32 %v8532, %v8634
    %v8636 = vpop.f32.mrb[0].mxu0
    %v8637 = vadd.f32 %v8534, %v8636
    %8638 = vmatprep.mubr.bf16.mxu0 %v3644
    %8639 = vmatmul.mubr.bf16.gmra.mrb[0].mxu0 %v3643
    %v8640 = vpop.f32.mrb[0].mxu0
    %v8641 = vadd.f32 %v8538, %v8640
    %v8642 = vpop.f32.mrb[0].mxu0
    %v8643 = vadd.f32 %v8540, %v8642
    %v8644 = vpop.f32.mrb[0].mxu0
    %v8645 = vadd.f32 %v8542, %v8644
    %v8646 = vpop.f32.mrb[0].mxu0
    %v8647 = vadd.f32 %v8544, %v8646
    %8648 = vmatprep.mubr.bf16.mxu0 %v3646
    %8649 = vmatmul.mubr.bf16.gmra.mrb[0].mxu0 %v3645
    %v8650 = vpop.f32.mrb[0].mxu0
    %v8651 = vadd.f32 %v8548, %v8650
    %v8652 = vpop.f32.mrb[0].mxu0
    %v8653 = vadd.f32 %v8550, %v8652
    %v8654 = vpop.f32.mrb[0].mxu0
    %v8655 = vadd.f32 %v8552, %v8654
    %v8656 = vpop.f32.mrb[0].mxu0
    %v8657 = vadd.f32 %v8554, %v8656
    %8658 = vmatprep.mubr.bf16.mxu0 %v3648
    %8659 = vmatmul.mubr.bf16.gmra.mrb[0].mxu0 %v3647
    %v8660 = vpop.f32.mrb[0].mxu0
    %v8661 = vadd.f32 %v8558, %v8660
    %v8662 = vpop.f32.mrb[0].mxu0
    %v8663 = vadd.f32 %v8560, %v8662
    %v8664 = vpop.f32.mrb[0].mxu0
    %v8665 = vadd.f32 %v8562, %v8664
    %v8666 = vpop.f32.mrb[0].mxu0
    %v8667 = vadd.f32 %v8564, %v8666
    %8668 = vdwg.mxu0
    %8669 = vmatprep.subr.bf16.mxu0 %v7234
    %8670 = vmatpush1.bf16.msra.mxu0 %v7233
    %8671 = vmatprep.subr.bf16.mxu0 %v7242
    %8672 = vmatpush1.bf16.msra.mxu0 %v7241
    %8673 = vmatprep.subr.bf16.mxu0 %v7250
    %8674 = vmatpush1.bf16.msra.mxu0 %v7249
    %8675 = vmatprep.subr.bf16.mxu0 %v7258
    %8676 = vmatpush1.bf16.msra.mxu0 %v7257
    %8677 = vmatprep.subr.bf16.mxu0 %v7266
    %8678 = vmatpush1.bf16.msra.mxu0 %v7265
    %8679 = vmatprep.subr.bf16.mxu0 %v7274
    %8680 = vmatpush1.bf16.msra.mxu0 %v7273
    %8681 = vmatprep.subr.bf16.mxu0 %v7282
    %8682 = vmatpush1.bf16.msra.mxu0 %v7281
    %8683 = vmatprep.subr.bf16.mxu0 %v7290
    %8684 = vmatpush1.bf16.msra.mxu0 %v7289
    %8685 = vmatprep.subr.bf16.mxu0 %v7298
    %8686 = vmatpush1.bf16.msra.mxu0 %v7297
    %8687 = vmatprep.subr.bf16.mxu0 %v7306
    %8688 = vmatpush1.bf16.msra.mxu0 %v7305
    %8689 = vmatprep.subr.bf16.mxu0 %v7314
    %8690 = vmatpush1.bf16.msra.mxu0 %v7313
    %8691 = vmatprep.subr.bf16.mxu0 %v7322
    %8692 = vmatpush1.bf16.msra.mxu0 %v7321
    %8693 = vmatprep.subr.bf16.mxu0 %v7330
    %8694 = vmatpush1.bf16.msra.mxu0 %v7329
    %8695 = vmatprep.subr.bf16.mxu0 %v7338
    %8696 = vmatpush1.bf16.msra.mxu0 %v7337
    %8697 = vmatprep.subr.bf16.mxu0 %v7346
    %8698 = vmatpush1.bf16.msra.mxu0 %v7345
    %8699 = vmatprep.subr.bf16.mxu0 %v7354
    %8700 = vmatpush1.bf16.msra.mxu0 %v7353
    %8701 = vmatprep.mubr.bf16.mxu0 %v3624
    %8702 = vmatmul.mubr.bf16.gmra.mrb[0].mxu0 %v3623
    %v8703 = vpop.f32.mrb[0].mxu0
    %v8704 = vadd.f32 %v8601, %v8703
    %v8705 = vpop.f32.mrb[0].mxu0
    %v8706 = vadd.f32 %v8603, %v8705
    %v8707 = vpop.f32.mrb[0].mxu0
    %v8708 = vadd.f32 %v8605, %v8707
    %v8709 = vpop.f32.mrb[0].mxu0
    %v8710 = vadd.f32 %v8607, %v8709
    %8711 = vmatprep.mubr.bf16.mxu0 %v3626
    %8712 = vmatmul.mubr.bf16.gmra.mrb[0].mxu0 %v3625
    %v8713 = vpop.f32.mrb[0].mxu0
    %v8714 = vadd.f32 %v8611, %v8713
    %v8715 = vpop.f32.mrb[0].mxu0
    %v8716 = vadd.f32 %v8613, %v8715
    %v8717 = vpop.f32.mrb[0].mxu0
    %v8718 = vadd.f32 %v8615, %v8717
    %v8719 = vpop.f32.mrb[0].mxu0
    %v8720 = vadd.f32 %v8617, %v8719
    %8721 = vmatprep.mubr.bf16.mxu0 %v3628
    %8722 = vmatmul.mubr.bf16.gmra.mrb[0].mxu0 %v3627
    %v8723 = vpop.f32.mrb[0].mxu0
    %v8724 = vadd.f32 %v8621, %v8723
    %v8725 = vpop.f32.mrb[0].mxu0
    %v8726 = vadd.f32 %v8623, %v8725
    %v8727 = vpop.f32.mrb[0].mxu0
    %v8728 = vadd.f32 %v8625, %v8727
    %v8729 = vpop.f32.mrb[0].mxu0
    %v8730 = vadd.f32 %v8627, %v8729
    %8731 = vmatprep.mubr.bf16.mxu0 %v3630
    %8732 = vmatmul.mubr.bf16.gmra.mrb[0].mxu0 %v3629
    %v8733 = vpop.f32.mrb[0].mxu0
    %v8734 = vadd.f32 %v8631, %v8733
    %v8735 = vpop.f32.mrb[0].mxu0
    %v8736 = vadd.f32 %v8633, %v8735
    %v8737 = vpop.f32.mrb[0].mxu0
    %v8738 = vadd.f32 %v8635, %v8737
    %v8739 = vpop.f32.mrb[0].mxu0
    %v8740 = vadd.f32 %v8637, %v8739
    %8741 = vmatprep.mubr.bf16.mxu0 %v3632
    %8742 = vmatmul.mubr.bf16.gmra.mrb[0].mxu0 %v3631
    %v8743 = vpop.f32.mrb[0].mxu0
    %v8744 = vadd.f32 %v8641, %v8743
    %v8745 = vpop.f32.mrb[0].mxu0
    %v8746 = vadd.f32 %v8643, %v8745
    %v8747 = vpop.f32.mrb[0].mxu0
    %v8748 = vadd.f32 %v8645, %v8747
    %v8749 = vpop.f32.mrb[0].mxu0
    %v8750 = vadd.f32 %v8647, %v8749
    %8751 = vmatprep.mubr.bf16.mxu0 %v3634
    %8752 = vmatmul.mubr.bf16.gmra.mrb[0].mxu0 %v3633
    %v8753 = vpop.f32.mrb[0].mxu0
    %v8754 = vadd.f32 %v8651, %v8753
    %v8755 = vpop.f32.mrb[0].mxu0
    %v8756 = vadd.f32 %v8653, %v8755
    %v8757 = vpop.f32.mrb[0].mxu0
    %v8758 = vadd.f32 %v8655, %v8757
    %v8759 = vpop.f32.mrb[0].mxu0
    %v8760 = vadd.f32 %v8657, %v8759
    %8761 = vmatprep.mubr.bf16.mxu0 0
    %8762 = vmatmul.mubr.bf16.gmra.mrb[0].mxu0 0
    %v8763 = vpop.f32.mrb[0].mxu0
    %v8764 = vadd.f32 %v8661, %v8763
    %v8765 = vpop.f32.mrb[0].mxu0
    %v8766 = vadd.f32 %v8663, %v8765
    %v8767 = vpop.f32.mrb[0].mxu0
    %v8768 = vadd.f32 %v8665, %v8767
    %v8769 = vpop.f32.mrb[0].mxu0
    %v8770 = vadd.f32 %v8667, %v8769
    %8771 = vdwg.mxu0
    %8772 = vmatprep.subr.bf16.mxu0 %v7362
    %8773 = vmatpush1.bf16.msra.mxu0 %v7361
    %8774 = vmatprep.subr.bf16.mxu0 %v7370
    %8775 = vmatpush1.bf16.msra.mxu0 %v7369
    %8776 = vmatprep.subr.bf16.mxu0 %v7378
    %8777 = vmatpush1.bf16.msra.mxu0 %v7377
    %8778 = vmatprep.subr.bf16.mxu0 %v7386
    %8779 = vmatpush1.bf16.msra.mxu0 %v7385
    %8780 = vmatprep.subr.bf16.mxu0 %v7394
    %8781 = vmatpush1.bf16.msra.mxu0 %v7393
    %8782 = vmatprep.subr.bf16.mxu0 %v7402
    %8783 = vmatpush1.bf16.msra.mxu0 %v7401
    %8784 = vmatprep.subr.bf16.mxu0 %v7410
    %8785 = vmatpush1.bf16.msra.mxu0 %v7409
    %8786 = vmatprep.subr.bf16.mxu0 %v7418
    %8787 = vmatpush1.bf16.msra.mxu0 %v7417
    %8788 = vmatprep.subr.bf16.mxu0 %v7426
    %8789 = vmatpush1.bf16.msra.mxu0 %v7425
    %8790 = vmatprep.subr.bf16.mxu0 %v7434
    %8791 = vmatpush1.bf16.msra.mxu0 %v7433
    %8792 = vmatprep.subr.bf16.mxu0 %v7442
    %8793 = vmatpush1.bf16.msra.mxu0 %v7441
    %8794 = vmatprep.subr.bf16.mxu0 %v7450
    %8795 = vmatpush1.bf16.msra.mxu0 %v7449
    %8796 = vmatprep.subr.bf16.mxu0 %v7458
    %8797 = vmatpush1.bf16.msra.mxu0 %v7457
    %8798 = vmatprep.subr.bf16.mxu0 %v7466
    %8799 = vmatpush1.bf16.msra.mxu0 %v7465
    %8800 = vmatprep.subr.bf16.mxu0 %v7474
    %8801 = vmatpush1.bf16.msra.mxu0 %v7473
    %8802 = vmatprep.subr.bf16.mxu0 %v7482
    %8803 = vmatpush1.bf16.msra.mxu0 %v7481
    %8804 = vmatprep.mubr.bf16.mxu0 %v3638
    %8805 = vmatmul.mubr.bf16.gmra.mrb[0].mxu0 %v3637
    %v8806 = vpop.f32.mrb[0].mxu0
    %v8807 = vadd.f32 %v8704, %v8806
    %v8808 = vpop.f32.mrb[0].mxu0
    %v8809 = vadd.f32 %v8706, %v8808
    %v8810 = vpop.f32.mrb[0].mxu0
    %v8811 = vadd.f32 %v8708, %v8810
    %v8812 = vpop.f32.mrb[0].mxu0
    %v8813 = vadd.f32 %v8710, %v8812
    %8814 = vmatprep.mubr.bf16.mxu0 %v3640
    %8815 = vmatmul.mubr.bf16.gmra.mrb[0].mxu0 %v3639
    %v8816 = vpop.f32.mrb[0].mxu0
    %v8817 = vadd.f32 %v8714, %v8816
    %v8818 = vpop.f32.mrb[0].mxu0
    %v8819 = vadd.f32 %v8716, %v8818
    %v8820 = vpop.f32.mrb[0].mxu0
    %v8821 = vadd.f32 %v8718, %v8820
    %v8822 = vpop.f32.mrb[0].mxu0
    %v8823 = vadd.f32 %v8720, %v8822
    %8824 = vmatprep.mubr.bf16.mxu0 %v3642
    %8825 = vmatmul.mubr.bf16.gmra.mrb[0].mxu0 %v3641
    %v8826 = vpop.f32.mrb[0].mxu0
    %v8827 = vadd.f32 %v8724, %v8826
    %v8828 = vpop.f32.mrb[0].mxu0
    %v8829 = vadd.f32 %v8726, %v8828
    %v8830 = vpop.f32.mrb[0].mxu0
    %v8831 = vadd.f32 %v8728, %v8830
    %v8832 = vpop.f32.mrb[0].mxu0
    %v8833 = vadd.f32 %v8730, %v8832
    %8834 = vmatprep.mubr.bf16.mxu0 %v3644
    %8835 = vmatmul.mubr.bf16.gmra.mrb[0].mxu0 %v3643
    %v8836 = vpop.f32.mrb[0].mxu0
    %v8837 = vadd.f32 %v8734, %v8836
    %v8838 = vpop.f32.mrb[0].mxu0
    %v8839 = vadd.f32 %v8736, %v8838
    %v8840 = vpop.f32.mrb[0].mxu0
    %v8841 = vadd.f32 %v8738, %v8840
    %v8842 = vpop.f32.mrb[0].mxu0
    %v8843 = vadd.f32 %v8740, %v8842
    %8844 = vmatprep.mubr.bf16.mxu0 %v3646
    %8845 = vmatmul.mubr.bf16.gmra.mrb[0].mxu0 %v3645
    %v8846 = vpop.f32.mrb[0].mxu0
    %v8847 = vadd.f32 %v8744, %v8846
    %v8848 = vpop.f32.mrb[0].mxu0
    %v8849 = vadd.f32 %v8746, %v8848
    %v8850 = vpop.f32.mrb[0].mxu0
    %v8851 = vadd.f32 %v8748, %v8850
    %v8852 = vpop.f32.mrb[0].mxu0
    %v8853 = vadd.f32 %v8750, %v8852
    %8854 = vmatprep.mubr.bf16.mxu0 %v3648
    %8855 = vmatmul.mubr.bf16.gmra.mrb[0].mxu0 %v3647
    %v8856 = vpop.f32.mrb[0].mxu0
    %v8857 = vadd.f32 %v8754, %v8856
    %v8858 = vpop.f32.mrb[0].mxu0
    %v8859 = vadd.f32 %v8756, %v8858
    %v8860 = vpop.f32.mrb[0].mxu0
    %v8861 = vadd.f32 %v8758, %v8860
    %v8862 = vpop.f32.mrb[0].mxu0
    %v8863 = vadd.f32 %v8760, %v8862
    %8864 = vmatprep.mubr.bf16.mxu0 0
    %8865 = vmatmul.mubr.bf16.gmra.mrb[0].mxu0 0
    %v8866 = vpop.f32.mrb[0].mxu0
    %v8867 = vadd.f32 %v8764, %v8866
    %v8868 = vpop.f32.mrb[0].mxu0
    %v8869 = vadd.f32 %v8766, %v8868
    %v8870 = vpop.f32.mrb[0].mxu0
    %v8871 = vadd.f32 %v8768, %v8870
    %v8872 = vpop.f32.mrb[0].mxu0
    %v8873 = vadd.f32 %v8770, %v8872
    %8874 = vdwg.mxu0
    %8875 = vmatprep.subr.bf16.mxu0 %v6724
    %8876 = vmatpush1.bf16.msra.mxu0 %v6723
    %8877 = vmatprep.subr.bf16.mxu0 %v6732
    %8878 = vmatpush1.bf16.msra.mxu0 %v6731
    %8879 = vmatprep.subr.bf16.mxu0 %v6740
    %8880 = vmatpush1.bf16.msra.mxu0 %v6739
    %8881 = vmatprep.subr.bf16.mxu0 %v6748
    %8882 = vmatpush1.bf16.msra.mxu0 %v6747
    %8883 = vmatprep.subr.bf16.mxu0 %v6756
    %8884 = vmatpush1.bf16.msra.mxu0 %v6755
    %8885 = vmatprep.subr.bf16.mxu0 %v6764
    %8886 = vmatpush1.bf16.msra.mxu0 %v6763
    %8887 = vmatprep.subr.bf16.mxu0 %v6772
    %8888 = vmatpush1.bf16.msra.mxu0 %v6771
    %8889 = vmatprep.subr.bf16.mxu0 %v6780
    %8890 = vmatpush1.bf16.msra.mxu0 %v6779
    %8891 = vmatprep.subr.bf16.mxu0 %v6788
    %8892 = vmatpush1.bf16.msra.mxu0 %v6787
    %8893 = vmatprep.subr.bf16.mxu0 %v6796
    %8894 = vmatpush1.bf16.msra.mxu0 %v6795
    %8895 = vmatprep.subr.bf16.mxu0 %v6804
    %8896 = vmatpush1.bf16.msra.mxu0 %v6803
    %8897 = vmatprep.subr.bf16.mxu0 %v6812
    %8898 = vmatpush1.bf16.msra.mxu0 %v6811
    %8899 = vmatprep.subr.bf16.mxu0 %v6820
    %8900 = vmatpush1.bf16.msra.mxu0 %v6819
    %8901 = vmatprep.subr.bf16.mxu0 %v6828
    %8902 = vmatpush1.bf16.msra.mxu0 %v6827
    %8903 = vmatprep.subr.bf16.mxu0 %v6836
    %8904 = vmatpush1.bf16.msra.mxu0 %v6835
    %8905 = vmatprep.subr.bf16.mxu0 %v6844
    %8906 = vmatpush1.bf16.msra.mxu0 %v6843
    %8907 = vmatprep.mubr.bf16.mxu0 0
    %8908 = vmatmul.mubr.bf16.gmra.mrb[0].mxu0 0
    %v8909 = vpop.f32.mrb[0].mxu0
    %v8910 = vadd.f32 0.0, %v8909
    %v8911 = vpop.f32.mrb[0].mxu0
    %v8912 = vadd.f32 0.0, %v8911
    %v8913 = vpop.f32.mrb[0].mxu0
    %v8914 = vadd.f32 0.0, %v8913
    %v8915 = vpop.f32.mrb[0].mxu0
    %v8916 = vadd.f32 0.0, %v8915
    %8917 = vmatprep.mubr.bf16.mxu0 %v3622
    %8918 = vmatmul.mubr.bf16.gmra.mrb[0].mxu0 %v3621
    %v8919 = vpop.f32.mrb[0].mxu0
    %v8920 = vadd.f32 0.0, %v8919
    %v8921 = vpop.f32.mrb[0].mxu0
    %v8922 = vadd.f32 0.0, %v8921
    %v8923 = vpop.f32.mrb[0].mxu0
    %v8924 = vadd.f32 0.0, %v8923
    %v8925 = vpop.f32.mrb[0].mxu0
    %v8926 = vadd.f32 0.0, %v8925
    %8927 = vmatprep.mubr.bf16.mxu0 %v3624
    %8928 = vmatmul.mubr.bf16.gmra.mrb[0].mxu0 %v3623
    %v8929 = vpop.f32.mrb[0].mxu0
    %v8930 = vadd.f32 0.0, %v8929
    %v8931 = vpop.f32.mrb[0].mxu0
    %v8932 = vadd.f32 0.0, %v8931
    %v8933 = vpop.f32.mrb[0].mxu0
    %v8934 = vadd.f32 0.0, %v8933
    %v8935 = vpop.f32.mrb[0].mxu0
    %v8936 = vadd.f32 0.0, %v8935
    %8937 = vmatprep.mubr.bf16.mxu0 %v3626
    %8938 = vmatmul.mubr.bf16.gmra.mrb[0].mxu0 %v3625
    %v8939 = vpop.f32.mrb[0].mxu0
    %v8940 = vadd.f32 0.0, %v8939
    %v8941 = vpop.f32.mrb[0].mxu0
    %v8942 = vadd.f32 0.0, %v8941
    %v8943 = vpop.f32.mrb[0].mxu0
    %v8944 = vadd.f32 0.0, %v8943
    %v8945 = vpop.f32.mrb[0].mxu0
    %v8946 = vadd.f32 0.0, %v8945
    %8947 = vmatprep.mubr.bf16.mxu0 %v3628
    %8948 = vmatmul.mubr.bf16.gmra.mrb[0].mxu0 %v3627
    %v8949 = vpop.f32.mrb[0].mxu0
    %v8950 = vadd.f32 0.0, %v8949
    %v8951 = vpop.f32.mrb[0].mxu0
    %v8952 = vadd.f32 0.0, %v8951
    %v8953 = vpop.f32.mrb[0].mxu0
    %v8954 = vadd.f32 0.0, %v8953
    %v8955 = vpop.f32.mrb[0].mxu0
    %v8956 = vadd.f32 0.0, %v8955
    %8957 = vmatprep.mubr.bf16.mxu0 %v3630
    %8958 = vmatmul.mubr.bf16.gmra.mrb[0].mxu0 %v3629
    %v8959 = vpop.f32.mrb[0].mxu0
    %v8960 = vadd.f32 0.0, %v8959
    %v8961 = vpop.f32.mrb[0].mxu0
    %v8962 = vadd.f32 0.0, %v8961
    %v8963 = vpop.f32.mrb[0].mxu0
    %v8964 = vadd.f32 0.0, %v8963
    %v8965 = vpop.f32.mrb[0].mxu0
    %v8966 = vadd.f32 0.0, %v8965
    %8967 = vmatprep.mubr.bf16.mxu0 %v3632
    %8968 = vmatmul.mubr.bf16.gmra.mrb[0].mxu0 %v3631
    %v8969 = vpop.f32.mrb[0].mxu0
    %v8970 = vadd.f32 0.0, %v8969
    %v8971 = vpop.f32.mrb[0].mxu0
    %v8972 = vadd.f32 0.0, %v8971
    %v8973 = vpop.f32.mrb[0].mxu0
    %v8974 = vadd.f32 0.0, %v8973
    %v8975 = vpop.f32.mrb[0].mxu0
    %v8976 = vadd.f32 0.0, %v8975
    %8977 = vdwg.mxu0
    %8978 = vmatprep.subr.bf16.mxu0 %v6852
    %8979 = vmatpush1.bf16.msra.mxu0 %v6851
    %8980 = vmatprep.subr.bf16.mxu0 %v6860
    %8981 = vmatpush1.bf16.msra.mxu0 %v6859
    %8982 = vmatprep.subr.bf16.mxu0 %v6868
    %8983 = vmatpush1.bf16.msra.mxu0 %v6867
    %8984 = vmatprep.subr.bf16.mxu0 %v6876
    %8985 = vmatpush1.bf16.msra.mxu0 %v6875
    %8986 = vmatprep.subr.bf16.mxu0 %v6884
    %8987 = vmatpush1.bf16.msra.mxu0 %v6883
    %8988 = vmatprep.subr.bf16.mxu0 %v6892
    %8989 = vmatpush1.bf16.msra.mxu0 %v6891
    %8990 = vmatprep.subr.bf16.mxu0 %v6900
    %8991 = vmatpush1.bf16.msra.mxu0 %v6899
    %8992 = vmatprep.subr.bf16.mxu0 %v6908
    %8993 = vmatpush1.bf16.msra.mxu0 %v6907
    %8994 = vmatprep.subr.bf16.mxu0 %v6916
    %8995 = vmatpush1.bf16.msra.mxu0 %v6915
    %8996 = vmatprep.subr.bf16.mxu0 %v6924
    %8997 = vmatpush1.bf16.msra.mxu0 %v6923
    %8998 = vmatprep.subr.bf16.mxu0 %v6932
    %8999 = vmatpush1.bf16.msra.mxu0 %v6931
    %9000 = vmatprep.subr.bf16.mxu0 %v6940
    %9001 = vmatpush1.bf16.msra.mxu0 %v6939
    %9002 = vmatprep.subr.bf16.mxu0 %v6948
    %9003 = vmatpush1.bf16.msra.mxu0 %v6947
    %9004 = vmatprep.subr.bf16.mxu0 %v6956
    %9005 = vmatpush1.bf16.msra.mxu0 %v6955
    %9006 = vmatprep.subr.bf16.mxu0 %v6964
    %9007 = vmatpush1.bf16.msra.mxu0 %v6963
    %9008 = vmatprep.subr.bf16.mxu0 %v6972
    %9009 = vmatpush1.bf16.msra.mxu0 %v6971
    %9010 = vmatprep.mubr.bf16.mxu0 0
    %9011 = vmatmul.mubr.bf16.gmra.mrb[0].mxu0 0
    %v9012 = vpop.f32.mrb[0].mxu0
    %v9013 = vadd.f32 %v8910, %v9012
    %v9014 = vpop.f32.mrb[0].mxu0
    %v9015 = vadd.f32 %v8912, %v9014
    %v9016 = vpop.f32.mrb[0].mxu0
    %v9017 = vadd.f32 %v8914, %v9016
    %v9018 = vpop.f32.mrb[0].mxu0
    %v9019 = vadd.f32 %v8916, %v9018
    %9020 = vmatprep.mubr.bf16.mxu0 %v3636
    %9021 = vmatmul.mubr.bf16.gmra.mrb[0].mxu0 %v3635
    %v9022 = vpop.f32.mrb[0].mxu0
    %v9023 = vadd.f32 %v8920, %v9022
    %v9024 = vpop.f32.mrb[0].mxu0
    %v9025 = vadd.f32 %v8922, %v9024
    %v9026 = vpop.f32.mrb[0].mxu0
    %v9027 = vadd.f32 %v8924, %v9026
    %v9028 = vpop.f32.mrb[0].mxu0
    %v9029 = vadd.f32 %v8926, %v9028
    %9030 = vmatprep.mubr.bf16.mxu0 %v3638
    %9031 = vmatmul.mubr.bf16.gmra.mrb[0].mxu0 %v3637
    %v9032 = vpop.f32.mrb[0].mxu0
    %v9033 = vadd.f32 %v8930, %v9032
    %v9034 = vpop.f32.mrb[0].mxu0
    %v9035 = vadd.f32 %v8932, %v9034
    %v9036 = vpop.f32.mrb[0].mxu0
    %v9037 = vadd.f32 %v8934, %v9036
    %v9038 = vpop.f32.mrb[0].mxu0
    %v9039 = vadd.f32 %v8936, %v9038
    %9040 = vmatprep.mubr.bf16.mxu0 %v3640
    %9041 = vmatmul.mubr.bf16.gmra.mrb[0].mxu0 %v3639
    %v9042 = vpop.f32.mrb[0].mxu0
    %v9043 = vadd.f32 %v8940, %v9042
    %v9044 = vpop.f32.mrb[0].mxu0
    %v9045 = vadd.f32 %v8942, %v9044
    %v9046 = vpop.f32.mrb[0].mxu0
    %v9047 = vadd.f32 %v8944, %v9046
    %v9048 = vpop.f32.mrb[0].mxu0
    %v9049 = vadd.f32 %v8946, %v9048
    %9050 = vmatprep.mubr.bf16.mxu0 %v3642
    %9051 = vmatmul.mubr.bf16.gmra.mrb[0].mxu0 %v3641
    %v9052 = vpop.f32.mrb[0].mxu0
    %v9053 = vadd.f32 %v8950, %v9052
    %v9054 = vpop.f32.mrb[0].mxu0
    %v9055 = vadd.f32 %v8952, %v9054
    %v9056 = vpop.f32.mrb[0].mxu0
    %v9057 = vadd.f32 %v8954, %v9056
    %v9058 = vpop.f32.mrb[0].mxu0
    %v9059 = vadd.f32 %v8956, %v9058
    %9060 = vmatprep.mubr.bf16.mxu0 %v3644
    %9061 = vmatmul.mubr.bf16.gmra.mrb[0].mxu0 %v3643
    %v9062 = vpop.f32.mrb[0].mxu0
    %v9063 = vadd.f32 %v8960, %v9062
    %v9064 = vpop.f32.mrb[0].mxu0
    %v9065 = vadd.f32 %v8962, %v9064
    %v9066 = vpop.f32.mrb[0].mxu0
    %v9067 = vadd.f32 %v8964, %v9066
    %v9068 = vpop.f32.mrb[0].mxu0
    %v9069 = vadd.f32 %v8966, %v9068
    %9070 = vmatprep.mubr.bf16.mxu0 %v3646
    %9071 = vmatmul.mubr.bf16.gmra.mrb[0].mxu0 %v3645
    %v9072 = vpop.f32.mrb[0].mxu0
    %v9073 = vadd.f32 %v8970, %v9072
    %v9074 = vpop.f32.mrb[0].mxu0
    %v9075 = vadd.f32 %v8972, %v9074
    %v9076 = vpop.f32.mrb[0].mxu0
    %v9077 = vadd.f32 %v8974, %v9076
    %v9078 = vpop.f32.mrb[0].mxu0
    %v9079 = vadd.f32 %v8976, %v9078
    %9080 = vdwg.mxu0
    %9081 = vmatprep.subr.bf16.mxu0 %v6980
    %9082 = vmatpush1.bf16.msra.mxu0 %v6979
    %9083 = vmatprep.subr.bf16.mxu0 %v6988
    %9084 = vmatpush1.bf16.msra.mxu0 %v6987
    %9085 = vmatprep.subr.bf16.mxu0 %v6996
    %9086 = vmatpush1.bf16.msra.mxu0 %v6995
    %9087 = vmatprep.subr.bf16.mxu0 %v7004
    %9088 = vmatpush1.bf16.msra.mxu0 %v7003
    %9089 = vmatprep.subr.bf16.mxu0 %v7012
    %9090 = vmatpush1.bf16.msra.mxu0 %v7011
    %9091 = vmatprep.subr.bf16.mxu0 %v7020
    %9092 = vmatpush1.bf16.msra.mxu0 %v7019
    %9093 = vmatprep.subr.bf16.mxu0 %v7028
    %9094 = vmatpush1.bf16.msra.mxu0 %v7027
    %9095 = vmatprep.subr.bf16.mxu0 %v7036
    %9096 = vmatpush1.bf16.msra.mxu0 %v7035
    %9097 = vmatprep.subr.bf16.mxu0 %v7044
    %9098 = vmatpush1.bf16.msra.mxu0 %v7043
    %9099 = vmatprep.subr.bf16.mxu0 %v7052
    %9100 = vmatpush1.bf16.msra.mxu0 %v7051
    %9101 = vmatprep.subr.bf16.mxu0 %v7060
    %9102 = vmatpush1.bf16.msra.mxu0 %v7059
    %9103 = vmatprep.subr.bf16.mxu0 %v7068
    %9104 = vmatpush1.bf16.msra.mxu0 %v7067
    %9105 = vmatprep.subr.bf16.mxu0 %v7076
    %9106 = vmatpush1.bf16.msra.mxu0 %v7075
    %9107 = vmatprep.subr.bf16.mxu0 %v7084
    %9108 = vmatpush1.bf16.msra.mxu0 %v7083
    %9109 = vmatprep.subr.bf16.mxu0 %v7092
    %9110 = vmatpush1.bf16.msra.mxu0 %v7091
    %9111 = vmatprep.subr.bf16.mxu0 %v7100
    %9112 = vmatpush1.bf16.msra.mxu0 %v7099
    %9113 = vmatprep.mubr.bf16.mxu0 %v3622
    %9114 = vmatmul.mubr.bf16.gmra.mrb[0].mxu0 %v3621
    %v9115 = vpop.f32.mrb[0].mxu0
    %v9116 = vadd.f32 %v9013, %v9115
    %v9117 = vpop.f32.mrb[0].mxu0
    %v9118 = vadd.f32 %v9015, %v9117
    %v9119 = vpop.f32.mrb[0].mxu0
    %v9120 = vadd.f32 %v9017, %v9119
    %v9121 = vpop.f32.mrb[0].mxu0
    %v9122 = vadd.f32 %v9019, %v9121
    %9123 = vmatprep.mubr.bf16.mxu0 %v3624
    %9124 = vmatmul.mubr.bf16.gmra.mrb[0].mxu0 %v3623
    %v9125 = vpop.f32.mrb[0].mxu0
    %v9126 = vadd.f32 %v9023, %v9125
    %v9127 = vpop.f32.mrb[0].mxu0
    %v9128 = vadd.f32 %v9025, %v9127
    %v9129 = vpop.f32.mrb[0].mxu0
    %v9130 = vadd.f32 %v9027, %v9129
    %v9131 = vpop.f32.mrb[0].mxu0
    %v9132 = vadd.f32 %v9029, %v9131
    %9133 = vmatprep.mubr.bf16.mxu0 %v3626
    %9134 = vmatmul.mubr.bf16.gmra.mrb[0].mxu0 %v3625
    %v9135 = vpop.f32.mrb[0].mxu0
    %v9136 = vadd.f32 %v9033, %v9135
    %v9137 = vpop.f32.mrb[0].mxu0
    %v9138 = vadd.f32 %v9035, %v9137
    %v9139 = vpop.f32.mrb[0].mxu0
    %v9140 = vadd.f32 %v9037, %v9139
    %v9141 = vpop.f32.mrb[0].mxu0
    %v9142 = vadd.f32 %v9039, %v9141
    %9143 = vmatprep.mubr.bf16.mxu0 %v3628
    %9144 = vmatmul.mubr.bf16.gmra.mrb[0].mxu0 %v3627
    %v9145 = vpop.f32.mrb[0].mxu0
    %v9146 = vadd.f32 %v9043, %v9145
    %v9147 = vpop.f32.mrb[0].mxu0
    %v9148 = vadd.f32 %v9045, %v9147
    %v9149 = vpop.f32.mrb[0].mxu0
    %v9150 = vadd.f32 %v9047, %v9149
    %v9151 = vpop.f32.mrb[0].mxu0
    %v9152 = vadd.f32 %v9049, %v9151
    %9153 = vmatprep.mubr.bf16.mxu0 %v3630
    %9154 = vmatmul.mubr.bf16.gmra.mrb[0].mxu0 %v3629
    %v9155 = vpop.f32.mrb[0].mxu0
    %v9156 = vadd.f32 %v9053, %v9155
    %v9157 = vpop.f32.mrb[0].mxu0
    %v9158 = vadd.f32 %v9055, %v9157
    %v9159 = vpop.f32.mrb[0].mxu0
    %v9160 = vadd.f32 %v9057, %v9159
    %v9161 = vpop.f32.mrb[0].mxu0
    %v9162 = vadd.f32 %v9059, %v9161
    %9163 = vmatprep.mubr.bf16.mxu0 %v3632
    %9164 = vmatmul.mubr.bf16.gmra.mrb[0].mxu0 %v3631
    %v9165 = vpop.f32.mrb[0].mxu0
    %v9166 = vadd.f32 %v9063, %v9165
    %v9167 = vpop.f32.mrb[0].mxu0
    %v9168 = vadd.f32 %v9065, %v9167
    %v9169 = vpop.f32.mrb[0].mxu0
    %v9170 = vadd.f32 %v9067, %v9169
    %v9171 = vpop.f32.mrb[0].mxu0
    %v9172 = vadd.f32 %v9069, %v9171
    %9173 = vmatprep.mubr.bf16.mxu0 %v3634
    %9174 = vmatmul.mubr.bf16.gmra.mrb[0].mxu0 %v3633
    %v9175 = vpop.f32.mrb[0].mxu0
    %v9176 = vadd.f32 %v9073, %v9175
    %v9177 = vpop.f32.mrb[0].mxu0
    %v9178 = vadd.f32 %v9075, %v9177
    %v9179 = vpop.f32.mrb[0].mxu0
    %v9180 = vadd.f32 %v9077, %v9179
    %v9181 = vpop.f32.mrb[0].mxu0
    %v9182 = vadd.f32 %v9079, %v9181
    %9183 = vdwg.mxu0
    %9184 = vmatprep.subr.bf16.mxu0 %v7108
    %9185 = vmatpush1.bf16.msra.mxu0 %v7107
    %9186 = vmatprep.subr.bf16.mxu0 %v7116
    %9187 = vmatpush1.bf16.msra.mxu0 %v7115
    %9188 = vmatprep.subr.bf16.mxu0 %v7124
    %9189 = vmatpush1.bf16.msra.mxu0 %v7123
    %9190 = vmatprep.subr.bf16.mxu0 %v7132
    %9191 = vmatpush1.bf16.msra.mxu0 %v7131
    %9192 = vmatprep.subr.bf16.mxu0 %v7140
    %9193 = vmatpush1.bf16.msra.mxu0 %v7139
    %9194 = vmatprep.subr.bf16.mxu0 %v7148
    %9195 = vmatpush1.bf16.msra.mxu0 %v7147
    %9196 = vmatprep.subr.bf16.mxu0 %v7156
    %9197 = vmatpush1.bf16.msra.mxu0 %v7155
    %9198 = vmatprep.subr.bf16.mxu0 %v7164
    %9199 = vmatpush1.bf16.msra.mxu0 %v7163
    %9200 = vmatprep.subr.bf16.mxu0 %v7172
    %9201 = vmatpush1.bf16.msra.mxu0 %v7171
    %9202 = vmatprep.subr.bf16.mxu0 %v7180
    %9203 = vmatpush1.bf16.msra.mxu0 %v7179
    %9204 = vmatprep.subr.bf16.mxu0 %v7188
    %9205 = vmatpush1.bf16.msra.mxu0 %v7187
    %9206 = vmatprep.subr.bf16.mxu0 %v7196
    %9207 = vmatpush1.bf16.msra.mxu0 %v7195
    %9208 = vmatprep.subr.bf16.mxu0 %v7204
    %9209 = vmatpush1.bf16.msra.mxu0 %v7203
    %9210 = vmatprep.subr.bf16.mxu0 %v7212
    %9211 = vmatpush1.bf16.msra.mxu0 %v7211
    %9212 = vmatprep.subr.bf16.mxu0 %v7220
    %9213 = vmatpush1.bf16.msra.mxu0 %v7219
    %9214 = vmatprep.subr.bf16.mxu0 %v7228
    %9215 = vmatpush1.bf16.msra.mxu0 %v7227
    %9216 = vmatprep.mubr.bf16.mxu0 %v3636
    %9217 = vmatmul.mubr.bf16.gmra.mrb[0].mxu0 %v3635
    %v9218 = vpop.f32.mrb[0].mxu0
    %v9219 = vadd.f32 %v9116, %v9218
    %v9220 = vpop.f32.mrb[0].mxu0
    %v9221 = vadd.f32 %v9118, %v9220
    %v9222 = vpop.f32.mrb[0].mxu0
    %v9223 = vadd.f32 %v9120, %v9222
    %v9224 = vpop.f32.mrb[0].mxu0
    %v9225 = vadd.f32 %v9122, %v9224
    %9226 = vmatprep.mubr.bf16.mxu0 %v3638
    %9227 = vmatmul.mubr.bf16.gmra.mrb[0].mxu0 %v3637
    %v9228 = vpop.f32.mrb[0].mxu0
    %v9229 = vadd.f32 %v9126, %v9228
    %v9230 = vpop.f32.mrb[0].mxu0
    %v9231 = vadd.f32 %v9128, %v9230
    %v9232 = vpop.f32.mrb[0].mxu0
    %v9233 = vadd.f32 %v9130, %v9232
    %v9234 = vpop.f32.mrb[0].mxu0
    %v9235 = vadd.f32 %v9132, %v9234
    %9236 = vmatprep.mubr.bf16.mxu0 %v3640
    %9237 = vmatmul.mubr.bf16.gmra.mrb[0].mxu0 %v3639
    %v9238 = vpop.f32.mrb[0].mxu0
    %v9239 = vadd.f32 %v9136, %v9238
    %v9240 = vpop.f32.mrb[0].mxu0
    %v9241 = vadd.f32 %v9138, %v9240
    %v9242 = vpop.f32.mrb[0].mxu0
    %v9243 = vadd.f32 %v9140, %v9242
    %v9244 = vpop.f32.mrb[0].mxu0
    %v9245 = vadd.f32 %v9142, %v9244
    %9246 = vmatprep.mubr.bf16.mxu0 %v3642
    %9247 = vmatmul.mubr.bf16.gmra.mrb[0].mxu0 %v3641
    %v9248 = vpop.f32.mrb[0].mxu0
    %v9249 = vadd.f32 %v9146, %v9248
    %v9250 = vpop.f32.mrb[0].mxu0
    %v9251 = vadd.f32 %v9148, %v9250
    %v9252 = vpop.f32.mrb[0].mxu0
    %v9253 = vadd.f32 %v9150, %v9252
    %v9254 = vpop.f32.mrb[0].mxu0
    %v9255 = vadd.f32 %v9152, %v9254
    %9256 = vmatprep.mubr.bf16.mxu0 %v3644
    %9257 = vmatmul.mubr.bf16.gmra.mrb[0].mxu0 %v3643
    %v9258 = vpop.f32.mrb[0].mxu0
    %v9259 = vadd.f32 %v9156, %v9258
    %v9260 = vpop.f32.mrb[0].mxu0
    %v9261 = vadd.f32 %v9158, %v9260
    %v9262 = vpop.f32.mrb[0].mxu0
    %v9263 = vadd.f32 %v9160, %v9262
    %v9264 = vpop.f32.mrb[0].mxu0
    %v9265 = vadd.f32 %v9162, %v9264
    %9266 = vmatprep.mubr.bf16.mxu0 %v3646
    %9267 = vmatmul.mubr.bf16.gmra.mrb[0].mxu0 %v3645
    %v9268 = vpop.f32.mrb[0].mxu0
    %v9269 = vadd.f32 %v9166, %v9268
    %v9270 = vpop.f32.mrb[0].mxu0
    %v9271 = vadd.f32 %v9168, %v9270
    %v9272 = vpop.f32.mrb[0].mxu0
    %v9273 = vadd.f32 %v9170, %v9272
    %v9274 = vpop.f32.mrb[0].mxu0
    %v9275 = vadd.f32 %v9172, %v9274
    %9276 = vmatprep.mubr.bf16.mxu0 %v3648
    %9277 = vmatmul.mubr.bf16.gmra.mrb[0].mxu0 %v3647
    %v9278 = vpop.f32.mrb[0].mxu0
    %v9279 = vadd.f32 %v9176, %v9278
    %v9280 = vpop.f32.mrb[0].mxu0
    %v9281 = vadd.f32 %v9178, %v9280
    %v9282 = vpop.f32.mrb[0].mxu0
    %v9283 = vadd.f32 %v9180, %v9282
    %v9284 = vpop.f32.mrb[0].mxu0
    %v9285 = vadd.f32 %v9182, %v9284
    %9286 = vdwg.mxu0
    %9287 = vmatprep.subr.bf16.mxu0 %v7236
    %9288 = vmatpush1.bf16.msra.mxu0 %v7235
    %9289 = vmatprep.subr.bf16.mxu0 %v7244
    %9290 = vmatpush1.bf16.msra.mxu0 %v7243
    %9291 = vmatprep.subr.bf16.mxu0 %v7252
    %9292 = vmatpush1.bf16.msra.mxu0 %v7251
    %9293 = vmatprep.subr.bf16.mxu0 %v7260
    %9294 = vmatpush1.bf16.msra.mxu0 %v7259
    %9295 = vmatprep.subr.bf16.mxu0 %v7268
    %9296 = vmatpush1.bf16.msra.mxu0 %v7267
    %9297 = vmatprep.subr.bf16.mxu0 %v7276
    %9298 = vmatpush1.bf16.msra.mxu0 %v7275
    %9299 = vmatprep.subr.bf16.mxu0 %v7284
    %9300 = vmatpush1.bf16.msra.mxu0 %v7283
    %9301 = vmatprep.subr.bf16.mxu0 %v7292
    %9302 = vmatpush1.bf16.msra.mxu0 %v7291
    %9303 = vmatprep.subr.bf16.mxu0 %v7300
    %9304 = vmatpush1.bf16.msra.mxu0 %v7299
    %9305 = vmatprep.subr.bf16.mxu0 %v7308
    %9306 = vmatpush1.bf16.msra.mxu0 %v7307
    %9307 = vmatprep.subr.bf16.mxu0 %v7316
    %9308 = vmatpush1.bf16.msra.mxu0 %v7315
    %9309 = vmatprep.subr.bf16.mxu0 %v7324
    %9310 = vmatpush1.bf16.msra.mxu0 %v7323
    %9311 = vmatprep.subr.bf16.mxu0 %v7332
    %9312 = vmatpush1.bf16.msra.mxu0 %v7331
    %9313 = vmatprep.subr.bf16.mxu0 %v7340
    %9314 = vmatpush1.bf16.msra.mxu0 %v7339
    %9315 = vmatprep.subr.bf16.mxu0 %v7348
    %9316 = vmatpush1.bf16.msra.mxu0 %v7347
    %9317 = vmatprep.subr.bf16.mxu0 %v7356
    %9318 = vmatpush1.bf16.msra.mxu0 %v7355
    %9319 = vmatprep.mubr.bf16.mxu0 %v3624
    %9320 = vmatmul.mubr.bf16.gmra.mrb[0].mxu0 %v3623
    %v9321 = vpop.f32.mrb[0].mxu0
    %v9322 = vadd.f32 %v9219, %v9321
    %v9323 = vpop.f32.mrb[0].mxu0
    %v9324 = vadd.f32 %v9221, %v9323
    %v9325 = vpop.f32.mrb[0].mxu0
    %v9326 = vadd.f32 %v9223, %v9325
    %v9327 = vpop.f32.mrb[0].mxu0
    %v9328 = vadd.f32 %v9225, %v9327
    %9329 = vmatprep.mubr.bf16.mxu0 %v3626
    %9330 = vmatmul.mubr.bf16.gmra.mrb[0].mxu0 %v3625
    %v9331 = vpop.f32.mrb[0].mxu0
    %v9332 = vadd.f32 %v9229, %v9331
    %v9333 = vpop.f32.mrb[0].mxu0
    %v9334 = vadd.f32 %v9231, %v9333
    %v9335 = vpop.f32.mrb[0].mxu0
    %v9336 = vadd.f32 %v9233, %v9335
    %v9337 = vpop.f32.mrb[0].mxu0
    %v9338 = vadd.f32 %v9235, %v9337
    %9339 = vmatprep.mubr.bf16.mxu0 %v3628
    %9340 = vmatmul.mubr.bf16.gmra.mrb[0].mxu0 %v3627
    %v9341 = vpop.f32.mrb[0].mxu0
    %v9342 = vadd.f32 %v9239, %v9341
    %v9343 = vpop.f32.mrb[0].mxu0
    %v9344 = vadd.f32 %v9241, %v9343
    %v9345 = vpop.f32.mrb[0].mxu0
    %v9346 = vadd.f32 %v9243, %v9345
    %v9347 = vpop.f32.mrb[0].mxu0
    %v9348 = vadd.f32 %v9245, %v9347
    %9349 = vmatprep.mubr.bf16.mxu0 %v3630
    %9350 = vmatmul.mubr.bf16.gmra.mrb[0].mxu0 %v3629
    %v9351 = vpop.f32.mrb[0].mxu0
    %v9352 = vadd.f32 %v9249, %v9351
    %v9353 = vpop.f32.mrb[0].mxu0
    %v9354 = vadd.f32 %v9251, %v9353
    %v9355 = vpop.f32.mrb[0].mxu0
    %v9356 = vadd.f32 %v9253, %v9355
    %v9357 = vpop.f32.mrb[0].mxu0
    %v9358 = vadd.f32 %v9255, %v9357
    %9359 = vmatprep.mubr.bf16.mxu0 %v3632
    %9360 = vmatmul.mubr.bf16.gmra.mrb[0].mxu0 %v3631
    %v9361 = vpop.f32.mrb[0].mxu0
    %v9362 = vadd.f32 %v9259, %v9361
    %v9363 = vpop.f32.mrb[0].mxu0
    %v9364 = vadd.f32 %v9261, %v9363
    %v9365 = vpop.f32.mrb[0].mxu0
    %v9366 = vadd.f32 %v9263, %v9365
    %v9367 = vpop.f32.mrb[0].mxu0
    %v9368 = vadd.f32 %v9265, %v9367
    %9369 = vmatprep.mubr.bf16.mxu0 %v3634
    %9370 = vmatmul.mubr.bf16.gmra.mrb[0].mxu0 %v3633
    %v9371 = vpop.f32.mrb[0].mxu0
    %v9372 = vadd.f32 %v9269, %v9371
    %v9373 = vpop.f32.mrb[0].mxu0
    %v9374 = vadd.f32 %v9271, %v9373
    %v9375 = vpop.f32.mrb[0].mxu0
    %v9376 = vadd.f32 %v9273, %v9375
    %v9377 = vpop.f32.mrb[0].mxu0
    %v9378 = vadd.f32 %v9275, %v9377
    %9379 = vmatprep.mubr.bf16.mxu0 0
    %9380 = vmatmul.mubr.bf16.gmra.mrb[0].mxu0 0
    %v9381 = vpop.f32.mrb[0].mxu0
    %v9382 = vadd.f32 %v9279, %v9381
    %v9383 = vpop.f32.mrb[0].mxu0
    %v9384 = vadd.f32 %v9281, %v9383
    %v9385 = vpop.f32.mrb[0].mxu0
    %v9386 = vadd.f32 %v9283, %v9385
    %v9387 = vpop.f32.mrb[0].mxu0
    %v9388 = vadd.f32 %v9285, %v9387
    %9389 = vdwg.mxu0
    %9390 = vmatprep.subr.bf16.mxu0 %v7364
    %9391 = vmatpush1.bf16.msra.mxu0 %v7363
    %9392 = vmatprep.subr.bf16.mxu0 %v7372
    %9393 = vmatpush1.bf16.msra.mxu0 %v7371
    %9394 = vmatprep.subr.bf16.mxu0 %v7380
    %9395 = vmatpush1.bf16.msra.mxu0 %v7379
    %9396 = vmatprep.subr.bf16.mxu0 %v7388
    %9397 = vmatpush1.bf16.msra.mxu0 %v7387
    %9398 = vmatprep.subr.bf16.mxu0 %v7396
    %9399 = vmatpush1.bf16.msra.mxu0 %v7395
    %9400 = vmatprep.subr.bf16.mxu0 %v7404
    %9401 = vmatpush1.bf16.msra.mxu0 %v7403
    %9402 = vmatprep.subr.bf16.mxu0 %v7412
    %9403 = vmatpush1.bf16.msra.mxu0 %v7411
    %9404 = vmatprep.subr.bf16.mxu0 %v7420
    %9405 = vmatpush1.bf16.msra.mxu0 %v7419
    %9406 = vmatprep.subr.bf16.mxu0 %v7428
    %9407 = vmatpush1.bf16.msra.mxu0 %v7427
    %9408 = vmatprep.subr.bf16.mxu0 %v7436
    %9409 = vmatpush1.bf16.msra.mxu0 %v7435
    %9410 = vmatprep.subr.bf16.mxu0 %v7444
    %9411 = vmatpush1.bf16.msra.mxu0 %v7443
    %9412 = vmatprep.subr.bf16.mxu0 %v7452
    %9413 = vmatpush1.bf16.msra.mxu0 %v7451
    %9414 = vmatprep.subr.bf16.mxu0 %v7460
    %9415 = vmatpush1.bf16.msra.mxu0 %v7459
    %9416 = vmatprep.subr.bf16.mxu0 %v7468
    %9417 = vmatpush1.bf16.msra.mxu0 %v7467
    %9418 = vmatprep.subr.bf16.mxu0 %v7476
    %9419 = vmatpush1.bf16.msra.mxu0 %v7475
    %9420 = vmatprep.subr.bf16.mxu0 %v7484
    %9421 = vmatpush1.bf16.msra.mxu0 %v7483
    %9422 = vmatprep.mubr.bf16.mxu0 %v3638
    %9423 = vmatmul.mubr.bf16.gmra.mrb[0].mxu0 %v3637
    %v9424 = vpop.f32.mrb[0].mxu0
    %v9425 = vadd.f32 %v9322, %v9424
    %v9426 = vpop.f32.mrb[0].mxu0
    %v9427 = vadd.f32 %v9324, %v9426
    %v9428 = vpop.f32.mrb[0].mxu0
    %v9429 = vadd.f32 %v9326, %v9428
    %v9430 = vpop.f32.mrb[0].mxu0
    %v9431 = vadd.f32 %v9328, %v9430
    %9432 = vmatprep.mubr.bf16.mxu0 %v3640
    %9433 = vmatmul.mubr.bf16.gmra.mrb[0].mxu0 %v3639
    %v9434 = vpop.f32.mrb[0].mxu0
    %v9435 = vadd.f32 %v9332, %v9434
    %v9436 = vpop.f32.mrb[0].mxu0
    %v9437 = vadd.f32 %v9334, %v9436
    %v9438 = vpop.f32.mrb[0].mxu0
    %v9439 = vadd.f32 %v9336, %v9438
    %v9440 = vpop.f32.mrb[0].mxu0
    %v9441 = vadd.f32 %v9338, %v9440
    %9442 = vmatprep.mubr.bf16.mxu0 %v3642
    %9443 = vmatmul.mubr.bf16.gmra.mrb[0].mxu0 %v3641
    %v9444 = vpop.f32.mrb[0].mxu0
    %v9445 = vadd.f32 %v9342, %v9444
    %v9446 = vpop.f32.mrb[0].mxu0
    %v9447 = vadd.f32 %v9344, %v9446
    %v9448 = vpop.f32.mrb[0].mxu0
    %v9449 = vadd.f32 %v9346, %v9448
    %v9450 = vpop.f32.mrb[0].mxu0
    %v9451 = vadd.f32 %v9348, %v9450
    %9452 = vmatprep.mubr.bf16.mxu0 %v3644
    %9453 = vmatmul.mubr.bf16.gmra.mrb[0].mxu0 %v3643
    %v9454 = vpop.f32.mrb[0].mxu0
    %v9455 = vadd.f32 %v9352, %v9454
    %v9456 = vpop.f32.mrb[0].mxu0
    %v9457 = vadd.f32 %v9354, %v9456
    %v9458 = vpop.f32.mrb[0].mxu0
    %v9459 = vadd.f32 %v9356, %v9458
    %v9460 = vpop.f32.mrb[0].mxu0
    %v9461 = vadd.f32 %v9358, %v9460
    %9462 = vmatprep.mubr.bf16.mxu0 %v3646
    %9463 = vmatmul.mubr.bf16.gmra.mrb[0].mxu0 %v3645
    %v9464 = vpop.f32.mrb[0].mxu0
    %v9465 = vadd.f32 %v9362, %v9464
    %v9466 = vpop.f32.mrb[0].mxu0
    %v9467 = vadd.f32 %v9364, %v9466
    %v9468 = vpop.f32.mrb[0].mxu0
    %v9469 = vadd.f32 %v9366, %v9468
    %v9470 = vpop.f32.mrb[0].mxu0
    %v9471 = vadd.f32 %v9368, %v9470
    %9472 = vmatprep.mubr.bf16.mxu0 %v3648
    %9473 = vmatmul.mubr.bf16.gmra.mrb[0].mxu0 %v3647
    %v9474 = vpop.f32.mrb[0].mxu0
    %v9475 = vadd.f32 %v9372, %v9474
    %v9476 = vpop.f32.mrb[0].mxu0
    %v9477 = vadd.f32 %v9374, %v9476
    %v9478 = vpop.f32.mrb[0].mxu0
    %v9479 = vadd.f32 %v9376, %v9478
    %v9480 = vpop.f32.mrb[0].mxu0
    %v9481 = vadd.f32 %v9378, %v9480
    %9482 = vmatprep.mubr.bf16.mxu0 0
    %9483 = vmatmul.mubr.bf16.gmra.mrb[0].mxu0 0
    %v9484 = vpop.f32.mrb[0].mxu0
    %v9485 = vadd.f32 %v9382, %v9484
    %v9486 = vpop.f32.mrb[0].mxu0
    %v9487 = vadd.f32 %v9384, %v9486
    %v9488 = vpop.f32.mrb[0].mxu0
    %v9489 = vadd.f32 %v9386, %v9488
    %v9490 = vpop.f32.mrb[0].mxu0
    %v9491 = vadd.f32 %v9388, %v9490
    %9492 = vdwg.mxu0
    %9493 = vmatprep.subr.bf16.mxu0 %v6726
    %9494 = vmatpush1.bf16.msra.mxu0 %v6725
    %9495 = vmatprep.subr.bf16.mxu0 %v6734
    %9496 = vmatpush1.bf16.msra.mxu0 %v6733
    %9497 = vmatprep.subr.bf16.mxu0 %v6742
    %9498 = vmatpush1.bf16.msra.mxu0 %v6741
    %9499 = vmatprep.subr.bf16.mxu0 %v6750
    %9500 = vmatpush1.bf16.msra.mxu0 %v6749
    %9501 = vmatprep.subr.bf16.mxu0 %v6758
    %9502 = vmatpush1.bf16.msra.mxu0 %v6757
    %9503 = vmatprep.subr.bf16.mxu0 %v6766
    %9504 = vmatpush1.bf16.msra.mxu0 %v6765
    %9505 = vmatprep.subr.bf16.mxu0 %v6774
    %9506 = vmatpush1.bf16.msra.mxu0 %v6773
    %9507 = vmatprep.subr.bf16.mxu0 %v6782
    %9508 = vmatpush1.bf16.msra.mxu0 %v6781
    %9509 = vmatprep.subr.bf16.mxu0 %v6790
    %9510 = vmatpush1.bf16.msra.mxu0 %v6789
    %9511 = vmatprep.subr.bf16.mxu0 %v6798
    %9512 = vmatpush1.bf16.msra.mxu0 %v6797
    %9513 = vmatprep.subr.bf16.mxu0 %v6806
    %9514 = vmatpush1.bf16.msra.mxu0 %v6805
    %9515 = vmatprep.subr.bf16.mxu0 %v6814
    %9516 = vmatpush1.bf16.msra.mxu0 %v6813
    %9517 = vmatprep.subr.bf16.mxu0 %v6822
    %9518 = vmatpush1.bf16.msra.mxu0 %v6821
    %9519 = vmatprep.subr.bf16.mxu0 %v6830
    %9520 = vmatpush1.bf16.msra.mxu0 %v6829
    %9521 = vmatprep.subr.bf16.mxu0 %v6838
    %9522 = vmatpush1.bf16.msra.mxu0 %v6837
    %9523 = vmatprep.subr.bf16.mxu0 %v6846
    %9524 = vmatpush1.bf16.msra.mxu0 %v6845
    %9525 = vmatprep.mubr.bf16.mxu0 0
    %9526 = vmatmul.mubr.bf16.gmra.mrb[0].mxu0 0
    %v9527 = vpop.f32.mrb[0].mxu0
    %v9528 = vadd.f32 0.0, %v9527
    %v9529 = vpop.f32.mrb[0].mxu0
    %v9530 = vadd.f32 0.0, %v9529
    %v9531 = vpop.f32.mrb[0].mxu0
    %v9532 = vadd.f32 0.0, %v9531
    %v9533 = vpop.f32.mrb[0].mxu0
    %v9534 = vadd.f32 0.0, %v9533
    %9535 = vmatprep.mubr.bf16.mxu0 %v3622
    %9536 = vmatmul.mubr.bf16.gmra.mrb[0].mxu0 %v3621
    %v9537 = vpop.f32.mrb[0].mxu0
    %v9538 = vadd.f32 0.0, %v9537
    %v9539 = vpop.f32.mrb[0].mxu0
    %v9540 = vadd.f32 0.0, %v9539
    %v9541 = vpop.f32.mrb[0].mxu0
    %v9542 = vadd.f32 0.0, %v9541
    %v9543 = vpop.f32.mrb[0].mxu0
    %v9544 = vadd.f32 0.0, %v9543
    %9545 = vmatprep.mubr.bf16.mxu0 %v3624
    %9546 = vmatmul.mubr.bf16.gmra.mrb[0].mxu0 %v3623
    %v9547 = vpop.f32.mrb[0].mxu0
    %v9548 = vadd.f32 0.0, %v9547
    %v9549 = vpop.f32.mrb[0].mxu0
    %v9550 = vadd.f32 0.0, %v9549
    %v9551 = vpop.f32.mrb[0].mxu0
    %v9552 = vadd.f32 0.0, %v9551
    %v9553 = vpop.f32.mrb[0].mxu0
    %v9554 = vadd.f32 0.0, %v9553
    %9555 = vmatprep.mubr.bf16.mxu0 %v3626
    %9556 = vmatmul.mubr.bf16.gmra.mrb[0].mxu0 %v3625
    %v9557 = vpop.f32.mrb[0].mxu0
    %v9558 = vadd.f32 0.0, %v9557
    %v9559 = vpop.f32.mrb[0].mxu0
    %v9560 = vadd.f32 0.0, %v9559
    %v9561 = vpop.f32.mrb[0].mxu0
    %v9562 = vadd.f32 0.0, %v9561
    %v9563 = vpop.f32.mrb[0].mxu0
    %v9564 = vadd.f32 0.0, %v9563
    %9565 = vmatprep.mubr.bf16.mxu0 %v3628
    %9566 = vmatmul.mubr.bf16.gmra.mrb[0].mxu0 %v3627
    %v9567 = vpop.f32.mrb[0].mxu0
    %v9568 = vadd.f32 0.0, %v9567
    %v9569 = vpop.f32.mrb[0].mxu0
    %v9570 = vadd.f32 0.0, %v9569
    %v9571 = vpop.f32.mrb[0].mxu0
    %v9572 = vadd.f32 0.0, %v9571
    %v9573 = vpop.f32.mrb[0].mxu0
    %v9574 = vadd.f32 0.0, %v9573
    %9575 = vmatprep.mubr.bf16.mxu0 %v3630
    %9576 = vmatmul.mubr.bf16.gmra.mrb[0].mxu0 %v3629
    %v9577 = vpop.f32.mrb[0].mxu0
    %v9578 = vadd.f32 0.0, %v9577
    %v9579 = vpop.f32.mrb[0].mxu0
    %v9580 = vadd.f32 0.0, %v9579
    %v9581 = vpop.f32.mrb[0].mxu0
    %v9582 = vadd.f32 0.0, %v9581
    %v9583 = vpop.f32.mrb[0].mxu0
    %v9584 = vadd.f32 0.0, %v9583
    %9585 = vmatprep.mubr.bf16.mxu0 %v3632
    %9586 = vmatmul.mubr.bf16.gmra.mrb[0].mxu0 %v3631
    %v9587 = vpop.f32.mrb[0].mxu0
    %v9588 = vadd.f32 0.0, %v9587
    %v9589 = vpop.f32.mrb[0].mxu0
    %v9590 = vadd.f32 0.0, %v9589
    %v9591 = vpop.f32.mrb[0].mxu0
    %v9592 = vadd.f32 0.0, %v9591
    %v9593 = vpop.f32.mrb[0].mxu0
    %v9594 = vadd.f32 0.0, %v9593
    %9595 = vdwg.mxu0
    %9596 = vmatprep.subr.bf16.mxu0 %v6854
    %9597 = vmatpush1.bf16.msra.mxu0 %v6853
    %9598 = vmatprep.subr.bf16.mxu0 %v6862
    %9599 = vmatpush1.bf16.msra.mxu0 %v6861
    %9600 = vmatprep.subr.bf16.mxu0 %v6870
    %9601 = vmatpush1.bf16.msra.mxu0 %v6869
    %9602 = vmatprep.subr.bf16.mxu0 %v6878
    %9603 = vmatpush1.bf16.msra.mxu0 %v6877
    %9604 = vmatprep.subr.bf16.mxu0 %v6886
    %9605 = vmatpush1.bf16.msra.mxu0 %v6885
    %9606 = vmatprep.subr.bf16.mxu0 %v6894
    %9607 = vmatpush1.bf16.msra.mxu0 %v6893
    %9608 = vmatprep.subr.bf16.mxu0 %v6902
    %9609 = vmatpush1.bf16.msra.mxu0 %v6901
    %9610 = vmatprep.subr.bf16.mxu0 %v6910
    %9611 = vmatpush1.bf16.msra.mxu0 %v6909
    %9612 = vmatprep.subr.bf16.mxu0 %v6918
    %9613 = vmatpush1.bf16.msra.mxu0 %v6917
    %9614 = vmatprep.subr.bf16.mxu0 %v6926
    %9615 = vmatpush1.bf16.msra.mxu0 %v6925
    %9616 = vmatprep.subr.bf16.mxu0 %v6934
    %9617 = vmatpush1.bf16.msra.mxu0 %v6933
    %9618 = vmatprep.subr.bf16.mxu0 %v6942
    %9619 = vmatpush1.bf16.msra.mxu0 %v6941
    %9620 = vmatprep.subr.bf16.mxu0 %v6950
    %9621 = vmatpush1.bf16.msra.mxu0 %v6949
    %9622 = vmatprep.subr.bf16.mxu0 %v6958
    %9623 = vmatpush1.bf16.msra.mxu0 %v6957
    %9624 = vmatprep.subr.bf16.mxu0 %v6966
    %9625 = vmatpush1.bf16.msra.mxu0 %v6965
    %9626 = vmatprep.subr.bf16.mxu0 %v6974
    %9627 = vmatpush1.bf16.msra.mxu0 %v6973
    %9628 = vmatprep.mubr.bf16.mxu0 0
    %9629 = vmatmul.mubr.bf16.gmra.mrb[0].mxu0 0
    %v9630 = vpop.f32.mrb[0].mxu0
    %v9631 = vadd.f32 %v9528, %v9630
    %v9632 = vpop.f32.mrb[0].mxu0
    %v9633 = vadd.f32 %v9530, %v9632
    %v9634 = vpop.f32.mrb[0].mxu0
    %v9635 = vadd.f32 %v9532, %v9634
    %v9636 = vpop.f32.mrb[0].mxu0
    %v9637 = vadd.f32 %v9534, %v9636
    %9638 = vmatprep.mubr.bf16.mxu0 %v3636
    %9639 = vmatmul.mubr.bf16.gmra.mrb[0].mxu0 %v3635
    %v9640 = vpop.f32.mrb[0].mxu0
    %v9641 = vadd.f32 %v9538, %v9640
    %v9642 = vpop.f32.mrb[0].mxu0
    %v9643 = vadd.f32 %v9540, %v9642
    %v9644 = vpop.f32.mrb[0].mxu0
    %v9645 = vadd.f32 %v9542, %v9644
    %v9646 = vpop.f32.mrb[0].mxu0
    %v9647 = vadd.f32 %v9544, %v9646
    %9648 = vmatprep.mubr.bf16.mxu0 %v3638
    %9649 = vmatmul.mubr.bf16.gmra.mrb[0].mxu0 %v3637
    %v9650 = vpop.f32.mrb[0].mxu0
    %v9651 = vadd.f32 %v9548, %v9650
    %v9652 = vpop.f32.mrb[0].mxu0
    %v9653 = vadd.f32 %v9550, %v9652
    %v9654 = vpop.f32.mrb[0].mxu0
    %v9655 = vadd.f32 %v9552, %v9654
    %v9656 = vpop.f32.mrb[0].mxu0
    %v9657 = vadd.f32 %v9554, %v9656
    %9658 = vmatprep.mubr.bf16.mxu0 %v3640
    %9659 = vmatmul.mubr.bf16.gmra.mrb[0].mxu0 %v3639
    %v9660 = vpop.f32.mrb[0].mxu0
    %v9661 = vadd.f32 %v9558, %v9660
    %v9662 = vpop.f32.mrb[0].mxu0
    %v9663 = vadd.f32 %v9560, %v9662
    %v9664 = vpop.f32.mrb[0].mxu0
    %v9665 = vadd.f32 %v9562, %v9664
    %v9666 = vpop.f32.mrb[0].mxu0
    %v9667 = vadd.f32 %v9564, %v9666
    %9668 = vmatprep.mubr.bf16.mxu0 %v3642
    %9669 = vmatmul.mubr.bf16.gmra.mrb[0].mxu0 %v3641
    %v9670 = vpop.f32.mrb[0].mxu0
    %v9671 = vadd.f32 %v9568, %v9670
    %v9672 = vpop.f32.mrb[0].mxu0
    %v9673 = vadd.f32 %v9570, %v9672
    %v9674 = vpop.f32.mrb[0].mxu0
    %v9675 = vadd.f32 %v9572, %v9674
    %v9676 = vpop.f32.mrb[0].mxu0
    %v9677 = vadd.f32 %v9574, %v9676
    %9678 = vmatprep.mubr.bf16.mxu0 %v3644
    %9679 = vmatmul.mubr.bf16.gmra.mrb[0].mxu0 %v3643
    %v9680 = vpop.f32.mrb[0].mxu0
    %v9681 = vadd.f32 %v9578, %v9680
    %v9682 = vpop.f32.mrb[0].mxu0
    %v9683 = vadd.f32 %v9580, %v9682
    %v9684 = vpop.f32.mrb[0].mxu0
    %v9685 = vadd.f32 %v9582, %v9684
    %v9686 = vpop.f32.mrb[0].mxu0
    %v9687 = vadd.f32 %v9584, %v9686
    %9688 = vmatprep.mubr.bf16.mxu0 %v3646
    %9689 = vmatmul.mubr.bf16.gmra.mrb[0].mxu0 %v3645
    %v9690 = vpop.f32.mrb[0].mxu0
    %v9691 = vadd.f32 %v9588, %v9690
    %v9692 = vpop.f32.mrb[0].mxu0
    %v9693 = vadd.f32 %v9590, %v9692
    %v9694 = vpop.f32.mrb[0].mxu0
    %v9695 = vadd.f32 %v9592, %v9694
    %v9696 = vpop.f32.mrb[0].mxu0
    %v9697 = vadd.f32 %v9594, %v9696
    %9698 = vdwg.mxu0
    %9699 = vmatprep.subr.bf16.mxu0 %v6982
    %9700 = vmatpush1.bf16.msra.mxu0 %v6981
    %9701 = vmatprep.subr.bf16.mxu0 %v6990
    %9702 = vmatpush1.bf16.msra.mxu0 %v6989
    %9703 = vmatprep.subr.bf16.mxu0 %v6998
    %9704 = vmatpush1.bf16.msra.mxu0 %v6997
    %9705 = vmatprep.subr.bf16.mxu0 %v7006
    %9706 = vmatpush1.bf16.msra.mxu0 %v7005
    %9707 = vmatprep.subr.bf16.mxu0 %v7014
    %9708 = vmatpush1.bf16.msra.mxu0 %v7013
    %9709 = vmatprep.subr.bf16.mxu0 %v7022
    %9710 = vmatpush1.bf16.msra.mxu0 %v7021
    %9711 = vmatprep.subr.bf16.mxu0 %v7030
    %9712 = vmatpush1.bf16.msra.mxu0 %v7029
    %9713 = vmatprep.subr.bf16.mxu0 %v7038
    %9714 = vmatpush1.bf16.msra.mxu0 %v7037
    %9715 = vmatprep.subr.bf16.mxu0 %v7046
    %9716 = vmatpush1.bf16.msra.mxu0 %v7045
    %9717 = vmatprep.subr.bf16.mxu0 %v7054
    %9718 = vmatpush1.bf16.msra.mxu0 %v7053
    %9719 = vmatprep.subr.bf16.mxu0 %v7062
    %9720 = vmatpush1.bf16.msra.mxu0 %v7061
    %9721 = vmatprep.subr.bf16.mxu0 %v7070
    %9722 = vmatpush1.bf16.msra.mxu0 %v7069
    %9723 = vmatprep.subr.bf16.mxu0 %v7078
    %9724 = vmatpush1.bf16.msra.mxu0 %v7077
    %9725 = vmatprep.subr.bf16.mxu0 %v7086
    %9726 = vmatpush1.bf16.msra.mxu0 %v7085
    %9727 = vmatprep.subr.bf16.mxu0 %v7094
    %9728 = vmatpush1.bf16.msra.mxu0 %v7093
    %9729 = vmatprep.subr.bf16.mxu0 %v7102
    %9730 = vmatpush1.bf16.msra.mxu0 %v7101
    %9731 = vmatprep.mubr.bf16.mxu0 %v3622
    %9732 = vmatmul.mubr.bf16.gmra.mrb[0].mxu0 %v3621
    %v9733 = vpop.f32.mrb[0].mxu0
    %v9734 = vadd.f32 %v9631, %v9733
    %v9735 = vpop.f32.mrb[0].mxu0
    %v9736 = vadd.f32 %v9633, %v9735
    %v9737 = vpop.f32.mrb[0].mxu0
    %v9738 = vadd.f32 %v9635, %v9737
    %v9739 = vpop.f32.mrb[0].mxu0
    %v9740 = vadd.f32 %v9637, %v9739
    %9741 = vmatprep.mubr.bf16.mxu0 %v3624
    %9742 = vmatmul.mubr.bf16.gmra.mrb[0].mxu0 %v3623
    %v9743 = vpop.f32.mrb[0].mxu0
    %v9744 = vadd.f32 %v9641, %v9743
    %v9745 = vpop.f32.mrb[0].mxu0
    %v9746 = vadd.f32 %v9643, %v9745
    %v9747 = vpop.f32.mrb[0].mxu0
    %v9748 = vadd.f32 %v9645, %v9747
    %v9749 = vpop.f32.mrb[0].mxu0
    %v9750 = vadd.f32 %v9647, %v9749
    %9751 = vmatprep.mubr.bf16.mxu0 %v3626
    %9752 = vmatmul.mubr.bf16.gmra.mrb[0].mxu0 %v3625
    %v9753 = vpop.f32.mrb[0].mxu0
    %v9754 = vadd.f32 %v9651, %v9753
    %v9755 = vpop.f32.mrb[0].mxu0
    %v9756 = vadd.f32 %v9653, %v9755
    %v9757 = vpop.f32.mrb[0].mxu0
    %v9758 = vadd.f32 %v9655, %v9757
    %v9759 = vpop.f32.mrb[0].mxu0
    %v9760 = vadd.f32 %v9657, %v9759
    %9761 = vmatprep.mubr.bf16.mxu0 %v3628
    %9762 = vmatmul.mubr.bf16.gmra.mrb[0].mxu0 %v3627
    %v9763 = vpop.f32.mrb[0].mxu0
    %v9764 = vadd.f32 %v9661, %v9763
    %v9765 = vpop.f32.mrb[0].mxu0
    %v9766 = vadd.f32 %v9663, %v9765
    %v9767 = vpop.f32.mrb[0].mxu0
    %v9768 = vadd.f32 %v9665, %v9767
    %v9769 = vpop.f32.mrb[0].mxu0
    %v9770 = vadd.f32 %v9667, %v9769
    %9771 = vmatprep.mubr.bf16.mxu0 %v3630
    %9772 = vmatmul.mubr.bf16.gmra.mrb[0].mxu0 %v3629
    %v9773 = vpop.f32.mrb[0].mxu0
    %v9774 = vadd.f32 %v9671, %v9773
    %v9775 = vpop.f32.mrb[0].mxu0
    %v9776 = vadd.f32 %v9673, %v9775
    %v9777 = vpop.f32.mrb[0].mxu0
    %v9778 = vadd.f32 %v9675, %v9777
    %v9779 = vpop.f32.mrb[0].mxu0
    %v9780 = vadd.f32 %v9677, %v9779
    %9781 = vmatprep.mubr.bf16.mxu0 %v3632
    %9782 = vmatmul.mubr.bf16.gmra.mrb[0].mxu0 %v3631
    %v9783 = vpop.f32.mrb[0].mxu0
    %v9784 = vadd.f32 %v9681, %v9783
    %v9785 = vpop.f32.mrb[0].mxu0
    %v9786 = vadd.f32 %v9683, %v9785
    %v9787 = vpop.f32.mrb[0].mxu0
    %v9788 = vadd.f32 %v9685, %v9787
    %v9789 = vpop.f32.mrb[0].mxu0
    %v9790 = vadd.f32 %v9687, %v9789
    %9791 = vmatprep.mubr.bf16.mxu0 %v3634
    %9792 = vmatmul.mubr.bf16.gmra.mrb[0].mxu0 %v3633
    %v9793 = vpop.f32.mrb[0].mxu0
    %v9794 = vadd.f32 %v9691, %v9793
    %v9795 = vpop.f32.mrb[0].mxu0
    %v9796 = vadd.f32 %v9693, %v9795
    %v9797 = vpop.f32.mrb[0].mxu0
    %v9798 = vadd.f32 %v9695, %v9797
    %v9799 = vpop.f32.mrb[0].mxu0
    %v9800 = vadd.f32 %v9697, %v9799
    %9801 = vdwg.mxu0
    %9802 = vmatprep.subr.bf16.mxu0 %v7110
    %9803 = vmatpush1.bf16.msra.mxu0 %v7109
    %9804 = vmatprep.subr.bf16.mxu0 %v7118
    %9805 = vmatpush1.bf16.msra.mxu0 %v7117
    %9806 = vmatprep.subr.bf16.mxu0 %v7126
    %9807 = vmatpush1.bf16.msra.mxu0 %v7125
    %9808 = vmatprep.subr.bf16.mxu0 %v7134
    %9809 = vmatpush1.bf16.msra.mxu0 %v7133
    %9810 = vmatprep.subr.bf16.mxu0 %v7142
    %9811 = vmatpush1.bf16.msra.mxu0 %v7141
    %9812 = vmatprep.subr.bf16.mxu0 %v7150
    %9813 = vmatpush1.bf16.msra.mxu0 %v7149
    %9814 = vmatprep.subr.bf16.mxu0 %v7158
    %9815 = vmatpush1.bf16.msra.mxu0 %v7157
    %9816 = vmatprep.subr.bf16.mxu0 %v7166
    %9817 = vmatpush1.bf16.msra.mxu0 %v7165
    %9818 = vmatprep.subr.bf16.mxu0 %v7174
    %9819 = vmatpush1.bf16.msra.mxu0 %v7173
    %9820 = vmatprep.subr.bf16.mxu0 %v7182
    %9821 = vmatpush1.bf16.msra.mxu0 %v7181
    %9822 = vmatprep.subr.bf16.mxu0 %v7190
    %9823 = vmatpush1.bf16.msra.mxu0 %v7189
    %9824 = vmatprep.subr.bf16.mxu0 %v7198
    %9825 = vmatpush1.bf16.msra.mxu0 %v7197
    %9826 = vmatprep.subr.bf16.mxu0 %v7206
    %9827 = vmatpush1.bf16.msra.mxu0 %v7205
    %9828 = vmatprep.subr.bf16.mxu0 %v7214
    %9829 = vmatpush1.bf16.msra.mxu0 %v7213
    %9830 = vmatprep.subr.bf16.mxu0 %v7222
    %9831 = vmatpush1.bf16.msra.mxu0 %v7221
    %9832 = vmatprep.subr.bf16.mxu0 %v7230
    %9833 = vmatpush1.bf16.msra.mxu0 %v7229
    %9834 = vmatprep.mubr.bf16.mxu0 %v3636
    %9835 = vmatmul.mubr.bf16.gmra.mrb[0].mxu0 %v3635
    %v9836 = vpop.f32.mrb[0].mxu0
    %v9837 = vadd.f32 %v9734, %v9836
    %v9838 = vpop.f32.mrb[0].mxu0
    %v9839 = vadd.f32 %v9736, %v9838
    %v9840 = vpop.f32.mrb[0].mxu0
    %v9841 = vadd.f32 %v9738, %v9840
    %v9842 = vpop.f32.mrb[0].mxu0
    %v9843 = vadd.f32 %v9740, %v9842
    %9844 = vmatprep.mubr.bf16.mxu0 %v3638
    %9845 = vmatmul.mubr.bf16.gmra.mrb[0].mxu0 %v3637
    %v9846 = vpop.f32.mrb[0].mxu0
    %v9847 = vadd.f32 %v9744, %v9846
    %v9848 = vpop.f32.mrb[0].mxu0
    %v9849 = vadd.f32 %v9746, %v9848
    %v9850 = vpop.f32.mrb[0].mxu0
    %v9851 = vadd.f32 %v9748, %v9850
    %v9852 = vpop.f32.mrb[0].mxu0
    %v9853 = vadd.f32 %v9750, %v9852
    %9854 = vmatprep.mubr.bf16.mxu0 %v3640
    %9855 = vmatmul.mubr.bf16.gmra.mrb[0].mxu0 %v3639
    %v9856 = vpop.f32.mrb[0].mxu0
    %v9857 = vadd.f32 %v9754, %v9856
    %v9858 = vpop.f32.mrb[0].mxu0
    %v9859 = vadd.f32 %v9756, %v9858
    %v9860 = vpop.f32.mrb[0].mxu0
    %v9861 = vadd.f32 %v9758, %v9860
    %v9862 = vpop.f32.mrb[0].mxu0
    %v9863 = vadd.f32 %v9760, %v9862
    %9864 = vmatprep.mubr.bf16.mxu0 %v3642
    %9865 = vmatmul.mubr.bf16.gmra.mrb[0].mxu0 %v3641
    %v9866 = vpop.f32.mrb[0].mxu0
    %v9867 = vadd.f32 %v9764, %v9866
    %v9868 = vpop.f32.mrb[0].mxu0
    %v9869 = vadd.f32 %v9766, %v9868
    %v9870 = vpop.f32.mrb[0].mxu0
    %v9871 = vadd.f32 %v9768, %v9870
    %v9872 = vpop.f32.mrb[0].mxu0
    %v9873 = vadd.f32 %v9770, %v9872
    %9874 = vmatprep.mubr.bf16.mxu0 %v3644
    %9875 = vmatmul.mubr.bf16.gmra.mrb[0].mxu0 %v3643
    %v9876 = vpop.f32.mrb[0].mxu0
    %v9877 = vadd.f32 %v9774, %v9876
    %v9878 = vpop.f32.mrb[0].mxu0
    %v9879 = vadd.f32 %v9776, %v9878
    %v9880 = vpop.f32.mrb[0].mxu0
    %v9881 = vadd.f32 %v9778, %v9880
    %v9882 = vpop.f32.mrb[0].mxu0
    %v9883 = vadd.f32 %v9780, %v9882
    %9884 = vmatprep.mubr.bf16.mxu0 %v3646
    %9885 = vmatmul.mubr.bf16.gmra.mrb[0].mxu0 %v3645
    %v9886 = vpop.f32.mrb[0].mxu0
    %v9887 = vadd.f32 %v9784, %v9886
    %v9888 = vpop.f32.mrb[0].mxu0
    %v9889 = vadd.f32 %v9786, %v9888
    %v9890 = vpop.f32.mrb[0].mxu0
    %v9891 = vadd.f32 %v9788, %v9890
    %v9892 = vpop.f32.mrb[0].mxu0
    %v9893 = vadd.f32 %v9790, %v9892
    %9894 = vmatprep.mubr.bf16.mxu0 %v3648
    %9895 = vmatmul.mubr.bf16.gmra.mrb[0].mxu0 %v3647
    %v9896 = vpop.f32.mrb[0].mxu0
    %v9897 = vadd.f32 %v9794, %v9896
    %v9898 = vpop.f32.mrb[0].mxu0
    %v9899 = vadd.f32 %v9796, %v9898
    %v9900 = vpop.f32.mrb[0].mxu0
    %v9901 = vadd.f32 %v9798, %v9900
    %v9902 = vpop.f32.mrb[0].mxu0
    %v9903 = vadd.f32 %v9800, %v9902
    %9904 = vdwg.mxu0
    %9905 = vmatprep.subr.bf16.mxu0 %v7238
    %9906 = vmatpush1.bf16.msra.mxu0 %v7237
    %9907 = vmatprep.subr.bf16.mxu0 %v7246
    %9908 = vmatpush1.bf16.msra.mxu0 %v7245
    %9909 = vmatprep.subr.bf16.mxu0 %v7254
    %9910 = vmatpush1.bf16.msra.mxu0 %v7253
    %9911 = vmatprep.subr.bf16.mxu0 %v7262
    %9912 = vmatpush1.bf16.msra.mxu0 %v7261
    %9913 = vmatprep.subr.bf16.mxu0 %v7270
    %9914 = vmatpush1.bf16.msra.mxu0 %v7269
    %9915 = vmatprep.subr.bf16.mxu0 %v7278
    %9916 = vmatpush1.bf16.msra.mxu0 %v7277
    %9917 = vmatprep.subr.bf16.mxu0 %v7286
    %9918 = vmatpush1.bf16.msra.mxu0 %v7285
    %9919 = vmatprep.subr.bf16.mxu0 %v7294
    %9920 = vmatpush1.bf16.msra.mxu0 %v7293
    %9921 = vmatprep.subr.bf16.mxu0 %v7302
    %9922 = vmatpush1.bf16.msra.mxu0 %v7301
    %9923 = vmatprep.subr.bf16.mxu0 %v7310
    %9924 = vmatpush1.bf16.msra.mxu0 %v7309
    %9925 = vmatprep.subr.bf16.mxu0 %v7318
    %9926 = vmatpush1.bf16.msra.mxu0 %v7317
    %9927 = vmatprep.subr.bf16.mxu0 %v7326
    %9928 = vmatpush1.bf16.msra.mxu0 %v7325
    %9929 = vmatprep.subr.bf16.mxu0 %v7334
    %9930 = vmatpush1.bf16.msra.mxu0 %v7333
    %9931 = vmatprep.subr.bf16.mxu0 %v7342
    %9932 = vmatpush1.bf16.msra.mxu0 %v7341
    %9933 = vmatprep.subr.bf16.mxu0 %v7350
    %9934 = vmatpush1.bf16.msra.mxu0 %v7349
    %9935 = vmatprep.subr.bf16.mxu0 %v7358
    %9936 = vmatpush1.bf16.msra.mxu0 %v7357
    %9937 = vmatprep.mubr.bf16.mxu0 %v3624
    %9938 = vmatmul.mubr.bf16.gmra.mrb[0].mxu0 %v3623
    %v9939 = vpop.f32.mrb[0].mxu0
    %v9940 = vadd.f32 %v9837, %v9939
    %v9941 = vpop.f32.mrb[0].mxu0
    %v9942 = vadd.f32 %v9839, %v9941
    %v9943 = vpop.f32.mrb[0].mxu0
    %v9944 = vadd.f32 %v9841, %v9943
    %v9945 = vpop.f32.mrb[0].mxu0
    %v9946 = vadd.f32 %v9843, %v9945
    %9947 = vmatprep.mubr.bf16.mxu0 %v3626
    %9948 = vmatmul.mubr.bf16.gmra.mrb[0].mxu0 %v3625
    %v9949 = vpop.f32.mrb[0].mxu0
    %v9950 = vadd.f32 %v9847, %v9949
    %v9951 = vpop.f32.mrb[0].mxu0
    %v9952 = vadd.f32 %v9849, %v9951
    %v9953 = vpop.f32.mrb[0].mxu0
    %v9954 = vadd.f32 %v9851, %v9953
    %v9955 = vpop.f32.mrb[0].mxu0
    %v9956 = vadd.f32 %v9853, %v9955
    %9957 = vmatprep.mubr.bf16.mxu0 %v3628
    %9958 = vmatmul.mubr.bf16.gmra.mrb[0].mxu0 %v3627
    %v9959 = vpop.f32.mrb[0].mxu0
    %v9960 = vadd.f32 %v9857, %v9959
    %v9961 = vpop.f32.mrb[0].mxu0
    %v9962 = vadd.f32 %v9859, %v9961
    %v9963 = vpop.f32.mrb[0].mxu0
    %v9964 = vadd.f32 %v9861, %v9963
    %v9965 = vpop.f32.mrb[0].mxu0
    %v9966 = vadd.f32 %v9863, %v9965
    %9967 = vmatprep.mubr.bf16.mxu0 %v3630
    %9968 = vmatmul.mubr.bf16.gmra.mrb[0].mxu0 %v3629
    %v9969 = vpop.f32.mrb[0].mxu0
    %v9970 = vadd.f32 %v9867, %v9969
    %v9971 = vpop.f32.mrb[0].mxu0
    %v9972 = vadd.f32 %v9869, %v9971
    %v9973 = vpop.f32.mrb[0].mxu0
    %v9974 = vadd.f32 %v9871, %v9973
    %v9975 = vpop.f32.mrb[0].mxu0
    %v9976 = vadd.f32 %v9873, %v9975
    %9977 = vmatprep.mubr.bf16.mxu0 %v3632
    %9978 = vmatmul.mubr.bf16.gmra.mrb[0].mxu0 %v3631
    %v9979 = vpop.f32.mrb[0].mxu0
    %v9980 = vadd.f32 %v9877, %v9979
    %v9981 = vpop.f32.mrb[0].mxu0
    %v9982 = vadd.f32 %v9879, %v9981
    %v9983 = vpop.f32.mrb[0].mxu0
    %v9984 = vadd.f32 %v9881, %v9983
    %v9985 = vpop.f32.mrb[0].mxu0
    %v9986 = vadd.f32 %v9883, %v9985
    %9987 = vmatprep.mubr.bf16.mxu0 %v3634
    %9988 = vmatmul.mubr.bf16.gmra.mrb[0].mxu0 %v3633
    %v9989 = vpop.f32.mrb[0].mxu0
    %v9990 = vadd.f32 %v9887, %v9989
    %v9991 = vpop.f32.mrb[0].mxu0
    %v9992 = vadd.f32 %v9889, %v9991
    %v9993 = vpop.f32.mrb[0].mxu0
    %v9994 = vadd.f32 %v9891, %v9993
    %v9995 = vpop.f32.mrb[0].mxu0
    %v9996 = vadd.f32 %v9893, %v9995
    %9997 = vmatprep.mubr.bf16.mxu0 0
    %9998 = vmatmul.mubr.bf16.gmra.mrb[0].mxu0 0
    %v9999 = vpop.f32.mrb[0].mxu0
    %v10000 = vadd.f32 %v9897, %v9999
    %v10001 = vpop.f32.mrb[0].mxu0
    %v10002 = vadd.f32 %v9899, %v10001
    %v10003 = vpop.f32.mrb[0].mxu0
    %v10004 = vadd.f32 %v9901, %v10003
    %v10005 = vpop.f32.mrb[0].mxu0
    %v10006 = vadd.f32 %v9903, %v10005
    %10007 = vdwg.mxu0
    %10008 = vmatprep.subr.bf16.mxu0 %v7366
    %10009 = vmatpush1.bf16.msra.mxu0 %v7365
    %10010 = vmatprep.subr.bf16.mxu0 %v7374
    %10011 = vmatpush1.bf16.msra.mxu0 %v7373
    %10012 = vmatprep.subr.bf16.mxu0 %v7382
    %10013 = vmatpush1.bf16.msra.mxu0 %v7381
    %10014 = vmatprep.subr.bf16.mxu0 %v7390
    %10015 = vmatpush1.bf16.msra.mxu0 %v7389
    %10016 = vmatprep.subr.bf16.mxu0 %v7398
    %10017 = vmatpush1.bf16.msra.mxu0 %v7397
    %10018 = vmatprep.subr.bf16.mxu0 %v7406
    %10019 = vmatpush1.bf16.msra.mxu0 %v7405
    %10020 = vmatprep.subr.bf16.mxu0 %v7414
    %10021 = vmatpush1.bf16.msra.mxu0 %v7413
    %10022 = vmatprep.subr.bf16.mxu0 %v7422
    %10023 = vmatpush1.bf16.msra.mxu0 %v7421
    %10024 = vmatprep.subr.bf16.mxu0 %v7430
    %10025 = vmatpush1.bf16.msra.mxu0 %v7429
    %10026 = vmatprep.subr.bf16.mxu0 %v7438
    %10027 = vmatpush1.bf16.msra.mxu0 %v7437
    %10028 = vmatprep.subr.bf16.mxu0 %v7446
    %10029 = vmatpush1.bf16.msra.mxu0 %v7445
    %10030 = vmatprep.subr.bf16.mxu0 %v7454
    %10031 = vmatpush1.bf16.msra.mxu0 %v7453
    %10032 = vmatprep.subr.bf16.mxu0 %v7462
    %10033 = vmatpush1.bf16.msra.mxu0 %v7461
    %10034 = vmatprep.subr.bf16.mxu0 %v7470
    %10035 = vmatpush1.bf16.msra.mxu0 %v7469
    %10036 = vmatprep.subr.bf16.mxu0 %v7478
    %10037 = vmatpush1.bf16.msra.mxu0 %v7477
    %10038 = vmatprep.subr.bf16.mxu0 %v7486
    %10039 = vmatpush1.bf16.msra.mxu0 %v7485
    %10040 = vmatprep.mubr.bf16.mxu0 %v3638
    %10041 = vmatmul.mubr.bf16.gmra.mrb[0].mxu0 %v3637
    %v10042 = vpop.f32.mrb[0].mxu0
    %v10043 = vadd.f32 %v9940, %v10042
    %v10044 = vpop.f32.mrb[0].mxu0
    %v10045 = vadd.f32 %v9942, %v10044
    %v10046 = vpop.f32.mrb[0].mxu0
    %v10047 = vadd.f32 %v9944, %v10046
    %v10048 = vpop.f32.mrb[0].mxu0
    %v10049 = vadd.f32 %v9946, %v10048
    %10050 = vmatprep.mubr.bf16.mxu0 %v3640
    %10051 = vmatmul.mubr.bf16.gmra.mrb[0].mxu0 %v3639
    %v10052 = vpop.f32.mrb[0].mxu0
    %v10053 = vadd.f32 %v9950, %v10052
    %v10054 = vpop.f32.mrb[0].mxu0
    %v10055 = vadd.f32 %v9952, %v10054
    %v10056 = vpop.f32.mrb[0].mxu0
    %v10057 = vadd.f32 %v9954, %v10056
    %v10058 = vpop.f32.mrb[0].mxu0
    %v10059 = vadd.f32 %v9956, %v10058
    %10060 = vmatprep.mubr.bf16.mxu0 %v3642
    %10061 = vmatmul.mubr.bf16.gmra.mrb[0].mxu0 %v3641
    %v10062 = vpop.f32.mrb[0].mxu0
    %v10063 = vadd.f32 %v9960, %v10062
    %v10064 = vpop.f32.mrb[0].mxu0
    %v10065 = vadd.f32 %v9962, %v10064
    %v10066 = vpop.f32.mrb[0].mxu0
    %v10067 = vadd.f32 %v9964, %v10066
    %v10068 = vpop.f32.mrb[0].mxu0
    %v10069 = vadd.f32 %v9966, %v10068
    %10070 = vmatprep.mubr.bf16.mxu0 %v3644
    %10071 = vmatmul.mubr.bf16.gmra.mrb[0].mxu0 %v3643
    %v10072 = vpop.f32.mrb[0].mxu0
    %v10073 = vadd.f32 %v9970, %v10072
    %v10074 = vpop.f32.mrb[0].mxu0
    %v10075 = vadd.f32 %v9972, %v10074
    %v10076 = vpop.f32.mrb[0].mxu0
    %v10077 = vadd.f32 %v9974, %v10076
    %v10078 = vpop.f32.mrb[0].mxu0
    %v10079 = vadd.f32 %v9976, %v10078
    %10080 = vmatprep.mubr.bf16.mxu0 %v3646
    %10081 = vmatmul.mubr.bf16.gmra.mrb[0].mxu0 %v3645
    %v10082 = vpop.f32.mrb[0].mxu0
    %v10083 = vadd.f32 %v9980, %v10082
    %v10084 = vpop.f32.mrb[0].mxu0
    %v10085 = vadd.f32 %v9982, %v10084
    %v10086 = vpop.f32.mrb[0].mxu0
    %v10087 = vadd.f32 %v9984, %v10086
    %v10088 = vpop.f32.mrb[0].mxu0
    %v10089 = vadd.f32 %v9986, %v10088
    %10090 = vmatprep.mubr.bf16.mxu0 %v3648
    %10091 = vmatmul.mubr.bf16.gmra.mrb[0].mxu0 %v3647
    %v10092 = vpop.f32.mrb[0].mxu0
    %v10093 = vadd.f32 %v9990, %v10092
    %v10094 = vpop.f32.mrb[0].mxu0
    %v10095 = vadd.f32 %v9992, %v10094
    %v10096 = vpop.f32.mrb[0].mxu0
    %v10097 = vadd.f32 %v9994, %v10096
    %v10098 = vpop.f32.mrb[0].mxu0
    %v10099 = vadd.f32 %v9996, %v10098
    %10100 = vmatprep.mubr.bf16.mxu0 0
    %10101 = vmatmul.mubr.bf16.gmra.mrb[0].mxu0 0
    %v10102 = vpop.f32.mrb[0].mxu0
    %v10103 = vadd.f32 %v10000, %v10102
    %v10104 = vpop.f32.mrb[0].mxu0
    %v10105 = vadd.f32 %v10002, %v10104
    %v10106 = vpop.f32.mrb[0].mxu0
    %v10107 = vadd.f32 %v10004, %v10106
    %v10108 = vpop.f32.mrb[0].mxu0
    %v10109 = vadd.f32 %v10006, %v10108
    %10110 = vdwg.mxu0
    %10111 = vmatprep.subr.bf16.mxu0 %v6728
    %10112 = vmatpush1.bf16.msra.mxu0 %v6727
    %10113 = vmatprep.subr.bf16.mxu0 %v6736
    %10114 = vmatpush1.bf16.msra.mxu0 %v6735
    %10115 = vmatprep.subr.bf16.mxu0 %v6744
    %10116 = vmatpush1.bf16.msra.mxu0 %v6743
    %10117 = vmatprep.subr.bf16.mxu0 %v6752
    %10118 = vmatpush1.bf16.msra.mxu0 %v6751
    %10119 = vmatprep.subr.bf16.mxu0 %v6760
    %10120 = vmatpush1.bf16.msra.mxu0 %v6759
    %10121 = vmatprep.subr.bf16.mxu0 %v6768
    %10122 = vmatpush1.bf16.msra.mxu0 %v6767
    %10123 = vmatprep.subr.bf16.mxu0 %v6776
    %10124 = vmatpush1.bf16.msra.mxu0 %v6775
    %10125 = vmatprep.subr.bf16.mxu0 %v6784
    %10126 = vmatpush1.bf16.msra.mxu0 %v6783
    %10127 = vmatprep.subr.bf16.mxu0 %v6792
    %10128 = vmatpush1.bf16.msra.mxu0 %v6791
    %10129 = vmatprep.subr.bf16.mxu0 %v6800
    %10130 = vmatpush1.bf16.msra.mxu0 %v6799
    %10131 = vmatprep.subr.bf16.mxu0 %v6808
    %10132 = vmatpush1.bf16.msra.mxu0 %v6807
    %10133 = vmatprep.subr.bf16.mxu0 %v6816
    %10134 = vmatpush1.bf16.msra.mxu0 %v6815
    %10135 = vmatprep.subr.bf16.mxu0 %v6824
    %10136 = vmatpush1.bf16.msra.mxu0 %v6823
    %10137 = vmatprep.subr.bf16.mxu0 %v6832
    %10138 = vmatpush1.bf16.msra.mxu0 %v6831
    %10139 = vmatprep.subr.bf16.mxu0 %v6840
    %10140 = vmatpush1.bf16.msra.mxu0 %v6839
    %10141 = vmatprep.subr.bf16.mxu0 %v6848
    %10142 = vmatpush1.bf16.msra.mxu0 %v6847
    %10143 = vmatprep.mubr.bf16.mxu0 0
    %10144 = vmatmul.mubr.bf16.gmra.mrb[0].mxu0 0
    %v10145 = vpop.f32.mrb[0].mxu0
    %v10146 = vadd.f32 0.0, %v10145
    %v10147 = vpop.f32.mrb[0].mxu0
    %v10148 = vadd.f32 0.0, %v10147
    %v10149 = vpop.f32.mrb[0].mxu0
    %v10150 = vadd.f32 0.0, %v10149
    %v10151 = vpop.f32.mrb[0].mxu0
    %v10152 = vadd.f32 0.0, %v10151
    %10153 = vmatprep.mubr.bf16.mxu0 %v3622
    %10154 = vmatmul.mubr.bf16.gmra.mrb[0].mxu0 %v3621
    %v10155 = vpop.f32.mrb[0].mxu0
    %v10156 = vadd.f32 0.0, %v10155
    %v10157 = vpop.f32.mrb[0].mxu0
    %v10158 = vadd.f32 0.0, %v10157
    %v10159 = vpop.f32.mrb[0].mxu0
    %v10160 = vadd.f32 0.0, %v10159
    %v10161 = vpop.f32.mrb[0].mxu0
    %v10162 = vadd.f32 0.0, %v10161
    %10163 = vmatprep.mubr.bf16.mxu0 %v3624
    %10164 = vmatmul.mubr.bf16.gmra.mrb[0].mxu0 %v3623
    %v10165 = vpop.f32.mrb[0].mxu0
    %v10166 = vadd.f32 0.0, %v10165
    %v10167 = vpop.f32.mrb[0].mxu0
    %v10168 = vadd.f32 0.0, %v10167
    %v10169 = vpop.f32.mrb[0].mxu0
    %v10170 = vadd.f32 0.0, %v10169
    %v10171 = vpop.f32.mrb[0].mxu0
    %v10172 = vadd.f32 0.0, %v10171
    %10173 = vmatprep.mubr.bf16.mxu0 %v3626
    %10174 = vmatmul.mubr.bf16.gmra.mrb[0].mxu0 %v3625
    %v10175 = vpop.f32.mrb[0].mxu0
    %v10176 = vadd.f32 0.0, %v10175
    %v10177 = vpop.f32.mrb[0].mxu0
    %v10178 = vadd.f32 0.0, %v10177
    %v10179 = vpop.f32.mrb[0].mxu0
    %v10180 = vadd.f32 0.0, %v10179
    %v10181 = vpop.f32.mrb[0].mxu0
    %v10182 = vadd.f32 0.0, %v10181
    %10183 = vmatprep.mubr.bf16.mxu0 %v3628
    %10184 = vmatmul.mubr.bf16.gmra.mrb[0].mxu0 %v3627
    %v10185 = vpop.f32.mrb[0].mxu0
    %v10186 = vadd.f32 0.0, %v10185
    %v10187 = vpop.f32.mrb[0].mxu0
    %v10188 = vadd.f32 0.0, %v10187
    %v10189 = vpop.f32.mrb[0].mxu0
    %v10190 = vadd.f32 0.0, %v10189
    %v10191 = vpop.f32.mrb[0].mxu0
    %v10192 = vadd.f32 0.0, %v10191
    %10193 = vmatprep.mubr.bf16.mxu0 %v3630
    %10194 = vmatmul.mubr.bf16.gmra.mrb[0].mxu0 %v3629
    %v10195 = vpop.f32.mrb[0].mxu0
    %v10196 = vadd.f32 0.0, %v10195
    %v10197 = vpop.f32.mrb[0].mxu0
    %v10198 = vadd.f32 0.0, %v10197
    %v10199 = vpop.f32.mrb[0].mxu0
    %v10200 = vadd.f32 0.0, %v10199
    %v10201 = vpop.f32.mrb[0].mxu0
    %v10202 = vadd.f32 0.0, %v10201
    %10203 = vmatprep.mubr.bf16.mxu0 %v3632
    %10204 = vmatmul.mubr.bf16.gmra.mrb[0].mxu0 %v3631
    %v10205 = vpop.f32.mrb[0].mxu0
    %v10206 = vadd.f32 0.0, %v10205
    %v10207 = vpop.f32.mrb[0].mxu0
    %v10208 = vadd.f32 0.0, %v10207
    %v10209 = vpop.f32.mrb[0].mxu0
    %v10210 = vadd.f32 0.0, %v10209
    %v10211 = vpop.f32.mrb[0].mxu0
    %v10212 = vadd.f32 0.0, %v10211
    %10213 = vdwg.mxu0
    %10214 = vmatprep.subr.bf16.mxu0 %v6856
    %10215 = vmatpush1.bf16.msra.mxu0 %v6855
    %10216 = vmatprep.subr.bf16.mxu0 %v6864
    %10217 = vmatpush1.bf16.msra.mxu0 %v6863
    %10218 = vmatprep.subr.bf16.mxu0 %v6872
    %10219 = vmatpush1.bf16.msra.mxu0 %v6871
    %10220 = vmatprep.subr.bf16.mxu0 %v6880
    %10221 = vmatpush1.bf16.msra.mxu0 %v6879
    %10222 = vmatprep.subr.bf16.mxu0 %v6888
    %10223 = vmatpush1.bf16.msra.mxu0 %v6887
    %10224 = vmatprep.subr.bf16.mxu0 %v6896
    %10225 = vmatpush1.bf16.msra.mxu0 %v6895
    %10226 = vmatprep.subr.bf16.mxu0 %v6904
    %10227 = vmatpush1.bf16.msra.mxu0 %v6903
    %10228 = vmatprep.subr.bf16.mxu0 %v6912
    %10229 = vmatpush1.bf16.msra.mxu0 %v6911
    %10230 = vmatprep.subr.bf16.mxu0 %v6920
    %10231 = vmatpush1.bf16.msra.mxu0 %v6919
    %10232 = vmatprep.subr.bf16.mxu0 %v6928
    %10233 = vmatpush1.bf16.msra.mxu0 %v6927
    %10234 = vmatprep.subr.bf16.mxu0 %v6936
    %10235 = vmatpush1.bf16.msra.mxu0 %v6935
    %10236 = vmatprep.subr.bf16.mxu0 %v6944
    %10237 = vmatpush1.bf16.msra.mxu0 %v6943
    %10238 = vmatprep.subr.bf16.mxu0 %v6952
    %10239 = vmatpush1.bf16.msra.mxu0 %v6951
    %10240 = vmatprep.subr.bf16.mxu0 %v6960
    %10241 = vmatpush1.bf16.msra.mxu0 %v6959
    %10242 = vmatprep.subr.bf16.mxu0 %v6968
    %10243 = vmatpush1.bf16.msra.mxu0 %v6967
    %10244 = vmatprep.subr.bf16.mxu0 %v6976
    %10245 = vmatpush1.bf16.msra.mxu0 %v6975
    %10246 = vmatprep.mubr.bf16.mxu0 0
    %10247 = vmatmul.mubr.bf16.gmra.mrb[0].mxu0 0
    %v10248 = vpop.f32.mrb[0].mxu0
    %v10249 = vadd.f32 %v10146, %v10248
    %v10250 = vpop.f32.mrb[0].mxu0
    %v10251 = vadd.f32 %v10148, %v10250
    %v10252 = vpop.f32.mrb[0].mxu0
    %v10253 = vadd.f32 %v10150, %v10252
    %v10254 = vpop.f32.mrb[0].mxu0
    %v10255 = vadd.f32 %v10152, %v10254
    %10256 = vmatprep.mubr.bf16.mxu0 %v3636
    %10257 = vmatmul.mubr.bf16.gmra.mrb[0].mxu0 %v3635
    %v10258 = vpop.f32.mrb[0].mxu0
    %v10259 = vadd.f32 %v10156, %v10258
    %v10260 = vpop.f32.mrb[0].mxu0
    %v10261 = vadd.f32 %v10158, %v10260
    %v10262 = vpop.f32.mrb[0].mxu0
    %v10263 = vadd.f32 %v10160, %v10262
    %v10264 = vpop.f32.mrb[0].mxu0
    %v10265 = vadd.f32 %v10162, %v10264
    %10266 = vmatprep.mubr.bf16.mxu0 %v3638
    %10267 = vmatmul.mubr.bf16.gmra.mrb[0].mxu0 %v3637
    %v10268 = vpop.f32.mrb[0].mxu0
    %v10269 = vadd.f32 %v10166, %v10268
    %v10270 = vpop.f32.mrb[0].mxu0
    %v10271 = vadd.f32 %v10168, %v10270
    %v10272 = vpop.f32.mrb[0].mxu0
    %v10273 = vadd.f32 %v10170, %v10272
    %v10274 = vpop.f32.mrb[0].mxu0
    %v10275 = vadd.f32 %v10172, %v10274
    %10276 = vmatprep.mubr.bf16.mxu0 %v3640
    %10277 = vmatmul.mubr.bf16.gmra.mrb[0].mxu0 %v3639
    %v10278 = vpop.f32.mrb[0].mxu0
    %v10279 = vadd.f32 %v10176, %v10278
    %v10280 = vpop.f32.mrb[0].mxu0
    %v10281 = vadd.f32 %v10178, %v10280
    %v10282 = vpop.f32.mrb[0].mxu0
    %v10283 = vadd.f32 %v10180, %v10282
    %v10284 = vpop.f32.mrb[0].mxu0
    %v10285 = vadd.f32 %v10182, %v10284
    %10286 = vmatprep.mubr.bf16.mxu0 %v3642
    %10287 = vmatmul.mubr.bf16.gmra.mrb[0].mxu0 %v3641
    %v10288 = vpop.f32.mrb[0].mxu0
    %v10289 = vadd.f32 %v10186, %v10288
    %v10290 = vpop.f32.mrb[0].mxu0
    %v10291 = vadd.f32 %v10188, %v10290
    %v10292 = vpop.f32.mrb[0].mxu0
    %v10293 = vadd.f32 %v10190, %v10292
    %v10294 = vpop.f32.mrb[0].mxu0
    %v10295 = vadd.f32 %v10192, %v10294
    %10296 = vmatprep.mubr.bf16.mxu0 %v3644
    %10297 = vmatmul.mubr.bf16.gmra.mrb[0].mxu0 %v3643
    %v10298 = vpop.f32.mrb[0].mxu0
    %v10299 = vadd.f32 %v10196, %v10298
    %v10300 = vpop.f32.mrb[0].mxu0
    %v10301 = vadd.f32 %v10198, %v10300
    %v10302 = vpop.f32.mrb[0].mxu0
    %v10303 = vadd.f32 %v10200, %v10302
    %v10304 = vpop.f32.mrb[0].mxu0
    %v10305 = vadd.f32 %v10202, %v10304
    %10306 = vmatprep.mubr.bf16.mxu0 %v3646
    %10307 = vmatmul.mubr.bf16.gmra.mrb[0].mxu0 %v3645
    %v10308 = vpop.f32.mrb[0].mxu0
    %v10309 = vadd.f32 %v10206, %v10308
    %v10310 = vpop.f32.mrb[0].mxu0
    %v10311 = vadd.f32 %v10208, %v10310
    %v10312 = vpop.f32.mrb[0].mxu0
    %v10313 = vadd.f32 %v10210, %v10312
    %v10314 = vpop.f32.mrb[0].mxu0
    %v10315 = vadd.f32 %v10212, %v10314
    %10316 = vdwg.mxu0
    %10317 = vmatprep.subr.bf16.mxu0 %v6984
    %10318 = vmatpush1.bf16.msra.mxu0 %v6983
    %10319 = vmatprep.subr.bf16.mxu0 %v6992
    %10320 = vmatpush1.bf16.msra.mxu0 %v6991
    %10321 = vmatprep.subr.bf16.mxu0 %v7000
    %10322 = vmatpush1.bf16.msra.mxu0 %v6999
    %10323 = vmatprep.subr.bf16.mxu0 %v7008
    %10324 = vmatpush1.bf16.msra.mxu0 %v7007
    %10325 = vmatprep.subr.bf16.mxu0 %v7016
    %10326 = vmatpush1.bf16.msra.mxu0 %v7015
    %10327 = vmatprep.subr.bf16.mxu0 %v7024
    %10328 = vmatpush1.bf16.msra.mxu0 %v7023
    %10329 = vmatprep.subr.bf16.mxu0 %v7032
    %10330 = vmatpush1.bf16.msra.mxu0 %v7031
    %10331 = vmatprep.subr.bf16.mxu0 %v7040
    %10332 = vmatpush1.bf16.msra.mxu0 %v7039
    %10333 = vmatprep.subr.bf16.mxu0 %v7048
    %10334 = vmatpush1.bf16.msra.mxu0 %v7047
    %10335 = vmatprep.subr.bf16.mxu0 %v7056
    %10336 = vmatpush1.bf16.msra.mxu0 %v7055
    %10337 = vmatprep.subr.bf16.mxu0 %v7064
    %10338 = vmatpush1.bf16.msra.mxu0 %v7063
    %10339 = vmatprep.subr.bf16.mxu0 %v7072
    %10340 = vmatpush1.bf16.msra.mxu0 %v7071
    %10341 = vmatprep.subr.bf16.mxu0 %v7080
    %10342 = vmatpush1.bf16.msra.mxu0 %v7079
    %10343 = vmatprep.subr.bf16.mxu0 %v7088
    %10344 = vmatpush1.bf16.msra.mxu0 %v7087
    %10345 = vmatprep.subr.bf16.mxu0 %v7096
    %10346 = vmatpush1.bf16.msra.mxu0 %v7095
    %10347 = vmatprep.subr.bf16.mxu0 %v7104
    %10348 = vmatpush1.bf16.msra.mxu0 %v7103
    %10349 = vmatprep.mubr.bf16.mxu0 %v3622
    %10350 = vmatmul.mubr.bf16.gmra.mrb[0].mxu0 %v3621
    %v10351 = vpop.f32.mrb[0].mxu0
    %v10352 = vadd.f32 %v10249, %v10351
    %v10353 = vpop.f32.mrb[0].mxu0
    %v10354 = vadd.f32 %v10251, %v10353
    %v10355 = vpop.f32.mrb[0].mxu0
    %v10356 = vadd.f32 %v10253, %v10355
    %v10357 = vpop.f32.mrb[0].mxu0
    %v10358 = vadd.f32 %v10255, %v10357
    %10359 = vmatprep.mubr.bf16.mxu0 %v3624
    %10360 = vmatmul.mubr.bf16.gmra.mrb[0].mxu0 %v3623
    %v10361 = vpop.f32.mrb[0].mxu0
    %v10362 = vadd.f32 %v10259, %v10361
    %v10363 = vpop.f32.mrb[0].mxu0
    %v10364 = vadd.f32 %v10261, %v10363
    %v10365 = vpop.f32.mrb[0].mxu0
    %v10366 = vadd.f32 %v10263, %v10365
    %v10367 = vpop.f32.mrb[0].mxu0
    %v10368 = vadd.f32 %v10265, %v10367
    %10369 = vmatprep.mubr.bf16.mxu0 %v3626
    %10370 = vmatmul.mubr.bf16.gmra.mrb[0].mxu0 %v3625
    %v10371 = vpop.f32.mrb[0].mxu0
    %v10372 = vadd.f32 %v10269, %v10371
    %v10373 = vpop.f32.mrb[0].mxu0
    %v10374 = vadd.f32 %v10271, %v10373
    %v10375 = vpop.f32.mrb[0].mxu0
    %v10376 = vadd.f32 %v10273, %v10375
    %v10377 = vpop.f32.mrb[0].mxu0
    %v10378 = vadd.f32 %v10275, %v10377
    %10379 = vmatprep.mubr.bf16.mxu0 %v3628
    %10380 = vmatmul.mubr.bf16.gmra.mrb[0].mxu0 %v3627
    %v10381 = vpop.f32.mrb[0].mxu0
    %v10382 = vadd.f32 %v10279, %v10381
    %v10383 = vpop.f32.mrb[0].mxu0
    %v10384 = vadd.f32 %v10281, %v10383
    %v10385 = vpop.f32.mrb[0].mxu0
    %v10386 = vadd.f32 %v10283, %v10385
    %v10387 = vpop.f32.mrb[0].mxu0
    %v10388 = vadd.f32 %v10285, %v10387
    %10389 = vmatprep.mubr.bf16.mxu0 %v3630
    %10390 = vmatmul.mubr.bf16.gmra.mrb[0].mxu0 %v3629
    %v10391 = vpop.f32.mrb[0].mxu0
    %v10392 = vadd.f32 %v10289, %v10391
    %v10393 = vpop.f32.mrb[0].mxu0
    %v10394 = vadd.f32 %v10291, %v10393
    %v10395 = vpop.f32.mrb[0].mxu0
    %v10396 = vadd.f32 %v10293, %v10395
    %v10397 = vpop.f32.mrb[0].mxu0
    %v10398 = vadd.f32 %v10295, %v10397
    %10399 = vmatprep.mubr.bf16.mxu0 %v3632
    %10400 = vmatmul.mubr.bf16.gmra.mrb[0].mxu0 %v3631
    %v10401 = vpop.f32.mrb[0].mxu0
    %v10402 = vadd.f32 %v10299, %v10401
    %v10403 = vpop.f32.mrb[0].mxu0
    %v10404 = vadd.f32 %v10301, %v10403
    %v10405 = vpop.f32.mrb[0].mxu0
    %v10406 = vadd.f32 %v10303, %v10405
    %v10407 = vpop.f32.mrb[0].mxu0
    %v10408 = vadd.f32 %v10305, %v10407
    %10409 = vmatprep.mubr.bf16.mxu0 %v3634
    %10410 = vmatmul.mubr.bf16.gmra.mrb[0].mxu0 %v3633
    %v10411 = vpop.f32.mrb[0].mxu0
    %v10412 = vadd.f32 %v10309, %v10411
    %v10413 = vpop.f32.mrb[0].mxu0
    %v10414 = vadd.f32 %v10311, %v10413
    %v10415 = vpop.f32.mrb[0].mxu0
    %v10416 = vadd.f32 %v10313, %v10415
    %v10417 = vpop.f32.mrb[0].mxu0
    %v10418 = vadd.f32 %v10315, %v10417
    %10419 = vdwg.mxu0
    %10420 = vmatprep.subr.bf16.mxu0 %v7112
    %10421 = vmatpush1.bf16.msra.mxu0 %v7111
    %10422 = vmatprep.subr.bf16.mxu0 %v7120
    %10423 = vmatpush1.bf16.msra.mxu0 %v7119
    %10424 = vmatprep.subr.bf16.mxu0 %v7128
    %10425 = vmatpush1.bf16.msra.mxu0 %v7127
    %10426 = vmatprep.subr.bf16.mxu0 %v7136
    %10427 = vmatpush1.bf16.msra.mxu0 %v7135
    %10428 = vmatprep.subr.bf16.mxu0 %v7144
    %10429 = vmatpush1.bf16.msra.mxu0 %v7143
    %10430 = vmatprep.subr.bf16.mxu0 %v7152
    %10431 = vmatpush1.bf16.msra.mxu0 %v7151
    %10432 = vmatprep.subr.bf16.mxu0 %v7160
    %10433 = vmatpush1.bf16.msra.mxu0 %v7159
    %10434 = vmatprep.subr.bf16.mxu0 %v7168
    %10435 = vmatpush1.bf16.msra.mxu0 %v7167
    %10436 = vmatprep.subr.bf16.mxu0 %v7176
    %10437 = vmatpush1.bf16.msra.mxu0 %v7175
    %10438 = vmatprep.subr.bf16.mxu0 %v7184
    %10439 = vmatpush1.bf16.msra.mxu0 %v7183
    %10440 = vmatprep.subr.bf16.mxu0 %v7192
    %10441 = vmatpush1.bf16.msra.mxu0 %v7191
    %10442 = vmatprep.subr.bf16.mxu0 %v7200
    %10443 = vmatpush1.bf16.msra.mxu0 %v7199
    %10444 = vmatprep.subr.bf16.mxu0 %v7208
    %10445 = vmatpush1.bf16.msra.mxu0 %v7207
    %10446 = vmatprep.subr.bf16.mxu0 %v7216
    %10447 = vmatpush1.bf16.msra.mxu0 %v7215
    %10448 = vmatprep.subr.bf16.mxu0 %v7224
    %10449 = vmatpush1.bf16.msra.mxu0 %v7223
    %10450 = vmatprep.subr.bf16.mxu0 %v7232
    %10451 = vmatpush1.bf16.msra.mxu0 %v7231
    %10452 = vmatprep.mubr.bf16.mxu0 %v3636
    %10453 = vmatmul.mubr.bf16.gmra.mrb[0].mxu0 %v3635
    %v10454 = vpop.f32.mrb[0].mxu0
    %v10455 = vadd.f32 %v10352, %v10454
    %v10456 = vpop.f32.mrb[0].mxu0
    %v10457 = vadd.f32 %v10354, %v10456
    %v10458 = vpop.f32.mrb[0].mxu0
    %v10459 = vadd.f32 %v10356, %v10458
    %v10460 = vpop.f32.mrb[0].mxu0
    %v10461 = vadd.f32 %v10358, %v10460
    %10462 = vmatprep.mubr.bf16.mxu0 %v3638
    %10463 = vmatmul.mubr.bf16.gmra.mrb[0].mxu0 %v3637
    %v10464 = vpop.f32.mrb[0].mxu0
    %v10465 = vadd.f32 %v10362, %v10464
    %v10466 = vpop.f32.mrb[0].mxu0
    %v10467 = vadd.f32 %v10364, %v10466
    %v10468 = vpop.f32.mrb[0].mxu0
    %v10469 = vadd.f32 %v10366, %v10468
    %v10470 = vpop.f32.mrb[0].mxu0
    %v10471 = vadd.f32 %v10368, %v10470
    %10472 = vmatprep.mubr.bf16.mxu0 %v3640
    %10473 = vmatmul.mubr.bf16.gmra.mrb[0].mxu0 %v3639
    %v10474 = vpop.f32.mrb[0].mxu0
    %v10475 = vadd.f32 %v10372, %v10474
    %v10476 = vpop.f32.mrb[0].mxu0
    %v10477 = vadd.f32 %v10374, %v10476
    %v10478 = vpop.f32.mrb[0].mxu0
    %v10479 = vadd.f32 %v10376, %v10478
    %v10480 = vpop.f32.mrb[0].mxu0
    %v10481 = vadd.f32 %v10378, %v10480
    %10482 = vmatprep.mubr.bf16.mxu0 %v3642
    %10483 = vmatmul.mubr.bf16.gmra.mrb[0].mxu0 %v3641
    %v10484 = vpop.f32.mrb[0].mxu0
    %v10485 = vadd.f32 %v10382, %v10484
    %v10486 = vpop.f32.mrb[0].mxu0
    %v10487 = vadd.f32 %v10384, %v10486
    %v10488 = vpop.f32.mrb[0].mxu0
    %v10489 = vadd.f32 %v10386, %v10488
    %v10490 = vpop.f32.mrb[0].mxu0
    %v10491 = vadd.f32 %v10388, %v10490
    %10492 = vmatprep.mubr.bf16.mxu0 %v3644
    %10493 = vmatmul.mubr.bf16.gmra.mrb[0].mxu0 %v3643
    %v10494 = vpop.f32.mrb[0].mxu0
    %v10495 = vadd.f32 %v10392, %v10494
    %v10496 = vpop.f32.mrb[0].mxu0
    %v10497 = vadd.f32 %v10394, %v10496
    %v10498 = vpop.f32.mrb[0].mxu0
    %v10499 = vadd.f32 %v10396, %v10498
    %v10500 = vpop.f32.mrb[0].mxu0
    %v10501 = vadd.f32 %v10398, %v10500
    %10502 = vmatprep.mubr.bf16.mxu0 %v3646
    %10503 = vmatmul.mubr.bf16.gmra.mrb[0].mxu0 %v3645
    %v10504 = vpop.f32.mrb[0].mxu0
    %v10505 = vadd.f32 %v10402, %v10504
    %v10506 = vpop.f32.mrb[0].mxu0
    %v10507 = vadd.f32 %v10404, %v10506
    %v10508 = vpop.f32.mrb[0].mxu0
    %v10509 = vadd.f32 %v10406, %v10508
    %v10510 = vpop.f32.mrb[0].mxu0
    %v10511 = vadd.f32 %v10408, %v10510
    %10512 = vmatprep.mubr.bf16.mxu0 %v3648
    %10513 = vmatmul.mubr.bf16.gmra.mrb[0].mxu0 %v3647
    %v10514 = vpop.f32.mrb[0].mxu0
    %v10515 = vadd.f32 %v10412, %v10514
    %v10516 = vpop.f32.mrb[0].mxu0
    %v10517 = vadd.f32 %v10414, %v10516
    %v10518 = vpop.f32.mrb[0].mxu0
    %v10519 = vadd.f32 %v10416, %v10518
    %v10520 = vpop.f32.mrb[0].mxu0
    %v10521 = vadd.f32 %v10418, %v10520
    %10522 = vdwg.mxu0
    %10523 = vmatprep.subr.bf16.mxu0 %v7240
    %10524 = vmatpush1.bf16.msra.mxu0 %v7239
    %10525 = vmatprep.subr.bf16.mxu0 %v7248
    %10526 = vmatpush1.bf16.msra.mxu0 %v7247
    %10527 = vmatprep.subr.bf16.mxu0 %v7256
    %10528 = vmatpush1.bf16.msra.mxu0 %v7255
    %10529 = vmatprep.subr.bf16.mxu0 %v7264
    %10530 = vmatpush1.bf16.msra.mxu0 %v7263
    %10531 = vmatprep.subr.bf16.mxu0 %v7272
    %10532 = vmatpush1.bf16.msra.mxu0 %v7271
    %10533 = vmatprep.subr.bf16.mxu0 %v7280
    %10534 = vmatpush1.bf16.msra.mxu0 %v7279
    %10535 = vmatprep.subr.bf16.mxu0 %v7288
    %10536 = vmatpush1.bf16.msra.mxu0 %v7287
    %10537 = vmatprep.subr.bf16.mxu0 %v7296
    %10538 = vmatpush1.bf16.msra.mxu0 %v7295
    %10539 = vmatprep.subr.bf16.mxu0 %v7304
    %10540 = vmatpush1.bf16.msra.mxu0 %v7303
    %10541 = vmatprep.subr.bf16.mxu0 %v7312
    %10542 = vmatpush1.bf16.msra.mxu0 %v7311
    %10543 = vmatprep.subr.bf16.mxu0 %v7320
    %10544 = vmatpush1.bf16.msra.mxu0 %v7319
    %10545 = vmatprep.subr.bf16.mxu0 %v7328
    %10546 = vmatpush1.bf16.msra.mxu0 %v7327
    %10547 = vmatprep.subr.bf16.mxu0 %v7336
    %10548 = vmatpush1.bf16.msra.mxu0 %v7335
    %10549 = vmatprep.subr.bf16.mxu0 %v7344
    %10550 = vmatpush1.bf16.msra.mxu0 %v7343
    %10551 = vmatprep.subr.bf16.mxu0 %v7352
    %10552 = vmatpush1.bf16.msra.mxu0 %v7351
    %10553 = vmatprep.subr.bf16.mxu0 %v7360
    %10554 = vmatpush1.bf16.msra.mxu0 %v7359
    %10555 = vmatprep.mubr.bf16.mxu0 %v3624
    %10556 = vmatmul.mubr.bf16.gmra.mrb[0].mxu0 %v3623
    %v10557 = vpop.f32.mrb[0].mxu0
    %v10558 = vadd.f32 %v10455, %v10557
    %v10559 = vpop.f32.mrb[0].mxu0
    %v10560 = vadd.f32 %v10457, %v10559
    %v10561 = vpop.f32.mrb[0].mxu0
    %v10562 = vadd.f32 %v10459, %v10561
    %v10563 = vpop.f32.mrb[0].mxu0
    %v10564 = vadd.f32 %v10461, %v10563
    %10565 = vmatprep.mubr.bf16.mxu0 %v3626
    %10566 = vmatmul.mubr.bf16.gmra.mrb[0].mxu0 %v3625
    %v10567 = vpop.f32.mrb[0].mxu0
    %v10568 = vadd.f32 %v10465, %v10567
    %v10569 = vpop.f32.mrb[0].mxu0
    %v10570 = vadd.f32 %v10467, %v10569
    %v10571 = vpop.f32.mrb[0].mxu0
    %v10572 = vadd.f32 %v10469, %v10571
    %v10573 = vpop.f32.mrb[0].mxu0
    %v10574 = vadd.f32 %v10471, %v10573
    %10575 = vmatprep.mubr.bf16.mxu0 %v3628
    %10576 = vmatmul.mubr.bf16.gmra.mrb[0].mxu0 %v3627
    %v10577 = vpop.f32.mrb[0].mxu0
    %v10578 = vadd.f32 %v10475, %v10577
    %v10579 = vpop.f32.mrb[0].mxu0
    %v10580 = vadd.f32 %v10477, %v10579
    %v10581 = vpop.f32.mrb[0].mxu0
    %v10582 = vadd.f32 %v10479, %v10581
    %v10583 = vpop.f32.mrb[0].mxu0
    %v10584 = vadd.f32 %v10481, %v10583
    %10585 = vmatprep.mubr.bf16.mxu0 %v3630
    %10586 = vmatmul.mubr.bf16.gmra.mrb[0].mxu0 %v3629
    %v10587 = vpop.f32.mrb[0].mxu0
    %v10588 = vadd.f32 %v10485, %v10587
    %v10589 = vpop.f32.mrb[0].mxu0
    %v10590 = vadd.f32 %v10487, %v10589
    %v10591 = vpop.f32.mrb[0].mxu0
    %v10592 = vadd.f32 %v10489, %v10591
    %v10593 = vpop.f32.mrb[0].mxu0
    %v10594 = vadd.f32 %v10491, %v10593
    %10595 = vmatprep.mubr.bf16.mxu0 %v3632
    %10596 = vmatmul.mubr.bf16.gmra.mrb[0].mxu0 %v3631
    %v10597 = vpop.f32.mrb[0].mxu0
    %v10598 = vadd.f32 %v10495, %v10597
    %v10599 = vpop.f32.mrb[0].mxu0
    %v10600 = vadd.f32 %v10497, %v10599
    %v10601 = vpop.f32.mrb[0].mxu0
    %v10602 = vadd.f32 %v10499, %v10601
    %v10603 = vpop.f32.mrb[0].mxu0
    %v10604 = vadd.f32 %v10501, %v10603
    %10605 = vmatprep.mubr.bf16.mxu0 %v3634
    %10606 = vmatmul.mubr.bf16.gmra.mrb[0].mxu0 %v3633
    %v10607 = vpop.f32.mrb[0].mxu0
    %v10608 = vadd.f32 %v10505, %v10607
    %v10609 = vpop.f32.mrb[0].mxu0
    %v10610 = vadd.f32 %v10507, %v10609
    %v10611 = vpop.f32.mrb[0].mxu0
    %v10612 = vadd.f32 %v10509, %v10611
    %v10613 = vpop.f32.mrb[0].mxu0
    %v10614 = vadd.f32 %v10511, %v10613
    %10615 = vmatprep.mubr.bf16.mxu0 0
    %10616 = vmatmul.mubr.bf16.gmra.mrb[0].mxu0 0
    %v10617 = vpop.f32.mrb[0].mxu0
    %v10618 = vadd.f32 %v10515, %v10617
    %v10619 = vpop.f32.mrb[0].mxu0
    %v10620 = vadd.f32 %v10517, %v10619
    %v10621 = vpop.f32.mrb[0].mxu0
    %v10622 = vadd.f32 %v10519, %v10621
    %v10623 = vpop.f32.mrb[0].mxu0
    %v10624 = vadd.f32 %v10521, %v10623
    %10625 = vdwg.mxu0
    %10626 = vmatprep.subr.bf16.mxu0 %v7368
    %10627 = vmatpush1.bf16.msra.mxu0 %v7367
    %10628 = vmatprep.subr.bf16.mxu0 %v7376
    %10629 = vmatpush1.bf16.msra.mxu0 %v7375
    %10630 = vmatprep.subr.bf16.mxu0 %v7384
    %10631 = vmatpush1.bf16.msra.mxu0 %v7383
    %10632 = vmatprep.subr.bf16.mxu0 %v7392
    %10633 = vmatpush1.bf16.msra.mxu0 %v7391
    %10634 = vmatprep.subr.bf16.mxu0 %v7400
    %10635 = vmatpush1.bf16.msra.mxu0 %v7399
    %10636 = vmatprep.subr.bf16.mxu0 %v7408
    %10637 = vmatpush1.bf16.msra.mxu0 %v7407
    %10638 = vmatprep.subr.bf16.mxu0 %v7416
    %10639 = vmatpush1.bf16.msra.mxu0 %v7415
    %10640 = vmatprep.subr.bf16.mxu0 %v7424
    %10641 = vmatpush1.bf16.msra.mxu0 %v7423
    %10642 = vmatprep.subr.bf16.mxu0 %v7432
    %10643 = vmatpush1.bf16.msra.mxu0 %v7431
    %10644 = vmatprep.subr.bf16.mxu0 %v7440
    %10645 = vmatpush1.bf16.msra.mxu0 %v7439
    %10646 = vmatprep.subr.bf16.mxu0 %v7448
    %10647 = vmatpush1.bf16.msra.mxu0 %v7447
    %10648 = vmatprep.subr.bf16.mxu0 %v7456
    %10649 = vmatpush1.bf16.msra.mxu0 %v7455
    %10650 = vmatprep.subr.bf16.mxu0 %v7464
    %10651 = vmatpush1.bf16.msra.mxu0 %v7463
    %10652 = vmatprep.subr.bf16.mxu0 %v7472
    %10653 = vmatpush1.bf16.msra.mxu0 %v7471
    %10654 = vmatprep.subr.bf16.mxu0 %v7480
    %10655 = vmatpush1.bf16.msra.mxu0 %v7479
    %10656 = vmatprep.subr.bf16.mxu0 %v7488
    %10657 = vmatpush1.bf16.msra.mxu0 %v7487
    %10658 = vmatprep.mubr.bf16.mxu0 %v3638
    %10659 = vmatmul.mubr.bf16.gmra.mrb[0].mxu0 %v3637
    %v10660 = vpop.f32.mrb[0].mxu0
    %v10661 = vadd.f32 %v10558, %v10660
    %v10662 = vpop.f32.mrb[0].mxu0
    %v10663 = vadd.f32 %v10560, %v10662
    %v10664 = vpop.f32.mrb[0].mxu0
    %v10665 = vadd.f32 %v10562, %v10664
    %v10666 = vpop.f32.mrb[0].mxu0
    %v10667 = vadd.f32 %v10564, %v10666
    %10668 = vmatprep.mubr.bf16.mxu0 %v3640
    %10669 = vmatmul.mubr.bf16.gmra.mrb[0].mxu0 %v3639
    %v10670 = vpop.f32.mrb[0].mxu0
    %v10671 = vadd.f32 %v10568, %v10670
    %v10672 = vpop.f32.mrb[0].mxu0
    %v10673 = vadd.f32 %v10570, %v10672
    %v10674 = vpop.f32.mrb[0].mxu0
    %v10675 = vadd.f32 %v10572, %v10674
    %v10676 = vpop.f32.mrb[0].mxu0
    %v10677 = vadd.f32 %v10574, %v10676
    %10678 = vmatprep.mubr.bf16.mxu0 %v3642
    %10679 = vmatmul.mubr.bf16.gmra.mrb[0].mxu0 %v3641
    %v10680 = vpop.f32.mrb[0].mxu0
    %v10681 = vadd.f32 %v10578, %v10680
    %v10682 = vpop.f32.mrb[0].mxu0
    %v10683 = vadd.f32 %v10580, %v10682
    %v10684 = vpop.f32.mrb[0].mxu0
    %v10685 = vadd.f32 %v10582, %v10684
    %v10686 = vpop.f32.mrb[0].mxu0
    %v10687 = vadd.f32 %v10584, %v10686
    %10688 = vmatprep.mubr.bf16.mxu0 %v3644
    %10689 = vmatmul.mubr.bf16.gmra.mrb[0].mxu0 %v3643
    %v10690 = vpop.f32.mrb[0].mxu0
    %v10691 = vadd.f32 %v10588, %v10690
    %v10692 = vpop.f32.mrb[0].mxu0
    %v10693 = vadd.f32 %v10590, %v10692
    %v10694 = vpop.f32.mrb[0].mxu0
    %v10695 = vadd.f32 %v10592, %v10694
    %v10696 = vpop.f32.mrb[0].mxu0
    %v10697 = vadd.f32 %v10594, %v10696
    %10698 = vmatprep.mubr.bf16.mxu0 %v3646
    %10699 = vmatmul.mubr.bf16.gmra.mrb[0].mxu0 %v3645
    %v10700 = vpop.f32.mrb[0].mxu0
    %v10701 = vadd.f32 %v10598, %v10700
    %v10702 = vpop.f32.mrb[0].mxu0
    %v10703 = vadd.f32 %v10600, %v10702
    %v10704 = vpop.f32.mrb[0].mxu0
    %v10705 = vadd.f32 %v10602, %v10704
    %v10706 = vpop.f32.mrb[0].mxu0
    %v10707 = vadd.f32 %v10604, %v10706
    %10708 = vmatprep.mubr.bf16.mxu0 %v3648
    %10709 = vmatmul.mubr.bf16.gmra.mrb[0].mxu0 %v3647
    %v10710 = vpop.f32.mrb[0].mxu0
    %v10711 = vadd.f32 %v10608, %v10710
    %v10712 = vpop.f32.mrb[0].mxu0
    %v10713 = vadd.f32 %v10610, %v10712
    %v10714 = vpop.f32.mrb[0].mxu0
    %v10715 = vadd.f32 %v10612, %v10714
    %v10716 = vpop.f32.mrb[0].mxu0
    %v10717 = vadd.f32 %v10614, %v10716
    %10718 = vmatprep.mubr.bf16.mxu0 0
    %10719 = vmatmul.mubr.bf16.gmra.mrb[0].mxu0 0
    %v10720 = vpop.f32.mrb[0].mxu0
    %v10721 = vadd.f32 %v10618, %v10720
    %v10722 = vpop.f32.mrb[0].mxu0
    %v10723 = vadd.f32 %v10620, %v10722
    %v10724 = vpop.f32.mrb[0].mxu0
    %v10725 = vadd.f32 %v10622, %v10724
    %v10726 = vpop.f32.mrb[0].mxu0
    %v10727 = vadd.f32 %v10624, %v10726
    %10728 = vdwg.mxu0
    %v10729 = vld [vmem:[#allocation9] sm:$0xff]
    %v10731 = vlaneseq
    %v10732 = vshrl.u32 %v10731, 7
    %v10733 = vsub.s32 0, %v10732
    %v10734 = vrot.slane %v10729, %v10733
    %v10735 = vlaneseq
    %v10736 = vshrl.u32 %v10735, 7
    %v10737 = vsub.s32 1, %v10736
    %v10738 = vrot.slane %v10729, %v10737
    %v10739 = vlaneseq
    %v10740 = vshrl.u32 %v10739, 7
    %v10741 = vsub.s32 2, %v10740
    %v10742 = vrot.slane %v10729, %v10741
    %v10743 = vlaneseq
    %v10744 = vshrl.u32 %v10743, 7
    %v10745 = vsub.s32 3, %v10744
    %v10746 = vrot.slane %v10729, %v10745
    %v10747 = vlaneseq
    %v10748 = vshrl.u32 %v10747, 7
    %v10749 = vsub.s32 4, %v10748
    %v10750 = vrot.slane %v10729, %v10749
    %v10751 = vlaneseq
    %v10752 = vshrl.u32 %v10751, 7
    %v10753 = vsub.s32 5, %v10752
    %v10754 = vrot.slane %v10729, %v10753
    %v10755 = vlaneseq
    %v10756 = vshrl.u32 %v10755, 7
    %v10757 = vsub.s32 6, %v10756
    %v10758 = vrot.slane %v10729, %v10757
    %v10759 = vlaneseq
    %v10760 = vshrl.u32 %v10759, 7
    %v10761 = vsub.s32 7, %v10760
    %v10762 = vrot.slane %v10729, %v10761
    %v10771 = vmul.f32 %v8807, %v10734
    %v10772 = vmul.f32 %v8809, %v10738
    %v10773 = vmul.f32 %v9425, %v10742
    %v10774 = vmul.f32 %v9427, %v10746
    %v10775 = vmul.f32 %v10043, %v10750
    %v10776 = vmul.f32 %v10045, %v10754
    %v10777 = vmul.f32 %v10661, %v10758
    %v10778 = vmul.f32 %v10663, %v10762
    %v10779 = vmul.f32 %v8811, %v10734
    %v10780 = vmul.f32 %v8813, %v10738
    %v10781 = vmul.f32 %v9429, %v10742
    %v10782 = vmul.f32 %v9431, %v10746
    %v10783 = vmul.f32 %v10047, %v10750
    %v10784 = vmul.f32 %v10049, %v10754
    %v10785 = vmul.f32 %v10665, %v10758
    %v10786 = vmul.f32 %v10667, %v10762
    %v10787 = vmul.f32 %v8817, %v10734
    %v10788 = vmul.f32 %v8819, %v10738
    %v10789 = vmul.f32 %v9435, %v10742
    %v10790 = vmul.f32 %v9437, %v10746
    %v10791 = vmul.f32 %v10053, %v10750
    %v10792 = vmul.f32 %v10055, %v10754
    %v10793 = vmul.f32 %v10671, %v10758
    %v10794 = vmul.f32 %v10673, %v10762
    %v10795 = vmul.f32 %v8821, %v10734
    %v10796 = vmul.f32 %v8823, %v10738
    %v10797 = vmul.f32 %v9439, %v10742
    %v10798 = vmul.f32 %v9441, %v10746
    %v10799 = vmul.f32 %v10057, %v10750
    %v10800 = vmul.f32 %v10059, %v10754
    %v10801 = vmul.f32 %v10675, %v10758
    %v10802 = vmul.f32 %v10677, %v10762
    %v10803 = vmul.f32 %v8827, %v10734
    %v10804 = vmul.f32 %v8829, %v10738
    %v10805 = vmul.f32 %v9445, %v10742
    %v10806 = vmul.f32 %v9447, %v10746
    %v10807 = vmul.f32 %v10063, %v10750
    %v10808 = vmul.f32 %v10065, %v10754
    %v10809 = vmul.f32 %v10681, %v10758
    %v10810 = vmul.f32 %v10683, %v10762
    %v10811 = vmul.f32 %v8831, %v10734
    %v10812 = vmul.f32 %v8833, %v10738
    %v10813 = vmul.f32 %v9449, %v10742
    %v10814 = vmul.f32 %v9451, %v10746
    %v10815 = vmul.f32 %v10067, %v10750
    %v10816 = vmul.f32 %v10069, %v10754
    %v10817 = vmul.f32 %v10685, %v10758
    %v10818 = vmul.f32 %v10687, %v10762
    %v10819 = vmul.f32 %v8837, %v10734
    %v10820 = vmul.f32 %v8839, %v10738
    %v10821 = vmul.f32 %v9455, %v10742
    %v10822 = vmul.f32 %v9457, %v10746
    %v10823 = vmul.f32 %v10073, %v10750
    %v10824 = vmul.f32 %v10075, %v10754
    %v10825 = vmul.f32 %v10691, %v10758
    %v10826 = vmul.f32 %v10693, %v10762
    %v10827 = vmul.f32 %v8841, %v10734
    %v10828 = vmul.f32 %v8843, %v10738
    %v10829 = vmul.f32 %v9459, %v10742
    %v10830 = vmul.f32 %v9461, %v10746
    %v10831 = vmul.f32 %v10077, %v10750
    %v10832 = vmul.f32 %v10079, %v10754
    %v10833 = vmul.f32 %v10695, %v10758
    %v10834 = vmul.f32 %v10697, %v10762
    %v10835 = vmul.f32 %v8847, %v10734
    %v10836 = vmul.f32 %v8849, %v10738
    %v10837 = vmul.f32 %v9465, %v10742
    %v10838 = vmul.f32 %v9467, %v10746
    %v10839 = vmul.f32 %v10083, %v10750
    %v10840 = vmul.f32 %v10085, %v10754
    %v10841 = vmul.f32 %v10701, %v10758
    %v10842 = vmul.f32 %v10703, %v10762
    %v10843 = vmul.f32 %v8851, %v10734
    %v10844 = vmul.f32 %v8853, %v10738
    %v10845 = vmul.f32 %v9469, %v10742
    %v10846 = vmul.f32 %v9471, %v10746
    %v10847 = vmul.f32 %v10087, %v10750
    %v10848 = vmul.f32 %v10089, %v10754
    %v10849 = vmul.f32 %v10705, %v10758
    %v10850 = vmul.f32 %v10707, %v10762
    %v10851 = vmul.f32 %v8857, %v10734
    %v10852 = vmul.f32 %v8859, %v10738
    %v10853 = vmul.f32 %v9475, %v10742
    %v10854 = vmul.f32 %v9477, %v10746
    %v10855 = vmul.f32 %v10093, %v10750
    %v10856 = vmul.f32 %v10095, %v10754
    %v10857 = vmul.f32 %v10711, %v10758
    %v10858 = vmul.f32 %v10713, %v10762
    %v10859 = vmul.f32 %v8861, %v10734
    %v10860 = vmul.f32 %v8863, %v10738
    %v10861 = vmul.f32 %v9479, %v10742
    %v10862 = vmul.f32 %v9481, %v10746
    %v10863 = vmul.f32 %v10097, %v10750
    %v10864 = vmul.f32 %v10099, %v10754
    %v10865 = vmul.f32 %v10715, %v10758
    %v10866 = vmul.f32 %v10717, %v10762
    %v10867 = vmul.f32 %v8867, %v10734
    %v10868 = vmul.f32 %v8869, %v10738
    %v10869 = vmul.f32 %v9485, %v10742
    %v10870 = vmul.f32 %v9487, %v10746
    %v10871 = vmul.f32 %v10103, %v10750
    %v10872 = vmul.f32 %v10105, %v10754
    %v10873 = vmul.f32 %v10721, %v10758
    %v10874 = vmul.f32 %v10723, %v10762
    %v10875 = vmul.f32 %v8871, %v10734
    %v10876 = vmul.f32 %v8873, %v10738
    %v10877 = vmul.f32 %v9489, %v10742
    %v10878 = vmul.f32 %v9491, %v10746
    %v10879 = vmul.f32 %v10107, %v10750
    %v10880 = vmul.f32 %v10109, %v10754
    %v10881 = vmul.f32 %v10725, %v10758
    %v10882 = vmul.f32 %v10727, %v10762
    %v10883 = vld [vmem:[#allocation10] sm:$0xff]
    %v10885 = vlaneseq
    %v10886 = vshrl.u32 %v10885, 7
    %v10887 = vsub.s32 0, %v10886
    %v10888 = vrot.slane %v10883, %v10887
    %v10889 = vlaneseq
    %v10890 = vshrl.u32 %v10889, 7
    %v10891 = vsub.s32 1, %v10890
    %v10892 = vrot.slane %v10883, %v10891
    %v10893 = vlaneseq
    %v10894 = vshrl.u32 %v10893, 7
    %v10895 = vsub.s32 2, %v10894
    %v10896 = vrot.slane %v10883, %v10895
    %v10897 = vlaneseq
    %v10898 = vshrl.u32 %v10897, 7
    %v10899 = vsub.s32 3, %v10898
    %v10900 = vrot.slane %v10883, %v10899
    %v10901 = vlaneseq
    %v10902 = vshrl.u32 %v10901, 7
    %v10903 = vsub.s32 4, %v10902
    %v10904 = vrot.slane %v10883, %v10903
    %v10905 = vlaneseq
    %v10906 = vshrl.u32 %v10905, 7
    %v10907 = vsub.s32 5, %v10906
    %v10908 = vrot.slane %v10883, %v10907
    %v10909 = vlaneseq
    %v10910 = vshrl.u32 %v10909, 7
    %v10911 = vsub.s32 6, %v10910
    %v10912 = vrot.slane %v10883, %v10911
    %v10913 = vlaneseq
    %v10914 = vshrl.u32 %v10913, 7
    %v10915 = vsub.s32 7, %v10914
    %v10916 = vrot.slane %v10883, %v10915
    %v10925 = vadd.f32 %v10771, %v10888
    %v10926 = vadd.f32 %v10772, %v10892
    %v10927 = vadd.f32 %v10773, %v10896
    %v10928 = vadd.f32 %v10774, %v10900
    %v10929 = vadd.f32 %v10775, %v10904
    %v10930 = vadd.f32 %v10776, %v10908
    %v10931 = vadd.f32 %v10777, %v10912
    %v10932 = vadd.f32 %v10778, %v10916
    %v10933 = vadd.f32 %v10779, %v10888
    %v10934 = vadd.f32 %v10780, %v10892
    %v10935 = vadd.f32 %v10781, %v10896
    %v10936 = vadd.f32 %v10782, %v10900
    %v10937 = vadd.f32 %v10783, %v10904
    %v10938 = vadd.f32 %v10784, %v10908
    %v10939 = vadd.f32 %v10785, %v10912
    %v10940 = vadd.f32 %v10786, %v10916
    %v10941 = vadd.f32 %v10787, %v10888
    %v10942 = vadd.f32 %v10788, %v10892
    %v10943 = vadd.f32 %v10789, %v10896
    %v10944 = vadd.f32 %v10790, %v10900
    %v10945 = vadd.f32 %v10791, %v10904
    %v10946 = vadd.f32 %v10792, %v10908
    %v10947 = vadd.f32 %v10793, %v10912
    %v10948 = vadd.f32 %v10794, %v10916
    %v10949 = vadd.f32 %v10795, %v10888
    %v10950 = vadd.f32 %v10796, %v10892
    %v10951 = vadd.f32 %v10797, %v10896
    %v10952 = vadd.f32 %v10798, %v10900
    %v10953 = vadd.f32 %v10799, %v10904
    %v10954 = vadd.f32 %v10800, %v10908
    %v10955 = vadd.f32 %v10801, %v10912
    %v10956 = vadd.f32 %v10802, %v10916
    %v10957 = vadd.f32 %v10803, %v10888
    %v10958 = vadd.f32 %v10804, %v10892
    %v10959 = vadd.f32 %v10805, %v10896
    %v10960 = vadd.f32 %v10806, %v10900
    %v10961 = vadd.f32 %v10807, %v10904
    %v10962 = vadd.f32 %v10808, %v10908
    %v10963 = vadd.f32 %v10809, %v10912
    %v10964 = vadd.f32 %v10810, %v10916
    %v10965 = vadd.f32 %v10811, %v10888
    %v10966 = vadd.f32 %v10812, %v10892
    %v10967 = vadd.f32 %v10813, %v10896
    %v10968 = vadd.f32 %v10814, %v10900
    %v10969 = vadd.f32 %v10815, %v10904
    %v10970 = vadd.f32 %v10816, %v10908
    %v10971 = vadd.f32 %v10817, %v10912
    %v10972 = vadd.f32 %v10818, %v10916
    %v10973 = vadd.f32 %v10819, %v10888
    %v10974 = vadd.f32 %v10820, %v10892
    %v10975 = vadd.f32 %v10821, %v10896
    %v10976 = vadd.f32 %v10822, %v10900
    %v10977 = vadd.f32 %v10823, %v10904
    %v10978 = vadd.f32 %v10824, %v10908
    %v10979 = vadd.f32 %v10825, %v10912
    %v10980 = vadd.f32 %v10826, %v10916
    %v10981 = vadd.f32 %v10827, %v10888
    %v10982 = vadd.f32 %v10828, %v10892
    %v10983 = vadd.f32 %v10829, %v10896
    %v10984 = vadd.f32 %v10830, %v10900
    %v10985 = vadd.f32 %v10831, %v10904
    %v10986 = vadd.f32 %v10832, %v10908
    %v10987 = vadd.f32 %v10833, %v10912
    %v10988 = vadd.f32 %v10834, %v10916
    %v10989 = vadd.f32 %v10835, %v10888
    %v10990 = vadd.f32 %v10836, %v10892
    %v10991 = vadd.f32 %v10837, %v10896
    %v10992 = vadd.f32 %v10838, %v10900
    %v10993 = vadd.f32 %v10839, %v10904
    %v10994 = vadd.f32 %v10840, %v10908
    %v10995 = vadd.f32 %v10841, %v10912
    %v10996 = vadd.f32 %v10842, %v10916
    %v10997 = vadd.f32 %v10843, %v10888
    %v10998 = vadd.f32 %v10844, %v10892
    %v10999 = vadd.f32 %v10845, %v10896
    %v11000 = vadd.f32 %v10846, %v10900
    %v11001 = vadd.f32 %v10847, %v10904
    %v11002 = vadd.f32 %v10848, %v10908
    %v11003 = vadd.f32 %v10849, %v10912
    %v11004 = vadd.f32 %v10850, %v10916
    %v11005 = vadd.f32 %v10851, %v10888
    %v11006 = vadd.f32 %v10852, %v10892
    %v11007 = vadd.f32 %v10853, %v10896
    %v11008 = vadd.f32 %v10854, %v10900
    %v11009 = vadd.f32 %v10855, %v10904
    %v11010 = vadd.f32 %v10856, %v10908
    %v11011 = vadd.f32 %v10857, %v10912
    %v11012 = vadd.f32 %v10858, %v10916
    %v11013 = vadd.f32 %v10859, %v10888
    %v11014 = vadd.f32 %v10860, %v10892
    %v11015 = vadd.f32 %v10861, %v10896
    %v11016 = vadd.f32 %v10862, %v10900
    %v11017 = vadd.f32 %v10863, %v10904
    %v11018 = vadd.f32 %v10864, %v10908
    %v11019 = vadd.f32 %v10865, %v10912
    %v11020 = vadd.f32 %v10866, %v10916
    %v11021 = vadd.f32 %v10867, %v10888
    %v11022 = vadd.f32 %v10868, %v10892
    %v11023 = vadd.f32 %v10869, %v10896
    %v11024 = vadd.f32 %v10870, %v10900
    %v11025 = vadd.f32 %v10871, %v10904
    %v11026 = vadd.f32 %v10872, %v10908
    %v11027 = vadd.f32 %v10873, %v10912
    %v11028 = vadd.f32 %v10874, %v10916
    %v11029 = vadd.f32 %v10875, %v10888
    %v11030 = vadd.f32 %v10876, %v10892
    %v11031 = vadd.f32 %v10877, %v10896
    %v11032 = vadd.f32 %v10878, %v10900
    %v11033 = vadd.f32 %v10879, %v10904
    %v11034 = vadd.f32 %v10880, %v10908
    %v11035 = vadd.f32 %v10881, %v10912
    %v11036 = vadd.f32 %v10882, %v10916
    %v11037 = vmax.f32 %v10925, 0.0
    %v11038 = vmax.f32 %v10926, 0.0
    %v11039 = vmax.f32 %v10927, 0.0
    %v11040 = vmax.f32 %v10928, 0.0
    %v11041 = vmax.f32 %v10929, 0.0
    %v11042 = vmax.f32 %v10930, 0.0
    %v11043 = vmax.f32 %v10931, 0.0
    %v11044 = vmax.f32 %v10932, 0.0
    %v11045 = vmax.f32 %v10933, 0.0
    %v11046 = vmax.f32 %v10934, 0.0
    %v11047 = vmax.f32 %v10935, 0.0
    %v11048 = vmax.f32 %v10936, 0.0
    %v11049 = vmax.f32 %v10937, 0.0
    %v11050 = vmax.f32 %v10938, 0.0
    %v11051 = vmax.f32 %v10939, 0.0
    %v11052 = vmax.f32 %v10940, 0.0
    %v11053 = vmax.f32 %v10941, 0.0
    %v11054 = vmax.f32 %v10942, 0.0
    %v11055 = vmax.f32 %v10943, 0.0
    %v11056 = vmax.f32 %v10944, 0.0
    %v11057 = vmax.f32 %v10945, 0.0
    %v11058 = vmax.f32 %v10946, 0.0
    %v11059 = vmax.f32 %v10947, 0.0
    %v11060 = vmax.f32 %v10948, 0.0
    %v11061 = vmax.f32 %v10949, 0.0
    %v11062 = vmax.f32 %v10950, 0.0
    %v11063 = vmax.f32 %v10951, 0.0
    %v11064 = vmax.f32 %v10952, 0.0
    %v11065 = vmax.f32 %v10953, 0.0
    %v11066 = vmax.f32 %v10954, 0.0
    %v11067 = vmax.f32 %v10955, 0.0
    %v11068 = vmax.f32 %v10956, 0.0
    %v11069 = vmax.f32 %v10957, 0.0
    %v11070 = vmax.f32 %v10958, 0.0
    %v11071 = vmax.f32 %v10959, 0.0
    %v11072 = vmax.f32 %v10960, 0.0
    %v11073 = vmax.f32 %v10961, 0.0
    %v11074 = vmax.f32 %v10962, 0.0
    %v11075 = vmax.f32 %v10963, 0.0
    %v11076 = vmax.f32 %v10964, 0.0
    %v11077 = vmax.f32 %v10965, 0.0
    %v11078 = vmax.f32 %v10966, 0.0
    %v11079 = vmax.f32 %v10967, 0.0
    %v11080 = vmax.f32 %v10968, 0.0
    %v11081 = vmax.f32 %v10969, 0.0
    %v11082 = vmax.f32 %v10970, 0.0
    %v11083 = vmax.f32 %v10971, 0.0
    %v11084 = vmax.f32 %v10972, 0.0
    %v11085 = vmax.f32 %v10973, 0.0
    %v11086 = vmax.f32 %v10974, 0.0
    %v11087 = vmax.f32 %v10975, 0.0
    %v11088 = vmax.f32 %v10976, 0.0
    %v11089 = vmax.f32 %v10977, 0.0
    %v11090 = vmax.f32 %v10978, 0.0
    %v11091 = vmax.f32 %v10979, 0.0
    %v11092 = vmax.f32 %v10980, 0.0
    %v11093 = vmax.f32 %v10981, 0.0
    %v11094 = vmax.f32 %v10982, 0.0
    %v11095 = vmax.f32 %v10983, 0.0
    %v11096 = vmax.f32 %v10984, 0.0
    %v11097 = vmax.f32 %v10985, 0.0
    %v11098 = vmax.f32 %v10986, 0.0
    %v11099 = vmax.f32 %v10987, 0.0
    %v11100 = vmax.f32 %v10988, 0.0
    %v11101 = vmax.f32 %v10989, 0.0
    %v11102 = vmax.f32 %v10990, 0.0
    %v11103 = vmax.f32 %v10991, 0.0
    %v11104 = vmax.f32 %v10992, 0.0
    %v11105 = vmax.f32 %v10993, 0.0
    %v11106 = vmax.f32 %v10994, 0.0
    %v11107 = vmax.f32 %v10995, 0.0
    %v11108 = vmax.f32 %v10996, 0.0
    %v11109 = vmax.f32 %v10997, 0.0
    %v11110 = vmax.f32 %v10998, 0.0
    %v11111 = vmax.f32 %v10999, 0.0
    %v11112 = vmax.f32 %v11000, 0.0
    %v11113 = vmax.f32 %v11001, 0.0
    %v11114 = vmax.f32 %v11002, 0.0
    %v11115 = vmax.f32 %v11003, 0.0
    %v11116 = vmax.f32 %v11004, 0.0
    %v11117 = vmax.f32 %v11005, 0.0
    %v11118 = vmax.f32 %v11006, 0.0
    %v11119 = vmax.f32 %v11007, 0.0
    %v11120 = vmax.f32 %v11008, 0.0
    %v11121 = vmax.f32 %v11009, 0.0
    %v11122 = vmax.f32 %v11010, 0.0
    %v11123 = vmax.f32 %v11011, 0.0
    %v11124 = vmax.f32 %v11012, 0.0
    %v11125 = vmax.f32 %v11013, 0.0
    %v11126 = vmax.f32 %v11014, 0.0
    %v11127 = vmax.f32 %v11015, 0.0
    %v11128 = vmax.f32 %v11016, 0.0
    %v11129 = vmax.f32 %v11017, 0.0
    %v11130 = vmax.f32 %v11018, 0.0
    %v11131 = vmax.f32 %v11019, 0.0
    %v11132 = vmax.f32 %v11020, 0.0
    %v11133 = vmax.f32 %v11021, 0.0
    %v11134 = vmax.f32 %v11022, 0.0
    %v11135 = vmax.f32 %v11023, 0.0
    %v11136 = vmax.f32 %v11024, 0.0
    %v11137 = vmax.f32 %v11025, 0.0
    %v11138 = vmax.f32 %v11026, 0.0
    %v11139 = vmax.f32 %v11027, 0.0
    %v11140 = vmax.f32 %v11028, 0.0
    %v11141 = vmax.f32 %v11029, 0.0
    %v11142 = vmax.f32 %v11030, 0.0
    %v11143 = vmax.f32 %v11031, 0.0
    %v11144 = vmax.f32 %v11032, 0.0
    %v11145 = vmax.f32 %v11033, 0.0
    %v11146 = vmax.f32 %v11034, 0.0
    %v11147 = vmax.f32 %v11035, 0.0
    %v11148 = vmax.f32 %v11036, 0.0
    %v11149 = vmax.f32 %v11037, %v11039
    %v11150 = vmax.f32 %v11038, %v11040
    %v11151 = vmax.f32 %v11045, %v11047
    %v11152 = vmax.f32 %v11046, %v11048
    %v11153 = vmax.f32 %v11053, %v11055
    %v11154 = vmax.f32 %v11054, %v11056
    %v11155 = vmax.f32 %v11061, %v11063
    %v11156 = vmax.f32 %v11062, %v11064
    %v11157 = vmax.f32 %v11069, %v11071
    %v11158 = vmax.f32 %v11070, %v11072
    %v11159 = vmax.f32 %v11077, %v11079
    %v11160 = vmax.f32 %v11078, %v11080
    %v11161 = vmax.f32 %v11085, %v11087
    %v11162 = vmax.f32 %v11086, %v11088
    %v11163 = vmax.f32 %v11093, %v11095
    %v11164 = vmax.f32 %v11094, %v11096
    %v11165 = vmax.f32 %v11101, %v11103
    %v11166 = vmax.f32 %v11102, %v11104
    %v11167 = vmax.f32 %v11109, %v11111
    %v11168 = vmax.f32 %v11110, %v11112
    %v11169 = vmax.f32 %v11117, %v11119
    %v11170 = vmax.f32 %v11118, %v11120
    %v11171 = vmax.f32 %v11125, %v11127
    %v11172 = vmax.f32 %v11126, %v11128
    %v11173 = vmax.f32 %v11133, %v11135
    %v11174 = vmax.f32 %v11134, %v11136
    %v11175 = vmax.f32 %v11141, %v11143
    %v11176 = vmax.f32 %v11142, %v11144
    %v11177 = vmax.f32 %v11041, %v11043
    %v11178 = vmax.f32 %v11042, %v11044
    %v11179 = vmax.f32 %v11049, %v11051
    %v11180 = vmax.f32 %v11050, %v11052
    %v11181 = vmax.f32 %v11057, %v11059
    %v11182 = vmax.f32 %v11058, %v11060
    %v11183 = vmax.f32 %v11065, %v11067
    %v11184 = vmax.f32 %v11066, %v11068
    %v11185 = vmax.f32 %v11073, %v11075
    %v11186 = vmax.f32 %v11074, %v11076
    %v11187 = vmax.f32 %v11081, %v11083
    %v11188 = vmax.f32 %v11082, %v11084
    %v11189 = vmax.f32 %v11089, %v11091
    %v11190 = vmax.f32 %v11090, %v11092
    %v11191 = vmax.f32 %v11097, %v11099
    %v11192 = vmax.f32 %v11098, %v11100
    %v11193 = vmax.f32 %v11105, %v11107
    %v11194 = vmax.f32 %v11106, %v11108
    %v11195 = vmax.f32 %v11113, %v11115
    %v11196 = vmax.f32 %v11114, %v11116
    %v11197 = vmax.f32 %v11121, %v11123
    %v11198 = vmax.f32 %v11122, %v11124
    %v11199 = vmax.f32 %v11129, %v11131
    %v11200 = vmax.f32 %v11130, %v11132
    %v11201 = vmax.f32 %v11137, %v11139
    %v11202 = vmax.f32 %v11138, %v11140
    %v11203 = vmax.f32 %v11145, %v11147
    %v11204 = vmax.f32 %v11146, %v11148
    %v11205 = vmax.f32 %v11149, %v11177
    %v11206 = vmax.f32 %v11150, %v11178
    %v11207 = vmax.f32 %v11151, %v11179
    %v11208 = vmax.f32 %v11152, %v11180
    %v11209 = vmax.f32 %v11153, %v11181
    %v11210 = vmax.f32 %v11154, %v11182
    %v11211 = vmax.f32 %v11155, %v11183
    %v11212 = vmax.f32 %v11156, %v11184
    %v11213 = vmax.f32 %v11157, %v11185
    %v11214 = vmax.f32 %v11158, %v11186
    %v11215 = vmax.f32 %v11159, %v11187
    %v11216 = vmax.f32 %v11160, %v11188
    %v11217 = vmax.f32 %v11161, %v11189
    %v11218 = vmax.f32 %v11162, %v11190
    %v11219 = vmax.f32 %v11163, %v11191
    %v11220 = vmax.f32 %v11164, %v11192
    %v11221 = vmax.f32 %v11165, %v11193
    %v11222 = vmax.f32 %v11166, %v11194
    %v11223 = vmax.f32 %v11167, %v11195
    %v11224 = vmax.f32 %v11168, %v11196
    %v11225 = vmax.f32 %v11169, %v11197
    %v11226 = vmax.f32 %v11170, %v11198
    %v11227 = vmax.f32 %v11171, %v11199
    %v11228 = vmax.f32 %v11172, %v11200
    %v11229 = vmax.f32 %v11173, %v11201
    %v11230 = vmax.f32 %v11174, %v11202
    %v11231 = vmax.f32 %v11175, %v11203
    %v11232 = vmax.f32 %v11176, %v11204
    %v11233 = vpack.c.bf16 %v11207, %v11205
    %v11234 = vpack.c.bf16 %v11208, %v11206
    %v11235 = vpack.c.bf16 %v11211, %v11209
    %v11236 = vpack.c.bf16 %v11212, %v11210
    %v11237 = vpack.c.bf16 %v11215, %v11213
    %v11238 = vpack.c.bf16 %v11216, %v11214
    %v11239 = vpack.c.bf16 %v11219, %v11217
    %v11240 = vpack.c.bf16 %v11220, %v11218
    %v11241 = vpack.c.bf16 %v11223, %v11221
    %v11242 = vpack.c.bf16 %v11224, %v11222
    %v11243 = vpack.c.bf16 %v11227, %v11225
    %v11244 = vpack.c.bf16 %v11228, %v11226
    %v11245 = vpack.c.bf16 %v11231, %v11229
    %v11246 = vpack.c.bf16 %v11232, %v11230
    %v11247 = vld [vmem:[#allocation12] sm:$0xf]
    %v11248 = vld [vmem:[#allocation12 + $0x4] sm:$0xf]
    %v11249 = vld [vmem:[#allocation12 + $0x8] sm:$0xf]
    %v11250 = vld [vmem:[#allocation12 + $0xc] sm:$0xf]
    %v11251 = vld [vmem:[#allocation12 + $0x10] sm:$0xf]
    %v11252 = vld [vmem:[#allocation12 + $0x14] sm:$0xf]
    %v11253 = vld [vmem:[#allocation12 + $0x18] sm:$0xf]
    %v11254 = vld [vmem:[#allocation12 + $0x1c] sm:$0xf]
    %v11255 = vld [vmem:[#allocation12 + $0x20] sm:$0xf]
    %v11256 = vld [vmem:[#allocation12 + $0x24] sm:$0xf]
    %v11257 = vld [vmem:[#allocation12 + $0x28] sm:$0xf]
    %v11258 = vld [vmem:[#allocation12 + $0x2c] sm:$0xf]
    %v11259 = vld [vmem:[#allocation12 + $0x30] sm:$0xf]
    %v11260 = vld [vmem:[#allocation12 + $0x34] sm:$0xf]
    %v11261 = vld [vmem:[#allocation12 + $0x38] sm:$0xf]
    %v11262 = vld [vmem:[#allocation12 + $0x3c] sm:$0xf]
    %v11263 = vld [vmem:[#allocation12 + $0x40] sm:$0xf]
    %v11264 = vld [vmem:[#allocation12 + $0x44] sm:$0xf]
    %v11265 = vld [vmem:[#allocation12 + $0x48] sm:$0xf]
    %v11266 = vld [vmem:[#allocation12 + $0x4c] sm:$0xf]
    %v11267 = vld [vmem:[#allocation12 + $0x50] sm:$0xf]
    %v11268 = vld [vmem:[#allocation12 + $0x54] sm:$0xf]
    %v11269 = vld [vmem:[#allocation12 + $0x58] sm:$0xf]
    %v11270 = vld [vmem:[#allocation12 + $0x5c] sm:$0xf]
    %v11271 = vld [vmem:[#allocation12 + $0x60] sm:$0xf]
    %v11272 = vld [vmem:[#allocation12 + $0x64] sm:$0xf]
    %v11273 = vld [vmem:[#allocation12 + $0x68] sm:$0xf]
    %v11274 = vld [vmem:[#allocation12 + $0x6c] sm:$0xf]
    %v11275 = vld [vmem:[#allocation12 + $0x70] sm:$0xf]
    %v11276 = vld [vmem:[#allocation12 + $0x74] sm:$0xf]
    %v11277 = vld [vmem:[#allocation12 + $0x78] sm:$0xf]
    %v11278 = vld [vmem:[#allocation12 + $0x7c] sm:$0xf]
    %v11279 = vld [vmem:[#allocation12 + $0x80] sm:$0xf]
    %v11280 = vld [vmem:[#allocation12 + $0x84] sm:$0xf]
    %v11281 = vld [vmem:[#allocation12 + $0x88] sm:$0xf]
    %v11282 = vld [vmem:[#allocation12 + $0x8c] sm:$0xf]
    %v11283 = vld [vmem:[#allocation12 + $0x90] sm:$0xf]
    %v11284 = vld [vmem:[#allocation12 + $0x94] sm:$0xf]
    %v11285 = vld [vmem:[#allocation12 + $0x98] sm:$0xf]
    %v11286 = vld [vmem:[#allocation12 + $0x9c] sm:$0xf]
    %v11287 = vld [vmem:[#allocation12 + $0xa0] sm:$0xf]
    %v11288 = vld [vmem:[#allocation12 + $0xa4] sm:$0xf]
    %v11289 = vld [vmem:[#allocation12 + $0xa8] sm:$0xf]
    %v11290 = vld [vmem:[#allocation12 + $0xac] sm:$0xf]
    %v11291 = vld [vmem:[#allocation12 + $0xb0] sm:$0xf]
    %v11292 = vld [vmem:[#allocation12 + $0xb4] sm:$0xf]
    %v11293 = vld [vmem:[#allocation12 + $0xb8] sm:$0xf]
    %v11294 = vld [vmem:[#allocation12 + $0xbc] sm:$0xf]
    %v11295 = vld [vmem:[#allocation12 + $0xc0] sm:$0xf]
    %v11296 = vld [vmem:[#allocation12 + $0xc4] sm:$0xf]
    %v11297 = vld [vmem:[#allocation12 + $0xc8] sm:$0xf]
    %v11298 = vld [vmem:[#allocation12 + $0xcc] sm:$0xf]
    %v11299 = vld [vmem:[#allocation12 + $0xd0] sm:$0xf]
    %v11300 = vld [vmem:[#allocation12 + $0xd4] sm:$0xf]
    %v11301 = vld [vmem:[#allocation12 + $0xd8] sm:$0xf]
    %v11302 = vld [vmem:[#allocation12 + $0xdc] sm:$0xf]
    %v11303 = vld [vmem:[#allocation12 + $0xe0] sm:$0xf]
    %v11304 = vld [vmem:[#allocation12 + $0xe4] sm:$0xf]
    %v11305 = vld [vmem:[#allocation12 + $0xe8] sm:$0xf]
    %v11306 = vld [vmem:[#allocation12 + $0xec] sm:$0xf]
    %v11307 = vld [vmem:[#allocation12 + $0xf0] sm:$0xf]
    %v11308 = vld [vmem:[#allocation12 + $0xf4] sm:$0xf]
    %v11309 = vld [vmem:[#allocation12 + $0xf8] sm:$0xf]
    %v11310 = vld [vmem:[#allocation12 + $0xfc] sm:$0xf]
    %v11311 = vld [vmem:[#allocation12 + $0x100] sm:$0xf]
    %v11312 = vld [vmem:[#allocation12 + $0x104] sm:$0xf]
    %v11313 = vld [vmem:[#allocation12 + $0x108] sm:$0xf]
    %v11314 = vld [vmem:[#allocation12 + $0x10c] sm:$0xf]
    %v11315 = vld [vmem:[#allocation12 + $0x110] sm:$0xf]
    %v11316 = vld [vmem:[#allocation12 + $0x114] sm:$0xf]
    %v11317 = vld [vmem:[#allocation12 + $0x118] sm:$0xf]
    %v11318 = vld [vmem:[#allocation12 + $0x11c] sm:$0xf]
    %v11319 = vld [vmem:[#allocation12 + $0x120] sm:$0xf]
    %v11320 = vld [vmem:[#allocation12 + $0x124] sm:$0xf]
    %v11321 = vld [vmem:[#allocation12 + $0x128] sm:$0xf]
    %v11322 = vld [vmem:[#allocation12 + $0x12c] sm:$0xf]
    %v11323 = vld [vmem:[#allocation12 + $0x130] sm:$0xf]
    %v11324 = vld [vmem:[#allocation12 + $0x134] sm:$0xf]
    %v11325 = vld [vmem:[#allocation12 + $0x138] sm:$0xf]
    %v11326 = vld [vmem:[#allocation12 + $0x13c] sm:$0xf]
    %v11327 = vld [vmem:[#allocation12 + $0x140] sm:$0xf]
    %v11328 = vld [vmem:[#allocation12 + $0x144] sm:$0xf]
    %v11329 = vld [vmem:[#allocation12 + $0x148] sm:$0xf]
    %v11330 = vld [vmem:[#allocation12 + $0x14c] sm:$0xf]
    %v11331 = vld [vmem:[#allocation12 + $0x150] sm:$0xf]
    %v11332 = vld [vmem:[#allocation12 + $0x154] sm:$0xf]
    %v11333 = vld [vmem:[#allocation12 + $0x158] sm:$0xf]
    %v11334 = vld [vmem:[#allocation12 + $0x15c] sm:$0xf]
    %v11335 = vld [vmem:[#allocation12 + $0x160] sm:$0xf]
    %v11336 = vld [vmem:[#allocation12 + $0x164] sm:$0xf]
    %v11337 = vld [vmem:[#allocation12 + $0x168] sm:$0xf]
    %v11338 = vld [vmem:[#allocation12 + $0x16c] sm:$0xf]
    %v11339 = vld [vmem:[#allocation12 + $0x170] sm:$0xf]
    %v11340 = vld [vmem:[#allocation12 + $0x174] sm:$0xf]
    %v11341 = vld [vmem:[#allocation12 + $0x178] sm:$0xf]
    %v11342 = vld [vmem:[#allocation12 + $0x17c] sm:$0xf]
    %v11343 = vld [vmem:[#allocation12 + $0x180] sm:$0xf]
    %v11344 = vld [vmem:[#allocation12 + $0x184] sm:$0xf]
    %v11345 = vld [vmem:[#allocation12 + $0x188] sm:$0xf]
    %v11346 = vld [vmem:[#allocation12 + $0x18c] sm:$0xf]
    %v11347 = vld [vmem:[#allocation12 + $0x190] sm:$0xf]
    %v11348 = vld [vmem:[#allocation12 + $0x194] sm:$0xf]
    %v11349 = vld [vmem:[#allocation12 + $0x198] sm:$0xf]
    %v11350 = vld [vmem:[#allocation12 + $0x19c] sm:$0xf]
    %v11351 = vld [vmem:[#allocation12 + $0x1a0] sm:$0xf]
    %v11352 = vld [vmem:[#allocation12 + $0x1a4] sm:$0xf]
    %v11353 = vld [vmem:[#allocation12 + $0x1a8] sm:$0xf]
    %v11354 = vld [vmem:[#allocation12 + $0x1ac] sm:$0xf]
    %v11355 = vld [vmem:[#allocation12 + $0x1b0] sm:$0xf]
    %v11356 = vld [vmem:[#allocation12 + $0x1b4] sm:$0xf]
    %v11357 = vld [vmem:[#allocation12 + $0x1b8] sm:$0xf]
    %v11358 = vld [vmem:[#allocation12 + $0x1bc] sm:$0xf]
    %v11359 = vld [vmem:[#allocation12 + $0x1c0] sm:$0xf]
    %v11360 = vld [vmem:[#allocation12 + $0x1c4] sm:$0xf]
    %v11361 = vld [vmem:[#allocation12 + $0x1c8] sm:$0xf]
    %v11362 = vld [vmem:[#allocation12 + $0x1cc] sm:$0xf]
    %v11363 = vld [vmem:[#allocation12 + $0x1d0] sm:$0xf]
    %v11364 = vld [vmem:[#allocation12 + $0x1d4] sm:$0xf]
    %v11365 = vld [vmem:[#allocation12 + $0x1d8] sm:$0xf]
    %v11366 = vld [vmem:[#allocation12 + $0x1dc] sm:$0xf]
    %v11367 = vld [vmem:[#allocation12 + $0x1e0] sm:$0xf]
    %v11368 = vld [vmem:[#allocation12 + $0x1e4] sm:$0xf]
    %v11369 = vld [vmem:[#allocation12 + $0x1e8] sm:$0xf]
    %v11370 = vld [vmem:[#allocation12 + $0x1ec] sm:$0xf]
    %v11371 = vld [vmem:[#allocation12 + $0x1f0] sm:$0xf]
    %v11372 = vld [vmem:[#allocation12 + $0x1f4] sm:$0xf]
    %v11373 = vld [vmem:[#allocation12 + $0x1f8] sm:$0xf]
    %v11374 = vld [vmem:[#allocation12 + $0x1fc] sm:$0xf]
    %v11375 = vld [vmem:[#allocation12 + $0x200] sm:$0xf]
    %v11376 = vld [vmem:[#allocation12 + $0x204] sm:$0xf]
    %v11377 = vld [vmem:[#allocation12 + $0x208] sm:$0xf]
    %v11378 = vld [vmem:[#allocation12 + $0x20c] sm:$0xf]
    %v11379 = vld [vmem:[#allocation12 + $0x210] sm:$0xf]
    %v11380 = vld [vmem:[#allocation12 + $0x214] sm:$0xf]
    %v11381 = vld [vmem:[#allocation12 + $0x218] sm:$0xf]
    %v11382 = vld [vmem:[#allocation12 + $0x21c] sm:$0xf]
    %v11383 = vld [vmem:[#allocation12 + $0x220] sm:$0xf]
    %v11384 = vld [vmem:[#allocation12 + $0x224] sm:$0xf]
    %v11385 = vld [vmem:[#allocation12 + $0x228] sm:$0xf]
    %v11386 = vld [vmem:[#allocation12 + $0x22c] sm:$0xf]
    %v11387 = vld [vmem:[#allocation12 + $0x230] sm:$0xf]
    %v11388 = vld [vmem:[#allocation12 + $0x234] sm:$0xf]
    %v11389 = vld [vmem:[#allocation12 + $0x238] sm:$0xf]
    %v11390 = vld [vmem:[#allocation12 + $0x23c] sm:$0xf]
    %v11391 = vld [vmem:[#allocation12 + $0x240] sm:$0xf]
    %v11392 = vld [vmem:[#allocation12 + $0x244] sm:$0xf]
    %v11393 = vld [vmem:[#allocation12 + $0x248] sm:$0xf]
    %v11394 = vld [vmem:[#allocation12 + $0x24c] sm:$0xf]
    %v11395 = vld [vmem:[#allocation12 + $0x250] sm:$0xf]
    %v11396 = vld [vmem:[#allocation12 + $0x254] sm:$0xf]
    %v11397 = vld [vmem:[#allocation12 + $0x258] sm:$0xf]
    %v11398 = vld [vmem:[#allocation12 + $0x25c] sm:$0xf]
    %v11399 = vld [vmem:[#allocation12 + $0x260] sm:$0xf]
    %v11400 = vld [vmem:[#allocation12 + $0x264] sm:$0xf]
    %v11401 = vld [vmem:[#allocation12 + $0x268] sm:$0xf]
    %v11402 = vld [vmem:[#allocation12 + $0x26c] sm:$0xf]
    %v11403 = vld [vmem:[#allocation12 + $0x270] sm:$0xf]
    %v11404 = vld [vmem:[#allocation12 + $0x274] sm:$0xf]
    %v11405 = vld [vmem:[#allocation12 + $0x278] sm:$0xf]
    %v11406 = vld [vmem:[#allocation12 + $0x27c] sm:$0xf]
    %v11407 = vld [vmem:[#allocation12 + $0x280] sm:$0xf]
    %v11408 = vld [vmem:[#allocation12 + $0x284] sm:$0xf]
    %v11409 = vld [vmem:[#allocation12 + $0x288] sm:$0xf]
    %v11410 = vld [vmem:[#allocation12 + $0x28c] sm:$0xf]
    %v11411 = vld [vmem:[#allocation12 + $0x290] sm:$0xf]
    %v11412 = vld [vmem:[#allocation12 + $0x294] sm:$0xf]
    %v11413 = vld [vmem:[#allocation12 + $0x298] sm:$0xf]
    %v11414 = vld [vmem:[#allocation12 + $0x29c] sm:$0xf]
    %v11415 = vld [vmem:[#allocation12 + $0x2a0] sm:$0xf]
    %v11416 = vld [vmem:[#allocation12 + $0x2a4] sm:$0xf]
    %v11417 = vld [vmem:[#allocation12 + $0x2a8] sm:$0xf]
    %v11418 = vld [vmem:[#allocation12 + $0x2ac] sm:$0xf]
    %v11419 = vld [vmem:[#allocation12 + $0x2b0] sm:$0xf]
    %v11420 = vld [vmem:[#allocation12 + $0x2b4] sm:$0xf]
    %v11421 = vld [vmem:[#allocation12 + $0x2b8] sm:$0xf]
    %v11422 = vld [vmem:[#allocation12 + $0x2bc] sm:$0xf]
    %v11423 = vld [vmem:[#allocation12 + $0x2c0] sm:$0xf]
    %v11424 = vld [vmem:[#allocation12 + $0x2c4] sm:$0xf]
    %v11425 = vld [vmem:[#allocation12 + $0x2c8] sm:$0xf]
    %v11426 = vld [vmem:[#allocation12 + $0x2cc] sm:$0xf]
    %v11427 = vld [vmem:[#allocation12 + $0x2d0] sm:$0xf]
    %v11428 = vld [vmem:[#allocation12 + $0x2d4] sm:$0xf]
    %v11429 = vld [vmem:[#allocation12 + $0x2d8] sm:$0xf]
    %v11430 = vld [vmem:[#allocation12 + $0x2dc] sm:$0xf]
    %v11431 = vld [vmem:[#allocation12 + $0x2e0] sm:$0xf]
    %v11432 = vld [vmem:[#allocation12 + $0x2e4] sm:$0xf]
    %v11433 = vld [vmem:[#allocation12 + $0x2e8] sm:$0xf]
    %v11434 = vld [vmem:[#allocation12 + $0x2ec] sm:$0xf]
    %v11435 = vld [vmem:[#allocation12 + $0x2f0] sm:$0xf]
    %v11436 = vld [vmem:[#allocation12 + $0x2f4] sm:$0xf]
    %v11437 = vld [vmem:[#allocation12 + $0x2f8] sm:$0xf]
    %v11438 = vld [vmem:[#allocation12 + $0x2fc] sm:$0xf]
    %v11439 = vld [vmem:[#allocation12 + $0x300] sm:$0xf]
    %v11440 = vld [vmem:[#allocation12 + $0x304] sm:$0xf]
    %v11441 = vld [vmem:[#allocation12 + $0x308] sm:$0xf]
    %v11442 = vld [vmem:[#allocation12 + $0x30c] sm:$0xf]
    %v11443 = vld [vmem:[#allocation12 + $0x310] sm:$0xf]
    %v11444 = vld [vmem:[#allocation12 + $0x314] sm:$0xf]
    %v11445 = vld [vmem:[#allocation12 + $0x318] sm:$0xf]
    %v11446 = vld [vmem:[#allocation12 + $0x31c] sm:$0xf]
    %v11447 = vld [vmem:[#allocation12 + $0x320] sm:$0xf]
    %v11448 = vld [vmem:[#allocation12 + $0x324] sm:$0xf]
    %v11449 = vld [vmem:[#allocation12 + $0x328] sm:$0xf]
    %v11450 = vld [vmem:[#allocation12 + $0x32c] sm:$0xf]
    %v11451 = vld [vmem:[#allocation12 + $0x330] sm:$0xf]
    %v11452 = vld [vmem:[#allocation12 + $0x334] sm:$0xf]
    %v11453 = vld [vmem:[#allocation12 + $0x338] sm:$0xf]
    %v11454 = vld [vmem:[#allocation12 + $0x33c] sm:$0xf]
    %v11455 = vld [vmem:[#allocation12 + $0x340] sm:$0xf]
    %v11456 = vld [vmem:[#allocation12 + $0x344] sm:$0xf]
    %v11457 = vld [vmem:[#allocation12 + $0x348] sm:$0xf]
    %v11458 = vld [vmem:[#allocation12 + $0x34c] sm:$0xf]
    %v11459 = vld [vmem:[#allocation12 + $0x350] sm:$0xf]
    %v11460 = vld [vmem:[#allocation12 + $0x354] sm:$0xf]
    %v11461 = vld [vmem:[#allocation12 + $0x358] sm:$0xf]
    %v11462 = vld [vmem:[#allocation12 + $0x35c] sm:$0xf]
    %v11463 = vld [vmem:[#allocation12 + $0x360] sm:$0xf]
    %v11464 = vld [vmem:[#allocation12 + $0x364] sm:$0xf]
    %v11465 = vld [vmem:[#allocation12 + $0x368] sm:$0xf]
    %v11466 = vld [vmem:[#allocation12 + $0x36c] sm:$0xf]
    %v11467 = vld [vmem:[#allocation12 + $0x370] sm:$0xf]
    %v11468 = vld [vmem:[#allocation12 + $0x374] sm:$0xf]
    %v11469 = vld [vmem:[#allocation12 + $0x378] sm:$0xf]
    %v11470 = vld [vmem:[#allocation12 + $0x37c] sm:$0xf]
    %v11471 = vld [vmem:[#allocation13] sm:$0x1]
    %v11473 = vlaneseq
    %v11474 = vshrl.u32 %v11473, 7
    %v11475 = vsub.s32 0, %v11474
    %v11476 = vrot.slane %v11471, %v11475
    %v11702 = vunpack.c.l.b16 %v11247
    %v11703 = vunpack.c.l.b16 %v11248
    %v11704 = vunpack.c.l.b16 %v11249
    %v11705 = vunpack.c.l.b16 %v11250
    %v11706 = vunpack.c.l.b16 %v11251
    %v11707 = vunpack.c.l.b16 %v11252
    %v11708 = vunpack.c.l.b16 %v11253
    %v11709 = vunpack.c.l.b16 %v11254
    %v11710 = vunpack.c.l.b16 %v11255
    %v11711 = vunpack.c.l.b16 %v11256
    %v11712 = vunpack.c.l.b16 %v11257
    %v11713 = vunpack.c.l.b16 %v11258
    %v11714 = vunpack.c.l.b16 %v11259
    %v11715 = vunpack.c.l.b16 %v11260
    %v11716 = vunpack.c.l.b16 %v11261
    %v11717 = vunpack.c.l.b16 %v11262
    %v11718 = vunpack.c.l.b16 %v11263
    %v11719 = vunpack.c.l.b16 %v11264
    %v11720 = vunpack.c.l.b16 %v11265
    %v11721 = vunpack.c.l.b16 %v11266
    %v11722 = vunpack.c.l.b16 %v11267
    %v11723 = vunpack.c.l.b16 %v11268
    %v11724 = vunpack.c.l.b16 %v11269
    %v11725 = vunpack.c.l.b16 %v11270
    %v11726 = vunpack.c.l.b16 %v11271
    %v11727 = vunpack.c.l.b16 %v11272
    %v11728 = vunpack.c.l.b16 %v11273
    %v11729 = vunpack.c.l.b16 %v11274
    %v11730 = vunpack.c.l.b16 %v11275
    %v11731 = vunpack.c.l.b16 %v11276
    %v11732 = vunpack.c.l.b16 %v11277
    %v11733 = vunpack.c.l.b16 %v11278
    %v11734 = vunpack.c.l.b16 %v11279
    %v11735 = vunpack.c.l.b16 %v11280
    %v11736 = vunpack.c.l.b16 %v11281
    %v11737 = vunpack.c.l.b16 %v11282
    %v11738 = vunpack.c.l.b16 %v11283
    %v11739 = vunpack.c.l.b16 %v11284
    %v11740 = vunpack.c.l.b16 %v11285
    %v11741 = vunpack.c.l.b16 %v11286
    %v11742 = vunpack.c.l.b16 %v11287
    %v11743 = vunpack.c.l.b16 %v11288
    %v11744 = vunpack.c.l.b16 %v11289
    %v11745 = vunpack.c.l.b16 %v11290
    %v11746 = vunpack.c.l.b16 %v11291
    %v11747 = vunpack.c.l.b16 %v11292
    %v11748 = vunpack.c.l.b16 %v11293
    %v11749 = vunpack.c.l.b16 %v11294
    %v11750 = vunpack.c.l.b16 %v11295
    %v11751 = vunpack.c.l.b16 %v11296
    %v11752 = vunpack.c.l.b16 %v11297
    %v11753 = vunpack.c.l.b16 %v11298
    %v11754 = vunpack.c.l.b16 %v11299
    %v11755 = vunpack.c.l.b16 %v11300
    %v11756 = vunpack.c.l.b16 %v11301
    %v11757 = vunpack.c.l.b16 %v11302
    %v11758 = vunpack.c.l.b16 %v11303
    %v11759 = vunpack.c.l.b16 %v11304
    %v11760 = vunpack.c.l.b16 %v11305
    %v11761 = vunpack.c.l.b16 %v11306
    %v11762 = vunpack.c.l.b16 %v11307
    %v11763 = vunpack.c.l.b16 %v11308
    %v11764 = vunpack.c.l.b16 %v11309
    %v11765 = vunpack.c.l.b16 %v11310
    %v11766 = vunpack.c.l.b16 %v11311
    %v11767 = vunpack.c.l.b16 %v11312
    %v11768 = vunpack.c.l.b16 %v11313
    %v11769 = vunpack.c.l.b16 %v11314
    %v11770 = vunpack.c.l.b16 %v11315
    %v11771 = vunpack.c.l.b16 %v11316
    %v11772 = vunpack.c.l.b16 %v11317
    %v11773 = vunpack.c.l.b16 %v11318
    %v11774 = vunpack.c.l.b16 %v11319
    %v11775 = vunpack.c.l.b16 %v11320
    %v11776 = vunpack.c.l.b16 %v11321
    %v11777 = vunpack.c.l.b16 %v11322
    %v11778 = vunpack.c.l.b16 %v11323
    %v11779 = vunpack.c.l.b16 %v11324
    %v11780 = vunpack.c.l.b16 %v11325
    %v11781 = vunpack.c.l.b16 %v11326
    %v11782 = vunpack.c.l.b16 %v11327
    %v11783 = vunpack.c.l.b16 %v11328
    %v11784 = vunpack.c.l.b16 %v11329
    %v11785 = vunpack.c.l.b16 %v11330
    %v11786 = vunpack.c.l.b16 %v11331
    %v11787 = vunpack.c.l.b16 %v11332
    %v11788 = vunpack.c.l.b16 %v11333
    %v11789 = vunpack.c.l.b16 %v11334
    %v11790 = vunpack.c.l.b16 %v11335
    %v11791 = vunpack.c.l.b16 %v11336
    %v11792 = vunpack.c.l.b16 %v11337
    %v11793 = vunpack.c.l.b16 %v11338
    %v11794 = vunpack.c.l.b16 %v11339
    %v11795 = vunpack.c.l.b16 %v11340
    %v11796 = vunpack.c.l.b16 %v11341
    %v11797 = vunpack.c.l.b16 %v11342
    %v11798 = vunpack.c.l.b16 %v11343
    %v11799 = vunpack.c.l.b16 %v11344
    %v11800 = vunpack.c.l.b16 %v11345
    %v11801 = vunpack.c.l.b16 %v11346
    %v11802 = vunpack.c.l.b16 %v11347
    %v11803 = vunpack.c.l.b16 %v11348
    %v11804 = vunpack.c.l.b16 %v11349
    %v11805 = vunpack.c.l.b16 %v11350
    %v11806 = vunpack.c.l.b16 %v11351
    %v11807 = vunpack.c.l.b16 %v11352
    %v11808 = vunpack.c.l.b16 %v11353
    %v11809 = vunpack.c.l.b16 %v11354
    %v11810 = vunpack.c.l.b16 %v11355
    %v11811 = vunpack.c.l.b16 %v11356
    %v11812 = vunpack.c.l.b16 %v11357
    %v11813 = vunpack.c.l.b16 %v11358
    %v11814 = vunpack.c.l.b16 %v11359
    %v11815 = vunpack.c.l.b16 %v11360
    %v11816 = vunpack.c.l.b16 %v11361
    %v11817 = vunpack.c.l.b16 %v11362
    %v11818 = vunpack.c.l.b16 %v11363
    %v11819 = vunpack.c.l.b16 %v11364
    %v11820 = vunpack.c.l.b16 %v11365
    %v11821 = vunpack.c.l.b16 %v11366
    %v11822 = vunpack.c.l.b16 %v11367
    %v11823 = vunpack.c.l.b16 %v11368
    %v11824 = vunpack.c.l.b16 %v11369
    %v11825 = vunpack.c.l.b16 %v11370
    %v11826 = vunpack.c.l.b16 %v11371
    %v11827 = vunpack.c.l.b16 %v11372
    %v11828 = vunpack.c.l.b16 %v11373
    %v11829 = vunpack.c.l.b16 %v11374
    %v11830 = vunpack.c.l.b16 %v11375
    %v11831 = vunpack.c.l.b16 %v11376
    %v11832 = vunpack.c.l.b16 %v11377
    %v11833 = vunpack.c.l.b16 %v11378
    %v11834 = vunpack.c.l.b16 %v11379
    %v11835 = vunpack.c.l.b16 %v11380
    %v11836 = vunpack.c.l.b16 %v11381
    %v11837 = vunpack.c.l.b16 %v11382
    %v11838 = vunpack.c.l.b16 %v11383
    %v11839 = vunpack.c.l.b16 %v11384
    %v11840 = vunpack.c.l.b16 %v11385
    %v11841 = vunpack.c.l.b16 %v11386
    %v11842 = vunpack.c.l.b16 %v11387
    %v11843 = vunpack.c.l.b16 %v11388
    %v11844 = vunpack.c.l.b16 %v11389
    %v11845 = vunpack.c.l.b16 %v11390
    %v11846 = vunpack.c.l.b16 %v11391
    %v11847 = vunpack.c.l.b16 %v11392
    %v11848 = vunpack.c.l.b16 %v11393
    %v11849 = vunpack.c.l.b16 %v11394
    %v11850 = vunpack.c.l.b16 %v11395
    %v11851 = vunpack.c.l.b16 %v11396
    %v11852 = vunpack.c.l.b16 %v11397
    %v11853 = vunpack.c.l.b16 %v11398
    %v11854 = vunpack.c.l.b16 %v11399
    %v11855 = vunpack.c.l.b16 %v11400
    %v11856 = vunpack.c.l.b16 %v11401
    %v11857 = vunpack.c.l.b16 %v11402
    %v11858 = vunpack.c.l.b16 %v11403
    %v11859 = vunpack.c.l.b16 %v11404
    %v11860 = vunpack.c.l.b16 %v11405
    %v11861 = vunpack.c.l.b16 %v11406
    %v11862 = vunpack.c.l.b16 %v11407
    %v11863 = vunpack.c.l.b16 %v11408
    %v11864 = vunpack.c.l.b16 %v11409
    %v11865 = vunpack.c.l.b16 %v11410
    %v11866 = vunpack.c.l.b16 %v11411
    %v11867 = vunpack.c.l.b16 %v11412
    %v11868 = vunpack.c.l.b16 %v11413
    %v11869 = vunpack.c.l.b16 %v11414
    %v11870 = vunpack.c.l.b16 %v11415
    %v11871 = vunpack.c.l.b16 %v11416
    %v11872 = vunpack.c.l.b16 %v11417
    %v11873 = vunpack.c.l.b16 %v11418
    %v11874 = vunpack.c.l.b16 %v11419
    %v11875 = vunpack.c.l.b16 %v11420
    %v11876 = vunpack.c.l.b16 %v11421
    %v11877 = vunpack.c.l.b16 %v11422
    %v11878 = vunpack.c.l.b16 %v11423
    %v11879 = vunpack.c.l.b16 %v11424
    %v11880 = vunpack.c.l.b16 %v11425
    %v11881 = vunpack.c.l.b16 %v11426
    %v11882 = vunpack.c.l.b16 %v11427
    %v11883 = vunpack.c.l.b16 %v11428
    %v11884 = vunpack.c.l.b16 %v11429
    %v11885 = vunpack.c.l.b16 %v11430
    %v11886 = vunpack.c.l.b16 %v11431
    %v11887 = vunpack.c.l.b16 %v11432
    %v11888 = vunpack.c.l.b16 %v11433
    %v11889 = vunpack.c.l.b16 %v11434
    %v11890 = vunpack.c.l.b16 %v11435
    %v11891 = vunpack.c.l.b16 %v11436
    %v11892 = vunpack.c.l.b16 %v11437
    %v11893 = vunpack.c.l.b16 %v11438
    %v11894 = vunpack.c.l.b16 %v11439
    %v11895 = vunpack.c.l.b16 %v11440
    %v11896 = vunpack.c.l.b16 %v11441
    %v11897 = vunpack.c.l.b16 %v11442
    %v11898 = vunpack.c.l.b16 %v11443
    %v11899 = vunpack.c.l.b16 %v11444
    %v11900 = vunpack.c.l.b16 %v11445
    %v11901 = vunpack.c.l.b16 %v11446
    %v11902 = vunpack.c.l.b16 %v11447
    %v11903 = vunpack.c.l.b16 %v11448
    %v11904 = vunpack.c.l.b16 %v11449
    %v11905 = vunpack.c.l.b16 %v11450
    %v11906 = vunpack.c.l.b16 %v11451
    %v11907 = vunpack.c.l.b16 %v11452
    %v11908 = vunpack.c.l.b16 %v11453
    %v11909 = vunpack.c.l.b16 %v11454
    %v11910 = vunpack.c.l.b16 %v11455
    %v11911 = vunpack.c.l.b16 %v11456
    %v11912 = vunpack.c.l.b16 %v11457
    %v11913 = vunpack.c.l.b16 %v11458
    %v11914 = vunpack.c.l.b16 %v11459
    %v11915 = vunpack.c.l.b16 %v11460
    %v11916 = vunpack.c.l.b16 %v11461
    %v11917 = vunpack.c.l.b16 %v11462
    %v11918 = vunpack.c.l.b16 %v11463
    %v11919 = vunpack.c.l.b16 %v11464
    %v11920 = vunpack.c.l.b16 %v11465
    %v11921 = vunpack.c.l.b16 %v11466
    %v11922 = vunpack.c.l.b16 %v11467
    %v11923 = vunpack.c.l.b16 %v11468
    %v11924 = vunpack.c.l.b16 %v11469
    %v11925 = vunpack.c.l.b16 %v11470
    %v11926 = vpack.c.b16 %v11703, %v11702
    %v11927 = vpack.c.b16 %v11705, %v11704
    %v11928 = vpack.c.b16 %v11707, %v11706
    %v11929 = vpack.c.b16 %v11709, %v11708
    %v11930 = vpack.c.b16 %v11711, %v11710
    %v11931 = vpack.c.b16 %v11713, %v11712
    %v11932 = vpack.c.b16 %v11715, %v11714
    %v11933 = vpack.c.b16 %v11717, %v11716
    %v11934 = vpack.c.b16 %v11719, %v11718
    %v11935 = vpack.c.b16 %v11721, %v11720
    %v11936 = vpack.c.b16 %v11723, %v11722
    %v11937 = vpack.c.b16 %v11725, %v11724
    %v11938 = vpack.c.b16 %v11727, %v11726
    %v11939 = vpack.c.b16 %v11729, %v11728
    %v11940 = vpack.c.b16 %v11731, %v11730
    %v11941 = vpack.c.b16 %v11733, %v11732
    %v11942 = vpack.c.b16 %v11735, %v11734
    %v11943 = vpack.c.b16 %v11737, %v11736
    %v11944 = vpack.c.b16 %v11739, %v11738
    %v11945 = vpack.c.b16 %v11741, %v11740
    %v11946 = vpack.c.b16 %v11743, %v11742
    %v11947 = vpack.c.b16 %v11745, %v11744
    %v11948 = vpack.c.b16 %v11747, %v11746
    %v11949 = vpack.c.b16 %v11749, %v11748
    %v11950 = vpack.c.b16 %v11751, %v11750
    %v11951 = vpack.c.b16 %v11753, %v11752
    %v11952 = vpack.c.b16 %v11755, %v11754
    %v11953 = vpack.c.b16 %v11757, %v11756
    %v11954 = vpack.c.b16 %v11759, %v11758
    %v11955 = vpack.c.b16 %v11761, %v11760
    %v11956 = vpack.c.b16 %v11763, %v11762
    %v11957 = vpack.c.b16 %v11765, %v11764
    %v11958 = vpack.c.b16 %v11767, %v11766
    %v11959 = vpack.c.b16 %v11769, %v11768
    %v11960 = vpack.c.b16 %v11771, %v11770
    %v11961 = vpack.c.b16 %v11773, %v11772
    %v11962 = vpack.c.b16 %v11775, %v11774
    %v11963 = vpack.c.b16 %v11777, %v11776
    %v11964 = vpack.c.b16 %v11779, %v11778
    %v11965 = vpack.c.b16 %v11781, %v11780
    %v11966 = vpack.c.b16 %v11783, %v11782
    %v11967 = vpack.c.b16 %v11785, %v11784
    %v11968 = vpack.c.b16 %v11787, %v11786
    %v11969 = vpack.c.b16 %v11789, %v11788
    %v11970 = vpack.c.b16 %v11791, %v11790
    %v11971 = vpack.c.b16 %v11793, %v11792
    %v11972 = vpack.c.b16 %v11795, %v11794
    %v11973 = vpack.c.b16 %v11797, %v11796
    %v11974 = vpack.c.b16 %v11799, %v11798
    %v11975 = vpack.c.b16 %v11801, %v11800
    %v11976 = vpack.c.b16 %v11803, %v11802
    %v11977 = vpack.c.b16 %v11805, %v11804
    %v11978 = vpack.c.b16 %v11807, %v11806
    %v11979 = vpack.c.b16 %v11809, %v11808
    %v11980 = vpack.c.b16 %v11811, %v11810
    %v11981 = vpack.c.b16 %v11813, %v11812
    %v11982 = vpack.c.b16 %v11815, %v11814
    %v11983 = vpack.c.b16 %v11817, %v11816
    %v11984 = vpack.c.b16 %v11819, %v11818
    %v11985 = vpack.c.b16 %v11821, %v11820
    %v11986 = vpack.c.b16 %v11823, %v11822
    %v11987 = vpack.c.b16 %v11825, %v11824
    %v11988 = vpack.c.b16 %v11827, %v11826
    %v11989 = vpack.c.b16 %v11829, %v11828
    %v11990 = vpack.c.b16 %v11831, %v11830
    %v11991 = vpack.c.b16 %v11833, %v11832
    %v11992 = vpack.c.b16 %v11835, %v11834
    %v11993 = vpack.c.b16 %v11837, %v11836
    %v11994 = vpack.c.b16 %v11839, %v11838
    %v11995 = vpack.c.b16 %v11841, %v11840
    %v11996 = vpack.c.b16 %v11843, %v11842
    %v11997 = vpack.c.b16 %v11845, %v11844
    %v11998 = vpack.c.b16 %v11847, %v11846
    %v11999 = vpack.c.b16 %v11849, %v11848
    %v12000 = vpack.c.b16 %v11851, %v11850
    %v12001 = vpack.c.b16 %v11853, %v11852
    %v12002 = vpack.c.b16 %v11855, %v11854
    %v12003 = vpack.c.b16 %v11857, %v11856
    %v12004 = vpack.c.b16 %v11859, %v11858
    %v12005 = vpack.c.b16 %v11861, %v11860
    %v12006 = vpack.c.b16 %v11863, %v11862
    %v12007 = vpack.c.b16 %v11865, %v11864
    %v12008 = vpack.c.b16 %v11867, %v11866
    %v12009 = vpack.c.b16 %v11869, %v11868
    %v12010 = vpack.c.b16 %v11871, %v11870
    %v12011 = vpack.c.b16 %v11873, %v11872
    %v12012 = vpack.c.b16 %v11875, %v11874
    %v12013 = vpack.c.b16 %v11877, %v11876
    %v12014 = vpack.c.b16 %v11879, %v11878
    %v12015 = vpack.c.b16 %v11881, %v11880
    %v12016 = vpack.c.b16 %v11883, %v11882
    %v12017 = vpack.c.b16 %v11885, %v11884
    %v12018 = vpack.c.b16 %v11887, %v11886
    %v12019 = vpack.c.b16 %v11889, %v11888
    %v12020 = vpack.c.b16 %v11891, %v11890
    %v12021 = vpack.c.b16 %v11893, %v11892
    %v12022 = vpack.c.b16 %v11895, %v11894
    %v12023 = vpack.c.b16 %v11897, %v11896
    %v12024 = vpack.c.b16 %v11899, %v11898
    %v12025 = vpack.c.b16 %v11901, %v11900
    %v12026 = vpack.c.b16 %v11903, %v11902
    %v12027 = vpack.c.b16 %v11905, %v11904
    %v12028 = vpack.c.b16 %v11907, %v11906
    %v12029 = vpack.c.b16 %v11909, %v11908
    %v12030 = vpack.c.b16 %v11911, %v11910
    %v12031 = vpack.c.b16 %v11913, %v11912
    %v12032 = vpack.c.b16 %v11915, %v11914
    %v12033 = vpack.c.b16 %v11917, %v11916
    %v12034 = vpack.c.b16 %v11919, %v11918
    %v12035 = vpack.c.b16 %v11921, %v11920
    %v12036 = vpack.c.b16 %v11923, %v11922
    %v12037 = vpack.c.b16 %v11925, %v11924
    %12150 = vmatprep.subr.bf16.mxu0 0
    %12151 = vmatpush1.bf16.msra.mxu0 %v11926
    %12152 = vmatprep.subr.bf16.mxu0 0
    %12153 = vmatpush1.bf16.msra.mxu0 %v11927
    %12154 = vmatprep.subr.bf16.mxu0 0
    %12155 = vmatpush1.bf16.msra.mxu0 %v11928
    %12156 = vmatprep.subr.bf16.mxu0 0
    %12157 = vmatpush1.bf16.msra.mxu0 %v11929
    %12158 = vmatprep.subr.bf16.mxu0 0
    %12159 = vmatpush1.bf16.msra.mxu0 %v11930
    %12160 = vmatprep.subr.bf16.mxu0 0
    %12161 = vmatpush1.bf16.msra.mxu0 %v11931
    %12162 = vmatprep.subr.bf16.mxu0 0
    %12163 = vmatpush1.bf16.msra.mxu0 %v11932
    %12164 = vmatprep.subr.bf16.mxu0 0
    %12165 = vmatpush1.bf16.msra.mxu0 %v11933
    %12166 = vmatprep.subr.bf16.mxu0 0
    %12167 = vmatpush1.bf16.msra.mxu0 %v11934
    %12168 = vmatprep.subr.bf16.mxu0 0
    %12169 = vmatpush1.bf16.msra.mxu0 %v11935
    %12170 = vmatprep.subr.bf16.mxu0 0
    %12171 = vmatpush1.bf16.msra.mxu0 %v11936
    %12172 = vmatprep.subr.bf16.mxu0 0
    %12173 = vmatpush1.bf16.msra.mxu0 %v11937
    %12174 = vmatprep.subr.bf16.mxu0 0
    %12175 = vmatpush1.bf16.msra.mxu0 %v11938
    %12176 = vmatprep.subr.bf16.mxu0 0
    %12177 = vmatpush1.bf16.msra.mxu0 %v11939
    %12178 = vmatprep.subr.bf16.mxu0 0
    %12179 = vmatpush1.bf16.msra.mxu0 %v11940
    %12180 = vmatprep.subr.bf16.mxu0 0
    %12181 = vmatpush1.bf16.msra.mxu0 %v11941
    %12182 = vmatprep.mubr.bf16.mxu0 %v11234
    %12183 = vmatmul.mubr.bf16.gmra.mrb[0].mxu0 %v11233
    %v12184 = vpop.f32.mrb[0].mxu0
    %v12185 = vadd.f32 %v11476, %v12184
    %v12186 = vpop.f32.mrb[0].mxu0
    %v12187 = vpop.f32.mrb[0].mxu0
    %v12188 = vadd.f32 %v11476, %v12187
    %v12189 = vpop.f32.mrb[0].mxu0
    %12190 = vdwg.mxu0
    %12191 = vmatprep.subr.bf16.mxu0 0
    %12192 = vmatpush1.bf16.msra.mxu0 %v11942
    %12193 = vmatprep.subr.bf16.mxu0 0
    %12194 = vmatpush1.bf16.msra.mxu0 %v11943
    %12195 = vmatprep.subr.bf16.mxu0 0
    %12196 = vmatpush1.bf16.msra.mxu0 %v11944
    %12197 = vmatprep.subr.bf16.mxu0 0
    %12198 = vmatpush1.bf16.msra.mxu0 %v11945
    %12199 = vmatprep.subr.bf16.mxu0 0
    %12200 = vmatpush1.bf16.msra.mxu0 %v11946
    %12201 = vmatprep.subr.bf16.mxu0 0
    %12202 = vmatpush1.bf16.msra.mxu0 %v11947
    %12203 = vmatprep.subr.bf16.mxu0 0
    %12204 = vmatpush1.bf16.msra.mxu0 %v11948
    %12205 = vmatprep.subr.bf16.mxu0 0
    %12206 = vmatpush1.bf16.msra.mxu0 %v11949
    %12207 = vmatprep.subr.bf16.mxu0 0
    %12208 = vmatpush1.bf16.msra.mxu0 %v11950
    %12209 = vmatprep.subr.bf16.mxu0 0
    %12210 = vmatpush1.bf16.msra.mxu0 %v11951
    %12211 = vmatprep.subr.bf16.mxu0 0
    %12212 = vmatpush1.bf16.msra.mxu0 %v11952
    %12213 = vmatprep.subr.bf16.mxu0 0
    %12214 = vmatpush1.bf16.msra.mxu0 %v11953
    %12215 = vmatprep.subr.bf16.mxu0 0
    %12216 = vmatpush1.bf16.msra.mxu0 %v11954
    %12217 = vmatprep.subr.bf16.mxu0 0
    %12218 = vmatpush1.bf16.msra.mxu0 %v11955
    %12219 = vmatprep.subr.bf16.mxu0 0
    %12220 = vmatpush1.bf16.msra.mxu0 %v11956
    %12221 = vmatprep.subr.bf16.mxu0 0
    %12222 = vmatpush1.bf16.msra.mxu0 %v11957
    %12223 = vmatprep.mubr.bf16.mxu0 %v11236
    %12224 = vmatmul.mubr.bf16.gmra.mrb[0].mxu0 %v11235
    %v12225 = vpop.f32.mrb[0].mxu0
    %v12226 = vadd.f32 %v12185, %v12225
    %v12227 = vpop.f32.mrb[0].mxu0
    %v12228 = vpop.f32.mrb[0].mxu0
    %v12229 = vadd.f32 %v12188, %v12228
    %v12230 = vpop.f32.mrb[0].mxu0
    %12231 = vdwg.mxu0
    %12232 = vmatprep.subr.bf16.mxu0 0
    %12233 = vmatpush1.bf16.msra.mxu0 %v11958
    %12234 = vmatprep.subr.bf16.mxu0 0
    %12235 = vmatpush1.bf16.msra.mxu0 %v11959
    %12236 = vmatprep.subr.bf16.mxu0 0
    %12237 = vmatpush1.bf16.msra.mxu0 %v11960
    %12238 = vmatprep.subr.bf16.mxu0 0
    %12239 = vmatpush1.bf16.msra.mxu0 %v11961
    %12240 = vmatprep.subr.bf16.mxu0 0
    %12241 = vmatpush1.bf16.msra.mxu0 %v11962
    %12242 = vmatprep.subr.bf16.mxu0 0
    %12243 = vmatpush1.bf16.msra.mxu0 %v11963
    %12244 = vmatprep.subr.bf16.mxu0 0
    %12245 = vmatpush1.bf16.msra.mxu0 %v11964
    %12246 = vmatprep.subr.bf16.mxu0 0
    %12247 = vmatpush1.bf16.msra.mxu0 %v11965
    %12248 = vmatprep.subr.bf16.mxu0 0
    %12249 = vmatpush1.bf16.msra.mxu0 %v11966
    %12250 = vmatprep.subr.bf16.mxu0 0
    %12251 = vmatpush1.bf16.msra.mxu0 %v11967
    %12252 = vmatprep.subr.bf16.mxu0 0
    %12253 = vmatpush1.bf16.msra.mxu0 %v11968
    %12254 = vmatprep.subr.bf16.mxu0 0
    %12255 = vmatpush1.bf16.msra.mxu0 %v11969
    %12256 = vmatprep.subr.bf16.mxu0 0
    %12257 = vmatpush1.bf16.msra.mxu0 %v11970
    %12258 = vmatprep.subr.bf16.mxu0 0
    %12259 = vmatpush1.bf16.msra.mxu0 %v11971
    %12260 = vmatprep.subr.bf16.mxu0 0
    %12261 = vmatpush1.bf16.msra.mxu0 %v11972
    %12262 = vmatprep.subr.bf16.mxu0 0
    %12263 = vmatpush1.bf16.msra.mxu0 %v11973
    %12264 = vmatprep.mubr.bf16.mxu0 %v11238
    %12265 = vmatmul.mubr.bf16.gmra.mrb[0].mxu0 %v11237
    %v12266 = vpop.f32.mrb[0].mxu0
    %v12267 = vadd.f32 %v12226, %v12266
    %v12268 = vpop.f32.mrb[0].mxu0
    %v12269 = vpop.f32.mrb[0].mxu0
    %v12270 = vadd.f32 %v12229, %v12269
    %v12271 = vpop.f32.mrb[0].mxu0
    %12272 = vdwg.mxu0
    %12273 = vmatprep.subr.bf16.mxu0 0
    %12274 = vmatpush1.bf16.msra.mxu0 %v11974
    %12275 = vmatprep.subr.bf16.mxu0 0
    %12276 = vmatpush1.bf16.msra.mxu0 %v11975
    %12277 = vmatprep.subr.bf16.mxu0 0
    %12278 = vmatpush1.bf16.msra.mxu0 %v11976
    %12279 = vmatprep.subr.bf16.mxu0 0
    %12280 = vmatpush1.bf16.msra.mxu0 %v11977
    %12281 = vmatprep.subr.bf16.mxu0 0
    %12282 = vmatpush1.bf16.msra.mxu0 %v11978
    %12283 = vmatprep.subr.bf16.mxu0 0
    %12284 = vmatpush1.bf16.msra.mxu0 %v11979
    %12285 = vmatprep.subr.bf16.mxu0 0
    %12286 = vmatpush1.bf16.msra.mxu0 %v11980
    %12287 = vmatprep.subr.bf16.mxu0 0
    %12288 = vmatpush1.bf16.msra.mxu0 %v11981
    %12289 = vmatprep.subr.bf16.mxu0 0
    %12290 = vmatpush1.bf16.msra.mxu0 %v11982
    %12291 = vmatprep.subr.bf16.mxu0 0
    %12292 = vmatpush1.bf16.msra.mxu0 %v11983
    %12293 = vmatprep.subr.bf16.mxu0 0
    %12294 = vmatpush1.bf16.msra.mxu0 %v11984
    %12295 = vmatprep.subr.bf16.mxu0 0
    %12296 = vmatpush1.bf16.msra.mxu0 %v11985
    %12297 = vmatprep.subr.bf16.mxu0 0
    %12298 = vmatpush1.bf16.msra.mxu0 %v11986
    %12299 = vmatprep.subr.bf16.mxu0 0
    %12300 = vmatpush1.bf16.msra.mxu0 %v11987
    %12301 = vmatprep.subr.bf16.mxu0 0
    %12302 = vmatpush1.bf16.msra.mxu0 %v11988
    %12303 = vmatprep.subr.bf16.mxu0 0
    %12304 = vmatpush1.bf16.msra.mxu0 %v11989
    %12305 = vmatprep.mubr.bf16.mxu0 %v11240
    %12306 = vmatmul.mubr.bf16.gmra.mrb[0].mxu0 %v11239
    %v12307 = vpop.f32.mrb[0].mxu0
    %v12308 = vadd.f32 %v12267, %v12307
    %v12309 = vpop.f32.mrb[0].mxu0
    %v12310 = vpop.f32.mrb[0].mxu0
    %v12311 = vadd.f32 %v12270, %v12310
    %v12312 = vpop.f32.mrb[0].mxu0
    %12313 = vdwg.mxu0
    %12314 = vmatprep.subr.bf16.mxu0 0
    %12315 = vmatpush1.bf16.msra.mxu0 %v11990
    %12316 = vmatprep.subr.bf16.mxu0 0
    %12317 = vmatpush1.bf16.msra.mxu0 %v11991
    %12318 = vmatprep.subr.bf16.mxu0 0
    %12319 = vmatpush1.bf16.msra.mxu0 %v11992
    %12320 = vmatprep.subr.bf16.mxu0 0
    %12321 = vmatpush1.bf16.msra.mxu0 %v11993
    %12322 = vmatprep.subr.bf16.mxu0 0
    %12323 = vmatpush1.bf16.msra.mxu0 %v11994
    %12324 = vmatprep.subr.bf16.mxu0 0
    %12325 = vmatpush1.bf16.msra.mxu0 %v11995
    %12326 = vmatprep.subr.bf16.mxu0 0
    %12327 = vmatpush1.bf16.msra.mxu0 %v11996
    %12328 = vmatprep.subr.bf16.mxu0 0
    %12329 = vmatpush1.bf16.msra.mxu0 %v11997
    %12330 = vmatprep.subr.bf16.mxu0 0
    %12331 = vmatpush1.bf16.msra.mxu0 %v11998
    %12332 = vmatprep.subr.bf16.mxu0 0
    %12333 = vmatpush1.bf16.msra.mxu0 %v11999
    %12334 = vmatprep.subr.bf16.mxu0 0
    %12335 = vmatpush1.bf16.msra.mxu0 %v12000
    %12336 = vmatprep.subr.bf16.mxu0 0
    %12337 = vmatpush1.bf16.msra.mxu0 %v12001
    %12338 = vmatprep.subr.bf16.mxu0 0
    %12339 = vmatpush1.bf16.msra.mxu0 %v12002
    %12340 = vmatprep.subr.bf16.mxu0 0
    %12341 = vmatpush1.bf16.msra.mxu0 %v12003
    %12342 = vmatprep.subr.bf16.mxu0 0
    %12343 = vmatpush1.bf16.msra.mxu0 %v12004
    %12344 = vmatprep.subr.bf16.mxu0 0
    %12345 = vmatpush1.bf16.msra.mxu0 %v12005
    %12346 = vmatprep.mubr.bf16.mxu0 %v11242
    %12347 = vmatmul.mubr.bf16.gmra.mrb[0].mxu0 %v11241
    %v12348 = vpop.f32.mrb[0].mxu0
    %v12349 = vadd.f32 %v12308, %v12348
    %v12350 = vpop.f32.mrb[0].mxu0
    %v12351 = vpop.f32.mrb[0].mxu0
    %v12352 = vadd.f32 %v12311, %v12351
    %v12353 = vpop.f32.mrb[0].mxu0
    %12354 = vdwg.mxu0
    %12355 = vmatprep.subr.bf16.mxu0 0
    %12356 = vmatpush1.bf16.msra.mxu0 %v12006
    %12357 = vmatprep.subr.bf16.mxu0 0
    %12358 = vmatpush1.bf16.msra.mxu0 %v12007
    %12359 = vmatprep.subr.bf16.mxu0 0
    %12360 = vmatpush1.bf16.msra.mxu0 %v12008
    %12361 = vmatprep.subr.bf16.mxu0 0
    %12362 = vmatpush1.bf16.msra.mxu0 %v12009
    %12363 = vmatprep.subr.bf16.mxu0 0
    %12364 = vmatpush1.bf16.msra.mxu0 %v12010
    %12365 = vmatprep.subr.bf16.mxu0 0
    %12366 = vmatpush1.bf16.msra.mxu0 %v12011
    %12367 = vmatprep.subr.bf16.mxu0 0
    %12368 = vmatpush1.bf16.msra.mxu0 %v12012
    %12369 = vmatprep.subr.bf16.mxu0 0
    %12370 = vmatpush1.bf16.msra.mxu0 %v12013
    %12371 = vmatprep.subr.bf16.mxu0 0
    %12372 = vmatpush1.bf16.msra.mxu0 %v12014
    %12373 = vmatprep.subr.bf16.mxu0 0
    %12374 = vmatpush1.bf16.msra.mxu0 %v12015
    %12375 = vmatprep.subr.bf16.mxu0 0
    %12376 = vmatpush1.bf16.msra.mxu0 %v12016
    %12377 = vmatprep.subr.bf16.mxu0 0
    %12378 = vmatpush1.bf16.msra.mxu0 %v12017
    %12379 = vmatprep.subr.bf16.mxu0 0
    %12380 = vmatpush1.bf16.msra.mxu0 %v12018
    %12381 = vmatprep.subr.bf16.mxu0 0
    %12382 = vmatpush1.bf16.msra.mxu0 %v12019
    %12383 = vmatprep.subr.bf16.mxu0 0
    %12384 = vmatpush1.bf16.msra.mxu0 %v12020
    %12385 = vmatprep.subr.bf16.mxu0 0
    %12386 = vmatpush1.bf16.msra.mxu0 %v12021
    %12387 = vmatprep.mubr.bf16.mxu0 %v11244
    %12388 = vmatmul.mubr.bf16.gmra.mrb[0].mxu0 %v11243
    %v12389 = vpop.f32.mrb[0].mxu0
    %v12390 = vadd.f32 %v12349, %v12389
    %v12391 = vpop.f32.mrb[0].mxu0
    %v12392 = vpop.f32.mrb[0].mxu0
    %v12393 = vadd.f32 %v12352, %v12392
    %v12394 = vpop.f32.mrb[0].mxu0
    %12395 = vdwg.mxu0
    %12396 = vmatprep.subr.bf16.mxu0 0
    %12397 = vmatpush1.bf16.msra.mxu0 %v12022
    %12398 = vmatprep.subr.bf16.mxu0 0
    %12399 = vmatpush1.bf16.msra.mxu0 %v12023
    %12400 = vmatprep.subr.bf16.mxu0 0
    %12401 = vmatpush1.bf16.msra.mxu0 %v12024
    %12402 = vmatprep.subr.bf16.mxu0 0
    %12403 = vmatpush1.bf16.msra.mxu0 %v12025
    %12404 = vmatprep.subr.bf16.mxu0 0
    %12405 = vmatpush1.bf16.msra.mxu0 %v12026
    %12406 = vmatprep.subr.bf16.mxu0 0
    %12407 = vmatpush1.bf16.msra.mxu0 %v12027
    %12408 = vmatprep.subr.bf16.mxu0 0
    %12409 = vmatpush1.bf16.msra.mxu0 %v12028
    %12410 = vmatprep.subr.bf16.mxu0 0
    %12411 = vmatpush1.bf16.msra.mxu0 %v12029
    %12412 = vmatprep.subr.bf16.mxu0 0
    %12413 = vmatpush1.bf16.msra.mxu0 %v12030
    %12414 = vmatprep.subr.bf16.mxu0 0
    %12415 = vmatpush1.bf16.msra.mxu0 %v12031
    %12416 = vmatprep.subr.bf16.mxu0 0
    %12417 = vmatpush1.bf16.msra.mxu0 %v12032
    %12418 = vmatprep.subr.bf16.mxu0 0
    %12419 = vmatpush1.bf16.msra.mxu0 %v12033
    %12420 = vmatprep.subr.bf16.mxu0 0
    %12421 = vmatpush1.bf16.msra.mxu0 %v12034
    %12422 = vmatprep.subr.bf16.mxu0 0
    %12423 = vmatpush1.bf16.msra.mxu0 %v12035
    %12424 = vmatprep.subr.bf16.mxu0 0
    %12425 = vmatpush1.bf16.msra.mxu0 %v12036
    %12426 = vmatprep.subr.bf16.mxu0 0
    %12427 = vmatpush1.bf16.msra.mxu0 %v12037
    %12428 = vmatprep.mubr.bf16.mxu0 %v11246
    %12429 = vmatmul.mubr.bf16.gmra.mrb[0].mxu0 %v11245
    %v12430 = vpop.f32.mrb[0].mxu0
    %v12431 = vadd.f32 %v12390, %v12430
    %v12432 = vpop.f32.mrb[0].mxu0
    %v12433 = vpop.f32.mrb[0].mxu0
    %v12434 = vadd.f32 %v12393, %v12433
    %v12435 = vpop.f32.mrb[0].mxu0
    %12436 = vdwg.mxu0
    %v12437 = vmax.f32 %v12431, 0.0
    %v12438 = vmax.f32 %v12434, 0.0
    %v12439 = vpack.c.bf16 %v12438, %v12437
    %v12440 = vld [vmem:[#allocation15] sm:$0xf]
    %v12441 = vld [vmem:[#allocation15 + $0x4] sm:$0xf]
    %v12442 = vld [vmem:[#allocation15 + $0x8] sm:$0xf]
    %v12443 = vld [vmem:[#allocation15 + $0xc] sm:$0xf]
    %v12444 = vld [vmem:[#allocation15 + $0x10] sm:$0xf]
    %v12445 = vld [vmem:[#allocation15 + $0x14] sm:$0xf]
    %v12446 = vld [vmem:[#allocation15 + $0x18] sm:$0xf]
    %v12447 = vld [vmem:[#allocation15 + $0x1c] sm:$0xf]
    %v12448 = vld [vmem:[#allocation15 + $0x20] sm:$0xf]
    %v12449 = vld [vmem:[#allocation15 + $0x24] sm:$0xf]
    %v12450 = vld [vmem:[#allocation15 + $0x28] sm:$0xf]
    %v12451 = vld [vmem:[#allocation15 + $0x2c] sm:$0xf]
    %v12452 = vld [vmem:[#allocation15 + $0x30] sm:$0xf]
    %v12453 = vld [vmem:[#allocation15 + $0x34] sm:$0xf]
    %v12454 = vld [vmem:[#allocation15 + $0x38] sm:$0xf]
    %v12455 = vld [vmem:[#allocation15 + $0x3c] sm:$0xf]
    %v12456 = vld [vmem:[#allocation16] sm:$0x1]
    %v12458 = vlaneseq
    %v12459 = vshrl.u32 %v12458, 7
    %v12460 = vsub.s32 0, %v12459
    %v12461 = vrot.slane %v12456, %v12460
    %v12479 = vunpack.c.l.b16 %v12440
    %v12480 = vunpack.c.l.b16 %v12441
    %v12481 = vunpack.c.l.b16 %v12442
    %v12482 = vunpack.c.l.b16 %v12443
    %v12483 = vunpack.c.l.b16 %v12444
    %v12484 = vunpack.c.l.b16 %v12445
    %v12485 = vunpack.c.l.b16 %v12446
    %v12486 = vunpack.c.l.b16 %v12447
    %v12487 = vunpack.c.l.b16 %v12448
    %v12488 = vunpack.c.l.b16 %v12449
    %v12489 = vunpack.c.l.b16 %v12450
    %v12490 = vunpack.c.l.b16 %v12451
    %v12491 = vunpack.c.l.b16 %v12452
    %v12492 = vunpack.c.l.b16 %v12453
    %v12493 = vunpack.c.l.b16 %v12454
    %v12494 = vunpack.c.l.b16 %v12455
    %v12495 = vpack.c.b16 %v12480, %v12479
    %v12496 = vpack.c.b16 %v12482, %v12481
    %v12497 = vpack.c.b16 %v12484, %v12483
    %v12498 = vpack.c.b16 %v12486, %v12485
    %v12499 = vpack.c.b16 %v12488, %v12487
    %v12500 = vpack.c.b16 %v12490, %v12489
    %v12501 = vpack.c.b16 %v12492, %v12491
    %v12502 = vpack.c.b16 %v12494, %v12493
    %12511 = vmatprep.subr.bf16.mxu0 0
    %12512 = vmatpush1.bf16.msra.mxu0 %v12495
    %12513 = vmatprep.subr.bf16.mxu0 0
    %12514 = vmatpush1.bf16.msra.mxu0 %v12496
    %12515 = vmatprep.subr.bf16.mxu0 0
    %12516 = vmatpush1.bf16.msra.mxu0 %v12497
    %12517 = vmatprep.subr.bf16.mxu0 0
    %12518 = vmatpush1.bf16.msra.mxu0 %v12498
    %12519 = vmatprep.subr.bf16.mxu0 0
    %12520 = vmatpush1.bf16.msra.mxu0 %v12499
    %12521 = vmatprep.subr.bf16.mxu0 0
    %12522 = vmatpush1.bf16.msra.mxu0 %v12500
    %12523 = vmatprep.subr.bf16.mxu0 0
    %12524 = vmatpush1.bf16.msra.mxu0 %v12501
    %12525 = vmatprep.subr.bf16.mxu0 0
    %12526 = vmatpush1.bf16.msra.mxu0 %v12502
    %12527 = vmatprep.subr.bf16.mxu0 0
    %12528 = vmatpush1.bf16.msra.mxu0 0
    %12529 = vmatprep.subr.bf16.mxu0 0
    %12530 = vmatpush1.bf16.msra.mxu0 0
    %12531 = vmatprep.subr.bf16.mxu0 0
    %12532 = vmatpush1.bf16.msra.mxu0 0
    %12533 = vmatprep.subr.bf16.mxu0 0
    %12534 = vmatpush1.bf16.msra.mxu0 0
    %12535 = vmatprep.subr.bf16.mxu0 0
    %12536 = vmatpush1.bf16.msra.mxu0 0
    %12537 = vmatprep.subr.bf16.mxu0 0
    %12538 = vmatpush1.bf16.msra.mxu0 0
    %12539 = vmatprep.subr.bf16.mxu0 0
    %12540 = vmatpush1.bf16.msra.mxu0 0
    %12541 = vmatprep.subr.bf16.mxu0 0
    %12542 = vmatpush1.bf16.msra.mxu0 0
    %12543 = vmatprep.mubr.bf16.mxu0 0
    %12544 = vmatmul.mubr.bf16.gmra.mrb[0].mxu0 %v12439
    %v12545 = vpop.f32.mrb[0].mxu0
    %v12546 = vadd.f32 %v12461, %v12545
    %v12547 = vpop.f32.mrb[0].mxu0
    %v12548 = vpop.f32.mrb[0].mxu0
    %v12549 = vadd.f32 %v12461, %v12548
    %v12550 = vpop.f32.mrb[0].mxu0
    %12551 = vdwg.mxu0
    %12552 = vst [vmem:[%s11] sm:$0xff] %v12546
    %12553 = vst [vmem:[%s11 + $0x8] sm:$0xff] %v12549
    // Predicated region
    $region86: #{forward.1} parent=1 // pred_check
      _
    $region87: #{forward.1} parent=1 // pred_check_branch
      %12555 = sbr.rel (0) target = $region89
    $region88: #{forward.1} parent=1 // pred_region
      _
    $region89: #{forward.1} parent=1 // pred_fallthru
      _
    // Predicated region
    $region90: #{forward.1} parent=1 // pred_check
      _
    $region91: #{forward.1} parent=1 // pred_check_branch
      %12557 = sbr.rel (0) target = $region93
    $region92: #{forward.1} parent=1 // pred_region
      _
    $region93: #{forward.1} parent=1 // pred_fallthru
      _
    %12558 = vsyncpa [#allocation3], 1
    %12559 = vsyncpa [#allocation5], 1
    %12560 = vsyncpa [#allocation8], 1
    %12561 = vsyncpa [#allocation11], 1
    %12562 = vsyncpa [#allocation14], 1
    %12563 = vsyncpa [#allocation17], 1

</llo_original>
